<compile_context>
chip_gen: v7x
topology: tpu7x:2x2x1
jax: 0.10.0
libtpu: 0.0.40
codegen_flags: <defaults>
</compile_context>

<pallas_src>
import functools
import math

import jax
import jax.numpy as jnp
from jax import lax
from jax.experimental import pallas as pl
from jax.experimental.pallas import tpu as pltpu

EPS = 1e-6
NEG_INF = -1e30


def _vmem_limit_bytes():
    """~3/4 of physical VMEM: ~96 MiB on v5e/v6e (128 MiB), ~48 MiB on v7x."""
    cap = 64 * 1024 * 1024
    try:
        info = pltpu.get_tpu_info()
        cap = int(getattr(info, "vmem_capacity_bytes", cap))
    except Exception:
        pass
    return max(32 * 1024 * 1024, min(cap * 3 // 4, 112 * 1024 * 1024))


def _pick_tile(n, cands):
    for c in cands:
        if n % c == 0:
            return c
    return n


def _rmsnorm_f32(x_f32):
    ms = jnp.mean(x_f32 * x_f32, axis=-1, keepdims=True)
    return x_f32 * lax.rsqrt(ms + EPS)


# --------------------------------------------------------------------------
# Kernel 1: attn-RMSNorm + fused QKV matmul + batched qk-RMSNorm + RoPE.
# --------------------------------------------------------------------------
def qkv_rope_kernel(x_ref, w_ref, cos_q_ref, sin_q_ref, cos_k_ref, sin_k_ref,
                    q_ref, k_ref, v_ref, *, nheads, head_dim):
    D = x_ref.shape[1]
    hd = head_dim

    h = _rmsnorm_f32(x_ref[...].astype(jnp.float32)).astype(jnp.bfloat16)
    qkv = jnp.dot(h, w_ref[...], preferred_element_type=jnp.float32)
    qkv = qkv.astype(jnp.bfloat16)                              # (tq, 3D)

    # head-major scatter: H contiguous 128-lane-tile copies (pure data layout)
    for hi in range(nheads):
        q_ref[hi] = qkv[:, 0 * D + hi * hd:0 * D + (hi + 1) * hd]
        k_ref[hi] = qkv[:, 1 * D + hi * hd:1 * D + (hi + 1) * hd]
        v_ref[hi] = qkv[:, 2 * D + hi * hd:2 * D + (hi + 1) * hd]

    # batched (all heads at once) qk-RMSNorm + RoPE.  Torch reference:
    # y1 = x1*cos + x2*sin, y2 = -x1*sin + x2*cos  ==
    # x*[cos,cos] + roll(x, hd/2)*[sin,-sin].  1/sqrt(hd) folded into cos_q/sin_q.
    qf = _rmsnorm_f32(q_ref[...].astype(jnp.float32))           # (H, tq, hd)
    kf = _rmsnorm_f32(k_ref[...].astype(jnp.float32))
    qf = qf * cos_q_ref[...][None] + \
        pltpu.roll(qf, shift=hd // 2, axis=2) * sin_q_ref[...][None]
    kf = kf * cos_k_ref[...][None] + \
        pltpu.roll(kf, shift=hd // 2, axis=2) * sin_k_ref[...][None]
    q_ref[...] = qf.astype(jnp.bfloat16)
    k_ref[...] = kf.astype(jnp.bfloat16)


def run_qkv_rope(x, qkv_w_t, cos_q, sin_q, cos_k, sin_k, *, head_dim,
                 vmem_limit):
    T, D = x.shape
    hd = head_dim
    H = D // hd
    tq = _pick_tile(T, (256, 128))
    kernel = functools.partial(qkv_rope_kernel, nheads=H, head_dim=hd)
    hm = jax.ShapeDtypeStruct((H, T, hd), jnp.bfloat16)
    rope_spec = pl.BlockSpec((tq, hd), lambda i: (i, 0))
    hm_spec = pl.BlockSpec((H, tq, hd), lambda i: (0, i, 0))
    return pl.pallas_call(
        kernel,
        out_shape=(hm, hm, hm),
        grid_spec=pltpu.PrefetchScalarGridSpec(
            num_scalar_prefetch=0,
            grid=(T // tq,),
            in_specs=[
                pl.BlockSpec((tq, D), lambda i: (i, 0)),
                pl.BlockSpec((D, 3 * D), lambda i: (0, 0)),
                rope_spec, rope_spec, rope_spec, rope_spec,
            ],
            out_specs=(hm_spec, hm_spec, hm_spec),
        ),
        compiler_params=pltpu.CompilerParams(
            dimension_semantics=("parallel",),
            vmem_limit_bytes=vmem_limit),
    )(x, qkv_w_t, cos_q, sin_q, cos_k, sin_k)


# --------------------------------------------------------------------------
# Kernel 2: head-batched causal flash attention (online softmax).
# --------------------------------------------------------------------------
def flash_attn_kernel(q_ref, k_ref, v_ref, o_ref, m_sc, l_sc, acc_sc,
                      *, tq, tkv, head_dim):
    i = pl.program_id(0)
    j = pl.program_id(1)
    H = q_ref.shape[0]
    hd = head_dim

    @pl.when(j == 0)
    def _():
        m_sc[...] = jnp.full(m_sc.shape, -jnp.inf, jnp.float32)
        l_sc[...] = jnp.zeros(l_sc.shape, jnp.float32)
        acc_sc[...] = jnp.zeros(acc_sc.shape, jnp.float32)

    # skip kv tiles entirely above the causal diagonal
    @pl.when(j * tkv <= i * tq + (tq - 1))
    def _():
        s = jnp.einsum('htd,hsd->hts', q_ref[...], k_ref[...],
                       preferred_element_type=jnp.float32)      # (H, tq, tkv)
        # causal mask computed inline -- no (T, T) f32 bias buffer in VMEM
        row = i * tq + lax.broadcasted_iota(jnp.int32, (tq, tkv), 0)
        col = j * tkv + lax.broadcasted_iota(jnp.int32, (tq, tkv), 1)
        s = jnp.where((col <= row)[None], s, NEG_INF)
        m_new = jnp.maximum(m_sc[...], jnp.max(s, axis=-1, keepdims=True))
        alpha = jnp.exp(m_sc[...] - m_new)
        p = jnp.exp(s - m_new)
        l_sc[...] = alpha * l_sc[...] + jnp.sum(p, axis=-1, keepdims=True)
        acc_sc[...] = alpha * acc_sc[...] + jnp.einsum(
            'hts,hsd->htd', p.astype(jnp.bfloat16), v_ref[...],
            preferred_element_type=jnp.float32)
        m_sc[...] = m_new

    @pl.when(j == pl.num_programs(1) - 1)
    def _():
        out = (acc_sc[...] * pl.reciprocal(l_sc[...], approx=True)
               ).astype(jnp.bfloat16)                           # (H, tq, hd)
        for hi in range(H):                                      # head merge
            o_ref[:, hi * hd:(hi + 1) * hd] = out[hi]


def run_flash_attn(q, k, v, *, vmem_limit):
    H, T, hd = q.shape
    D = H * hd
    tq = _pick_tile(T, (256, 128))
    tkv = _pick_tile(T, (256, 128))
    kernel = functools.partial(flash_attn_kernel, tq=tq, tkv=tkv, head_dim=hd)
    return pl.pallas_call(
        kernel,
        out_shape=jax.ShapeDtypeStruct((T, D), jnp.bfloat16),
        grid_spec=pltpu.PrefetchScalarGridSpec(
            num_scalar_prefetch=0,
            grid=(T // tq, T // tkv),
            in_specs=[
                pl.BlockSpec((H, tq, hd), lambda i, j: (0, i, 0)),
                pl.BlockSpec((H, tkv, hd), lambda i, j: (0, j, 0)),
                pl.BlockSpec((H, tkv, hd), lambda i, j: (0, j, 0)),
            ],
            out_specs=pl.BlockSpec((tq, D), lambda i, j: (i, 0)),
            scratch_shapes=[
                pltpu.VMEM((H, tq, 1), jnp.float32),    # running max
                pltpu.VMEM((H, tq, 1), jnp.float32),    # running denom
                pltpu.VMEM((H, tq, hd), jnp.float32),   # running output
            ],
        ),
        compiler_params=pltpu.CompilerParams(
            dimension_semantics=("parallel", "arbitrary"),
            vmem_limit_bytes=vmem_limit),
    )(q, k, v)


# --------------------------------------------------------------------------
# Kernel 3: o_proj + residual + RMSNorm + MLP(relu^2) + residual.
# --------------------------------------------------------------------------
def out_mlp_kernel(attn_ref, x_ref, o_w_ref, w1_ref, w3_ref, o_ref):
    x = x_ref[...]
    o = jnp.dot(attn_ref[...], o_w_ref[...], preferred_element_type=jnp.float32)
    x = x + o.astype(jnp.bfloat16)

    h = _rmsnorm_f32(x.astype(jnp.float32)).astype(jnp.bfloat16)
    h1 = jnp.dot(h, w1_ref[...], preferred_element_type=jnp.float32)
    h1 = h1.astype(jnp.bfloat16)
    h1 = jnp.maximum(h1, 0.0)
    h1 = h1 * h1                                   # ReLU^2 in bf16 (VPU)
    h2 = jnp.dot(h1, w3_ref[...], preferred_element_type=jnp.float32)
    o_ref[...] = x + h2.astype(jnp.bfloat16)


def run_out_mlp(attn, x, o_w_t, w1_t, w3_t, *, vmem_limit):
    T, D = x.shape
    tq = _pick_tile(T, (256, 128))
    return pl.pallas_call(
        out_mlp_kernel,
        out_shape=jax.ShapeDtypeStruct((T, D), jnp.bfloat16),
        grid_spec=pltpu.PrefetchScalarGridSpec(
            num_scalar_prefetch=0,
            grid=(T // tq,),
            in_specs=[
                pl.BlockSpec((tq, D), lambda i: (i, 0)),
                pl.BlockSpec((tq, D), lambda i: (i, 0)),
                pl.BlockSpec((D, D), lambda i: (0, 0)),
                pl.BlockSpec((D, 4 * D), lambda i: (0, 0)),
                pl.BlockSpec((4 * D, D), lambda i: (0, 0)),
            ],
            out_specs=pl.BlockSpec((tq, D), lambda i: (i, 0)),
        ),
        compiler_params=pltpu.CompilerParams(
            dimension_semantics=("parallel",),
            vmem_limit_bytes=vmem_limit),
    )(attn, x, o_w_t, w1_t, w3_t)


# --------------------------------------------------------------------------
# Kernel 4: lm_head + online-LSE cross-entropy.  Vocab axis is OUTER so the
# (D, V) weight streams from HBM exactly once; (T, 1) accumulators in scratch.
# --------------------------------------------------------------------------
def lm_head_ce_kernel(x_ref, w_ref, tgt_ref, loss_ref, m_sc, l_sc, t_sc,
                      *, t_real, tq, tv):
    j = pl.program_id(0)                 # vocab tile (outer)
    i = pl.program_id(1)                 # query tile (inner)
    row0 = pl.multiple_of(i * tq, tq)

    @pl.when(j == 0)
    def _():
        m_sc[pl.ds(row0, tq), :] = jnp.full((tq, 1), -jnp.inf, jnp.float32)
        l_sc[pl.ds(row0, tq), :] = jnp.zeros((tq, 1), jnp.float32)
        t_sc[pl.ds(row0, tq), :] = jnp.zeros((tq, 1), jnp.float32)

    logits = jnp.dot(x_ref[...], w_ref[...],
                     preferred_element_type=jnp.float32)        # (tq, tv) f32

    m_prev = m_sc[pl.ds(row0, tq), :]
    m_new = jnp.maximum(m_prev, jnp.max(logits, axis=-1, keepdims=True))
    l_sc[pl.ds(row0, tq), :] = (
        l_sc[pl.ds(row0, tq), :] * jnp.exp(m_prev - m_new)
        + jnp.sum(jnp.exp(logits - m_new), axis=-1, keepdims=True))
    m_sc[pl.ds(row0, tq), :] = m_new

    col = j * tv + lax.broadcasted_iota(jnp.int32, (tq, tv), 1)
    hit = col == tgt_ref[...]
    t_sc[pl.ds(row0, tq), :] = t_sc[pl.ds(row0, tq), :] + jnp.sum(
        jnp.where(hit, logits, 0.0), axis=-1, keepdims=True)

    # write the running per-token loss each step; the last vocab step survives
    per_tok = (m_sc[pl.ds(row0, tq), :] + jnp.log(l_sc[pl.ds(row0, tq), :])
               - t_sc[pl.ds(row0, tq), :])
    rowid = row0 + lax.broadcasted_iota(jnp.int32, (tq, 1), 0)
    loss_ref[...] = jnp.where(rowid < t_real, per_tok, 0.0)


def run_lm_head_ce(x, w_t, tgt_col, t_real, *, vmem_limit):
    T, D = x.shape
    V = w_t.shape[1]
    tq = _pick_tile(T, (512, 256, 128))
    tv = _pick_tile(V, (512, 256, 128, 64))
    kernel = functools.partial(lm_head_ce_kernel, t_real=t_real, tq=tq, tv=tv)
    per_tok = pl.pallas_call(
        kernel,
        out_shape=jax.ShapeDtypeStruct((T, 1), jnp.float32),
        grid_spec=pltpu.PrefetchScalarGridSpec(
            num_scalar_prefetch=0,
            grid=(V // tv, T // tq),        # vocab outer: weight streams once
            in_specs=[
                pl.BlockSpec((tq, D), lambda j, i: (i, 0)),
                pl.BlockSpec((D, tv), lambda j, i: (0, j)),
                pl.BlockSpec((tq, 1), lambda j, i: (i, 0)),
            ],
            out_specs=pl.BlockSpec((tq, 1), lambda j, i: (i, 0)),
            scratch_shapes=[pltpu.VMEM((T, 1), jnp.float32)] * 3,
        ),
        compiler_params=pltpu.CompilerParams(
            dimension_semantics=("arbitrary", "arbitrary"),
            vmem_limit_bytes=vmem_limit),
    )(x, w_t, tgt_col)
    return jnp.sum(per_tok) / t_real


# --------------------------------------------------------------------------
# Glue: embedding gather, padding, weight transposition, rotary tables.
# --------------------------------------------------------------------------
def gpt_forward(input_ids, target_ids, params, *, head_dim):
    T_real = input_ids.shape[0]
    T_pad = ((T_real + 127) // 128) * 128
    vmem_limit = _vmem_limit_bytes()
    hd = head_dim

    # embedding gather + pad to a lane/MXU-friendly multiple of 128 (padded
    # rows are causally invisible to real rows and excluded from the loss)
    x = params["embed_w"][input_ids].astype(jnp.bfloat16)
    x = jnp.pad(x, ((0, T_pad - T_real), (0, 0)))

    # rotary tables (rotate-half sign folded into sin); the 1/sqrt(head_dim)
    # attention scale is folded into the q tables only
    freqs = params["freqs"]                                     # (hd//2,) f32
    theta = jnp.arange(T_pad, dtype=jnp.float32)[:, None] * freqs[None, :]
    cos_h, sin_h = jnp.cos(theta), jnp.sin(theta)
    cos = jnp.concatenate([cos_h, cos_h], axis=-1)              # (T_pad, hd)
    sin = jnp.concatenate([sin_h, -sin_h], axis=-1)
    scale = 1.0 / math.sqrt(hd)
    cos_q, sin_q = cos * scale, sin * scale
    cos_k, sin_k = cos, sin

    # pre-transpose weights (torch (out,in)) to MXU-native (K, N)
    qkv_w_t = jnp.swapaxes(params["qkv_w"], 1, 2)               # (depth, D, 3D)
    o_w_t = jnp.swapaxes(params["o_w"], 1, 2)                   # (depth, D, D)
    w1_t = jnp.swapaxes(params["w1"], 1, 2)                     # (depth, D, 4D)
    w3_t = jnp.swapaxes(params["w3"], 1, 2)                     # (depth, 4D, D)
    lm_w_t = jnp.swapaxes(params["lm_w"], 0, 1)                 # (D, out_dim)

    depth = qkv_w_t.shape[0]
    for l in range(depth):
        q, k, v = run_qkv_rope(x, qkv_w_t[l], cos_q, sin_q, cos_k, sin_k,
                               head_dim=hd, vmem_limit=vmem_limit)
        attn = run_flash_attn(q, k, v, vmem_limit=vmem_limit)
        x = run_out_mlp(attn, x, o_w_t[l], w1_t[l], w3_t[l],
                        vmem_limit=vmem_limit)

    tgt = jnp.pad(target_ids.astype(jnp.int32), (0, T_pad - T_real))
    tgt = tgt.reshape(T_pad, 1)
    return run_lm_head_ce(x, lm_w_t, tgt, T_real, vmem_limit=vmem_limit)


if __name__ == "__main__":
    # small config consistent with the module (head_dim=128 default; 2 heads)
    dim = 256
    depth = 2
    vocab_size = 100
    head_dim = 128
    rotary_base = 1024.0
    T = 96                                                      # padded to 128
    out_dim = ((vocab_size - 1) // 64 + 1) * 64                 # 128

    key = jax.random.PRNGKey(0)
    ks = jax.random.split(key, 8)

    input_ids = jax.random.randint(ks[0], (T,), 0, vocab_size, dtype=jnp.int32)
    target_ids = jax.random.randint(ks[1], (T,), 0, vocab_size, dtype=jnp.int32)

    # parameters (deterministic synthetic init; shapes follow torch __init__)
    embed_w = jax.random.normal(ks[2], (vocab_size, dim), jnp.float32) * 0.5
    qkv_w = jax.random.normal(ks[3], (depth, 3 * dim, dim), jnp.float32) \
        / math.sqrt(dim) / 2.0
    o_w = jax.random.normal(ks[4], (depth, dim, dim), jnp.float32) / math.sqrt(dim)
    w1 = jax.random.normal(ks[5], (depth, 4 * dim, dim), jnp.float32) / math.sqrt(dim)
    w3 = jax.random.normal(ks[6], (depth, dim, 4 * dim), jnp.float32) \
        / math.sqrt(4 * dim)
    lm_w = jax.random.normal(ks[7], (out_dim, dim), jnp.float32) / math.sqrt(dim)

    # FusedLinear scalar scales (zero-init in torch __init__; nonzero here so
    # the full compute path is exercised), folded into the weights.
    o_w = o_w * 0.1
    w3 = w3 * 0.1
    lm_w = lm_w * 0.05

    # rotary frequency buffer (second half zeroed, as in DecoderLayer.__init__)
    freqs = (1.0 / rotary_base) ** jnp.linspace(0.0, 1.0, head_dim // 4,
                                                dtype=jnp.float32)
    freqs = jnp.concatenate([freqs, jnp.zeros(head_dim // 4, jnp.float32)])

    params = {
        "embed_w": embed_w,
        "freqs": freqs,
        "qkv_w": qkv_w.astype(jnp.bfloat16),
        "o_w": o_w.astype(jnp.bfloat16),
        "w1": w1.astype(jnp.bfloat16),
        "w3": w3.astype(jnp.bfloat16),
        "lm_w": lm_w.astype(jnp.bfloat16),
    }

    loss_fn = jax.jit(functools.partial(gpt_forward, head_dim=head_dim))
    loss = loss_fn(input_ids, target_ids, params)
    loss = jax.block_until_ready(loss)
    assert jnp.isfinite(loss), f"loss not finite: {loss}"
    print("KERNEL_OK")
</pallas_src>

<mosaic_0001>
module attributes {stable_mosaic.version = 11 : i64} {
  func.func @qkv_rope_kernel(%arg0: i32, %arg1: memref<128x256xbf16, #tpu.memory_space<vmem>>, %arg2: memref<256x768xbf16, #tpu.memory_space<vmem>>, %arg3: memref<128x128xf32, #tpu.memory_space<vmem>>, %arg4: memref<128x128xf32, #tpu.memory_space<vmem>>, %arg5: memref<128x128xf32, #tpu.memory_space<vmem>>, %arg6: memref<128x128xf32, #tpu.memory_space<vmem>>, %arg7: memref<2x128x128xbf16, #tpu.memory_space<vmem>>, %arg8: memref<2x128x128xbf16, #tpu.memory_space<vmem>>, %arg9: memref<2x128x128xbf16, #tpu.memory_space<vmem>>) attributes {dimension_semantics = [#tpu.dimension_semantics<parallel>], iteration_bounds = array<i64: 1>, scalar_prefetch = 0 : i64, scratch_operands = 0 : i64, tpu.core_type = #tpu.core_type<tc>, window_params = [{transform_indices = @transform_0, window_bounds = array<i64: 128, 256>}, {pipeline_mode = #tpu.pipeline_mode<synchronous>, transform_indices = @transform_1, window_bounds = array<i64: 256, 768>}, {transform_indices = @transform_2, window_bounds = array<i64: 128, 128>}, {transform_indices = @transform_3, window_bounds = array<i64: 128, 128>}, {transform_indices = @transform_4, window_bounds = array<i64: 128, 128>}, {transform_indices = @transform_5, window_bounds = array<i64: 128, 128>}, {transform_indices = @transform_6, window_bounds = array<i64: 2, 128, 128>}, {transform_indices = @transform_7, window_bounds = array<i64: 2, 128, 128>}, {transform_indices = @transform_8, window_bounds = array<i64: 2, 128, 128>}]} {
    %c0 = arith.constant 0 : index
    %c0_0 = arith.constant 0 : index
    %0 = vector.load %arg1[%c0, %c0_0] : memref<128x256xbf16, #tpu.memory_space<vmem>>, vector<128x256xbf16>
    %1 = arith.extf %0 : vector<128x256xbf16> to vector<128x256xf32>
    %2 = arith.mulf %1, %1 : vector<128x256xf32>
    %cst = arith.constant dense<0.000000e+00> : vector<128xf32>
    %3 = vector.multi_reduction <add>, %2, %cst [1] : vector<128x256xf32> to vector<128xf32>
    %4 = vector.shape_cast %3 : vector<128xf32> to vector<128x1xf32>
    %cst_1 = arith.constant 2.560000e+02 : f32
    %5 = vector.broadcast %cst_1 : f32 to vector<128x1xf32>
    %6 = arith.divf %4, %5 : vector<128x1xf32>
    %cst_2 = arith.constant 9.99999997E-7 : f32
    %7 = vector.broadcast %cst_2 : f32 to vector<128x1xf32>
    %8 = arith.addf %6, %7 : vector<128x1xf32>
    %9 = math.rsqrt %8 : vector<128x1xf32>
    %10 = vector.broadcast %9 : vector<128x1xf32> to vector<128x256xf32>
    %11 = arith.mulf %1, %10 : vector<128x256xf32>
    %12 = arith.truncf %11 : vector<128x256xf32> to vector<128x256xbf16>
    %c0_3 = arith.constant 0 : index
    %c0_4 = arith.constant 0 : index
    %13 = vector.load %arg2[%c0_3, %c0_4] : memref<256x768xbf16, #tpu.memory_space<vmem>>, vector<256x768xbf16>
    %cst_5 = arith.constant dense<0.000000e+00> : vector<128x768xf32>
    %14 = tpu.matmul %12, %13, %cst_5 {dimension_numbers = #tpu.dot_dimension_numbers<[1], [0], [0], [1], [0, 0, 1, 1], [], []>} : vector<128x256xbf16>, vector<256x768xbf16>, vector<128x768xf32> -> vector<128x768xf32>
    %15 = arith.truncf %14 : vector<128x768xf32> to vector<128x768xbf16>
    %16 = vector.extract_strided_slice %15 {offsets = [0, 0], sizes = [128, 128], strides = [1, 1]} : vector<128x768xbf16> to vector<128x128xbf16>
    %c0_6 = arith.constant 0 : index
    %c0_7 = arith.constant 0 : index
    %c0_8 = arith.constant 0 : index
    %17 = vector.load %arg7[%c0_6, %c0_7, %c0_8] : memref<2x128x128xbf16, #tpu.memory_space<vmem>>, vector<1x128x128xbf16>
    %18 = vector.shape_cast %17 : vector<1x128x128xbf16> to vector<128x128xbf16>
    %19 = vector.shape_cast %16 : vector<128x128xbf16> to vector<1x128x128xbf16>
    tpu.vector_store %arg7[%c0_6, %c0_7, %c0_8], %19 {strides = array<i32>} : memref<2x128x128xbf16, #tpu.memory_space<vmem>>, vector<1x128x128xbf16>,
    %20 = vector.extract_strided_slice %15 {offsets = [0, 256], sizes = [128, 128], strides = [1, 1]} : vector<128x768xbf16> to vector<128x128xbf16>
    %c0_9 = arith.constant 0 : index
    %c0_10 = arith.constant 0 : index
    %c0_11 = arith.constant 0 : index
    %21 = vector.load %arg8[%c0_9, %c0_10, %c0_11] : memref<2x128x128xbf16, #tpu.memory_space<vmem>>, vector<1x128x128xbf16>
    %22 = vector.shape_cast %21 : vector<1x128x128xbf16> to vector<128x128xbf16>
    %23 = vector.shape_cast %20 : vector<128x128xbf16> to vector<1x128x128xbf16>
    tpu.vector_store %arg8[%c0_9, %c0_10, %c0_11], %23 {strides = array<i32>} : memref<2x128x128xbf16, #tpu.memory_space<vmem>>, vector<1x128x128xbf16>,
    %24 = vector.extract_strided_slice %15 {offsets = [0, 512], sizes = [128, 128], strides = [1, 1]} : vector<128x768xbf16> to vector<128x128xbf16>
    %c0_12 = arith.constant 0 : index
    %c0_13 = arith.constant 0 : index
    %c0_14 = arith.constant 0 : index
    %25 = vector.load %arg9[%c0_12, %c0_13, %c0_14] : memref<2x128x128xbf16, #tpu.memory_space<vmem>>, vector<1x128x128xbf16>
    %26 = vector.shape_cast %25 : vector<1x128x128xbf16> to vector<128x128xbf16>
    %27 = vector.shape_cast %24 : vector<128x128xbf16> to vector<1x128x128xbf16>
    tpu.vector_store %arg9[%c0_12, %c0_13, %c0_14], %27 {strides = array<i32>} : memref<2x128x128xbf16, #tpu.memory_space<vmem>>, vector<1x128x128xbf16>,
    %28 = vector.extract_strided_slice %15 {offsets = [0, 128], sizes = [128, 128], strides = [1, 1]} : vector<128x768xbf16> to vector<128x128xbf16>
    %c1 = arith.constant 1 : index
    %c0_15 = arith.constant 0 : index
    %c0_16 = arith.constant 0 : index
    %29 = vector.load %arg7[%c1, %c0_15, %c0_16] : memref<2x128x128xbf16, #tpu.memory_space<vmem>>, vector<1x128x128xbf16>
    %30 = vector.shape_cast %29 : vector<1x128x128xbf16> to vector<128x128xbf16>
    %31 = vector.shape_cast %28 : vector<128x128xbf16> to vector<1x128x128xbf16>
    tpu.vector_store %arg7[%c1, %c0_15, %c0_16], %31 {strides = array<i32>} : memref<2x128x128xbf16, #tpu.memory_space<vmem>>, vector<1x128x128xbf16>,
    %32 = vector.extract_strided_slice %15 {offsets = [0, 384], sizes = [128, 128], strides = [1, 1]} : vector<128x768xbf16> to vector<128x128xbf16>
    %c1_17 = arith.constant 1 : index
    %c0_18 = arith.constant 0 : index
    %c0_19 = arith.constant 0 : index
    %33 = vector.load %arg8[%c1_17, %c0_18, %c0_19] : memref<2x128x128xbf16, #tpu.memory_space<vmem>>, vector<1x128x128xbf16>
    %34 = vector.shape_cast %33 : vector<1x128x128xbf16> to vector<128x128xbf16>
    %35 = vector.shape_cast %32 : vector<128x128xbf16> to vector<1x128x128xbf16>
    tpu.vector_store %arg8[%c1_17, %c0_18, %c0_19], %35 {strides = array<i32>} : memref<2x128x128xbf16, #tpu.memory_space<vmem>>, vector<1x128x128xbf16>,
    %36 = vector.extract_strided_slice %15 {offsets = [0, 640], sizes = [128, 128], strides = [1, 1]} : vector<128x768xbf16> to vector<128x128xbf16>
    %c1_20 = arith.constant 1 : index
    %c0_21 = arith.constant 0 : index
    %c0_22 = arith.constant 0 : index
    %37 = vector.load %arg9[%c1_20, %c0_21, %c0_22] : memref<2x128x128xbf16, #tpu.memory_space<vmem>>, vector<1x128x128xbf16>
    %38 = vector.shape_cast %37 : vector<1x128x128xbf16> to vector<128x128xbf16>
    %39 = vector.shape_cast %36 : vector<128x128xbf16> to vector<1x128x128xbf16>
    tpu.vector_store %arg9[%c1_20, %c0_21, %c0_22], %39 {strides = array<i32>} : memref<2x128x128xbf16, #tpu.memory_space<vmem>>, vector<1x128x128xbf16>,
    %c0_23 = arith.constant 0 : index
    %c0_24 = arith.constant 0 : index
    %c0_25 = arith.constant 0 : index
    %40 = vector.load %arg7[%c0_23, %c0_24, %c0_25] : memref<2x128x128xbf16, #tpu.memory_space<vmem>>, vector<2x128x128xbf16>
    %41 = arith.extf %40 : vector<2x128x128xbf16> to vector<2x128x128xf32>
    %42 = arith.mulf %41, %41 : vector<2x128x128xf32>
    %cst_26 = arith.constant dense<0.000000e+00> : vector<2x128xf32>
    %43 = vector.multi_reduction <add>, %42, %cst_26 [2] : vector<2x128x128xf32> to vector<2x128xf32>
    %44 = vector.shape_cast %43 : vector<2x128xf32> to vector<2x128x1xf32>
    %cst_27 = arith.constant 1.280000e+02 : f32
    %45 = vector.broadcast %cst_27 : f32 to vector<2x128x1xf32>
    %46 = arith.divf %44, %45 : vector<2x128x1xf32>
    %cst_28 = arith.constant 9.99999997E-7 : f32
    %47 = vector.broadcast %cst_28 : f32 to vector<2x128x1xf32>
    %48 = arith.addf %46, %47 : vector<2x128x1xf32>
    %49 = math.rsqrt %48 : vector<2x128x1xf32>
    %50 = vector.broadcast %49 : vector<2x128x1xf32> to vector<2x128x128xf32>
    %51 = arith.mulf %41, %50 : vector<2x128x128xf32>
    %c0_29 = arith.constant 0 : index
    %c0_30 = arith.constant 0 : index
    %c0_31 = arith.constant 0 : index
    %52 = vector.load %arg8[%c0_29, %c0_30, %c0_31] : memref<2x128x128xbf16, #tpu.memory_space<vmem>>, vector<2x128x128xbf16>
    %53 = arith.extf %52 : vector<2x128x128xbf16> to vector<2x128x128xf32>
    %54 = arith.mulf %53, %53 : vector<2x128x128xf32>
    %cst_32 = arith.constant dense<0.000000e+00> : vector<2x128xf32>
    %55 = vector.multi_reduction <add>, %54, %cst_32 [2] : vector<2x128x128xf32> to vector<2x128xf32>
    %56 = vector.shape_cast %55 : vector<2x128xf32> to vector<2x128x1xf32>
    %cst_33 = arith.constant 1.280000e+02 : f32
    %57 = vector.broadcast %cst_33 : f32 to vector<2x128x1xf32>
    %58 = arith.divf %56, %57 : vector<2x128x1xf32>
    %cst_34 = arith.constant 9.99999997E-7 : f32
    %59 = vector.broadcast %cst_34 : f32 to vector<2x128x1xf32>
    %60 = arith.addf %58, %59 : vector<2x128x1xf32>
    %61 = math.rsqrt %60 : vector<2x128x1xf32>
    %62 = vector.broadcast %61 : vector<2x128x1xf32> to vector<2x128x128xf32>
    %63 = arith.mulf %53, %62 : vector<2x128x128xf32>
    %c0_35 = arith.constant 0 : index
    %c0_36 = arith.constant 0 : index
    %64 = vector.load %arg3[%c0_35, %c0_36] : memref<128x128xf32, #tpu.memory_space<vmem>>, vector<128x128xf32>
    %65 = vector.shape_cast %64 : vector<128x128xf32> to vector<1x128x128xf32>
    %66 = vector.broadcast %65 : vector<1x128x128xf32> to vector<2x128x128xf32>
    %67 = arith.mulf %51, %66 : vector<2x128x128xf32>
    %c64_i32 = arith.constant 64 : i32
    %68 = tpu.dynamic_rotate %51 by %c64_i32 dim 2 : vector<2x128x128xf32>, i32 -> vector<2x128x128xf32>
    %c0_37 = arith.constant 0 : index
    %c0_38 = arith.constant 0 : index
    %69 = vector.load %arg4[%c0_37, %c0_38] : memref<128x128xf32, #tpu.memory_space<vmem>>, vector<128x128xf32>
    %70 = vector.shape_cast %69 : vector<128x128xf32> to vector<1x128x128xf32>
    %71 = vector.broadcast %70 : vector<1x128x128xf32> to vector<2x128x128xf32>
    %72 = arith.mulf %68, %71 : vector<2x128x128xf32>
    %73 = arith.addf %67, %72 : vector<2x128x128xf32>
    %c0_39 = arith.constant 0 : index
    %c0_40 = arith.constant 0 : index
    %74 = vector.load %arg5[%c0_39, %c0_40] : memref<128x128xf32, #tpu.memory_space<vmem>>, vector<128x128xf32>
    %75 = vector.shape_cast %74 : vector<128x128xf32> to vector<1x128x128xf32>
    %76 = vector.broadcast %75 : vector<1x128x128xf32> to vector<2x128x128xf32>
    %77 = arith.mulf %63, %76 : vector<2x128x128xf32>
    %c64_i32_41 = arith.constant 64 : i32
    %78 = tpu.dynamic_rotate %63 by %c64_i32_41 dim 2 : vector<2x128x128xf32>, i32 -> vector<2x128x128xf32>
    %c0_42 = arith.constant 0 : index
    %c0_43 = arith.constant 0 : index
    %79 = vector.load %arg6[%c0_42, %c0_43] : memref<128x128xf32, #tpu.memory_space<vmem>>, vector<128x128xf32>
    %80 = vector.shape_cast %79 : vector<128x128xf32> to vector<1x128x128xf32>
    %81 = vector.broadcast %80 : vector<1x128x128xf32> to vector<2x128x128xf32>
    %82 = arith.mulf %78, %81 : vector<2x128x128xf32>
    %83 = arith.addf %77, %82 : vector<2x128x128xf32>
    %84 = arith.truncf %73 : vector<2x128x128xf32> to vector<2x128x128xbf16>
    %c0_44 = arith.constant 0 : index
    %c0_45 = arith.constant 0 : index
    %c0_46 = arith.constant 0 : index
    %85 = vector.load %arg7[%c0_44, %c0_45, %c0_46] : memref<2x128x128xbf16, #tpu.memory_space<vmem>>, vector<2x128x128xbf16>
    tpu.vector_store %arg7[%c0_44, %c0_45, %c0_46], %84 {strides = array<i32>} : memref<2x128x128xbf16, #tpu.memory_space<vmem>>, vector<2x128x128xbf16>,
    %86 = arith.truncf %83 : vector<2x128x128xf32> to vector<2x128x128xbf16>
    %c0_47 = arith.constant 0 : index
    %c0_48 = arith.constant 0 : index
    %c0_49 = arith.constant 0 : index
    %87 = vector.load %arg8[%c0_47, %c0_48, %c0_49] : memref<2x128x128xbf16, #tpu.memory_space<vmem>>, vector<2x128x128xbf16>
    tpu.vector_store %arg8[%c0_47, %c0_48, %c0_49], %86 {strides = array<i32>} : memref<2x128x128xbf16, #tpu.memory_space<vmem>>, vector<2x128x128xbf16>,
    return
  }
  func.func @transform_0(%arg0: i32) -> (i32, i32) {
    %c0_i32 = arith.constant 0 : i32
    %c0_i32_0 = arith.constant 0 : i32
    return %arg0, %c0_i32 : i32, i32
  }
  func.func @transform_1(%arg0: i32) -> (i32, i32) {
    %c0_i32 = arith.constant 0 : i32
    %c0_i32_0 = arith.constant 0 : i32
    %c0_i32_1 = arith.constant 0 : i32
    return %c0_i32, %c0_i32_0 : i32, i32
  }
  func.func @transform_2(%arg0: i32) -> (i32, i32) {
    %c0_i32 = arith.constant 0 : i32
    %c0_i32_0 = arith.constant 0 : i32
    return %arg0, %c0_i32 : i32, i32
  }
  func.func @transform_3(%arg0: i32) -> (i32, i32) {
    %c0_i32 = arith.constant 0 : i32
    %c0_i32_0 = arith.constant 0 : i32
    return %arg0, %c0_i32 : i32, i32
  }
  func.func @transform_4(%arg0: i32) -> (i32, i32) {
    %c0_i32 = arith.constant 0 : i32
    %c0_i32_0 = arith.constant 0 : i32
    return %arg0, %c0_i32 : i32, i32
  }
  func.func @transform_5(%arg0: i32) -> (i32, i32) {
    %c0_i32 = arith.constant 0 : i32
    %c0_i32_0 = arith.constant 0 : i32
    return %arg0, %c0_i32 : i32, i32
  }
  func.func @transform_6(%arg0: i32) -> (i32, i32, i32) {
    %c0_i32 = arith.constant 0 : i32
    %c0_i32_0 = arith.constant 0 : i32
    %c0_i32_1 = arith.constant 0 : i32
    return %c0_i32, %arg0, %c0_i32_0 : i32, i32, i32
  }
  func.func @transform_7(%arg0: i32) -> (i32, i32, i32) {
    %c0_i32 = arith.constant 0 : i32
    %c0_i32_0 = arith.constant 0 : i32
    %c0_i32_1 = arith.constant 0 : i32
    return %c0_i32, %arg0, %c0_i32_0 : i32, i32, i32
  }
  func.func @transform_8(%arg0: i32) -> (i32, i32, i32) {
    %c0_i32 = arith.constant 0 : i32
    %c0_i32_0 = arith.constant 0 : i32
    %c0_i32_1 = arith.constant 0 : i32
    return %c0_i32, %arg0, %c0_i32_0 : i32, i32, i32
  }
}

module attributes {stable_mosaic.version = 11 : i64} {
  func.func @flash_attn_kernel(%arg0: i32, %arg1: i32, %arg2: memref<2x128x128xbf16, #tpu.memory_space<vmem>>, %arg3: memref<2x128x128xbf16, #tpu.memory_space<vmem>>, %arg4: memref<2x128x128xbf16, #tpu.memory_space<vmem>>, %arg5: memref<128x256xbf16, #tpu.memory_space<vmem>>, %arg6: memref<2x128x1xf32, #tpu.memory_space<vmem>>, %arg7: memref<2x128x1xf32, #tpu.memory_space<vmem>>, %arg8: memref<2x128x128xf32, #tpu.memory_space<vmem>>) attributes {dimension_semantics = [#tpu.dimension_semantics<parallel>, #tpu.dimension_semantics<arbitrary>], iteration_bounds = array<i64: 1, 1>, scalar_prefetch = 0 : i64, scratch_operands = 3 : i64, tpu.core_type = #tpu.core_type<tc>, window_params = [{transform_indices = @transform_0, window_bounds = array<i64: 2, 128, 128>}, {transform_indices = @transform_1, window_bounds = array<i64: 2, 128, 128>}, {transform_indices = @transform_2, window_bounds = array<i64: 2, 128, 128>}, {transform_indices = @transform_3, window_bounds = array<i64: 128, 256>}]} {
    %c0_i32 = arith.constant 0 : i32
    %0 = arith.cmpi eq, %arg1, %c0_i32 : i32
    %1 = arith.extui %0 : i1 to i32
    %c0_i32_0 = arith.constant 0 : i32
    %2 = arith.cmpi ne, %1, %c0_i32_0 : i32
    scf.if %2 {
      %cst = arith.constant 0xFF800000 : f32
      %12 = vector.broadcast %cst : f32 to vector<2x128x1xf32>
      %c0 = arith.constant 0 : index
      %c0_5 = arith.constant 0 : index
      %c0_6 = arith.constant 0 : index
      %13 = vector.load %arg6[%c0, %c0_5, %c0_6] : memref<2x128x1xf32, #tpu.memory_space<vmem>>, vector<2x128x1xf32>
      tpu.vector_store %arg6[%c0, %c0_5, %c0_6], %12 {strides = array<i32>} : memref<2x128x1xf32, #tpu.memory_space<vmem>>, vector<2x128x1xf32>,
      %cst_7 = arith.constant 0.000000e+00 : f32
      %14 = vector.broadcast %cst_7 : f32 to vector<2x128x1xf32>
      %c0_8 = arith.constant 0 : index
      %c0_9 = arith.constant 0 : index
      %c0_10 = arith.constant 0 : index
      %15 = vector.load %arg7[%c0_8, %c0_9, %c0_10] : memref<2x128x1xf32, #tpu.memory_space<vmem>>, vector<2x128x1xf32>
      tpu.vector_store %arg7[%c0_8, %c0_9, %c0_10], %14 {strides = array<i32>} : memref<2x128x1xf32, #tpu.memory_space<vmem>>, vector<2x128x1xf32>,
      %cst_11 = arith.constant 0.000000e+00 : f32
      %16 = vector.broadcast %cst_11 : f32 to vector<2x128x128xf32>
      %c0_12 = arith.constant 0 : index
      %c0_13 = arith.constant 0 : index
      %c0_14 = arith.constant 0 : index
      %17 = vector.load %arg8[%c0_12, %c0_13, %c0_14] : memref<2x128x128xf32, #tpu.memory_space<vmem>>, vector<2x128x128xf32>
      tpu.vector_store %arg8[%c0_12, %c0_13, %c0_14], %16 {strides = array<i32>} : memref<2x128x128xf32, #tpu.memory_space<vmem>>, vector<2x128x128xf32>,
    } else {
    }
    %c128_i32 = arith.constant 128 : i32
    %3 = arith.muli %arg1, %c128_i32 : i32
    %c128_i32_1 = arith.constant 128 : i32
    %4 = arith.muli %arg0, %c128_i32_1 : i32
    %c127_i32 = arith.constant 127 : i32
    %5 = arith.addi %4, %c127_i32 : i32
    %6 = arith.cmpi sle, %3, %5 : i32
    %7 = arith.extui %6 : i1 to i32
    %c0_i32_2 = arith.constant 0 : i32
    %8 = arith.cmpi ne, %7, %c0_i32_2 : i32
    scf.if %8 {
      %c0 = arith.constant 0 : index
      %c0_5 = arith.constant 0 : index
      %c0_6 = arith.constant 0 : index
      %12 = vector.load %arg2[%c0, %c0_5, %c0_6] : memref<2x128x128xbf16, #tpu.memory_space<vmem>>, vector<2x128x128xbf16>
      %c0_7 = arith.constant 0 : index
      %c0_8 = arith.constant 0 : index
      %c0_9 = arith.constant 0 : index
      %13 = vector.load %arg3[%c0_7, %c0_8, %c0_9] : memref<2x128x128xbf16, #tpu.memory_space<vmem>>, vector<2x128x128xbf16>
      "tpu.trace_start"() <{level = 10 : i32, message = "htd,hsd->hts"}> : () -> ()
      %cst = arith.constant dense<0.000000e+00> : vector<2x128x128xf32>
      %14 = tpu.matmul %12, %13, %cst {dimension_numbers = #tpu.dot_dimension_numbers<[2], [2], [1], [1], [0, 0, 0, 1, 1, 1], [0], [0]>} : vector<2x128x128xbf16>, vector<2x128x128xbf16>, vector<2x128x128xf32> -> vector<2x128x128xf32>
      "tpu.trace_stop"() : () -> ()
      %c128_i32_10 = arith.constant 128 : i32
      %15 = arith.muli %arg0, %c128_i32_10 : i32
      %16 = tpu.iota {dimensions = array<i32: 0>} : vector<128x128xi32>
      %17 = vector.broadcast %15 : i32 to vector<128x128xi32>
      %18 = arith.addi %17, %16 : vector<128x128xi32>
      %c128_i32_11 = arith.constant 128 : i32
      %19 = arith.muli %arg1, %c128_i32_11 : i32
      %20 = tpu.iota {dimensions = array<i32: 1>} : vector<128x128xi32>
      %21 = vector.broadcast %19 : i32 to vector<128x128xi32>
      %22 = arith.addi %21, %20 : vector<128x128xi32>
      %23 = arith.cmpi sle, %22, %18 : vector<128x128xi32>
      %24 = vector.shape_cast %23 : vector<128x128xi1> to vector<1x128x128xi1>
      %cst_12 = arith.constant -1.000000e+30 : f32
      %25 = vector.shape_cast %24 : vector<1x128x128xi1> to vector<1x128x128xi1>
      %26 = vector.broadcast %25 : vector<1x128x128xi1> to vector<2x128x128xi1>
      %27 = vector.broadcast %cst_12 : f32 to vector<2x128x128xf32>
      %28 = arith.select %26, %14, %27 : vector<2x128x128xi1>, vector<2x128x128xf32>
      %c0_13 = arith.constant 0 : index
      %c0_14 = arith.constant 0 : index
      %c0_15 = arith.constant 0 : index
      %29 = vector.load %arg6[%c0_13, %c0_14, %c0_15] : memref<2x128x1xf32, #tpu.memory_space<vmem>>, vector<2x128x1xf32>
      %cst_16 = arith.constant dense<0xFF800000> : vector<2x128xf32>
      %30 = vector.multi_reduction <maximumf>, %28, %cst_16 [2] : vector<2x128x128xf32> to vector<2x128xf32>
      %31 = vector.shape_cast %30 : vector<2x128xf32> to vector<2x128x1xf32>
      %32 = arith.maximumf %29, %31 : vector<2x128x1xf32>
      %c0_17 = arith.constant 0 : index
      %c0_18 = arith.constant 0 : index
      %c0_19 = arith.constant 0 : index
      %33 = vector.load %arg6[%c0_17, %c0_18, %c0_19] : memref<2x128x1xf32, #tpu.memory_space<vmem>>, vector<2x128x1xf32>
      %34 = arith.subf %33, %32 : vector<2x128x1xf32>
      %35 = math.exp %34 : vector<2x128x1xf32>
      %36 = vector.broadcast %32 : vector<2x128x1xf32> to vector<2x128x128xf32>
      %37 = arith.subf %28, %36 : vector<2x128x128xf32>
      %38 = math.exp %37 : vector<2x128x128xf32>
      %c0_20 = arith.constant 0 : index
      %c0_21 = arith.constant 0 : index
      %c0_22 = arith.constant 0 : index
      %39 = vector.load %arg7[%c0_20, %c0_21, %c0_22] : memref<2x128x1xf32, #tpu.memory_space<vmem>>, vector<2x128x1xf32>
      %40 = arith.mulf %35, %39 : vector<2x128x1xf32>
      %cst_23 = arith.constant dense<0.000000e+00> : vector<2x128xf32>
      %41 = vector.multi_reduction <add>, %38, %cst_23 [2] : vector<2x128x128xf32> to vector<2x128xf32>
      %42 = vector.shape_cast %41 : vector<2x128xf32> to vector<2x128x1xf32>
      %43 = arith.addf %40, %42 : vector<2x128x1xf32>
      %c0_24 = arith.constant 0 : index
      %c0_25 = arith.constant 0 : index
      %c0_26 = arith.constant 0 : index
      %44 = vector.load %arg7[%c0_24, %c0_25, %c0_26] : memref<2x128x1xf32, #tpu.memory_space<vmem>>, vector<2x128x1xf32>
      tpu.vector_store %arg7[%c0_24, %c0_25, %c0_26], %43 {strides = array<i32>} : memref<2x128x1xf32, #tpu.memory_space<vmem>>, vector<2x128x1xf32>,
      %c0_27 = arith.constant 0 : index
      %c0_28 = arith.constant 0 : index
      %c0_29 = arith.constant 0 : index
      %45 = vector.load %arg8[%c0_27, %c0_28, %c0_29] : memref<2x128x128xf32, #tpu.memory_space<vmem>>, vector<2x128x128xf32>
      %46 = vector.broadcast %35 : vector<2x128x1xf32> to vector<2x128x128xf32>
      %47 = arith.mulf %46, %45 : vector<2x128x128xf32>
      %48 = arith.truncf %38 : vector<2x128x128xf32> to vector<2x128x128xbf16>
      %c0_30 = arith.constant 0 : index
      %c0_31 = arith.constant 0 : index
      %c0_32 = arith.constant 0 : index
      %49 = vector.load %arg4[%c0_30, %c0_31, %c0_32] : memref<2x128x128xbf16, #tpu.memory_space<vmem>>, vector<2x128x128xbf16>
      "tpu.trace_start"() <{level = 10 : i32, message = "hts,hsd->htd"}> : () -> ()
      %cst_33 = arith.constant dense<0.000000e+00> : vector<2x128x128xf32>
      %50 = tpu.matmul %48, %49, %cst_33 {dimension_numbers = #tpu.dot_dimension_numbers<[2], [1], [1], [2], [0, 0, 0, 1, 1, 2], [0], [0]>} : vector<2x128x128xbf16>, vector<2x128x128xbf16>, vector<2x128x128xf32> -> vector<2x128x128xf32>
      "tpu.trace_stop"() : () -> ()
      %51 = arith.addf %47, %50 : vector<2x128x128xf32>
      %c0_34 = arith.constant 0 : index
      %c0_35 = arith.constant 0 : index
      %c0_36 = arith.constant 0 : index
      %52 = vector.load %arg8[%c0_34, %c0_35, %c0_36] : memref<2x128x128xf32, #tpu.memory_space<vmem>>, vector<2x128x128xf32>
      tpu.vector_store %arg8[%c0_34, %c0_35, %c0_36], %51 {strides = array<i32>} : memref<2x128x128xf32, #tpu.memory_space<vmem>>, vector<2x128x128xf32>,
      %c0_37 = arith.constant 0 : index
      %c0_38 = arith.constant 0 : index
      %c0_39 = arith.constant 0 : index
      %53 = vector.load %arg6[%c0_37, %c0_38, %c0_39] : memref<2x128x1xf32, #tpu.memory_space<vmem>>, vector<2x128x1xf32>
      tpu.vector_store %arg6[%c0_37, %c0_38, %c0_39], %32 {strides = array<i32>} : memref<2x128x1xf32, #tpu.memory_space<vmem>>, vector<2x128x1xf32>,
    } else {
    }
    %c0_i32_3 = arith.constant 0 : i32
    %9 = arith.cmpi eq, %arg1, %c0_i32_3 : i32
    %10 = arith.extui %9 : i1 to i32
    %c0_i32_4 = arith.constant 0 : i32
    %11 = arith.cmpi ne, %10, %c0_i32_4 : i32
    scf.if %11 {
      %c0 = arith.constant 0 : index
      %c0_5 = arith.constant 0 : index
      %c0_6 = arith.constant 0 : index
      %12 = vector.load %arg8[%c0, %c0_5, %c0_6] : memref<2x128x128xf32, #tpu.memory_space<vmem>>, vector<2x128x128xf32>
      %c0_7 = arith.constant 0 : index
      %c0_8 = arith.constant 0 : index
      %c0_9 = arith.constant 0 : index
      %13 = vector.load %arg7[%c0_7, %c0_8, %c0_9] : memref<2x128x1xf32, #tpu.memory_space<vmem>>, vector<2x128x1xf32>
      %14 = tpu.reciprocal %13 {approx = true} : vector<2x128x1xf32> -> vector<2x128x1xf32>
      %15 = vector.broadcast %14 : vector<2x128x1xf32> to vector<2x128x128xf32>
      %16 = arith.mulf %12, %15 : vector<2x128x128xf32>
      %17 = arith.truncf %16 : vector<2x128x128xf32> to vector<2x128x128xbf16>
      %18 = vector.extract_strided_slice %17 {offsets = [0, 0, 0], sizes = [1, 128, 128], strides = [1, 1, 1]} : vector<2x128x128xbf16> to vector<1x128x128xbf16>
      %19 = vector.shape_cast %18 : vector<1x128x128xbf16> to vector<128x128xbf16>
      %c0_10 = arith.constant 0 : index
      %c0_11 = arith.constant 0 : index
      %20 = vector.load %arg5[%c0_10, %c0_11] : memref<128x256xbf16, #tpu.memory_space<vmem>>, vector<128x128xbf16>
      tpu.vector_store %arg5[%c0_10, %c0_11], %19 {strides = array<i32>} : memref<128x256xbf16, #tpu.memory_space<vmem>>, vector<128x128xbf16>,
      %21 = vector.extract_strided_slice %17 {offsets = [1, 0, 0], sizes = [1, 128, 128], strides = [1, 1, 1]} : vector<2x128x128xbf16> to vector<1x128x128xbf16>
      %22 = vector.shape_cast %21 : vector<1x128x128xbf16> to vector<128x128xbf16>
      %c0_12 = arith.constant 0 : index
      %c128 = arith.constant 128 : index
      %23 = vector.load %arg5[%c0_12, %c128] : memref<128x256xbf16, #tpu.memory_space<vmem>>, vector<128x128xbf16>
      tpu.vector_store %arg5[%c0_12, %c128], %22 {strides = array<i32>} : memref<128x256xbf16, #tpu.memory_space<vmem>>, vector<128x128xbf16>,
    } else {
    }
    return
  }
  func.func @transform_0(%arg0: i32, %arg1: i32) -> (i32, i32, i32) {
    %c0_i32 = arith.constant 0 : i32
    %c0_i32_0 = arith.constant 0 : i32
    %c0_i32_1 = arith.constant 0 : i32
    return %c0_i32, %arg0, %c0_i32_0 : i32, i32, i32
  }
  func.func @transform_1(%arg0: i32, %arg1: i32) -> (i32, i32, i32) {
    %c0_i32 = arith.constant 0 : i32
    %c0_i32_0 = arith.constant 0 : i32
    %c0_i32_1 = arith.constant 0 : i32
    return %c0_i32, %arg1, %c0_i32_0 : i32, i32, i32
  }
  func.func @transform_2(%arg0: i32, %arg1: i32) -> (i32, i32, i32) {
    %c0_i32 = arith.constant 0 : i32
    %c0_i32_0 = arith.constant 0 : i32
    %c0_i32_1 = arith.constant 0 : i32
    return %c0_i32, %arg1, %c0_i32_0 : i32, i32, i32
  }
  func.func @transform_3(%arg0: i32, %arg1: i32) -> (i32, i32) {
    %c0_i32 = arith.constant 0 : i32
    %c0_i32_0 = arith.constant 0 : i32
    return %arg0, %c0_i32 : i32, i32
  }
}

module attributes {stable_mosaic.version = 11 : i64} {
  func.func @out_mlp_kernel(%arg0: i32, %arg1: memref<128x256xbf16, #tpu.memory_space<vmem>>, %arg2: memref<128x256xbf16, #tpu.memory_space<vmem>>, %arg3: memref<256x256xbf16, #tpu.memory_space<vmem>>, %arg4: memref<256x1024xbf16, #tpu.memory_space<vmem>>, %arg5: memref<1024x256xbf16, #tpu.memory_space<vmem>>, %arg6: memref<128x256xbf16, #tpu.memory_space<vmem>>) attributes {dimension_semantics = [#tpu.dimension_semantics<parallel>], iteration_bounds = array<i64: 1>, scalar_prefetch = 0 : i64, scratch_operands = 0 : i64, tpu.core_type = #tpu.core_type<tc>, window_params = [{transform_indices = @transform_0, window_bounds = array<i64: 128, 256>}, {transform_indices = @transform_1, window_bounds = array<i64: 128, 256>}, {pipeline_mode = #tpu.pipeline_mode<synchronous>, transform_indices = @transform_2, window_bounds = array<i64: 256, 256>}, {pipeline_mode = #tpu.pipeline_mode<synchronous>, transform_indices = @transform_3, window_bounds = array<i64: 256, 1024>}, {pipeline_mode = #tpu.pipeline_mode<synchronous>, transform_indices = @transform_4, window_bounds = array<i64: 1024, 256>}, {transform_indices = @transform_5, window_bounds = array<i64: 128, 256>}]} {
    %c0 = arith.constant 0 : index
    %c0_0 = arith.constant 0 : index
    %0 = vector.load %arg2[%c0, %c0_0] : memref<128x256xbf16, #tpu.memory_space<vmem>>, vector<128x256xbf16>
    %c0_1 = arith.constant 0 : index
    %c0_2 = arith.constant 0 : index
    %1 = vector.load %arg1[%c0_1, %c0_2] : memref<128x256xbf16, #tpu.memory_space<vmem>>, vector<128x256xbf16>
    %c0_3 = arith.constant 0 : index
    %c0_4 = arith.constant 0 : index
    %2 = vector.load %arg3[%c0_3, %c0_4] : memref<256x256xbf16, #tpu.memory_space<vmem>>, vector<256x256xbf16>
    %cst = arith.constant dense<0.000000e+00> : vector<128x256xf32>
    %3 = tpu.matmul %1, %2, %cst {dimension_numbers = #tpu.dot_dimension_numbers<[1], [0], [0], [1], [0, 0, 1, 1], [], []>} : vector<128x256xbf16>, vector<256x256xbf16>, vector<128x256xf32> -> vector<128x256xf32>
    %4 = arith.truncf %3 : vector<128x256xf32> to vector<128x256xbf16>
    %5 = arith.addf %0, %4 : vector<128x256xbf16>
    %6 = arith.extf %5 : vector<128x256xbf16> to vector<128x256xf32>
    %7 = arith.mulf %6, %6 : vector<128x256xf32>
    %cst_5 = arith.constant dense<0.000000e+00> : vector<128xf32>
    %8 = vector.multi_reduction <add>, %7, %cst_5 [1] : vector<128x256xf32> to vector<128xf32>
    %9 = vector.shape_cast %8 : vector<128xf32> to vector<128x1xf32>
    %cst_6 = arith.constant 2.560000e+02 : f32
    %10 = vector.broadcast %cst_6 : f32 to vector<128x1xf32>
    %11 = arith.divf %9, %10 : vector<128x1xf32>
    %cst_7 = arith.constant 9.99999997E-7 : f32
    %12 = vector.broadcast %cst_7 : f32 to vector<128x1xf32>
    %13 = arith.addf %11, %12 : vector<128x1xf32>
    %14 = math.rsqrt %13 : vector<128x1xf32>
    %15 = vector.broadcast %14 : vector<128x1xf32> to vector<128x256xf32>
    %16 = arith.mulf %6, %15 : vector<128x256xf32>
    %17 = arith.truncf %16 : vector<128x256xf32> to vector<128x256xbf16>
    %c0_8 = arith.constant 0 : index
    %c0_9 = arith.constant 0 : index
    %18 = vector.load %arg4[%c0_8, %c0_9] : memref<256x1024xbf16, #tpu.memory_space<vmem>>, vector<256x1024xbf16>
    %cst_10 = arith.constant dense<0.000000e+00> : vector<128x1024xf32>
    %19 = tpu.matmul %17, %18, %cst_10 {dimension_numbers = #tpu.dot_dimension_numbers<[1], [0], [0], [1], [0, 0, 1, 1], [], []>} : vector<128x256xbf16>, vector<256x1024xbf16>, vector<128x1024xf32> -> vector<128x1024xf32>
    %20 = arith.truncf %19 : vector<128x1024xf32> to vector<128x1024xbf16>
    %cst_11 = arith.constant 0.000000e+00 : bf16
    %21 = vector.broadcast %cst_11 : bf16 to vector<128x1024xbf16>
    %22 = arith.maximumf %20, %21 : vector<128x1024xbf16>
    %23 = arith.mulf %22, %22 : vector<128x1024xbf16>
    %c0_12 = arith.constant 0 : index
    %c0_13 = arith.constant 0 : index
    %24 = vector.load %arg5[%c0_12, %c0_13] : memref<1024x256xbf16, #tpu.memory_space<vmem>>, vector<1024x256xbf16>
    %cst_14 = arith.constant dense<0.000000e+00> : vector<128x256xf32>
    %25 = tpu.matmul %23, %24, %cst_14 {dimension_numbers = #tpu.dot_dimension_numbers<[1], [0], [0], [1], [0, 0, 1, 1], [], []>} : vector<128x1024xbf16>, vector<1024x256xbf16>, vector<128x256xf32> -> vector<128x256xf32>
    %26 = arith.truncf %25 : vector<128x256xf32> to vector<128x256xbf16>
    %27 = arith.addf %5, %26 : vector<128x256xbf16>
    %c0_15 = arith.constant 0 : index
    %c0_16 = arith.constant 0 : index
    %28 = vector.load %arg6[%c0_15, %c0_16] : memref<128x256xbf16, #tpu.memory_space<vmem>>, vector<128x256xbf16>
    tpu.vector_store %arg6[%c0_15, %c0_16], %27 {strides = array<i32>} : memref<128x256xbf16, #tpu.memory_space<vmem>>, vector<128x256xbf16>,
    return
  }
  func.func @transform_0(%arg0: i32) -> (i32, i32) {
    %c0_i32 = arith.constant 0 : i32
    %c0_i32_0 = arith.constant 0 : i32
    return %arg0, %c0_i32 : i32, i32
  }
  func.func @transform_1(%arg0: i32) -> (i32, i32) {
    %c0_i32 = arith.constant 0 : i32
    %c0_i32_0 = arith.constant 0 : i32
    return %arg0, %c0_i32 : i32, i32
  }
  func.func @transform_2(%arg0: i32) -> (i32, i32) {
    %c0_i32 = arith.constant 0 : i32
    %c0_i32_0 = arith.constant 0 : i32
    %c0_i32_1 = arith.constant 0 : i32
    return %c0_i32, %c0_i32_0 : i32, i32
  }
  func.func @transform_3(%arg0: i32) -> (i32, i32) {
    %c0_i32 = arith.constant 0 : i32
    %c0_i32_0 = arith.constant 0 : i32
    %c0_i32_1 = arith.constant 0 : i32
    return %c0_i32, %c0_i32_0 : i32, i32
  }
  func.func @transform_4(%arg0: i32) -> (i32, i32) {
    %c0_i32 = arith.constant 0 : i32
    %c0_i32_0 = arith.constant 0 : i32
    %c0_i32_1 = arith.constant 0 : i32
    return %c0_i32, %c0_i32_0 : i32, i32
  }
  func.func @transform_5(%arg0: i32) -> (i32, i32) {
    %c0_i32 = arith.constant 0 : i32
    %c0_i32_0 = arith.constant 0 : i32
    return %arg0, %c0_i32 : i32, i32
  }
}

module attributes {stable_mosaic.version = 11 : i64} {
  func.func @lm_head_ce_kernel(%arg0: i32, %arg1: i32, %arg2: memref<128x256xbf16, #tpu.memory_space<vmem>>, %arg3: memref<256x128xbf16, #tpu.memory_space<vmem>>, %arg4: memref<128x1xi32, #tpu.memory_space<vmem>>, %arg5: memref<128x1xf32, #tpu.memory_space<vmem>>, %arg6: memref<128x1xf32, #tpu.memory_space<vmem>>, %arg7: memref<128x1xf32, #tpu.memory_space<vmem>>, %arg8: memref<128x1xf32, #tpu.memory_space<vmem>>) attributes {dimension_semantics = [#tpu.dimension_semantics<arbitrary>, #tpu.dimension_semantics<arbitrary>], iteration_bounds = array<i64: 1, 1>, scalar_prefetch = 0 : i64, scratch_operands = 3 : i64, tpu.core_type = #tpu.core_type<tc>, window_params = [{transform_indices = @transform_0, window_bounds = array<i64: 128, 256>}, {transform_indices = @transform_1, window_bounds = array<i64: 256, 128>}, {transform_indices = @transform_2, window_bounds = array<i64: 128, 1>}, {transform_indices = @transform_3, window_bounds = array<i64: 128, 1>}]} {
    %c128_i32 = arith.constant 128 : i32
    %0 = arith.muli %arg1, %c128_i32 : i32
    %1 = tpu.assume_multiple %0, 128 : i32
    %c0_i32 = arith.constant 0 : i32
    %2 = arith.cmpi eq, %arg0, %c0_i32 : i32
    %3 = arith.extui %2 : i1 to i32
    %c0_i32_0 = arith.constant 0 : i32
    %4 = arith.cmpi ne, %3, %c0_i32_0 : i32
    scf.if %4 {
      %cst_23 = arith.constant 0xFF800000 : f32
      %61 = vector.broadcast %cst_23 : f32 to vector<128x1xf32>
      %62 = arith.index_cast %1 : i32 to index
      %c0_24 = arith.constant 0 : index
      %63 = vector.load %arg6[%62, %c0_24] : memref<128x1xf32, #tpu.memory_space<vmem>>, vector<128x1xf32>
      tpu.vector_store %arg6[%62, %c0_24], %61 {strides = array<i32>} : memref<128x1xf32, #tpu.memory_space<vmem>>, vector<128x1xf32>,
      %cst_25 = arith.constant 0.000000e+00 : f32
      %64 = vector.broadcast %cst_25 : f32 to vector<128x1xf32>
      %65 = arith.index_cast %1 : i32 to index
      %c0_26 = arith.constant 0 : index
      %66 = vector.load %arg7[%65, %c0_26] : memref<128x1xf32, #tpu.memory_space<vmem>>, vector<128x1xf32>
      tpu.vector_store %arg7[%65, %c0_26], %64 {strides = array<i32>} : memref<128x1xf32, #tpu.memory_space<vmem>>, vector<128x1xf32>,
      %cst_27 = arith.constant 0.000000e+00 : f32
      %67 = vector.broadcast %cst_27 : f32 to vector<128x1xf32>
      %68 = arith.index_cast %1 : i32 to index
      %c0_28 = arith.constant 0 : index
      %69 = vector.load %arg8[%68, %c0_28] : memref<128x1xf32, #tpu.memory_space<vmem>>, vector<128x1xf32>
      tpu.vector_store %arg8[%68, %c0_28], %67 {strides = array<i32>} : memref<128x1xf32, #tpu.memory_space<vmem>>, vector<128x1xf32>,
    } else {
    }
    %c0 = arith.constant 0 : index
    %c0_1 = arith.constant 0 : index
    %5 = vector.load %arg2[%c0, %c0_1] : memref<128x256xbf16, #tpu.memory_space<vmem>>, vector<128x256xbf16>
    %c0_2 = arith.constant 0 : index
    %c0_3 = arith.constant 0 : index
    %6 = vector.load %arg3[%c0_2, %c0_3] : memref<256x128xbf16, #tpu.memory_space<vmem>>, vector<256x128xbf16>
    %cst = arith.constant dense<0.000000e+00> : vector<128x128xf32>
    %7 = tpu.matmul %5, %6, %cst {dimension_numbers = #tpu.dot_dimension_numbers<[1], [0], [0], [1], [0, 0, 1, 1], [], []>} : vector<128x256xbf16>, vector<256x128xbf16>, vector<128x128xf32> -> vector<128x128xf32>
    %8 = arith.index_cast %1 : i32 to index
    %c0_4 = arith.constant 0 : index
    %9 = vector.load %arg6[%8, %c0_4] : memref<128x1xf32, #tpu.memory_space<vmem>>, vector<128x1xf32>
    %cst_5 = arith.constant dense<0xFF800000> : vector<128xf32>
    %10 = vector.multi_reduction <maximumf>, %7, %cst_5 [1] : vector<128x128xf32> to vector<128xf32>
    %11 = vector.shape_cast %10 : vector<128xf32> to vector<128x1xf32>
    %12 = arith.maximumf %9, %11 : vector<128x1xf32>
    %13 = arith.index_cast %1 : i32 to index
    %c0_6 = arith.constant 0 : index
    %14 = vector.load %arg7[%13, %c0_6] : memref<128x1xf32, #tpu.memory_space<vmem>>, vector<128x1xf32>
    %15 = arith.subf %9, %12 : vector<128x1xf32>
    %16 = math.exp %15 : vector<128x1xf32>
    %17 = arith.mulf %14, %16 : vector<128x1xf32>
    %18 = vector.broadcast %12 : vector<128x1xf32> to vector<128x128xf32>
    %19 = arith.subf %7, %18 : vector<128x128xf32>
    %20 = math.exp %19 : vector<128x128xf32>
    %cst_7 = arith.constant dense<0.000000e+00> : vector<128xf32>
    %21 = vector.multi_reduction <add>, %20, %cst_7 [1] : vector<128x128xf32> to vector<128xf32>
    %22 = vector.shape_cast %21 : vector<128xf32> to vector<128x1xf32>
    %23 = arith.addf %17, %22 : vector<128x1xf32>
    %24 = arith.index_cast %1 : i32 to index
    %c0_8 = arith.constant 0 : index
    %25 = vector.load %arg7[%24, %c0_8] : memref<128x1xf32, #tpu.memory_space<vmem>>, vector<128x1xf32>
    tpu.vector_store %arg7[%24, %c0_8], %23 {strides = array<i32>} : memref<128x1xf32, #tpu.memory_space<vmem>>, vector<128x1xf32>,
    %26 = arith.index_cast %1 : i32 to index
    %c0_9 = arith.constant 0 : index
    %27 = vector.load %arg6[%26, %c0_9] : memref<128x1xf32, #tpu.memory_space<vmem>>, vector<128x1xf32>
    tpu.vector_store %arg6[%26, %c0_9], %12 {strides = array<i32>} : memref<128x1xf32, #tpu.memory_space<vmem>>, vector<128x1xf32>,
    %c128_i32_10 = arith.constant 128 : i32
    %28 = arith.muli %arg0, %c128_i32_10 : i32
    %29 = tpu.iota {dimensions = array<i32: 1>} : vector<128x128xi32>
    %30 = vector.broadcast %28 : i32 to vector<128x128xi32>
    %31 = arith.addi %30, %29 : vector<128x128xi32>
    %c0_11 = arith.constant 0 : index
    %c0_12 = arith.constant 0 : index
    %32 = vector.load %arg4[%c0_11, %c0_12] : memref<128x1xi32, #tpu.memory_space<vmem>>, vector<128x1xi32>
    %33 = vector.broadcast %32 : vector<128x1xi32> to vector<128x128xi32>
    %34 = arith.cmpi eq, %31, %33 : vector<128x128xi32>
    %35 = arith.index_cast %1 : i32 to index
    %c0_13 = arith.constant 0 : index
    %36 = vector.load %arg8[%35, %c0_13] : memref<128x1xf32, #tpu.memory_space<vmem>>, vector<128x1xf32>
    %cst_14 = arith.constant 0.000000e+00 : f32
    %37 = vector.broadcast %cst_14 : f32 to vector<128x128xf32>
    %38 = arith.select %34, %7, %37 : vector<128x128xi1>, vector<128x128xf32>
    %cst_15 = arith.constant dense<0.000000e+00> : vector<128xf32>
    %39 = vector.multi_reduction <add>, %38, %cst_15 [1] : vector<128x128xf32> to vector<128xf32>
    %40 = vector.shape_cast %39 : vector<128xf32> to vector<128x1xf32>
    %41 = arith.addf %36, %40 : vector<128x1xf32>
    %42 = arith.index_cast %1 : i32 to index
    %c0_16 = arith.constant 0 : index
    %43 = vector.load %arg8[%42, %c0_16] : memref<128x1xf32, #tpu.memory_space<vmem>>, vector<128x1xf32>
    tpu.vector_store %arg8[%42, %c0_16], %41 {strides = array<i32>} : memref<128x1xf32, #tpu.memory_space<vmem>>, vector<128x1xf32>,
    %44 = arith.index_cast %1 : i32 to index
    %c0_17 = arith.constant 0 : index
    %45 = vector.load %arg6[%44, %c0_17] : memref<128x1xf32, #tpu.memory_space<vmem>>, vector<128x1xf32>
    %46 = arith.index_cast %1 : i32 to index
    %c0_18 = arith.constant 0 : index
    %47 = vector.load %arg7[%46, %c0_18] : memref<128x1xf32, #tpu.memory_space<vmem>>, vector<128x1xf32>
    %48 = math.log %47 : vector<128x1xf32>
    %49 = arith.addf %45, %48 : vector<128x1xf32>
    %50 = arith.index_cast %1 : i32 to index
    %c0_19 = arith.constant 0 : index
    %51 = vector.load %arg8[%50, %c0_19] : memref<128x1xf32, #tpu.memory_space<vmem>>, vector<128x1xf32>
    %52 = arith.subf %49, %51 : vector<128x1xf32>
    %53 = tpu.iota {dimensions = array<i32: 0>} : vector<128x1xi32>
    %54 = vector.broadcast %1 : i32 to vector<128x1xi32>
    %55 = arith.addi %54, %53 : vector<128x1xi32>
    %c96_i32 = arith.constant 96 : i32
    %56 = vector.broadcast %c96_i32 : i32 to vector<128x1xi32>
    %57 = arith.cmpi slt, %55, %56 : vector<128x1xi32>
    %cst_20 = arith.constant 0.000000e+00 : f32
    %58 = vector.broadcast %cst_20 : f32 to vector<128x1xf32>
    %59 = arith.select %57, %52, %58 : vector<128x1xi1>, vector<128x1xf32>
    %c0_21 = arith.constant 0 : index
    %c0_22 = arith.constant 0 : index
    %60 = vector.load %arg5[%c0_21, %c0_22] : memref<128x1xf32, #tpu.memory_space<vmem>>, vector<128x1xf32>
    tpu.vector_store %arg5[%c0_21, %c0_22], %59 {strides = array<i32>} : memref<128x1xf32, #tpu.memory_space<vmem>>, vector<128x1xf32>,
    return
  }
  func.func @transform_0(%arg0: i32, %arg1: i32) -> (i32, i32) {
    %c0_i32 = arith.constant 0 : i32
    %c0_i32_0 = arith.constant 0 : i32
    return %arg1, %c0_i32 : i32, i32
  }
  func.func @transform_1(%arg0: i32, %arg1: i32) -> (i32, i32) {
    %c0_i32 = arith.constant 0 : i32
    %c0_i32_0 = arith.constant 0 : i32
    return %c0_i32, %arg0 : i32, i32
  }
  func.func @transform_2(%arg0: i32, %arg1: i32) -> (i32, i32) {
    %c0_i32 = arith.constant 0 : i32
    %c0_i32_0 = arith.constant 0 : i32
    return %arg1, %c0_i32 : i32, i32
  }
  func.func @transform_3(%arg0: i32, %arg1: i32) -> (i32, i32) {
    %c0_i32 = arith.constant 0 : i32
    %c0_i32_0 = arith.constant 0 : i32
    return %arg1, %c0_i32 : i32, i32
  }
}

</mosaic_0001>

<llo_original>
// kernel: gpt_forward.8
$region0: #{gpt_forward.8}
  #allocation0 [shape = 'u32[]', space=smem, size = 0x4, offset = 0x4, fixed_abs, tag = 'smem constant byte address 0x4 - core index']
  #allocation1 [shape = 'u32[144,128]{1,0:T(1,128)}', space=vmem, size = 0x12000, scoped, tag = 'internal scratch']
  #allocation2 [shape = 'f32[2,128,1]{2,1,0:T(8,128)}', space=vmem, size = 0x20000, scoped, tag = 'scratch operand']
  #allocation3 [shape = 'f32[2,128,1]{2,1,0:T(8,128)}', space=vmem, size = 0x20000, scoped, tag = 'scratch operand']
  #allocation4 [shape = 'f32[2,128,128]{2,1,0:T(8,128)}', space=vmem, size = 0x20000, scoped, tag = 'scratch operand']
  %s0 = inlined_call_operand.vmem [shape: bf16[2,128,128], index: 0, kind: input, shape index: {}]
  %s1 = inlined_call_operand.vmem [shape: bf16[2,128,128], index: 1, kind: input, shape index: {}]
  %s2 = inlined_call_operand.vmem [shape: bf16[2,128,128], index: 2, kind: input, shape index: {}]
  %s3 = inlined_call_operand.vmem [shape: bf16[128,256], index: 3, kind: output, shape index: {}]
  %s4 = sld [smem:[#allocation0]]
  $region34: #{gpt_forward.8} parent=0
    _
  %s6 = ssub.s32 1, %s4
  %s7 = scalar_select 0, %s6, %s4
  // Predicated region
  $region2: #{gpt_forward.8} parent=0 // pred_check
    _
  $region3: #{gpt_forward.8} parent=0 // pred_check_branch
    %9 = sbr.rel (0) target = $region5
  $region4: #{gpt_forward.8} parent=0 // pred_region
    _
  $region5: #{gpt_forward.8} parent=0 // pred_fallthru
    _
  // Predicated region
  $region6: #{gpt_forward.8} parent=0 // pred_check
    _
  $region7: #{gpt_forward.8} parent=0 // pred_check_branch
    %11 = sbr.rel (0) target = $region9
  $region8: #{gpt_forward.8} parent=0 // pred_region
    _
  $region9: #{gpt_forward.8} parent=0 // pred_fallthru
    _
  // Predicated region
  $region10: #{gpt_forward.8} parent=0 // pred_check
    _
  $region11: #{gpt_forward.8} parent=0 // pred_check_branch
    %13 = sbr.rel (0) target = $region13
  $region12: #{gpt_forward.8} parent=0 // pred_region
    _
  $region13: #{gpt_forward.8} parent=0 // pred_fallthru
    _
  %p15 = scmp.eq.s32.totalorder 0, 0
  // Predicated region
  $region14: #{gpt_forward.8} parent=0 // pred_check
    %p16 = pneg %p15
  $region15: #{gpt_forward.8} parent=0 // pred_check_branch
    %18 = sbr.rel (%p16) target = $region17
  $region16: #{gpt_forward.8} parent=0 // pred_region
    %vm19 = vcmask 7168
    %20 = vst.msk [vmem:[#allocation2] sm:$0xff] %vm19, -inf
    %21 = vst.msk [vmem:[#allocation2 + $0x8] sm:$0xff] %vm19, -inf
    %22 = vst.msk [vmem:[#allocation2 + $0x10] sm:$0xff] %vm19, -inf
    %23 = vst.msk [vmem:[#allocation2 + $0x18] sm:$0xff] %vm19, -inf
    %24 = vst.msk [vmem:[#allocation2 + $0x20] sm:$0xff] %vm19, -inf
    %25 = vst.msk [vmem:[#allocation2 + $0x28] sm:$0xff] %vm19, -inf
    %26 = vst.msk [vmem:[#allocation2 + $0x30] sm:$0xff] %vm19, -inf
    %27 = vst.msk [vmem:[#allocation2 + $0x38] sm:$0xff] %vm19, -inf
    %28 = vst.msk [vmem:[#allocation2 + $0x40] sm:$0xff] %vm19, -inf
    %29 = vst.msk [vmem:[#allocation2 + $0x48] sm:$0xff] %vm19, -inf
    %30 = vst.msk [vmem:[#allocation2 + $0x50] sm:$0xff] %vm19, -inf
    %31 = vst.msk [vmem:[#allocation2 + $0x58] sm:$0xff] %vm19, -inf
    %32 = vst.msk [vmem:[#allocation2 + $0x60] sm:$0xff] %vm19, -inf
    %33 = vst.msk [vmem:[#allocation2 + $0x68] sm:$0xff] %vm19, -inf
    %34 = vst.msk [vmem:[#allocation2 + $0x70] sm:$0xff] %vm19, -inf
    %35 = vst.msk [vmem:[#allocation2 + $0x78] sm:$0xff] %vm19, -inf
    %36 = vst.msk [vmem:[#allocation2 + $0x80] sm:$0xff] %vm19, -inf
    %37 = vst.msk [vmem:[#allocation2 + $0x88] sm:$0xff] %vm19, -inf
    %38 = vst.msk [vmem:[#allocation2 + $0x90] sm:$0xff] %vm19, -inf
    %39 = vst.msk [vmem:[#allocation2 + $0x98] sm:$0xff] %vm19, -inf
    %40 = vst.msk [vmem:[#allocation2 + $0xa0] sm:$0xff] %vm19, -inf
    %41 = vst.msk [vmem:[#allocation2 + $0xa8] sm:$0xff] %vm19, -inf
    %42 = vst.msk [vmem:[#allocation2 + $0xb0] sm:$0xff] %vm19, -inf
    %43 = vst.msk [vmem:[#allocation2 + $0xb8] sm:$0xff] %vm19, -inf
    %44 = vst.msk [vmem:[#allocation2 + $0xc0] sm:$0xff] %vm19, -inf
    %45 = vst.msk [vmem:[#allocation2 + $0xc8] sm:$0xff] %vm19, -inf
    %46 = vst.msk [vmem:[#allocation2 + $0xd0] sm:$0xff] %vm19, -inf
    %47 = vst.msk [vmem:[#allocation2 + $0xd8] sm:$0xff] %vm19, -inf
    %48 = vst.msk [vmem:[#allocation2 + $0xe0] sm:$0xff] %vm19, -inf
    %49 = vst.msk [vmem:[#allocation2 + $0xe8] sm:$0xff] %vm19, -inf
    %50 = vst.msk [vmem:[#allocation2 + $0xf0] sm:$0xff] %vm19, -inf
    %51 = vst.msk [vmem:[#allocation2 + $0xf8] sm:$0xff] %vm19, -inf
    %52 = vst.msk [vmem:[#allocation3] sm:$0xff] %vm19, 0.0
    %53 = vst.msk [vmem:[#allocation3 + $0x8] sm:$0xff] %vm19, 0.0
    %54 = vst.msk [vmem:[#allocation3 + $0x10] sm:$0xff] %vm19, 0.0
    %55 = vst.msk [vmem:[#allocation3 + $0x18] sm:$0xff] %vm19, 0.0
    %56 = vst.msk [vmem:[#allocation3 + $0x20] sm:$0xff] %vm19, 0.0
    %57 = vst.msk [vmem:[#allocation3 + $0x28] sm:$0xff] %vm19, 0.0
    %58 = vst.msk [vmem:[#allocation3 + $0x30] sm:$0xff] %vm19, 0.0
    %59 = vst.msk [vmem:[#allocation3 + $0x38] sm:$0xff] %vm19, 0.0
    %60 = vst.msk [vmem:[#allocation3 + $0x40] sm:$0xff] %vm19, 0.0
    %61 = vst.msk [vmem:[#allocation3 + $0x48] sm:$0xff] %vm19, 0.0
    %62 = vst.msk [vmem:[#allocation3 + $0x50] sm:$0xff] %vm19, 0.0
    %63 = vst.msk [vmem:[#allocation3 + $0x58] sm:$0xff] %vm19, 0.0
    %64 = vst.msk [vmem:[#allocation3 + $0x60] sm:$0xff] %vm19, 0.0
    %65 = vst.msk [vmem:[#allocation3 + $0x68] sm:$0xff] %vm19, 0.0
    %66 = vst.msk [vmem:[#allocation3 + $0x70] sm:$0xff] %vm19, 0.0
    %67 = vst.msk [vmem:[#allocation3 + $0x78] sm:$0xff] %vm19, 0.0
    %68 = vst.msk [vmem:[#allocation3 + $0x80] sm:$0xff] %vm19, 0.0
    %69 = vst.msk [vmem:[#allocation3 + $0x88] sm:$0xff] %vm19, 0.0
    %70 = vst.msk [vmem:[#allocation3 + $0x90] sm:$0xff] %vm19, 0.0
    %71 = vst.msk [vmem:[#allocation3 + $0x98] sm:$0xff] %vm19, 0.0
    %72 = vst.msk [vmem:[#allocation3 + $0xa0] sm:$0xff] %vm19, 0.0
    %73 = vst.msk [vmem:[#allocation3 + $0xa8] sm:$0xff] %vm19, 0.0
    %74 = vst.msk [vmem:[#allocation3 + $0xb0] sm:$0xff] %vm19, 0.0
    %75 = vst.msk [vmem:[#allocation3 + $0xb8] sm:$0xff] %vm19, 0.0
    %76 = vst.msk [vmem:[#allocation3 + $0xc0] sm:$0xff] %vm19, 0.0
    %77 = vst.msk [vmem:[#allocation3 + $0xc8] sm:$0xff] %vm19, 0.0
    %78 = vst.msk [vmem:[#allocation3 + $0xd0] sm:$0xff] %vm19, 0.0
    %79 = vst.msk [vmem:[#allocation3 + $0xd8] sm:$0xff] %vm19, 0.0
    %80 = vst.msk [vmem:[#allocation3 + $0xe0] sm:$0xff] %vm19, 0.0
    %81 = vst.msk [vmem:[#allocation3 + $0xe8] sm:$0xff] %vm19, 0.0
    %82 = vst.msk [vmem:[#allocation3 + $0xf0] sm:$0xff] %vm19, 0.0
    %83 = vst.msk [vmem:[#allocation3 + $0xf8] sm:$0xff] %vm19, 0.0
    %84 = vst [vmem:[#allocation4] sm:$0xff] 0.0
    %85 = vst [vmem:[#allocation4 + $0x8] sm:$0xff] 0.0
    %86 = vst [vmem:[#allocation4 + $0x10] sm:$0xff] 0.0
    %87 = vst [vmem:[#allocation4 + $0x18] sm:$0xff] 0.0
    %88 = vst [vmem:[#allocation4 + $0x20] sm:$0xff] 0.0
    %89 = vst [vmem:[#allocation4 + $0x28] sm:$0xff] 0.0
    %90 = vst [vmem:[#allocation4 + $0x30] sm:$0xff] 0.0
    %91 = vst [vmem:[#allocation4 + $0x38] sm:$0xff] 0.0
    %92 = vst [vmem:[#allocation4 + $0x40] sm:$0xff] 0.0
    %93 = vst [vmem:[#allocation4 + $0x48] sm:$0xff] 0.0
    %94 = vst [vmem:[#allocation4 + $0x50] sm:$0xff] 0.0
    %95 = vst [vmem:[#allocation4 + $0x58] sm:$0xff] 0.0
    %96 = vst [vmem:[#allocation4 + $0x60] sm:$0xff] 0.0
    %97 = vst [vmem:[#allocation4 + $0x68] sm:$0xff] 0.0
    %98 = vst [vmem:[#allocation4 + $0x70] sm:$0xff] 0.0
    %99 = vst [vmem:[#allocation4 + $0x78] sm:$0xff] 0.0
    %100 = vst [vmem:[#allocation4 + $0x80] sm:$0xff] 0.0
    %101 = vst [vmem:[#allocation4 + $0x88] sm:$0xff] 0.0
    %102 = vst [vmem:[#allocation4 + $0x90] sm:$0xff] 0.0
    %103 = vst [vmem:[#allocation4 + $0x98] sm:$0xff] 0.0
    %104 = vst [vmem:[#allocation4 + $0xa0] sm:$0xff] 0.0
    %105 = vst [vmem:[#allocation4 + $0xa8] sm:$0xff] 0.0
    %106 = vst [vmem:[#allocation4 + $0xb0] sm:$0xff] 0.0
    %107 = vst [vmem:[#allocation4 + $0xb8] sm:$0xff] 0.0
    %108 = vst [vmem:[#allocation4 + $0xc0] sm:$0xff] 0.0
    %109 = vst [vmem:[#allocation4 + $0xc8] sm:$0xff] 0.0
    %110 = vst [vmem:[#allocation4 + $0xd0] sm:$0xff] 0.0
    %111 = vst [vmem:[#allocation4 + $0xd8] sm:$0xff] 0.0
    %112 = vst [vmem:[#allocation4 + $0xe0] sm:$0xff] 0.0
    %113 = vst [vmem:[#allocation4 + $0xe8] sm:$0xff] 0.0
    %114 = vst [vmem:[#allocation4 + $0xf0] sm:$0xff] 0.0
    %115 = vst [vmem:[#allocation4 + $0xf8] sm:$0xff] 0.0
  $region17: #{gpt_forward.8} parent=0 // pred_fallthru
    _
  %s116 = smul.u32 0, 128
  %s117 = smul.u32 0, 128
  %s118 = sadd.s32 %s117, 127
  %p119 = scmp.le.s32.totalorder %s116, %s118
  // Predicated region
  $region18: #{gpt_forward.8} parent=0 // pred_check
    %p120 = pneg %p119
  $region19: #{gpt_forward.8} parent=0 // pred_check_branch
    %122 = sbr.rel (%p120) target = $region21
  $region20: #{gpt_forward.8} parent=0 // pred_region
    %v123 = vld [vmem:[%s0] sm:$0xf]
    %v124 = vld [vmem:[%s0 + $0x4] sm:$0xf]
    %v125 = vld [vmem:[%s0 + $0x8] sm:$0xf]
    %v126 = vld [vmem:[%s0 + $0xc] sm:$0xf]
    %v127 = vld [vmem:[%s0 + $0x10] sm:$0xf]
    %v128 = vld [vmem:[%s0 + $0x14] sm:$0xf]
    %v129 = vld [vmem:[%s0 + $0x18] sm:$0xf]
    %v130 = vld [vmem:[%s0 + $0x1c] sm:$0xf]
    %v131 = vld [vmem:[%s0 + $0x20] sm:$0xf]
    %v132 = vld [vmem:[%s0 + $0x24] sm:$0xf]
    %v133 = vld [vmem:[%s0 + $0x28] sm:$0xf]
    %v134 = vld [vmem:[%s0 + $0x2c] sm:$0xf]
    %v135 = vld [vmem:[%s0 + $0x30] sm:$0xf]
    %v136 = vld [vmem:[%s0 + $0x34] sm:$0xf]
    %v137 = vld [vmem:[%s0 + $0x38] sm:$0xf]
    %v138 = vld [vmem:[%s0 + $0x3c] sm:$0xf]
    %v139 = vld [vmem:[%s0 + $0x40] sm:$0xf]
    %v140 = vld [vmem:[%s0 + $0x44] sm:$0xf]
    %v141 = vld [vmem:[%s0 + $0x48] sm:$0xf]
    %v142 = vld [vmem:[%s0 + $0x4c] sm:$0xf]
    %v143 = vld [vmem:[%s0 + $0x50] sm:$0xf]
    %v144 = vld [vmem:[%s0 + $0x54] sm:$0xf]
    %v145 = vld [vmem:[%s0 + $0x58] sm:$0xf]
    %v146 = vld [vmem:[%s0 + $0x5c] sm:$0xf]
    %v147 = vld [vmem:[%s0 + $0x60] sm:$0xf]
    %v148 = vld [vmem:[%s0 + $0x64] sm:$0xf]
    %v149 = vld [vmem:[%s0 + $0x68] sm:$0xf]
    %v150 = vld [vmem:[%s0 + $0x6c] sm:$0xf]
    %v151 = vld [vmem:[%s0 + $0x70] sm:$0xf]
    %v152 = vld [vmem:[%s0 + $0x74] sm:$0xf]
    %v153 = vld [vmem:[%s0 + $0x78] sm:$0xf]
    %v154 = vld [vmem:[%s0 + $0x7c] sm:$0xf]
    %v155 = vld [vmem:[%s1] sm:$0xf]
    %v156 = vld [vmem:[%s1 + $0x4] sm:$0xf]
    %v157 = vld [vmem:[%s1 + $0x8] sm:$0xf]
    %v158 = vld [vmem:[%s1 + $0xc] sm:$0xf]
    %v159 = vld [vmem:[%s1 + $0x10] sm:$0xf]
    %v160 = vld [vmem:[%s1 + $0x14] sm:$0xf]
    %v161 = vld [vmem:[%s1 + $0x18] sm:$0xf]
    %v162 = vld [vmem:[%s1 + $0x1c] sm:$0xf]
    %v163 = vld [vmem:[%s1 + $0x20] sm:$0xf]
    %v164 = vld [vmem:[%s1 + $0x24] sm:$0xf]
    %v165 = vld [vmem:[%s1 + $0x28] sm:$0xf]
    %v166 = vld [vmem:[%s1 + $0x2c] sm:$0xf]
    %v167 = vld [vmem:[%s1 + $0x30] sm:$0xf]
    %v168 = vld [vmem:[%s1 + $0x34] sm:$0xf]
    %v169 = vld [vmem:[%s1 + $0x38] sm:$0xf]
    %v170 = vld [vmem:[%s1 + $0x3c] sm:$0xf]
    %v171 = vld [vmem:[%s1 + $0x40] sm:$0xf]
    %v172 = vld [vmem:[%s1 + $0x44] sm:$0xf]
    %v173 = vld [vmem:[%s1 + $0x48] sm:$0xf]
    %v174 = vld [vmem:[%s1 + $0x4c] sm:$0xf]
    %v175 = vld [vmem:[%s1 + $0x50] sm:$0xf]
    %v176 = vld [vmem:[%s1 + $0x54] sm:$0xf]
    %v177 = vld [vmem:[%s1 + $0x58] sm:$0xf]
    %v178 = vld [vmem:[%s1 + $0x5c] sm:$0xf]
    %v179 = vld [vmem:[%s1 + $0x60] sm:$0xf]
    %v180 = vld [vmem:[%s1 + $0x64] sm:$0xf]
    %v181 = vld [vmem:[%s1 + $0x68] sm:$0xf]
    %v182 = vld [vmem:[%s1 + $0x6c] sm:$0xf]
    %v183 = vld [vmem:[%s1 + $0x70] sm:$0xf]
    %v184 = vld [vmem:[%s1 + $0x74] sm:$0xf]
    %v185 = vld [vmem:[%s1 + $0x78] sm:$0xf]
    %v186 = vld [vmem:[%s1 + $0x7c] sm:$0xf]
    %v203 = vunpack.c.l.b16 %v123
    %v204 = vunpack.c.l.b16 %v124
    %v205 = vunpack.c.l.b16 %v125
    %v206 = vunpack.c.l.b16 %v126
    %v207 = vunpack.c.l.b16 %v127
    %v208 = vunpack.c.l.b16 %v128
    %v209 = vunpack.c.l.b16 %v129
    %v210 = vunpack.c.l.b16 %v130
    %v211 = vunpack.c.l.b16 %v131
    %v212 = vunpack.c.l.b16 %v132
    %v213 = vunpack.c.l.b16 %v133
    %v214 = vunpack.c.l.b16 %v134
    %v215 = vunpack.c.l.b16 %v135
    %v216 = vunpack.c.l.b16 %v136
    %v217 = vunpack.c.l.b16 %v137
    %v218 = vunpack.c.l.b16 %v138
    %v219 = vpack.c.b16 %v204, %v203
    %v220 = vpack.c.b16 %v206, %v205
    %v221 = vpack.c.b16 %v208, %v207
    %v222 = vpack.c.b16 %v210, %v209
    %v223 = vpack.c.b16 %v212, %v211
    %v224 = vpack.c.b16 %v214, %v213
    %v225 = vpack.c.b16 %v216, %v215
    %v226 = vpack.c.b16 %v218, %v217
    %v251 = vunpack.c.l.b16 %v155
    %v252 = vunpack.c.l.b16 %v156
    %v253 = vunpack.c.l.b16 %v157
    %v254 = vunpack.c.l.b16 %v158
    %v255 = vunpack.c.l.b16 %v159
    %v256 = vunpack.c.l.b16 %v160
    %v257 = vunpack.c.l.b16 %v161
    %v258 = vunpack.c.l.b16 %v162
    %v259 = vunpack.c.l.b16 %v163
    %v260 = vunpack.c.l.b16 %v164
    %v261 = vunpack.c.l.b16 %v165
    %v262 = vunpack.c.l.b16 %v166
    %v263 = vunpack.c.l.b16 %v167
    %v264 = vunpack.c.l.b16 %v168
    %v265 = vunpack.c.l.b16 %v169
    %v266 = vunpack.c.l.b16 %v170
    %v267 = vpack.c.b16 %v252, %v251
    %v268 = vpack.c.b16 %v254, %v253
    %v269 = vpack.c.b16 %v256, %v255
    %v270 = vpack.c.b16 %v258, %v257
    %v271 = vpack.c.b16 %v260, %v259
    %v272 = vpack.c.b16 %v262, %v261
    %v273 = vpack.c.b16 %v264, %v263
    %v274 = vpack.c.b16 %v266, %v265
    %283 = vmatprep.subr.bf16.mxu0 0
    %284 = vmatpush1.bf16.xpose.msra.mxu0 %v267
    %285 = vmatprep.subr.bf16.mxu0 0
    %286 = vmatpush1.bf16.xpose.msra.mxu0 %v268
    %287 = vmatprep.subr.bf16.mxu0 0
    %288 = vmatpush1.bf16.xpose.msra.mxu0 %v269
    %289 = vmatprep.subr.bf16.mxu0 0
    %290 = vmatpush1.bf16.xpose.msra.mxu0 %v270
    %291 = vmatprep.subr.bf16.mxu0 0
    %292 = vmatpush1.bf16.xpose.msra.mxu0 %v271
    %293 = vmatprep.subr.bf16.mxu0 0
    %294 = vmatpush1.bf16.xpose.msra.mxu0 %v272
    %295 = vmatprep.subr.bf16.mxu0 0
    %296 = vmatpush1.bf16.xpose.msra.mxu0 %v273
    %297 = vmatprep.subr.bf16.mxu0 0
    %298 = vmatpush1.bf16.xpose.msra.mxu0 %v274
    %299 = vmatprep.subr.bf16.mxu0 0
    %300 = vmatpush1.bf16.xpose.msra.mxu0 0
    %301 = vmatprep.subr.bf16.mxu0 0
    %302 = vmatpush1.bf16.xpose.msra.mxu0 0
    %303 = vmatprep.subr.bf16.mxu0 0
    %304 = vmatpush1.bf16.xpose.msra.mxu0 0
    %305 = vmatprep.subr.bf16.mxu0 0
    %306 = vmatpush1.bf16.xpose.msra.mxu0 0
    %307 = vmatprep.subr.bf16.mxu0 0
    %308 = vmatpush1.bf16.xpose.msra.mxu0 0
    %309 = vmatprep.subr.bf16.mxu0 0
    %310 = vmatpush1.bf16.xpose.msra.mxu0 0
    %311 = vmatprep.subr.bf16.mxu0 0
    %312 = vmatpush1.bf16.xpose.msra.mxu0 0
    %313 = vmatprep.subr.bf16.mxu0 0
    %314 = vmatpush1.bf16.xpose.msra.mxu0 0
    %315 = vmatprep.mubr.bf16.mxu0 0
    %316 = vmatmul.mubr.bf16.gmra.mrb[0].mxu0 %v219
    %v317 = vpop.f32.mrb[0].mxu0
    %v318 = vadd.f32 0.0, %v317
    %v319 = vpop.f32.mrb[0].mxu0
    %v320 = vpop.f32.mrb[0].mxu0
    %v321 = vadd.f32 0.0, %v320
    %v322 = vpop.f32.mrb[0].mxu0
    %323 = vmatprep.mubr.bf16.mxu0 0
    %324 = vmatmul.mubr.bf16.gmra.mrb[0].mxu0 %v220
    %v325 = vpop.f32.mrb[0].mxu0
    %v326 = vadd.f32 0.0, %v325
    %v327 = vpop.f32.mrb[0].mxu0
    %v328 = vpop.f32.mrb[0].mxu0
    %v329 = vadd.f32 0.0, %v328
    %v330 = vpop.f32.mrb[0].mxu0
    %331 = vmatprep.mubr.bf16.mxu0 0
    %332 = vmatmul.mubr.bf16.gmra.mrb[0].mxu0 %v221
    %v333 = vpop.f32.mrb[0].mxu0
    %v334 = vadd.f32 0.0, %v333
    %v335 = vpop.f32.mrb[0].mxu0
    %v336 = vpop.f32.mrb[0].mxu0
    %v337 = vadd.f32 0.0, %v336
    %v338 = vpop.f32.mrb[0].mxu0
    %339 = vmatprep.mubr.bf16.mxu0 0
    %340 = vmatmul.mubr.bf16.gmra.mrb[0].mxu0 %v222
    %v341 = vpop.f32.mrb[0].mxu0
    %v342 = vadd.f32 0.0, %v341
    %v343 = vpop.f32.mrb[0].mxu0
    %v344 = vpop.f32.mrb[0].mxu0
    %v345 = vadd.f32 0.0, %v344
    %v346 = vpop.f32.mrb[0].mxu0
    %347 = vmatprep.mubr.bf16.mxu0 0
    %348 = vmatmul.mubr.bf16.gmra.mrb[0].mxu0 %v223
    %v349 = vpop.f32.mrb[0].mxu0
    %v350 = vadd.f32 0.0, %v349
    %v351 = vpop.f32.mrb[0].mxu0
    %v352 = vpop.f32.mrb[0].mxu0
    %v353 = vadd.f32 0.0, %v352
    %v354 = vpop.f32.mrb[0].mxu0
    %355 = vmatprep.mubr.bf16.mxu0 0
    %356 = vmatmul.mubr.bf16.gmra.mrb[0].mxu0 %v224
    %v357 = vpop.f32.mrb[0].mxu0
    %v358 = vadd.f32 0.0, %v357
    %v359 = vpop.f32.mrb[0].mxu0
    %v360 = vpop.f32.mrb[0].mxu0
    %v361 = vadd.f32 0.0, %v360
    %v362 = vpop.f32.mrb[0].mxu0
    %363 = vmatprep.mubr.bf16.mxu0 0
    %364 = vmatmul.mubr.bf16.gmra.mrb[0].mxu0 %v225
    %v365 = vpop.f32.mrb[0].mxu0
    %v366 = vadd.f32 0.0, %v365
    %v367 = vpop.f32.mrb[0].mxu0
    %v368 = vpop.f32.mrb[0].mxu0
    %v369 = vadd.f32 0.0, %v368
    %v370 = vpop.f32.mrb[0].mxu0
    %371 = vmatprep.mubr.bf16.mxu0 0
    %372 = vmatmul.mubr.bf16.gmra.mrb[0].mxu0 %v226
    %v373 = vpop.f32.mrb[0].mxu0
    %v374 = vadd.f32 0.0, %v373
    %v375 = vpop.f32.mrb[0].mxu0
    %v376 = vpop.f32.mrb[0].mxu0
    %v377 = vadd.f32 0.0, %v376
    %v378 = vpop.f32.mrb[0].mxu0
    %379 = vdwg.mxu0
    %v396 = vunpack.c.l.b16 %v139
    %v397 = vunpack.c.l.b16 %v140
    %v398 = vunpack.c.l.b16 %v141
    %v399 = vunpack.c.l.b16 %v142
    %v400 = vunpack.c.l.b16 %v143
    %v401 = vunpack.c.l.b16 %v144
    %v402 = vunpack.c.l.b16 %v145
    %v403 = vunpack.c.l.b16 %v146
    %v404 = vunpack.c.l.b16 %v147
    %v405 = vunpack.c.l.b16 %v148
    %v406 = vunpack.c.l.b16 %v149
    %v407 = vunpack.c.l.b16 %v150
    %v408 = vunpack.c.l.b16 %v151
    %v409 = vunpack.c.l.b16 %v152
    %v410 = vunpack.c.l.b16 %v153
    %v411 = vunpack.c.l.b16 %v154
    %v412 = vpack.c.b16 %v397, %v396
    %v413 = vpack.c.b16 %v399, %v398
    %v414 = vpack.c.b16 %v401, %v400
    %v415 = vpack.c.b16 %v403, %v402
    %v416 = vpack.c.b16 %v405, %v404
    %v417 = vpack.c.b16 %v407, %v406
    %v418 = vpack.c.b16 %v409, %v408
    %v419 = vpack.c.b16 %v411, %v410
    %v444 = vunpack.c.l.b16 %v171
    %v445 = vunpack.c.l.b16 %v172
    %v446 = vunpack.c.l.b16 %v173
    %v447 = vunpack.c.l.b16 %v174
    %v448 = vunpack.c.l.b16 %v175
    %v449 = vunpack.c.l.b16 %v176
    %v450 = vunpack.c.l.b16 %v177
    %v451 = vunpack.c.l.b16 %v178
    %v452 = vunpack.c.l.b16 %v179
    %v453 = vunpack.c.l.b16 %v180
    %v454 = vunpack.c.l.b16 %v181
    %v455 = vunpack.c.l.b16 %v182
    %v456 = vunpack.c.l.b16 %v183
    %v457 = vunpack.c.l.b16 %v184
    %v458 = vunpack.c.l.b16 %v185
    %v459 = vunpack.c.l.b16 %v186
    %v460 = vpack.c.b16 %v445, %v444
    %v461 = vpack.c.b16 %v447, %v446
    %v462 = vpack.c.b16 %v449, %v448
    %v463 = vpack.c.b16 %v451, %v450
    %v464 = vpack.c.b16 %v453, %v452
    %v465 = vpack.c.b16 %v455, %v454
    %v466 = vpack.c.b16 %v457, %v456
    %v467 = vpack.c.b16 %v459, %v458
    %476 = vmatprep.subr.bf16.mxu0 0
    %477 = vmatpush1.bf16.xpose.msra.mxu0 %v460
    %478 = vmatprep.subr.bf16.mxu0 0
    %479 = vmatpush1.bf16.xpose.msra.mxu0 %v461
    %480 = vmatprep.subr.bf16.mxu0 0
    %481 = vmatpush1.bf16.xpose.msra.mxu0 %v462
    %482 = vmatprep.subr.bf16.mxu0 0
    %483 = vmatpush1.bf16.xpose.msra.mxu0 %v463
    %484 = vmatprep.subr.bf16.mxu0 0
    %485 = vmatpush1.bf16.xpose.msra.mxu0 %v464
    %486 = vmatprep.subr.bf16.mxu0 0
    %487 = vmatpush1.bf16.xpose.msra.mxu0 %v465
    %488 = vmatprep.subr.bf16.mxu0 0
    %489 = vmatpush1.bf16.xpose.msra.mxu0 %v466
    %490 = vmatprep.subr.bf16.mxu0 0
    %491 = vmatpush1.bf16.xpose.msra.mxu0 %v467
    %492 = vmatprep.subr.bf16.mxu0 0
    %493 = vmatpush1.bf16.xpose.msra.mxu0 0
    %494 = vmatprep.subr.bf16.mxu0 0
    %495 = vmatpush1.bf16.xpose.msra.mxu0 0
    %496 = vmatprep.subr.bf16.mxu0 0
    %497 = vmatpush1.bf16.xpose.msra.mxu0 0
    %498 = vmatprep.subr.bf16.mxu0 0
    %499 = vmatpush1.bf16.xpose.msra.mxu0 0
    %500 = vmatprep.subr.bf16.mxu0 0
    %501 = vmatpush1.bf16.xpose.msra.mxu0 0
    %502 = vmatprep.subr.bf16.mxu0 0
    %503 = vmatpush1.bf16.xpose.msra.mxu0 0
    %504 = vmatprep.subr.bf16.mxu0 0
    %505 = vmatpush1.bf16.xpose.msra.mxu0 0
    %506 = vmatprep.subr.bf16.mxu0 0
    %507 = vmatpush1.bf16.xpose.msra.mxu0 0
    %508 = vmatprep.mubr.bf16.mxu0 0
    %509 = vmatmul.mubr.bf16.gmra.mrb[0].mxu0 %v412
    %v510 = vpop.f32.mrb[0].mxu0
    %v511 = vadd.f32 0.0, %v510
    %v512 = vpop.f32.mrb[0].mxu0
    %v513 = vpop.f32.mrb[0].mxu0
    %v514 = vadd.f32 0.0, %v513
    %v515 = vpop.f32.mrb[0].mxu0
    %516 = vmatprep.mubr.bf16.mxu0 0
    %517 = vmatmul.mubr.bf16.gmra.mrb[0].mxu0 %v413
    %v518 = vpop.f32.mrb[0].mxu0
    %v519 = vadd.f32 0.0, %v518
    %v520 = vpop.f32.mrb[0].mxu0
    %v521 = vpop.f32.mrb[0].mxu0
    %v522 = vadd.f32 0.0, %v521
    %v523 = vpop.f32.mrb[0].mxu0
    %524 = vmatprep.mubr.bf16.mxu0 0
    %525 = vmatmul.mubr.bf16.gmra.mrb[0].mxu0 %v414
    %v526 = vpop.f32.mrb[0].mxu0
    %v527 = vadd.f32 0.0, %v526
    %v528 = vpop.f32.mrb[0].mxu0
    %v529 = vpop.f32.mrb[0].mxu0
    %v530 = vadd.f32 0.0, %v529
    %v531 = vpop.f32.mrb[0].mxu0
    %532 = vmatprep.mubr.bf16.mxu0 0
    %533 = vmatmul.mubr.bf16.gmra.mrb[0].mxu0 %v415
    %v534 = vpop.f32.mrb[0].mxu0
    %v535 = vadd.f32 0.0, %v534
    %v536 = vpop.f32.mrb[0].mxu0
    %v537 = vpop.f32.mrb[0].mxu0
    %v538 = vadd.f32 0.0, %v537
    %v539 = vpop.f32.mrb[0].mxu0
    %540 = vmatprep.mubr.bf16.mxu0 0
    %541 = vmatmul.mubr.bf16.gmra.mrb[0].mxu0 %v416
    %v542 = vpop.f32.mrb[0].mxu0
    %v543 = vadd.f32 0.0, %v542
    %v544 = vpop.f32.mrb[0].mxu0
    %v545 = vpop.f32.mrb[0].mxu0
    %v546 = vadd.f32 0.0, %v545
    %v547 = vpop.f32.mrb[0].mxu0
    %548 = vmatprep.mubr.bf16.mxu0 0
    %549 = vmatmul.mubr.bf16.gmra.mrb[0].mxu0 %v417
    %v550 = vpop.f32.mrb[0].mxu0
    %v551 = vadd.f32 0.0, %v550
    %v552 = vpop.f32.mrb[0].mxu0
    %v553 = vpop.f32.mrb[0].mxu0
    %v554 = vadd.f32 0.0, %v553
    %v555 = vpop.f32.mrb[0].mxu0
    %556 = vmatprep.mubr.bf16.mxu0 0
    %557 = vmatmul.mubr.bf16.gmra.mrb[0].mxu0 %v418
    %v558 = vpop.f32.mrb[0].mxu0
    %v559 = vadd.f32 0.0, %v558
    %v560 = vpop.f32.mrb[0].mxu0
    %v561 = vpop.f32.mrb[0].mxu0
    %v562 = vadd.f32 0.0, %v561
    %v563 = vpop.f32.mrb[0].mxu0
    %564 = vmatprep.mubr.bf16.mxu0 0
    %565 = vmatmul.mubr.bf16.gmra.mrb[0].mxu0 %v419
    %v566 = vpop.f32.mrb[0].mxu0
    %v567 = vadd.f32 0.0, %v566
    %v568 = vpop.f32.mrb[0].mxu0
    %v569 = vpop.f32.mrb[0].mxu0
    %v570 = vadd.f32 0.0, %v569
    %v571 = vpop.f32.mrb[0].mxu0
    %572 = vdwg.mxu0
    %v573 = vlaneseq
    %v574 = vshrl.u32 %v573, 7
    %v575 = vadd.s32 %v574, 8
    %v576 = vadd.s32 %v574, 16
    %v577 = vadd.s32 %v574, 24
    %v578 = vadd.s32 %v574, 32
    %v579 = vadd.s32 %v574, 40
    %v580 = vadd.s32 %v574, 48
    %v581 = vadd.s32 %v574, 56
    %v582 = vadd.s32 %v574, 64
    %v583 = vadd.s32 %v574, 72
    %v584 = vadd.s32 %v574, 80
    %v585 = vadd.s32 %v574, 88
    %v586 = vadd.s32 %v574, 96
    %v587 = vadd.s32 %v574, 104
    %v588 = vadd.s32 %v574, 112
    %v589 = vadd.s32 %v574, 120
    %v590 = vstv %s117
    %v591 = vadd.s32 %v590, %v574
    %v592 = vadd.s32 %v590, %v575
    %v593 = vadd.s32 %v590, %v576
    %v594 = vadd.s32 %v590, %v577
    %v595 = vadd.s32 %v590, %v578
    %v596 = vadd.s32 %v590, %v579
    %v597 = vadd.s32 %v590, %v580
    %v598 = vadd.s32 %v590, %v581
    %v599 = vadd.s32 %v590, %v582
    %v600 = vadd.s32 %v590, %v583
    %v601 = vadd.s32 %v590, %v584
    %v602 = vadd.s32 %v590, %v585
    %v603 = vadd.s32 %v590, %v586
    %v604 = vadd.s32 %v590, %v587
    %v605 = vadd.s32 %v590, %v588
    %v606 = vadd.s32 %v590, %v589
    %v607 = vlaneseq
    %v608 = vand.u32 %v607, 127
    %v609 = vstv %s116
    %v610 = vadd.s32 %v609, %v608
    %vm611 = vcmp.le.s32.totalorder %v610, %v591
    %vm612 = vcmp.le.s32.totalorder %v610, %v592
    %vm613 = vcmp.le.s32.totalorder %v610, %v593
    %vm614 = vcmp.le.s32.totalorder %v610, %v594
    %vm615 = vcmp.le.s32.totalorder %v610, %v595
    %vm616 = vcmp.le.s32.totalorder %v610, %v596
    %vm617 = vcmp.le.s32.totalorder %v610, %v597
    %vm618 = vcmp.le.s32.totalorder %v610, %v598
    %vm619 = vcmp.le.s32.totalorder %v610, %v599
    %vm620 = vcmp.le.s32.totalorder %v610, %v600
    %vm621 = vcmp.le.s32.totalorder %v610, %v601
    %vm622 = vcmp.le.s32.totalorder %v610, %v602
    %vm623 = vcmp.le.s32.totalorder %v610, %v603
    %vm624 = vcmp.le.s32.totalorder %v610, %v604
    %vm625 = vcmp.le.s32.totalorder %v610, %v605
    %vm626 = vcmp.le.s32.totalorder %v610, %v606
    %v627 = vsel %vm611, 1, 0
    %v628 = vsel %vm612, 1, 0
    %v629 = vsel %vm613, 1, 0
    %v630 = vsel %vm614, 1, 0
    %v631 = vsel %vm615, 1, 0
    %v632 = vsel %vm616, 1, 0
    %v633 = vsel %vm617, 1, 0
    %v634 = vsel %vm618, 1, 0
    %v635 = vsel %vm619, 1, 0
    %v636 = vsel %vm620, 1, 0
    %v637 = vsel %vm621, 1, 0
    %v638 = vsel %vm622, 1, 0
    %v639 = vsel %vm623, 1, 0
    %v640 = vsel %vm624, 1, 0
    %v641 = vsel %vm625, 1, 0
    %v642 = vsel %vm626, 1, 0
    %vm643 = vcmp.eq.s32.totalorder %v627, 1
    %vm644 = vcmp.eq.s32.totalorder %v628, 1
    %vm645 = vcmp.eq.s32.totalorder %v629, 1
    %vm646 = vcmp.eq.s32.totalorder %v630, 1
    %vm647 = vcmp.eq.s32.totalorder %v631, 1
    %vm648 = vcmp.eq.s32.totalorder %v632, 1
    %vm649 = vcmp.eq.s32.totalorder %v633, 1
    %vm650 = vcmp.eq.s32.totalorder %v634, 1
    %vm651 = vcmp.eq.s32.totalorder %v635, 1
    %vm652 = vcmp.eq.s32.totalorder %v636, 1
    %vm653 = vcmp.eq.s32.totalorder %v637, 1
    %vm654 = vcmp.eq.s32.totalorder %v638, 1
    %vm655 = vcmp.eq.s32.totalorder %v639, 1
    %vm656 = vcmp.eq.s32.totalorder %v640, 1
    %vm657 = vcmp.eq.s32.totalorder %v641, 1
    %vm658 = vcmp.eq.s32.totalorder %v642, 1
    %v659 = vsel %vm643, %v318, -1e+30
    %v660 = vsel %vm644, %v321, -1e+30
    %v661 = vsel %vm645, %v326, -1e+30
    %v662 = vsel %vm646, %v329, -1e+30
    %v663 = vsel %vm647, %v334, -1e+30
    %v664 = vsel %vm648, %v337, -1e+30
    %v665 = vsel %vm649, %v342, -1e+30
    %v666 = vsel %vm650, %v345, -1e+30
    %v667 = vsel %vm651, %v350, -1e+30
    %v668 = vsel %vm652, %v353, -1e+30
    %v669 = vsel %vm653, %v358, -1e+30
    %v670 = vsel %vm654, %v361, -1e+30
    %v671 = vsel %vm655, %v366, -1e+30
    %v672 = vsel %vm656, %v369, -1e+30
    %v673 = vsel %vm657, %v374, -1e+30
    %v674 = vsel %vm658, %v377, -1e+30
    %v675 = vsel %vm643, %v511, -1e+30
    %v676 = vsel %vm644, %v514, -1e+30
    %v677 = vsel %vm645, %v519, -1e+30
    %v678 = vsel %vm646, %v522, -1e+30
    %v679 = vsel %vm647, %v527, -1e+30
    %v680 = vsel %vm648, %v530, -1e+30
    %v681 = vsel %vm649, %v535, -1e+30
    %v682 = vsel %vm650, %v538, -1e+30
    %v683 = vsel %vm651, %v543, -1e+30
    %v684 = vsel %vm652, %v546, -1e+30
    %v685 = vsel %vm653, %v551, -1e+30
    %v686 = vsel %vm654, %v554, -1e+30
    %v687 = vsel %vm655, %v559, -1e+30
    %v688 = vsel %vm656, %v562, -1e+30
    %v689 = vsel %vm657, %v567, -1e+30
    %v690 = vsel %vm658, %v570, -1e+30
    %v691 = vld [vmem:[#allocation2] sm:$0xff]
    %v692 = vld [vmem:[#allocation2 + $0x8] sm:$0xff]
    %v693 = vld [vmem:[#allocation2 + $0x10] sm:$0xff]
    %v694 = vld [vmem:[#allocation2 + $0x18] sm:$0xff]
    %v695 = vld [vmem:[#allocation2 + $0x20] sm:$0xff]
    %v696 = vld [vmem:[#allocation2 + $0x28] sm:$0xff]
    %v697 = vld [vmem:[#allocation2 + $0x30] sm:$0xff]
    %v698 = vld [vmem:[#allocation2 + $0x38] sm:$0xff]
    %v699 = vld [vmem:[#allocation2 + $0x40] sm:$0xff]
    %v700 = vld [vmem:[#allocation2 + $0x48] sm:$0xff]
    %v701 = vld [vmem:[#allocation2 + $0x50] sm:$0xff]
    %v702 = vld [vmem:[#allocation2 + $0x58] sm:$0xff]
    %v703 = vld [vmem:[#allocation2 + $0x60] sm:$0xff]
    %v704 = vld [vmem:[#allocation2 + $0x68] sm:$0xff]
    %v705 = vld [vmem:[#allocation2 + $0x70] sm:$0xff]
    %v706 = vld [vmem:[#allocation2 + $0x78] sm:$0xff]
    %v707 = vld [vmem:[#allocation2 + $0x80] sm:$0xff]
    %v708 = vld [vmem:[#allocation2 + $0x88] sm:$0xff]
    %v709 = vld [vmem:[#allocation2 + $0x90] sm:$0xff]
    %v710 = vld [vmem:[#allocation2 + $0x98] sm:$0xff]
    %v711 = vld [vmem:[#allocation2 + $0xa0] sm:$0xff]
    %v712 = vld [vmem:[#allocation2 + $0xa8] sm:$0xff]
    %v713 = vld [vmem:[#allocation2 + $0xb0] sm:$0xff]
    %v714 = vld [vmem:[#allocation2 + $0xb8] sm:$0xff]
    %v715 = vld [vmem:[#allocation2 + $0xc0] sm:$0xff]
    %v716 = vld [vmem:[#allocation2 + $0xc8] sm:$0xff]
    %v717 = vld [vmem:[#allocation2 + $0xd0] sm:$0xff]
    %v718 = vld [vmem:[#allocation2 + $0xd8] sm:$0xff]
    %v719 = vld [vmem:[#allocation2 + $0xe0] sm:$0xff]
    %v720 = vld [vmem:[#allocation2 + $0xe8] sm:$0xff]
    %v721 = vld [vmem:[#allocation2 + $0xf0] sm:$0xff]
    %v722 = vld [vmem:[#allocation2 + $0xf8] sm:$0xff]
    %723 = vmax.xlane.f32.xlu0 %v659
    %v724 = vpop.xlane.xlu0 %723
    %725 = vmax.xlane.f32.xlu0 %v660
    %v726 = vpop.xlane.xlu0 %725
    %727 = vmax.xlane.f32.xlu0 %v661
    %v728 = vpop.xlane.xlu0 %727
    %729 = vmax.xlane.f32.xlu0 %v662
    %v730 = vpop.xlane.xlu0 %729
    %731 = vmax.xlane.f32.xlu0 %v663
    %v732 = vpop.xlane.xlu0 %731
    %733 = vmax.xlane.f32.xlu0 %v664
    %v734 = vpop.xlane.xlu0 %733
    %735 = vmax.xlane.f32.xlu0 %v665
    %v736 = vpop.xlane.xlu0 %735
    %737 = vmax.xlane.f32.xlu0 %v666
    %v738 = vpop.xlane.xlu0 %737
    %739 = vmax.xlane.f32.xlu0 %v667
    %v740 = vpop.xlane.xlu0 %739
    %741 = vmax.xlane.f32.xlu0 %v668
    %v742 = vpop.xlane.xlu0 %741
    %743 = vmax.xlane.f32.xlu0 %v669
    %v744 = vpop.xlane.xlu0 %743
    %745 = vmax.xlane.f32.xlu0 %v670
    %v746 = vpop.xlane.xlu0 %745
    %747 = vmax.xlane.f32.xlu0 %v671
    %v748 = vpop.xlane.xlu0 %747
    %749 = vmax.xlane.f32.xlu0 %v672
    %v750 = vpop.xlane.xlu0 %749
    %751 = vmax.xlane.f32.xlu0 %v673
    %v752 = vpop.xlane.xlu0 %751
    %753 = vmax.xlane.f32.xlu0 %v674
    %v754 = vpop.xlane.xlu0 %753
    %755 = vmax.xlane.f32.xlu0 %v675
    %v756 = vpop.xlane.xlu0 %755
    %757 = vmax.xlane.f32.xlu0 %v676
    %v758 = vpop.xlane.xlu0 %757
    %759 = vmax.xlane.f32.xlu0 %v677
    %v760 = vpop.xlane.xlu0 %759
    %761 = vmax.xlane.f32.xlu0 %v678
    %v762 = vpop.xlane.xlu0 %761
    %763 = vmax.xlane.f32.xlu0 %v679
    %v764 = vpop.xlane.xlu0 %763
    %765 = vmax.xlane.f32.xlu0 %v680
    %v766 = vpop.xlane.xlu0 %765
    %767 = vmax.xlane.f32.xlu0 %v681
    %v768 = vpop.xlane.xlu0 %767
    %769 = vmax.xlane.f32.xlu0 %v682
    %v770 = vpop.xlane.xlu0 %769
    %771 = vmax.xlane.f32.xlu0 %v683
    %v772 = vpop.xlane.xlu0 %771
    %773 = vmax.xlane.f32.xlu0 %v684
    %v774 = vpop.xlane.xlu0 %773
    %775 = vmax.xlane.f32.xlu0 %v685
    %v776 = vpop.xlane.xlu0 %775
    %777 = vmax.xlane.f32.xlu0 %v686
    %v778 = vpop.xlane.xlu0 %777
    %779 = vmax.xlane.f32.xlu0 %v687
    %v780 = vpop.xlane.xlu0 %779
    %781 = vmax.xlane.f32.xlu0 %v688
    %v782 = vpop.xlane.xlu0 %781
    %783 = vmax.xlane.f32.xlu0 %v689
    %v784 = vpop.xlane.xlu0 %783
    %785 = vmax.xlane.f32.xlu0 %v690
    %v786 = vpop.xlane.xlu0 %785
    %v787 = vmax.f32 %v691, %v724
    %v788 = vmax.f32 %v692, %v726
    %v789 = vmax.f32 %v693, %v728
    %v790 = vmax.f32 %v694, %v730
    %v791 = vmax.f32 %v695, %v732
    %v792 = vmax.f32 %v696, %v734
    %v793 = vmax.f32 %v697, %v736
    %v794 = vmax.f32 %v698, %v738
    %v795 = vmax.f32 %v699, %v740
    %v796 = vmax.f32 %v700, %v742
    %v797 = vmax.f32 %v701, %v744
    %v798 = vmax.f32 %v702, %v746
    %v799 = vmax.f32 %v703, %v748
    %v800 = vmax.f32 %v704, %v750
    %v801 = vmax.f32 %v705, %v752
    %v802 = vmax.f32 %v706, %v754
    %v803 = vmax.f32 %v707, %v756
    %v804 = vmax.f32 %v708, %v758
    %v805 = vmax.f32 %v709, %v760
    %v806 = vmax.f32 %v710, %v762
    %v807 = vmax.f32 %v711, %v764
    %v808 = vmax.f32 %v712, %v766
    %v809 = vmax.f32 %v713, %v768
    %v810 = vmax.f32 %v714, %v770
    %v811 = vmax.f32 %v715, %v772
    %v812 = vmax.f32 %v716, %v774
    %v813 = vmax.f32 %v717, %v776
    %v814 = vmax.f32 %v718, %v778
    %v815 = vmax.f32 %v719, %v780
    %v816 = vmax.f32 %v720, %v782
    %v817 = vmax.f32 %v721, %v784
    %v818 = vmax.f32 %v722, %v786
    %v819 = vsub.f32 %v691, %v787
    %v820 = vsub.f32 %v692, %v788
    %v821 = vsub.f32 %v693, %v789
    %v822 = vsub.f32 %v694, %v790
    %v823 = vsub.f32 %v695, %v791
    %v824 = vsub.f32 %v696, %v792
    %v825 = vsub.f32 %v697, %v793
    %v826 = vsub.f32 %v698, %v794
    %v827 = vsub.f32 %v699, %v795
    %v828 = vsub.f32 %v700, %v796
    %v829 = vsub.f32 %v701, %v797
    %v830 = vsub.f32 %v702, %v798
    %v831 = vsub.f32 %v703, %v799
    %v832 = vsub.f32 %v704, %v800
    %v833 = vsub.f32 %v705, %v801
    %v834 = vsub.f32 %v706, %v802
    %v835 = vsub.f32 %v707, %v803
    %v836 = vsub.f32 %v708, %v804
    %v837 = vsub.f32 %v709, %v805
    %v838 = vsub.f32 %v710, %v806
    %v839 = vsub.f32 %v711, %v807
    %v840 = vsub.f32 %v712, %v808
    %v841 = vsub.f32 %v713, %v809
    %v842 = vsub.f32 %v714, %v810
    %v843 = vsub.f32 %v715, %v811
    %v844 = vsub.f32 %v716, %v812
    %v845 = vsub.f32 %v717, %v813
    %v846 = vsub.f32 %v718, %v814
    %v847 = vsub.f32 %v719, %v815
    %v848 = vsub.f32 %v720, %v816
    %v849 = vsub.f32 %v721, %v817
    %v850 = vsub.f32 %v722, %v818
    %v851 = vmul.f32 %v819, 1.442695
    %v852 = vpow.pop %v851
    %v853 = vmul.f32 %v820, 1.442695
    %v854 = vpow.pop %v853
    %v855 = vmul.f32 %v821, 1.442695
    %v856 = vpow.pop %v855
    %v857 = vmul.f32 %v822, 1.442695
    %v858 = vpow.pop %v857
    %v859 = vmul.f32 %v823, 1.442695
    %v860 = vpow.pop %v859
    %v861 = vmul.f32 %v824, 1.442695
    %v862 = vpow.pop %v861
    %v863 = vmul.f32 %v825, 1.442695
    %v864 = vpow.pop %v863
    %v865 = vmul.f32 %v826, 1.442695
    %v866 = vpow.pop %v865
    %v867 = vmul.f32 %v827, 1.442695
    %v868 = vpow.pop %v867
    %v869 = vmul.f32 %v828, 1.442695
    %v870 = vpow.pop %v869
    %v871 = vmul.f32 %v829, 1.442695
    %v872 = vpow.pop %v871
    %v873 = vmul.f32 %v830, 1.442695
    %v874 = vpow.pop %v873
    %v875 = vmul.f32 %v831, 1.442695
    %v876 = vpow.pop %v875
    %v877 = vmul.f32 %v832, 1.442695
    %v878 = vpow.pop %v877
    %v879 = vmul.f32 %v833, 1.442695
    %v880 = vpow.pop %v879
    %v881 = vmul.f32 %v834, 1.442695
    %v882 = vpow.pop %v881
    %v883 = vmul.f32 %v835, 1.442695
    %v884 = vpow.pop %v883
    %v885 = vmul.f32 %v836, 1.442695
    %v886 = vpow.pop %v885
    %v887 = vmul.f32 %v837, 1.442695
    %v888 = vpow.pop %v887
    %v889 = vmul.f32 %v838, 1.442695
    %v890 = vpow.pop %v889
    %v891 = vmul.f32 %v839, 1.442695
    %v892 = vpow.pop %v891
    %v893 = vmul.f32 %v840, 1.442695
    %v894 = vpow.pop %v893
    %v895 = vmul.f32 %v841, 1.442695
    %v896 = vpow.pop %v895
    %v897 = vmul.f32 %v842, 1.442695
    %v898 = vpow.pop %v897
    %v899 = vmul.f32 %v843, 1.442695
    %v900 = vpow.pop %v899
    %v901 = vmul.f32 %v844, 1.442695
    %v902 = vpow.pop %v901
    %v903 = vmul.f32 %v845, 1.442695
    %v904 = vpow.pop %v903
    %v905 = vmul.f32 %v846, 1.442695
    %v906 = vpow.pop %v905
    %v907 = vmul.f32 %v847, 1.442695
    %v908 = vpow.pop %v907
    %v909 = vmul.f32 %v848, 1.442695
    %v910 = vpow.pop %v909
    %v911 = vmul.f32 %v849, 1.442695
    %v912 = vpow.pop %v911
    %v913 = vmul.f32 %v850, 1.442695
    %v914 = vpow.pop %v913
    %916 = vset.pattern.permute.xlu0 0
    %917 = vperm.xlu0 %916, %v787
    %v918 = vpop.permute.xlu0 %917
    %921 = vset.pattern.permute.xlu0 0
    %922 = vperm.xlu0 %921, %v788
    %v923 = vpop.permute.xlu0 %922
    %926 = vset.pattern.permute.xlu0 0
    %927 = vperm.xlu0 %926, %v789
    %v928 = vpop.permute.xlu0 %927
    %931 = vset.pattern.permute.xlu0 0
    %932 = vperm.xlu0 %931, %v790
    %v933 = vpop.permute.xlu0 %932
    %936 = vset.pattern.permute.xlu0 0
    %937 = vperm.xlu0 %936, %v791
    %v938 = vpop.permute.xlu0 %937
    %941 = vset.pattern.permute.xlu0 0
    %942 = vperm.xlu0 %941, %v792
    %v943 = vpop.permute.xlu0 %942
    %946 = vset.pattern.permute.xlu0 0
    %947 = vperm.xlu0 %946, %v793
    %v948 = vpop.permute.xlu0 %947
    %951 = vset.pattern.permute.xlu0 0
    %952 = vperm.xlu0 %951, %v794
    %v953 = vpop.permute.xlu0 %952
    %956 = vset.pattern.permute.xlu0 0
    %957 = vperm.xlu0 %956, %v795
    %v958 = vpop.permute.xlu0 %957
    %961 = vset.pattern.permute.xlu0 0
    %962 = vperm.xlu0 %961, %v796
    %v963 = vpop.permute.xlu0 %962
    %966 = vset.pattern.permute.xlu0 0
    %967 = vperm.xlu0 %966, %v797
    %v968 = vpop.permute.xlu0 %967
    %971 = vset.pattern.permute.xlu0 0
    %972 = vperm.xlu0 %971, %v798
    %v973 = vpop.permute.xlu0 %972
    %976 = vset.pattern.permute.xlu0 0
    %977 = vperm.xlu0 %976, %v799
    %v978 = vpop.permute.xlu0 %977
    %981 = vset.pattern.permute.xlu0 0
    %982 = vperm.xlu0 %981, %v800
    %v983 = vpop.permute.xlu0 %982
    %986 = vset.pattern.permute.xlu0 0
    %987 = vperm.xlu0 %986, %v801
    %v988 = vpop.permute.xlu0 %987
    %991 = vset.pattern.permute.xlu0 0
    %992 = vperm.xlu0 %991, %v802
    %v993 = vpop.permute.xlu0 %992
    %996 = vset.pattern.permute.xlu0 0
    %997 = vperm.xlu0 %996, %v803
    %v998 = vpop.permute.xlu0 %997
    %1001 = vset.pattern.permute.xlu0 0
    %1002 = vperm.xlu0 %1001, %v804
    %v1003 = vpop.permute.xlu0 %1002
    %1006 = vset.pattern.permute.xlu0 0
    %1007 = vperm.xlu0 %1006, %v805
    %v1008 = vpop.permute.xlu0 %1007
    %1011 = vset.pattern.permute.xlu0 0
    %1012 = vperm.xlu0 %1011, %v806
    %v1013 = vpop.permute.xlu0 %1012
    %1016 = vset.pattern.permute.xlu0 0
    %1017 = vperm.xlu0 %1016, %v807
    %v1018 = vpop.permute.xlu0 %1017
    %1021 = vset.pattern.permute.xlu0 0
    %1022 = vperm.xlu0 %1021, %v808
    %v1023 = vpop.permute.xlu0 %1022
    %1026 = vset.pattern.permute.xlu0 0
    %1027 = vperm.xlu0 %1026, %v809
    %v1028 = vpop.permute.xlu0 %1027
    %1031 = vset.pattern.permute.xlu0 0
    %1032 = vperm.xlu0 %1031, %v810
    %v1033 = vpop.permute.xlu0 %1032
    %1036 = vset.pattern.permute.xlu0 0
    %1037 = vperm.xlu0 %1036, %v811
    %v1038 = vpop.permute.xlu0 %1037
    %1041 = vset.pattern.permute.xlu0 0
    %1042 = vperm.xlu0 %1041, %v812
    %v1043 = vpop.permute.xlu0 %1042
    %1046 = vset.pattern.permute.xlu0 0
    %1047 = vperm.xlu0 %1046, %v813
    %v1048 = vpop.permute.xlu0 %1047
    %1051 = vset.pattern.permute.xlu0 0
    %1052 = vperm.xlu0 %1051, %v814
    %v1053 = vpop.permute.xlu0 %1052
    %1056 = vset.pattern.permute.xlu0 0
    %1057 = vperm.xlu0 %1056, %v815
    %v1058 = vpop.permute.xlu0 %1057
    %1061 = vset.pattern.permute.xlu0 0
    %1062 = vperm.xlu0 %1061, %v816
    %v1063 = vpop.permute.xlu0 %1062
    %1066 = vset.pattern.permute.xlu0 0
    %1067 = vperm.xlu0 %1066, %v817
    %v1068 = vpop.permute.xlu0 %1067
    %1071 = vset.pattern.permute.xlu0 0
    %1072 = vperm.xlu0 %1071, %v818
    %v1073 = vpop.permute.xlu0 %1072
    %v1075 = vsub.f32 %v659, %v918
    %v1076 = vsub.f32 %v660, %v923
    %v1077 = vsub.f32 %v661, %v928
    %v1078 = vsub.f32 %v662, %v933
    %v1079 = vsub.f32 %v663, %v938
    %v1080 = vsub.f32 %v664, %v943
    %v1081 = vsub.f32 %v665, %v948
    %v1082 = vsub.f32 %v666, %v953
    %v1083 = vsub.f32 %v667, %v958
    %v1084 = vsub.f32 %v668, %v963
    %v1085 = vsub.f32 %v669, %v968
    %v1086 = vsub.f32 %v670, %v973
    %v1087 = vsub.f32 %v671, %v978
    %v1088 = vsub.f32 %v672, %v983
    %v1089 = vsub.f32 %v673, %v988
    %v1090 = vsub.f32 %v674, %v993
    %v1091 = vsub.f32 %v675, %v998
    %v1092 = vsub.f32 %v676, %v1003
    %v1093 = vsub.f32 %v677, %v1008
    %v1094 = vsub.f32 %v678, %v1013
    %v1095 = vsub.f32 %v679, %v1018
    %v1096 = vsub.f32 %v680, %v1023
    %v1097 = vsub.f32 %v681, %v1028
    %v1098 = vsub.f32 %v682, %v1033
    %v1099 = vsub.f32 %v683, %v1038
    %v1100 = vsub.f32 %v684, %v1043
    %v1101 = vsub.f32 %v685, %v1048
    %v1102 = vsub.f32 %v686, %v1053
    %v1103 = vsub.f32 %v687, %v1058
    %v1104 = vsub.f32 %v688, %v1063
    %v1105 = vsub.f32 %v689, %v1068
    %v1106 = vsub.f32 %v690, %v1073
    %v1107 = vmul.f32 %v1075, 1.442695
    %v1108 = vpow.pop %v1107
    %v1109 = vmul.f32 %v1076, 1.442695
    %v1110 = vpow.pop %v1109
    %v1111 = vmul.f32 %v1077, 1.442695
    %v1112 = vpow.pop %v1111
    %v1113 = vmul.f32 %v1078, 1.442695
    %v1114 = vpow.pop %v1113
    %v1115 = vmul.f32 %v1079, 1.442695
    %v1116 = vpow.pop %v1115
    %v1117 = vmul.f32 %v1080, 1.442695
    %v1118 = vpow.pop %v1117
    %v1119 = vmul.f32 %v1081, 1.442695
    %v1120 = vpow.pop %v1119
    %v1121 = vmul.f32 %v1082, 1.442695
    %v1122 = vpow.pop %v1121
    %v1123 = vmul.f32 %v1083, 1.442695
    %v1124 = vpow.pop %v1123
    %v1125 = vmul.f32 %v1084, 1.442695
    %v1126 = vpow.pop %v1125
    %v1127 = vmul.f32 %v1085, 1.442695
    %v1128 = vpow.pop %v1127
    %v1129 = vmul.f32 %v1086, 1.442695
    %v1130 = vpow.pop %v1129
    %v1131 = vmul.f32 %v1087, 1.442695
    %v1132 = vpow.pop %v1131
    %v1133 = vmul.f32 %v1088, 1.442695
    %v1134 = vpow.pop %v1133
    %v1135 = vmul.f32 %v1089, 1.442695
    %v1136 = vpow.pop %v1135
    %v1137 = vmul.f32 %v1090, 1.442695
    %v1138 = vpow.pop %v1137
    %v1139 = vmul.f32 %v1091, 1.442695
    %v1140 = vpow.pop %v1139
    %v1141 = vmul.f32 %v1092, 1.442695
    %v1142 = vpow.pop %v1141
    %v1143 = vmul.f32 %v1093, 1.442695
    %v1144 = vpow.pop %v1143
    %v1145 = vmul.f32 %v1094, 1.442695
    %v1146 = vpow.pop %v1145
    %v1147 = vmul.f32 %v1095, 1.442695
    %v1148 = vpow.pop %v1147
    %v1149 = vmul.f32 %v1096, 1.442695
    %v1150 = vpow.pop %v1149
    %v1151 = vmul.f32 %v1097, 1.442695
    %v1152 = vpow.pop %v1151
    %v1153 = vmul.f32 %v1098, 1.442695
    %v1154 = vpow.pop %v1153
    %v1155 = vmul.f32 %v1099, 1.442695
    %v1156 = vpow.pop %v1155
    %v1157 = vmul.f32 %v1100, 1.442695
    %v1158 = vpow.pop %v1157
    %v1159 = vmul.f32 %v1101, 1.442695
    %v1160 = vpow.pop %v1159
    %v1161 = vmul.f32 %v1102, 1.442695
    %v1162 = vpow.pop %v1161
    %v1163 = vmul.f32 %v1103, 1.442695
    %v1164 = vpow.pop %v1163
    %v1165 = vmul.f32 %v1104, 1.442695
    %v1166 = vpow.pop %v1165
    %v1167 = vmul.f32 %v1105, 1.442695
    %v1168 = vpow.pop %v1167
    %v1169 = vmul.f32 %v1106, 1.442695
    %v1170 = vpow.pop %v1169
    %v1171 = vld [vmem:[#allocation3] sm:$0xff]
    %v1172 = vld [vmem:[#allocation3 + $0x8] sm:$0xff]
    %v1173 = vld [vmem:[#allocation3 + $0x10] sm:$0xff]
    %v1174 = vld [vmem:[#allocation3 + $0x18] sm:$0xff]
    %v1175 = vld [vmem:[#allocation3 + $0x20] sm:$0xff]
    %v1176 = vld [vmem:[#allocation3 + $0x28] sm:$0xff]
    %v1177 = vld [vmem:[#allocation3 + $0x30] sm:$0xff]
    %v1178 = vld [vmem:[#allocation3 + $0x38] sm:$0xff]
    %v1179 = vld [vmem:[#allocation3 + $0x40] sm:$0xff]
    %v1180 = vld [vmem:[#allocation3 + $0x48] sm:$0xff]
    %v1181 = vld [vmem:[#allocation3 + $0x50] sm:$0xff]
    %v1182 = vld [vmem:[#allocation3 + $0x58] sm:$0xff]
    %v1183 = vld [vmem:[#allocation3 + $0x60] sm:$0xff]
    %v1184 = vld [vmem:[#allocation3 + $0x68] sm:$0xff]
    %v1185 = vld [vmem:[#allocation3 + $0x70] sm:$0xff]
    %v1186 = vld [vmem:[#allocation3 + $0x78] sm:$0xff]
    %v1187 = vld [vmem:[#allocation3 + $0x80] sm:$0xff]
    %v1188 = vld [vmem:[#allocation3 + $0x88] sm:$0xff]
    %v1189 = vld [vmem:[#allocation3 + $0x90] sm:$0xff]
    %v1190 = vld [vmem:[#allocation3 + $0x98] sm:$0xff]
    %v1191 = vld [vmem:[#allocation3 + $0xa0] sm:$0xff]
    %v1192 = vld [vmem:[#allocation3 + $0xa8] sm:$0xff]
    %v1193 = vld [vmem:[#allocation3 + $0xb0] sm:$0xff]
    %v1194 = vld [vmem:[#allocation3 + $0xb8] sm:$0xff]
    %v1195 = vld [vmem:[#allocation3 + $0xc0] sm:$0xff]
    %v1196 = vld [vmem:[#allocation3 + $0xc8] sm:$0xff]
    %v1197 = vld [vmem:[#allocation3 + $0xd0] sm:$0xff]
    %v1198 = vld [vmem:[#allocation3 + $0xd8] sm:$0xff]
    %v1199 = vld [vmem:[#allocation3 + $0xe0] sm:$0xff]
    %v1200 = vld [vmem:[#allocation3 + $0xe8] sm:$0xff]
    %v1201 = vld [vmem:[#allocation3 + $0xf0] sm:$0xff]
    %v1202 = vld [vmem:[#allocation3 + $0xf8] sm:$0xff]
    %v1203 = vmul.f32 %v852, %v1171
    %v1204 = vmul.f32 %v854, %v1172
    %v1205 = vmul.f32 %v856, %v1173
    %v1206 = vmul.f32 %v858, %v1174
    %v1207 = vmul.f32 %v860, %v1175
    %v1208 = vmul.f32 %v862, %v1176
    %v1209 = vmul.f32 %v864, %v1177
    %v1210 = vmul.f32 %v866, %v1178
    %v1211 = vmul.f32 %v868, %v1179
    %v1212 = vmul.f32 %v870, %v1180
    %v1213 = vmul.f32 %v872, %v1181
    %v1214 = vmul.f32 %v874, %v1182
    %v1215 = vmul.f32 %v876, %v1183
    %v1216 = vmul.f32 %v878, %v1184
    %v1217 = vmul.f32 %v880, %v1185
    %v1218 = vmul.f32 %v882, %v1186
    %v1219 = vmul.f32 %v884, %v1187
    %v1220 = vmul.f32 %v886, %v1188
    %v1221 = vmul.f32 %v888, %v1189
    %v1222 = vmul.f32 %v890, %v1190
    %v1223 = vmul.f32 %v892, %v1191
    %v1224 = vmul.f32 %v894, %v1192
    %v1225 = vmul.f32 %v896, %v1193
    %v1226 = vmul.f32 %v898, %v1194
    %v1227 = vmul.f32 %v900, %v1195
    %v1228 = vmul.f32 %v902, %v1196
    %v1229 = vmul.f32 %v904, %v1197
    %v1230 = vmul.f32 %v906, %v1198
    %v1231 = vmul.f32 %v908, %v1199
    %v1232 = vmul.f32 %v910, %v1200
    %v1233 = vmul.f32 %v912, %v1201
    %v1234 = vmul.f32 %v914, %v1202
    %1235 = vadd.xlane.f32.xlu0 %v1108
    %v1236 = vpop.xlane.xlu0 %1235
    %1237 = vadd.xlane.f32.xlu0 %v1110
    %v1238 = vpop.xlane.xlu0 %1237
    %1239 = vadd.xlane.f32.xlu0 %v1112
    %v1240 = vpop.xlane.xlu0 %1239
    %1241 = vadd.xlane.f32.xlu0 %v1114
    %v1242 = vpop.xlane.xlu0 %1241
    %1243 = vadd.xlane.f32.xlu0 %v1116
    %v1244 = vpop.xlane.xlu0 %1243
    %1245 = vadd.xlane.f32.xlu0 %v1118
    %v1246 = vpop.xlane.xlu0 %1245
    %1247 = vadd.xlane.f32.xlu0 %v1120
    %v1248 = vpop.xlane.xlu0 %1247
    %1249 = vadd.xlane.f32.xlu0 %v1122
    %v1250 = vpop.xlane.xlu0 %1249
    %1251 = vadd.xlane.f32.xlu0 %v1124
    %v1252 = vpop.xlane.xlu0 %1251
    %1253 = vadd.xlane.f32.xlu0 %v1126
    %v1254 = vpop.xlane.xlu0 %1253
    %1255 = vadd.xlane.f32.xlu0 %v1128
    %v1256 = vpop.xlane.xlu0 %1255
    %1257 = vadd.xlane.f32.xlu0 %v1130
    %v1258 = vpop.xlane.xlu0 %1257
    %1259 = vadd.xlane.f32.xlu0 %v1132
    %v1260 = vpop.xlane.xlu0 %1259
    %1261 = vadd.xlane.f32.xlu0 %v1134
    %v1262 = vpop.xlane.xlu0 %1261
    %1263 = vadd.xlane.f32.xlu0 %v1136
    %v1264 = vpop.xlane.xlu0 %1263
    %1265 = vadd.xlane.f32.xlu0 %v1138
    %v1266 = vpop.xlane.xlu0 %1265
    %1267 = vadd.xlane.f32.xlu0 %v1140
    %v1268 = vpop.xlane.xlu0 %1267
    %1269 = vadd.xlane.f32.xlu0 %v1142
    %v1270 = vpop.xlane.xlu0 %1269
    %1271 = vadd.xlane.f32.xlu0 %v1144
    %v1272 = vpop.xlane.xlu0 %1271
    %1273 = vadd.xlane.f32.xlu0 %v1146
    %v1274 = vpop.xlane.xlu0 %1273
    %1275 = vadd.xlane.f32.xlu0 %v1148
    %v1276 = vpop.xlane.xlu0 %1275
    %1277 = vadd.xlane.f32.xlu0 %v1150
    %v1278 = vpop.xlane.xlu0 %1277
    %1279 = vadd.xlane.f32.xlu0 %v1152
    %v1280 = vpop.xlane.xlu0 %1279
    %1281 = vadd.xlane.f32.xlu0 %v1154
    %v1282 = vpop.xlane.xlu0 %1281
    %1283 = vadd.xlane.f32.xlu0 %v1156
    %v1284 = vpop.xlane.xlu0 %1283
    %1285 = vadd.xlane.f32.xlu0 %v1158
    %v1286 = vpop.xlane.xlu0 %1285
    %1287 = vadd.xlane.f32.xlu0 %v1160
    %v1288 = vpop.xlane.xlu0 %1287
    %1289 = vadd.xlane.f32.xlu0 %v1162
    %v1290 = vpop.xlane.xlu0 %1289
    %1291 = vadd.xlane.f32.xlu0 %v1164
    %v1292 = vpop.xlane.xlu0 %1291
    %1293 = vadd.xlane.f32.xlu0 %v1166
    %v1294 = vpop.xlane.xlu0 %1293
    %1295 = vadd.xlane.f32.xlu0 %v1168
    %v1296 = vpop.xlane.xlu0 %1295
    %1297 = vadd.xlane.f32.xlu0 %v1170
    %v1298 = vpop.xlane.xlu0 %1297
    %v1299 = vadd.f32 %v1203, %v1236
    %v1300 = vadd.f32 %v1204, %v1238
    %v1301 = vadd.f32 %v1205, %v1240
    %v1302 = vadd.f32 %v1206, %v1242
    %v1303 = vadd.f32 %v1207, %v1244
    %v1304 = vadd.f32 %v1208, %v1246
    %v1305 = vadd.f32 %v1209, %v1248
    %v1306 = vadd.f32 %v1210, %v1250
    %v1307 = vadd.f32 %v1211, %v1252
    %v1308 = vadd.f32 %v1212, %v1254
    %v1309 = vadd.f32 %v1213, %v1256
    %v1310 = vadd.f32 %v1214, %v1258
    %v1311 = vadd.f32 %v1215, %v1260
    %v1312 = vadd.f32 %v1216, %v1262
    %v1313 = vadd.f32 %v1217, %v1264
    %v1314 = vadd.f32 %v1218, %v1266
    %v1315 = vadd.f32 %v1219, %v1268
    %v1316 = vadd.f32 %v1220, %v1270
    %v1317 = vadd.f32 %v1221, %v1272
    %v1318 = vadd.f32 %v1222, %v1274
    %v1319 = vadd.f32 %v1223, %v1276
    %v1320 = vadd.f32 %v1224, %v1278
    %v1321 = vadd.f32 %v1225, %v1280
    %v1322 = vadd.f32 %v1226, %v1282
    %v1323 = vadd.f32 %v1227, %v1284
    %v1324 = vadd.f32 %v1228, %v1286
    %v1325 = vadd.f32 %v1229, %v1288
    %v1326 = vadd.f32 %v1230, %v1290
    %v1327 = vadd.f32 %v1231, %v1292
    %v1328 = vadd.f32 %v1232, %v1294
    %v1329 = vadd.f32 %v1233, %v1296
    %v1330 = vadd.f32 %v1234, %v1298
    %vm1331 = vcmask 7168
    %1332 = vst.msk [vmem:[#allocation3] sm:$0xff] %vm1331, %v1299
    %1333 = vst.msk [vmem:[#allocation3 + $0x8] sm:$0xff] %vm1331, %v1300
    %1334 = vst.msk [vmem:[#allocation3 + $0x10] sm:$0xff] %vm1331, %v1301
    %1335 = vst.msk [vmem:[#allocation3 + $0x18] sm:$0xff] %vm1331, %v1302
    %1336 = vst.msk [vmem:[#allocation3 + $0x20] sm:$0xff] %vm1331, %v1303
    %1337 = vst.msk [vmem:[#allocation3 + $0x28] sm:$0xff] %vm1331, %v1304
    %1338 = vst.msk [vmem:[#allocation3 + $0x30] sm:$0xff] %vm1331, %v1305
    %1339 = vst.msk [vmem:[#allocation3 + $0x38] sm:$0xff] %vm1331, %v1306
    %1340 = vst.msk [vmem:[#allocation3 + $0x40] sm:$0xff] %vm1331, %v1307
    %1341 = vst.msk [vmem:[#allocation3 + $0x48] sm:$0xff] %vm1331, %v1308
    %1342 = vst.msk [vmem:[#allocation3 + $0x50] sm:$0xff] %vm1331, %v1309
    %1343 = vst.msk [vmem:[#allocation3 + $0x58] sm:$0xff] %vm1331, %v1310
    %1344 = vst.msk [vmem:[#allocation3 + $0x60] sm:$0xff] %vm1331, %v1311
    %1345 = vst.msk [vmem:[#allocation3 + $0x68] sm:$0xff] %vm1331, %v1312
    %1346 = vst.msk [vmem:[#allocation3 + $0x70] sm:$0xff] %vm1331, %v1313
    %1347 = vst.msk [vmem:[#allocation3 + $0x78] sm:$0xff] %vm1331, %v1314
    %1348 = vst.msk [vmem:[#allocation3 + $0x80] sm:$0xff] %vm1331, %v1315
    %1349 = vst.msk [vmem:[#allocation3 + $0x88] sm:$0xff] %vm1331, %v1316
    %1350 = vst.msk [vmem:[#allocation3 + $0x90] sm:$0xff] %vm1331, %v1317
    %1351 = vst.msk [vmem:[#allocation3 + $0x98] sm:$0xff] %vm1331, %v1318
    %1352 = vst.msk [vmem:[#allocation3 + $0xa0] sm:$0xff] %vm1331, %v1319
    %1353 = vst.msk [vmem:[#allocation3 + $0xa8] sm:$0xff] %vm1331, %v1320
    %1354 = vst.msk [vmem:[#allocation3 + $0xb0] sm:$0xff] %vm1331, %v1321
    %1355 = vst.msk [vmem:[#allocation3 + $0xb8] sm:$0xff] %vm1331, %v1322
    %1356 = vst.msk [vmem:[#allocation3 + $0xc0] sm:$0xff] %vm1331, %v1323
    %1357 = vst.msk [vmem:[#allocation3 + $0xc8] sm:$0xff] %vm1331, %v1324
    %1358 = vst.msk [vmem:[#allocation3 + $0xd0] sm:$0xff] %vm1331, %v1325
    %1359 = vst.msk [vmem:[#allocation3 + $0xd8] sm:$0xff] %vm1331, %v1326
    %1360 = vst.msk [vmem:[#allocation3 + $0xe0] sm:$0xff] %vm1331, %v1327
    %1361 = vst.msk [vmem:[#allocation3 + $0xe8] sm:$0xff] %vm1331, %v1328
    %1362 = vst.msk [vmem:[#allocation3 + $0xf0] sm:$0xff] %vm1331, %v1329
    %1363 = vst.msk [vmem:[#allocation3 + $0xf8] sm:$0xff] %vm1331, %v1330
    %v1364 = vld [vmem:[#allocation4] sm:$0xff]
    %v1365 = vld [vmem:[#allocation4 + $0x8] sm:$0xff]
    %v1366 = vld [vmem:[#allocation4 + $0x10] sm:$0xff]
    %v1367 = vld [vmem:[#allocation4 + $0x18] sm:$0xff]
    %v1368 = vld [vmem:[#allocation4 + $0x20] sm:$0xff]
    %v1369 = vld [vmem:[#allocation4 + $0x28] sm:$0xff]
    %v1370 = vld [vmem:[#allocation4 + $0x30] sm:$0xff]
    %v1371 = vld [vmem:[#allocation4 + $0x38] sm:$0xff]
    %v1372 = vld [vmem:[#allocation4 + $0x40] sm:$0xff]
    %v1373 = vld [vmem:[#allocation4 + $0x48] sm:$0xff]
    %v1374 = vld [vmem:[#allocation4 + $0x50] sm:$0xff]
    %v1375 = vld [vmem:[#allocation4 + $0x58] sm:$0xff]
    %v1376 = vld [vmem:[#allocation4 + $0x60] sm:$0xff]
    %v1377 = vld [vmem:[#allocation4 + $0x68] sm:$0xff]
    %v1378 = vld [vmem:[#allocation4 + $0x70] sm:$0xff]
    %v1379 = vld [vmem:[#allocation4 + $0x78] sm:$0xff]
    %v1380 = vld [vmem:[#allocation4 + $0x80] sm:$0xff]
    %v1381 = vld [vmem:[#allocation4 + $0x88] sm:$0xff]
    %v1382 = vld [vmem:[#allocation4 + $0x90] sm:$0xff]
    %v1383 = vld [vmem:[#allocation4 + $0x98] sm:$0xff]
    %v1384 = vld [vmem:[#allocation4 + $0xa0] sm:$0xff]
    %v1385 = vld [vmem:[#allocation4 + $0xa8] sm:$0xff]
    %v1386 = vld [vmem:[#allocation4 + $0xb0] sm:$0xff]
    %v1387 = vld [vmem:[#allocation4 + $0xb8] sm:$0xff]
    %v1388 = vld [vmem:[#allocation4 + $0xc0] sm:$0xff]
    %v1389 = vld [vmem:[#allocation4 + $0xc8] sm:$0xff]
    %v1390 = vld [vmem:[#allocation4 + $0xd0] sm:$0xff]
    %v1391 = vld [vmem:[#allocation4 + $0xd8] sm:$0xff]
    %v1392 = vld [vmem:[#allocation4 + $0xe0] sm:$0xff]
    %v1393 = vld [vmem:[#allocation4 + $0xe8] sm:$0xff]
    %v1394 = vld [vmem:[#allocation4 + $0xf0] sm:$0xff]
    %v1395 = vld [vmem:[#allocation4 + $0xf8] sm:$0xff]
    %1397 = vset.pattern.permute.xlu0 0
    %1398 = vperm.xlu0 %1397, %v852
    %v1399 = vpop.permute.xlu0 %1398
    %1402 = vset.pattern.permute.xlu0 0
    %1403 = vperm.xlu0 %1402, %v854
    %v1404 = vpop.permute.xlu0 %1403
    %1407 = vset.pattern.permute.xlu0 0
    %1408 = vperm.xlu0 %1407, %v856
    %v1409 = vpop.permute.xlu0 %1408
    %1412 = vset.pattern.permute.xlu0 0
    %1413 = vperm.xlu0 %1412, %v858
    %v1414 = vpop.permute.xlu0 %1413
    %1417 = vset.pattern.permute.xlu0 0
    %1418 = vperm.xlu0 %1417, %v860
    %v1419 = vpop.permute.xlu0 %1418
    %1422 = vset.pattern.permute.xlu0 0
    %1423 = vperm.xlu0 %1422, %v862
    %v1424 = vpop.permute.xlu0 %1423
    %1427 = vset.pattern.permute.xlu0 0
    %1428 = vperm.xlu0 %1427, %v864
    %v1429 = vpop.permute.xlu0 %1428
    %1432 = vset.pattern.permute.xlu0 0
    %1433 = vperm.xlu0 %1432, %v866
    %v1434 = vpop.permute.xlu0 %1433
    %1437 = vset.pattern.permute.xlu0 0
    %1438 = vperm.xlu0 %1437, %v868
    %v1439 = vpop.permute.xlu0 %1438
    %1442 = vset.pattern.permute.xlu0 0
    %1443 = vperm.xlu0 %1442, %v870
    %v1444 = vpop.permute.xlu0 %1443
    %1447 = vset.pattern.permute.xlu0 0
    %1448 = vperm.xlu0 %1447, %v872
    %v1449 = vpop.permute.xlu0 %1448
    %1452 = vset.pattern.permute.xlu0 0
    %1453 = vperm.xlu0 %1452, %v874
    %v1454 = vpop.permute.xlu0 %1453
    %1457 = vset.pattern.permute.xlu0 0
    %1458 = vperm.xlu0 %1457, %v876
    %v1459 = vpop.permute.xlu0 %1458
    %1462 = vset.pattern.permute.xlu0 0
    %1463 = vperm.xlu0 %1462, %v878
    %v1464 = vpop.permute.xlu0 %1463
    %1467 = vset.pattern.permute.xlu0 0
    %1468 = vperm.xlu0 %1467, %v880
    %v1469 = vpop.permute.xlu0 %1468
    %1472 = vset.pattern.permute.xlu0 0
    %1473 = vperm.xlu0 %1472, %v882
    %v1474 = vpop.permute.xlu0 %1473
    %1477 = vset.pattern.permute.xlu0 0
    %1478 = vperm.xlu0 %1477, %v884
    %v1479 = vpop.permute.xlu0 %1478
    %1482 = vset.pattern.permute.xlu0 0
    %1483 = vperm.xlu0 %1482, %v886
    %v1484 = vpop.permute.xlu0 %1483
    %1487 = vset.pattern.permute.xlu0 0
    %1488 = vperm.xlu0 %1487, %v888
    %v1489 = vpop.permute.xlu0 %1488
    %1492 = vset.pattern.permute.xlu0 0
    %1493 = vperm.xlu0 %1492, %v890
    %v1494 = vpop.permute.xlu0 %1493
    %1497 = vset.pattern.permute.xlu0 0
    %1498 = vperm.xlu0 %1497, %v892
    %v1499 = vpop.permute.xlu0 %1498
    %1502 = vset.pattern.permute.xlu0 0
    %1503 = vperm.xlu0 %1502, %v894
    %v1504 = vpop.permute.xlu0 %1503
    %1507 = vset.pattern.permute.xlu0 0
    %1508 = vperm.xlu0 %1507, %v896
    %v1509 = vpop.permute.xlu0 %1508
    %1512 = vset.pattern.permute.xlu0 0
    %1513 = vperm.xlu0 %1512, %v898
    %v1514 = vpop.permute.xlu0 %1513
    %1517 = vset.pattern.permute.xlu0 0
    %1518 = vperm.xlu0 %1517, %v900
    %v1519 = vpop.permute.xlu0 %1518
    %1522 = vset.pattern.permute.xlu0 0
    %1523 = vperm.xlu0 %1522, %v902
    %v1524 = vpop.permute.xlu0 %1523
    %1527 = vset.pattern.permute.xlu0 0
    %1528 = vperm.xlu0 %1527, %v904
    %v1529 = vpop.permute.xlu0 %1528
    %1532 = vset.pattern.permute.xlu0 0
    %1533 = vperm.xlu0 %1532, %v906
    %v1534 = vpop.permute.xlu0 %1533
    %1537 = vset.pattern.permute.xlu0 0
    %1538 = vperm.xlu0 %1537, %v908
    %v1539 = vpop.permute.xlu0 %1538
    %1542 = vset.pattern.permute.xlu0 0
    %1543 = vperm.xlu0 %1542, %v910
    %v1544 = vpop.permute.xlu0 %1543
    %1547 = vset.pattern.permute.xlu0 0
    %1548 = vperm.xlu0 %1547, %v912
    %v1549 = vpop.permute.xlu0 %1548
    %1552 = vset.pattern.permute.xlu0 0
    %1553 = vperm.xlu0 %1552, %v914
    %v1554 = vpop.permute.xlu0 %1553
    %v1556 = vmul.f32 %v1399, %v1364
    %v1557 = vmul.f32 %v1404, %v1365
    %v1558 = vmul.f32 %v1409, %v1366
    %v1559 = vmul.f32 %v1414, %v1367
    %v1560 = vmul.f32 %v1419, %v1368
    %v1561 = vmul.f32 %v1424, %v1369
    %v1562 = vmul.f32 %v1429, %v1370
    %v1563 = vmul.f32 %v1434, %v1371
    %v1564 = vmul.f32 %v1439, %v1372
    %v1565 = vmul.f32 %v1444, %v1373
    %v1566 = vmul.f32 %v1449, %v1374
    %v1567 = vmul.f32 %v1454, %v1375
    %v1568 = vmul.f32 %v1459, %v1376
    %v1569 = vmul.f32 %v1464, %v1377
    %v1570 = vmul.f32 %v1469, %v1378
    %v1571 = vmul.f32 %v1474, %v1379
    %v1572 = vmul.f32 %v1479, %v1380
    %v1573 = vmul.f32 %v1484, %v1381
    %v1574 = vmul.f32 %v1489, %v1382
    %v1575 = vmul.f32 %v1494, %v1383
    %v1576 = vmul.f32 %v1499, %v1384
    %v1577 = vmul.f32 %v1504, %v1385
    %v1578 = vmul.f32 %v1509, %v1386
    %v1579 = vmul.f32 %v1514, %v1387
    %v1580 = vmul.f32 %v1519, %v1388
    %v1581 = vmul.f32 %v1524, %v1389
    %v1582 = vmul.f32 %v1529, %v1390
    %v1583 = vmul.f32 %v1534, %v1391
    %v1584 = vmul.f32 %v1539, %v1392
    %v1585 = vmul.f32 %v1544, %v1393
    %v1586 = vmul.f32 %v1549, %v1394
    %v1587 = vmul.f32 %v1554, %v1395
    %v1588 = vpack.c.bf16 %v1110, %v1108
    %v1589 = vpack.c.bf16 %v1114, %v1112
    %v1590 = vpack.c.bf16 %v1118, %v1116
    %v1591 = vpack.c.bf16 %v1122, %v1120
    %v1592 = vpack.c.bf16 %v1126, %v1124
    %v1593 = vpack.c.bf16 %v1130, %v1128
    %v1594 = vpack.c.bf16 %v1134, %v1132
    %v1595 = vpack.c.bf16 %v1138, %v1136
    %v1596 = vpack.c.bf16 %v1142, %v1140
    %v1597 = vpack.c.bf16 %v1146, %v1144
    %v1598 = vpack.c.bf16 %v1150, %v1148
    %v1599 = vpack.c.bf16 %v1154, %v1152
    %v1600 = vpack.c.bf16 %v1158, %v1156
    %v1601 = vpack.c.bf16 %v1162, %v1160
    %v1602 = vpack.c.bf16 %v1166, %v1164
    %v1603 = vpack.c.bf16 %v1170, %v1168
    %v1604 = vld [vmem:[%s2] sm:$0xf]
    %v1605 = vld [vmem:[%s2 + $0x4] sm:$0xf]
    %v1606 = vld [vmem:[%s2 + $0x8] sm:$0xf]
    %v1607 = vld [vmem:[%s2 + $0xc] sm:$0xf]
    %v1608 = vld [vmem:[%s2 + $0x10] sm:$0xf]
    %v1609 = vld [vmem:[%s2 + $0x14] sm:$0xf]
    %v1610 = vld [vmem:[%s2 + $0x18] sm:$0xf]
    %v1611 = vld [vmem:[%s2 + $0x1c] sm:$0xf]
    %v1612 = vld [vmem:[%s2 + $0x20] sm:$0xf]
    %v1613 = vld [vmem:[%s2 + $0x24] sm:$0xf]
    %v1614 = vld [vmem:[%s2 + $0x28] sm:$0xf]
    %v1615 = vld [vmem:[%s2 + $0x2c] sm:$0xf]
    %v1616 = vld [vmem:[%s2 + $0x30] sm:$0xf]
    %v1617 = vld [vmem:[%s2 + $0x34] sm:$0xf]
    %v1618 = vld [vmem:[%s2 + $0x38] sm:$0xf]
    %v1619 = vld [vmem:[%s2 + $0x3c] sm:$0xf]
    %v1620 = vld [vmem:[%s2 + $0x40] sm:$0xf]
    %v1621 = vld [vmem:[%s2 + $0x44] sm:$0xf]
    %v1622 = vld [vmem:[%s2 + $0x48] sm:$0xf]
    %v1623 = vld [vmem:[%s2 + $0x4c] sm:$0xf]
    %v1624 = vld [vmem:[%s2 + $0x50] sm:$0xf]
    %v1625 = vld [vmem:[%s2 + $0x54] sm:$0xf]
    %v1626 = vld [vmem:[%s2 + $0x58] sm:$0xf]
    %v1627 = vld [vmem:[%s2 + $0x5c] sm:$0xf]
    %v1628 = vld [vmem:[%s2 + $0x60] sm:$0xf]
    %v1629 = vld [vmem:[%s2 + $0x64] sm:$0xf]
    %v1630 = vld [vmem:[%s2 + $0x68] sm:$0xf]
    %v1631 = vld [vmem:[%s2 + $0x6c] sm:$0xf]
    %v1632 = vld [vmem:[%s2 + $0x70] sm:$0xf]
    %v1633 = vld [vmem:[%s2 + $0x74] sm:$0xf]
    %v1634 = vld [vmem:[%s2 + $0x78] sm:$0xf]
    %v1635 = vld [vmem:[%s2 + $0x7c] sm:$0xf]
    %v1652 = vunpack.c.l.b16 %v1604
    %v1653 = vunpack.c.l.b16 %v1605
    %v1654 = vunpack.c.l.b16 %v1606
    %v1655 = vunpack.c.l.b16 %v1607
    %v1656 = vunpack.c.l.b16 %v1608
    %v1657 = vunpack.c.l.b16 %v1609
    %v1658 = vunpack.c.l.b16 %v1610
    %v1659 = vunpack.c.l.b16 %v1611
    %v1660 = vunpack.c.l.b16 %v1612
    %v1661 = vunpack.c.l.b16 %v1613
    %v1662 = vunpack.c.l.b16 %v1614
    %v1663 = vunpack.c.l.b16 %v1615
    %v1664 = vunpack.c.l.b16 %v1616
    %v1665 = vunpack.c.l.b16 %v1617
    %v1666 = vunpack.c.l.b16 %v1618
    %v1667 = vunpack.c.l.b16 %v1619
    %v1668 = vpack.c.b16 %v1653, %v1652
    %v1669 = vpack.c.b16 %v1655, %v1654
    %v1670 = vpack.c.b16 %v1657, %v1656
    %v1671 = vpack.c.b16 %v1659, %v1658
    %v1672 = vpack.c.b16 %v1661, %v1660
    %v1673 = vpack.c.b16 %v1663, %v1662
    %v1674 = vpack.c.b16 %v1665, %v1664
    %v1675 = vpack.c.b16 %v1667, %v1666
    %1684 = vmatprep.subr.bf16.mxu0 0
    %1685 = vmatpush1.bf16.msra.mxu0 %v1668
    %1686 = vmatprep.subr.bf16.mxu0 0
    %1687 = vmatpush1.bf16.msra.mxu0 %v1669
    %1688 = vmatprep.subr.bf16.mxu0 0
    %1689 = vmatpush1.bf16.msra.mxu0 %v1670
    %1690 = vmatprep.subr.bf16.mxu0 0
    %1691 = vmatpush1.bf16.msra.mxu0 %v1671
    %1692 = vmatprep.subr.bf16.mxu0 0
    %1693 = vmatpush1.bf16.msra.mxu0 %v1672
    %1694 = vmatprep.subr.bf16.mxu0 0
    %1695 = vmatpush1.bf16.msra.mxu0 %v1673
    %1696 = vmatprep.subr.bf16.mxu0 0
    %1697 = vmatpush1.bf16.msra.mxu0 %v1674
    %1698 = vmatprep.subr.bf16.mxu0 0
    %1699 = vmatpush1.bf16.msra.mxu0 %v1675
    %1700 = vmatprep.subr.bf16.mxu0 0
    %1701 = vmatpush1.bf16.msra.mxu0 0
    %1702 = vmatprep.subr.bf16.mxu0 0
    %1703 = vmatpush1.bf16.msra.mxu0 0
    %1704 = vmatprep.subr.bf16.mxu0 0
    %1705 = vmatpush1.bf16.msra.mxu0 0
    %1706 = vmatprep.subr.bf16.mxu0 0
    %1707 = vmatpush1.bf16.msra.mxu0 0
    %1708 = vmatprep.subr.bf16.mxu0 0
    %1709 = vmatpush1.bf16.msra.mxu0 0
    %1710 = vmatprep.subr.bf16.mxu0 0
    %1711 = vmatpush1.bf16.msra.mxu0 0
    %1712 = vmatprep.subr.bf16.mxu0 0
    %1713 = vmatpush1.bf16.msra.mxu0 0
    %1714 = vmatprep.subr.bf16.mxu0 0
    %1715 = vmatpush1.bf16.msra.mxu0 0
    %1716 = vmatprep.mubr.bf16.mxu0 0
    %1717 = vmatmul.mubr.bf16.gmra.mrb[0].mxu0 %v1588
    %v1718 = vpop.f32.mrb[0].mxu0
    %v1719 = vadd.f32 0.0, %v1718
    %v1720 = vpop.f32.mrb[0].mxu0
    %v1721 = vpop.f32.mrb[0].mxu0
    %v1722 = vadd.f32 0.0, %v1721
    %v1723 = vpop.f32.mrb[0].mxu0
    %1724 = vmatprep.mubr.bf16.mxu0 0
    %1725 = vmatmul.mubr.bf16.gmra.mrb[0].mxu0 %v1589
    %v1726 = vpop.f32.mrb[0].mxu0
    %v1727 = vadd.f32 0.0, %v1726
    %v1728 = vpop.f32.mrb[0].mxu0
    %v1729 = vpop.f32.mrb[0].mxu0
    %v1730 = vadd.f32 0.0, %v1729
    %v1731 = vpop.f32.mrb[0].mxu0
    %1732 = vmatprep.mubr.bf16.mxu0 0
    %1733 = vmatmul.mubr.bf16.gmra.mrb[0].mxu0 %v1590
    %v1734 = vpop.f32.mrb[0].mxu0
    %v1735 = vadd.f32 0.0, %v1734
    %v1736 = vpop.f32.mrb[0].mxu0
    %v1737 = vpop.f32.mrb[0].mxu0
    %v1738 = vadd.f32 0.0, %v1737
    %v1739 = vpop.f32.mrb[0].mxu0
    %1740 = vmatprep.mubr.bf16.mxu0 0
    %1741 = vmatmul.mubr.bf16.gmra.mrb[0].mxu0 %v1591
    %v1742 = vpop.f32.mrb[0].mxu0
    %v1743 = vadd.f32 0.0, %v1742
    %v1744 = vpop.f32.mrb[0].mxu0
    %v1745 = vpop.f32.mrb[0].mxu0
    %v1746 = vadd.f32 0.0, %v1745
    %v1747 = vpop.f32.mrb[0].mxu0
    %1748 = vmatprep.mubr.bf16.mxu0 0
    %1749 = vmatmul.mubr.bf16.gmra.mrb[0].mxu0 %v1592
    %v1750 = vpop.f32.mrb[0].mxu0
    %v1751 = vadd.f32 0.0, %v1750
    %v1752 = vpop.f32.mrb[0].mxu0
    %v1753 = vpop.f32.mrb[0].mxu0
    %v1754 = vadd.f32 0.0, %v1753
    %v1755 = vpop.f32.mrb[0].mxu0
    %1756 = vmatprep.mubr.bf16.mxu0 0
    %1757 = vmatmul.mubr.bf16.gmra.mrb[0].mxu0 %v1593
    %v1758 = vpop.f32.mrb[0].mxu0
    %v1759 = vadd.f32 0.0, %v1758
    %v1760 = vpop.f32.mrb[0].mxu0
    %v1761 = vpop.f32.mrb[0].mxu0
    %v1762 = vadd.f32 0.0, %v1761
    %v1763 = vpop.f32.mrb[0].mxu0
    %1764 = vmatprep.mubr.bf16.mxu0 0
    %1765 = vmatmul.mubr.bf16.gmra.mrb[0].mxu0 %v1594
    %v1766 = vpop.f32.mrb[0].mxu0
    %v1767 = vadd.f32 0.0, %v1766
    %v1768 = vpop.f32.mrb[0].mxu0
    %v1769 = vpop.f32.mrb[0].mxu0
    %v1770 = vadd.f32 0.0, %v1769
    %v1771 = vpop.f32.mrb[0].mxu0
    %1772 = vmatprep.mubr.bf16.mxu0 0
    %1773 = vmatmul.mubr.bf16.gmra.mrb[0].mxu0 %v1595
    %v1774 = vpop.f32.mrb[0].mxu0
    %v1775 = vadd.f32 0.0, %v1774
    %v1776 = vpop.f32.mrb[0].mxu0
    %v1777 = vpop.f32.mrb[0].mxu0
    %v1778 = vadd.f32 0.0, %v1777
    %v1779 = vpop.f32.mrb[0].mxu0
    %1780 = vdwg.mxu0
    %v1797 = vunpack.c.l.b16 %v1620
    %v1798 = vunpack.c.l.b16 %v1621
    %v1799 = vunpack.c.l.b16 %v1622
    %v1800 = vunpack.c.l.b16 %v1623
    %v1801 = vunpack.c.l.b16 %v1624
    %v1802 = vunpack.c.l.b16 %v1625
    %v1803 = vunpack.c.l.b16 %v1626
    %v1804 = vunpack.c.l.b16 %v1627
    %v1805 = vunpack.c.l.b16 %v1628
    %v1806 = vunpack.c.l.b16 %v1629
    %v1807 = vunpack.c.l.b16 %v1630
    %v1808 = vunpack.c.l.b16 %v1631
    %v1809 = vunpack.c.l.b16 %v1632
    %v1810 = vunpack.c.l.b16 %v1633
    %v1811 = vunpack.c.l.b16 %v1634
    %v1812 = vunpack.c.l.b16 %v1635
    %v1813 = vpack.c.b16 %v1798, %v1797
    %v1814 = vpack.c.b16 %v1800, %v1799
    %v1815 = vpack.c.b16 %v1802, %v1801
    %v1816 = vpack.c.b16 %v1804, %v1803
    %v1817 = vpack.c.b16 %v1806, %v1805
    %v1818 = vpack.c.b16 %v1808, %v1807
    %v1819 = vpack.c.b16 %v1810, %v1809
    %v1820 = vpack.c.b16 %v1812, %v1811
    %1829 = vmatprep.subr.bf16.mxu0 0
    %1830 = vmatpush1.bf16.msra.mxu0 %v1813
    %1831 = vmatprep.subr.bf16.mxu0 0
    %1832 = vmatpush1.bf16.msra.mxu0 %v1814
    %1833 = vmatprep.subr.bf16.mxu0 0
    %1834 = vmatpush1.bf16.msra.mxu0 %v1815
    %1835 = vmatprep.subr.bf16.mxu0 0
    %1836 = vmatpush1.bf16.msra.mxu0 %v1816
    %1837 = vmatprep.subr.bf16.mxu0 0
    %1838 = vmatpush1.bf16.msra.mxu0 %v1817
    %1839 = vmatprep.subr.bf16.mxu0 0
    %1840 = vmatpush1.bf16.msra.mxu0 %v1818
    %1841 = vmatprep.subr.bf16.mxu0 0
    %1842 = vmatpush1.bf16.msra.mxu0 %v1819
    %1843 = vmatprep.subr.bf16.mxu0 0
    %1844 = vmatpush1.bf16.msra.mxu0 %v1820
    %1845 = vmatprep.subr.bf16.mxu0 0
    %1846 = vmatpush1.bf16.msra.mxu0 0
    %1847 = vmatprep.subr.bf16.mxu0 0
    %1848 = vmatpush1.bf16.msra.mxu0 0
    %1849 = vmatprep.subr.bf16.mxu0 0
    %1850 = vmatpush1.bf16.msra.mxu0 0
    %1851 = vmatprep.subr.bf16.mxu0 0
    %1852 = vmatpush1.bf16.msra.mxu0 0
    %1853 = vmatprep.subr.bf16.mxu0 0
    %1854 = vmatpush1.bf16.msra.mxu0 0
    %1855 = vmatprep.subr.bf16.mxu0 0
    %1856 = vmatpush1.bf16.msra.mxu0 0
    %1857 = vmatprep.subr.bf16.mxu0 0
    %1858 = vmatpush1.bf16.msra.mxu0 0
    %1859 = vmatprep.subr.bf16.mxu0 0
    %1860 = vmatpush1.bf16.msra.mxu0 0
    %1861 = vmatprep.mubr.bf16.mxu0 0
    %1862 = vmatmul.mubr.bf16.gmra.mrb[0].mxu0 %v1596
    %v1863 = vpop.f32.mrb[0].mxu0
    %v1864 = vadd.f32 0.0, %v1863
    %v1865 = vpop.f32.mrb[0].mxu0
    %v1866 = vpop.f32.mrb[0].mxu0
    %v1867 = vadd.f32 0.0, %v1866
    %v1868 = vpop.f32.mrb[0].mxu0
    %1869 = vmatprep.mubr.bf16.mxu0 0
    %1870 = vmatmul.mubr.bf16.gmra.mrb[0].mxu0 %v1597
    %v1871 = vpop.f32.mrb[0].mxu0
    %v1872 = vadd.f32 0.0, %v1871
    %v1873 = vpop.f32.mrb[0].mxu0
    %v1874 = vpop.f32.mrb[0].mxu0
    %v1875 = vadd.f32 0.0, %v1874
    %v1876 = vpop.f32.mrb[0].mxu0
    %1877 = vmatprep.mubr.bf16.mxu0 0
    %1878 = vmatmul.mubr.bf16.gmra.mrb[0].mxu0 %v1598
    %v1879 = vpop.f32.mrb[0].mxu0
    %v1880 = vadd.f32 0.0, %v1879
    %v1881 = vpop.f32.mrb[0].mxu0
    %v1882 = vpop.f32.mrb[0].mxu0
    %v1883 = vadd.f32 0.0, %v1882
    %v1884 = vpop.f32.mrb[0].mxu0
    %1885 = vmatprep.mubr.bf16.mxu0 0
    %1886 = vmatmul.mubr.bf16.gmra.mrb[0].mxu0 %v1599
    %v1887 = vpop.f32.mrb[0].mxu0
    %v1888 = vadd.f32 0.0, %v1887
    %v1889 = vpop.f32.mrb[0].mxu0
    %v1890 = vpop.f32.mrb[0].mxu0
    %v1891 = vadd.f32 0.0, %v1890
    %v1892 = vpop.f32.mrb[0].mxu0
    %1893 = vmatprep.mubr.bf16.mxu0 0
    %1894 = vmatmul.mubr.bf16.gmra.mrb[0].mxu0 %v1600
    %v1895 = vpop.f32.mrb[0].mxu0
    %v1896 = vadd.f32 0.0, %v1895
    %v1897 = vpop.f32.mrb[0].mxu0
    %v1898 = vpop.f32.mrb[0].mxu0
    %v1899 = vadd.f32 0.0, %v1898
    %v1900 = vpop.f32.mrb[0].mxu0
    %1901 = vmatprep.mubr.bf16.mxu0 0
    %1902 = vmatmul.mubr.bf16.gmra.mrb[0].mxu0 %v1601
    %v1903 = vpop.f32.mrb[0].mxu0
    %v1904 = vadd.f32 0.0, %v1903
    %v1905 = vpop.f32.mrb[0].mxu0
    %v1906 = vpop.f32.mrb[0].mxu0
    %v1907 = vadd.f32 0.0, %v1906
    %v1908 = vpop.f32.mrb[0].mxu0
    %1909 = vmatprep.mubr.bf16.mxu0 0
    %1910 = vmatmul.mubr.bf16.gmra.mrb[0].mxu0 %v1602
    %v1911 = vpop.f32.mrb[0].mxu0
    %v1912 = vadd.f32 0.0, %v1911
    %v1913 = vpop.f32.mrb[0].mxu0
    %v1914 = vpop.f32.mrb[0].mxu0
    %v1915 = vadd.f32 0.0, %v1914
    %v1916 = vpop.f32.mrb[0].mxu0
    %1917 = vmatprep.mubr.bf16.mxu0 0
    %1918 = vmatmul.mubr.bf16.gmra.mrb[0].mxu0 %v1603
    %v1919 = vpop.f32.mrb[0].mxu0
    %v1920 = vadd.f32 0.0, %v1919
    %v1921 = vpop.f32.mrb[0].mxu0
    %v1922 = vpop.f32.mrb[0].mxu0
    %v1923 = vadd.f32 0.0, %v1922
    %v1924 = vpop.f32.mrb[0].mxu0
    %1925 = vdwg.mxu0
    %v1926 = vadd.f32 %v1556, %v1719
    %v1927 = vadd.f32 %v1557, %v1722
    %v1928 = vadd.f32 %v1558, %v1727
    %v1929 = vadd.f32 %v1559, %v1730
    %v1930 = vadd.f32 %v1560, %v1735
    %v1931 = vadd.f32 %v1561, %v1738
    %v1932 = vadd.f32 %v1562, %v1743
    %v1933 = vadd.f32 %v1563, %v1746
    %v1934 = vadd.f32 %v1564, %v1751
    %v1935 = vadd.f32 %v1565, %v1754
    %v1936 = vadd.f32 %v1566, %v1759
    %v1937 = vadd.f32 %v1567, %v1762
    %v1938 = vadd.f32 %v1568, %v1767
    %v1939 = vadd.f32 %v1569, %v1770
    %v1940 = vadd.f32 %v1570, %v1775
    %v1941 = vadd.f32 %v1571, %v1778
    %v1942 = vadd.f32 %v1572, %v1864
    %v1943 = vadd.f32 %v1573, %v1867
    %v1944 = vadd.f32 %v1574, %v1872
    %v1945 = vadd.f32 %v1575, %v1875
    %v1946 = vadd.f32 %v1576, %v1880
    %v1947 = vadd.f32 %v1577, %v1883
    %v1948 = vadd.f32 %v1578, %v1888
    %v1949 = vadd.f32 %v1579, %v1891
    %v1950 = vadd.f32 %v1580, %v1896
    %v1951 = vadd.f32 %v1581, %v1899
    %v1952 = vadd.f32 %v1582, %v1904
    %v1953 = vadd.f32 %v1583, %v1907
    %v1954 = vadd.f32 %v1584, %v1912
    %v1955 = vadd.f32 %v1585, %v1915
    %v1956 = vadd.f32 %v1586, %v1920
    %v1957 = vadd.f32 %v1587, %v1923
    %1958 = vst [vmem:[#allocation4] sm:$0xff] %v1926
    %1959 = vst [vmem:[#allocation4 + $0x8] sm:$0xff] %v1927
    %1960 = vst [vmem:[#allocation4 + $0x10] sm:$0xff] %v1928
    %1961 = vst [vmem:[#allocation4 + $0x18] sm:$0xff] %v1929
    %1962 = vst [vmem:[#allocation4 + $0x20] sm:$0xff] %v1930
    %1963 = vst [vmem:[#allocation4 + $0x28] sm:$0xff] %v1931
    %1964 = vst [vmem:[#allocation4 + $0x30] sm:$0xff] %v1932
    %1965 = vst [vmem:[#allocation4 + $0x38] sm:$0xff] %v1933
    %1966 = vst [vmem:[#allocation4 + $0x40] sm:$0xff] %v1934
    %1967 = vst [vmem:[#allocation4 + $0x48] sm:$0xff] %v1935
    %1968 = vst [vmem:[#allocation4 + $0x50] sm:$0xff] %v1936
    %1969 = vst [vmem:[#allocation4 + $0x58] sm:$0xff] %v1937
    %1970 = vst [vmem:[#allocation4 + $0x60] sm:$0xff] %v1938
    %1971 = vst [vmem:[#allocation4 + $0x68] sm:$0xff] %v1939
    %1972 = vst [vmem:[#allocation4 + $0x70] sm:$0xff] %v1940
    %1973 = vst [vmem:[#allocation4 + $0x78] sm:$0xff] %v1941
    %1974 = vst [vmem:[#allocation4 + $0x80] sm:$0xff] %v1942
    %1975 = vst [vmem:[#allocation4 + $0x88] sm:$0xff] %v1943
    %1976 = vst [vmem:[#allocation4 + $0x90] sm:$0xff] %v1944
    %1977 = vst [vmem:[#allocation4 + $0x98] sm:$0xff] %v1945
    %1978 = vst [vmem:[#allocation4 + $0xa0] sm:$0xff] %v1946
    %1979 = vst [vmem:[#allocation4 + $0xa8] sm:$0xff] %v1947
    %1980 = vst [vmem:[#allocation4 + $0xb0] sm:$0xff] %v1948
    %1981 = vst [vmem:[#allocation4 + $0xb8] sm:$0xff] %v1949
    %1982 = vst [vmem:[#allocation4 + $0xc0] sm:$0xff] %v1950
    %1983 = vst [vmem:[#allocation4 + $0xc8] sm:$0xff] %v1951
    %1984 = vst [vmem:[#allocation4 + $0xd0] sm:$0xff] %v1952
    %1985 = vst [vmem:[#allocation4 + $0xd8] sm:$0xff] %v1953
    %1986 = vst [vmem:[#allocation4 + $0xe0] sm:$0xff] %v1954
    %1987 = vst [vmem:[#allocation4 + $0xe8] sm:$0xff] %v1955
    %1988 = vst [vmem:[#allocation4 + $0xf0] sm:$0xff] %v1956
    %1989 = vst [vmem:[#allocation4 + $0xf8] sm:$0xff] %v1957
    %1990 = vst.msk [vmem:[#allocation2] sm:$0xff] %vm1331, %v787
    %1991 = vst.msk [vmem:[#allocation2 + $0x8] sm:$0xff] %vm1331, %v788
    %1992 = vst.msk [vmem:[#allocation2 + $0x10] sm:$0xff] %vm1331, %v789
    %1993 = vst.msk [vmem:[#allocation2 + $0x18] sm:$0xff] %vm1331, %v790
    %1994 = vst.msk [vmem:[#allocation2 + $0x20] sm:$0xff] %vm1331, %v791
    %1995 = vst.msk [vmem:[#allocation2 + $0x28] sm:$0xff] %vm1331, %v792
    %1996 = vst.msk [vmem:[#allocation2 + $0x30] sm:$0xff] %vm1331, %v793
    %1997 = vst.msk [vmem:[#allocation2 + $0x38] sm:$0xff] %vm1331, %v794
    %1998 = vst.msk [vmem:[#allocation2 + $0x40] sm:$0xff] %vm1331, %v795
    %1999 = vst.msk [vmem:[#allocation2 + $0x48] sm:$0xff] %vm1331, %v796
    %2000 = vst.msk [vmem:[#allocation2 + $0x50] sm:$0xff] %vm1331, %v797
    %2001 = vst.msk [vmem:[#allocation2 + $0x58] sm:$0xff] %vm1331, %v798
    %2002 = vst.msk [vmem:[#allocation2 + $0x60] sm:$0xff] %vm1331, %v799
    %2003 = vst.msk [vmem:[#allocation2 + $0x68] sm:$0xff] %vm1331, %v800
    %2004 = vst.msk [vmem:[#allocation2 + $0x70] sm:$0xff] %vm1331, %v801
    %2005 = vst.msk [vmem:[#allocation2 + $0x78] sm:$0xff] %vm1331, %v802
    %2006 = vst.msk [vmem:[#allocation2 + $0x80] sm:$0xff] %vm1331, %v803
    %2007 = vst.msk [vmem:[#allocation2 + $0x88] sm:$0xff] %vm1331, %v804
    %2008 = vst.msk [vmem:[#allocation2 + $0x90] sm:$0xff] %vm1331, %v805
    %2009 = vst.msk [vmem:[#allocation2 + $0x98] sm:$0xff] %vm1331, %v806
    %2010 = vst.msk [vmem:[#allocation2 + $0xa0] sm:$0xff] %vm1331, %v807
    %2011 = vst.msk [vmem:[#allocation2 + $0xa8] sm:$0xff] %vm1331, %v808
    %2012 = vst.msk [vmem:[#allocation2 + $0xb0] sm:$0xff] %vm1331, %v809
    %2013 = vst.msk [vmem:[#allocation2 + $0xb8] sm:$0xff] %vm1331, %v810
    %2014 = vst.msk [vmem:[#allocation2 + $0xc0] sm:$0xff] %vm1331, %v811
    %2015 = vst.msk [vmem:[#allocation2 + $0xc8] sm:$0xff] %vm1331, %v812
    %2016 = vst.msk [vmem:[#allocation2 + $0xd0] sm:$0xff] %vm1331, %v813
    %2017 = vst.msk [vmem:[#allocation2 + $0xd8] sm:$0xff] %vm1331, %v814
    %2018 = vst.msk [vmem:[#allocation2 + $0xe0] sm:$0xff] %vm1331, %v815
    %2019 = vst.msk [vmem:[#allocation2 + $0xe8] sm:$0xff] %vm1331, %v816
    %2020 = vst.msk [vmem:[#allocation2 + $0xf0] sm:$0xff] %vm1331, %v817
    %2021 = vst.msk [vmem:[#allocation2 + $0xf8] sm:$0xff] %vm1331, %v818
  $region21: #{gpt_forward.8} parent=0 // pred_fallthru
    _
  // Predicated region
  $region22: #{gpt_forward.8} parent=0 // pred_check
    %p2022 = pneg %p15
  $region23: #{gpt_forward.8} parent=0 // pred_check_branch
    %2024 = sbr.rel (%p2022) target = $region25
  $region24: #{gpt_forward.8} parent=0 // pred_region
    %v2025 = vld [vmem:[#allocation4] sm:$0xff]
    %v2026 = vld [vmem:[#allocation4 + $0x8] sm:$0xff]
    %v2027 = vld [vmem:[#allocation4 + $0x10] sm:$0xff]
    %v2028 = vld [vmem:[#allocation4 + $0x18] sm:$0xff]
    %v2029 = vld [vmem:[#allocation4 + $0x20] sm:$0xff]
    %v2030 = vld [vmem:[#allocation4 + $0x28] sm:$0xff]
    %v2031 = vld [vmem:[#allocation4 + $0x30] sm:$0xff]
    %v2032 = vld [vmem:[#allocation4 + $0x38] sm:$0xff]
    %v2033 = vld [vmem:[#allocation4 + $0x40] sm:$0xff]
    %v2034 = vld [vmem:[#allocation4 + $0x48] sm:$0xff]
    %v2035 = vld [vmem:[#allocation4 + $0x50] sm:$0xff]
    %v2036 = vld [vmem:[#allocation4 + $0x58] sm:$0xff]
    %v2037 = vld [vmem:[#allocation4 + $0x60] sm:$0xff]
    %v2038 = vld [vmem:[#allocation4 + $0x68] sm:$0xff]
    %v2039 = vld [vmem:[#allocation4 + $0x70] sm:$0xff]
    %v2040 = vld [vmem:[#allocation4 + $0x78] sm:$0xff]
    %v2041 = vld [vmem:[#allocation4 + $0x80] sm:$0xff]
    %v2042 = vld [vmem:[#allocation4 + $0x88] sm:$0xff]
    %v2043 = vld [vmem:[#allocation4 + $0x90] sm:$0xff]
    %v2044 = vld [vmem:[#allocation4 + $0x98] sm:$0xff]
    %v2045 = vld [vmem:[#allocation4 + $0xa0] sm:$0xff]
    %v2046 = vld [vmem:[#allocation4 + $0xa8] sm:$0xff]
    %v2047 = vld [vmem:[#allocation4 + $0xb0] sm:$0xff]
    %v2048 = vld [vmem:[#allocation4 + $0xb8] sm:$0xff]
    %v2049 = vld [vmem:[#allocation4 + $0xc0] sm:$0xff]
    %v2050 = vld [vmem:[#allocation4 + $0xc8] sm:$0xff]
    %v2051 = vld [vmem:[#allocation4 + $0xd0] sm:$0xff]
    %v2052 = vld [vmem:[#allocation4 + $0xd8] sm:$0xff]
    %v2053 = vld [vmem:[#allocation4 + $0xe0] sm:$0xff]
    %v2054 = vld [vmem:[#allocation4 + $0xe8] sm:$0xff]
    %v2055 = vld [vmem:[#allocation4 + $0xf0] sm:$0xff]
    %v2056 = vld [vmem:[#allocation4 + $0xf8] sm:$0xff]
    %v2057 = vld [vmem:[#allocation3] sm:$0xff]
    %v2058 = vld [vmem:[#allocation3 + $0x8] sm:$0xff]
    %v2059 = vld [vmem:[#allocation3 + $0x10] sm:$0xff]
    %v2060 = vld [vmem:[#allocation3 + $0x18] sm:$0xff]
    %v2061 = vld [vmem:[#allocation3 + $0x20] sm:$0xff]
    %v2062 = vld [vmem:[#allocation3 + $0x28] sm:$0xff]
    %v2063 = vld [vmem:[#allocation3 + $0x30] sm:$0xff]
    %v2064 = vld [vmem:[#allocation3 + $0x38] sm:$0xff]
    %v2065 = vld [vmem:[#allocation3 + $0x40] sm:$0xff]
    %v2066 = vld [vmem:[#allocation3 + $0x48] sm:$0xff]
    %v2067 = vld [vmem:[#allocation3 + $0x50] sm:$0xff]
    %v2068 = vld [vmem:[#allocation3 + $0x58] sm:$0xff]
    %v2069 = vld [vmem:[#allocation3 + $0x60] sm:$0xff]
    %v2070 = vld [vmem:[#allocation3 + $0x68] sm:$0xff]
    %v2071 = vld [vmem:[#allocation3 + $0x70] sm:$0xff]
    %v2072 = vld [vmem:[#allocation3 + $0x78] sm:$0xff]
    %v2073 = vld [vmem:[#allocation3 + $0x80] sm:$0xff]
    %v2074 = vld [vmem:[#allocation3 + $0x88] sm:$0xff]
    %v2075 = vld [vmem:[#allocation3 + $0x90] sm:$0xff]
    %v2076 = vld [vmem:[#allocation3 + $0x98] sm:$0xff]
    %v2077 = vld [vmem:[#allocation3 + $0xa0] sm:$0xff]
    %v2078 = vld [vmem:[#allocation3 + $0xa8] sm:$0xff]
    %v2079 = vld [vmem:[#allocation3 + $0xb0] sm:$0xff]
    %v2080 = vld [vmem:[#allocation3 + $0xb8] sm:$0xff]
    %v2081 = vld [vmem:[#allocation3 + $0xc0] sm:$0xff]
    %v2082 = vld [vmem:[#allocation3 + $0xc8] sm:$0xff]
    %v2083 = vld [vmem:[#allocation3 + $0xd0] sm:$0xff]
    %v2084 = vld [vmem:[#allocation3 + $0xd8] sm:$0xff]
    %v2085 = vld [vmem:[#allocation3 + $0xe0] sm:$0xff]
    %v2086 = vld [vmem:[#allocation3 + $0xe8] sm:$0xff]
    %v2087 = vld [vmem:[#allocation3 + $0xf0] sm:$0xff]
    %v2088 = vld [vmem:[#allocation3 + $0xf8] sm:$0xff]
    %v2089 = vrcp.pop %v2057
    %v2090 = vrcp.pop %v2058
    %v2091 = vrcp.pop %v2059
    %v2092 = vrcp.pop %v2060
    %v2093 = vrcp.pop %v2061
    %v2094 = vrcp.pop %v2062
    %v2095 = vrcp.pop %v2063
    %v2096 = vrcp.pop %v2064
    %v2097 = vrcp.pop %v2065
    %v2098 = vrcp.pop %v2066
    %v2099 = vrcp.pop %v2067
    %v2100 = vrcp.pop %v2068
    %v2101 = vrcp.pop %v2069
    %v2102 = vrcp.pop %v2070
    %v2103 = vrcp.pop %v2071
    %v2104 = vrcp.pop %v2072
    %v2105 = vrcp.pop %v2073
    %v2106 = vrcp.pop %v2074
    %v2107 = vrcp.pop %v2075
    %v2108 = vrcp.pop %v2076
    %v2109 = vrcp.pop %v2077
    %v2110 = vrcp.pop %v2078
    %v2111 = vrcp.pop %v2079
    %v2112 = vrcp.pop %v2080
    %v2113 = vrcp.pop %v2081
    %v2114 = vrcp.pop %v2082
    %v2115 = vrcp.pop %v2083
    %v2116 = vrcp.pop %v2084
    %v2117 = vrcp.pop %v2085
    %v2118 = vrcp.pop %v2086
    %v2119 = vrcp.pop %v2087
    %v2120 = vrcp.pop %v2088
    %2122 = vset.pattern.permute.xlu0 0
    %2123 = vperm.xlu0 %2122, %v2089
    %v2124 = vpop.permute.xlu0 %2123
    %2127 = vset.pattern.permute.xlu0 0
    %2128 = vperm.xlu0 %2127, %v2090
    %v2129 = vpop.permute.xlu0 %2128
    %2132 = vset.pattern.permute.xlu0 0
    %2133 = vperm.xlu0 %2132, %v2091
    %v2134 = vpop.permute.xlu0 %2133
    %2137 = vset.pattern.permute.xlu0 0
    %2138 = vperm.xlu0 %2137, %v2092
    %v2139 = vpop.permute.xlu0 %2138
    %2142 = vset.pattern.permute.xlu0 0
    %2143 = vperm.xlu0 %2142, %v2093
    %v2144 = vpop.permute.xlu0 %2143
    %2147 = vset.pattern.permute.xlu0 0
    %2148 = vperm.xlu0 %2147, %v2094
    %v2149 = vpop.permute.xlu0 %2148
    %2152 = vset.pattern.permute.xlu0 0
    %2153 = vperm.xlu0 %2152, %v2095
    %v2154 = vpop.permute.xlu0 %2153
    %2157 = vset.pattern.permute.xlu0 0
    %2158 = vperm.xlu0 %2157, %v2096
    %v2159 = vpop.permute.xlu0 %2158
    %2162 = vset.pattern.permute.xlu0 0
    %2163 = vperm.xlu0 %2162, %v2097
    %v2164 = vpop.permute.xlu0 %2163
    %2167 = vset.pattern.permute.xlu0 0
    %2168 = vperm.xlu0 %2167, %v2098
    %v2169 = vpop.permute.xlu0 %2168
    %2172 = vset.pattern.permute.xlu0 0
    %2173 = vperm.xlu0 %2172, %v2099
    %v2174 = vpop.permute.xlu0 %2173
    %2177 = vset.pattern.permute.xlu0 0
    %2178 = vperm.xlu0 %2177, %v2100
    %v2179 = vpop.permute.xlu0 %2178
    %2182 = vset.pattern.permute.xlu0 0
    %2183 = vperm.xlu0 %2182, %v2101
    %v2184 = vpop.permute.xlu0 %2183
    %2187 = vset.pattern.permute.xlu0 0
    %2188 = vperm.xlu0 %2187, %v2102
    %v2189 = vpop.permute.xlu0 %2188
    %2192 = vset.pattern.permute.xlu0 0
    %2193 = vperm.xlu0 %2192, %v2103
    %v2194 = vpop.permute.xlu0 %2193
    %2197 = vset.pattern.permute.xlu0 0
    %2198 = vperm.xlu0 %2197, %v2104
    %v2199 = vpop.permute.xlu0 %2198
    %2202 = vset.pattern.permute.xlu0 0
    %2203 = vperm.xlu0 %2202, %v2105
    %v2204 = vpop.permute.xlu0 %2203
    %2207 = vset.pattern.permute.xlu0 0
    %2208 = vperm.xlu0 %2207, %v2106
    %v2209 = vpop.permute.xlu0 %2208
    %2212 = vset.pattern.permute.xlu0 0
    %2213 = vperm.xlu0 %2212, %v2107
    %v2214 = vpop.permute.xlu0 %2213
    %2217 = vset.pattern.permute.xlu0 0
    %2218 = vperm.xlu0 %2217, %v2108
    %v2219 = vpop.permute.xlu0 %2218
    %2222 = vset.pattern.permute.xlu0 0
    %2223 = vperm.xlu0 %2222, %v2109
    %v2224 = vpop.permute.xlu0 %2223
    %2227 = vset.pattern.permute.xlu0 0
    %2228 = vperm.xlu0 %2227, %v2110
    %v2229 = vpop.permute.xlu0 %2228
    %2232 = vset.pattern.permute.xlu0 0
    %2233 = vperm.xlu0 %2232, %v2111
    %v2234 = vpop.permute.xlu0 %2233
    %2237 = vset.pattern.permute.xlu0 0
    %2238 = vperm.xlu0 %2237, %v2112
    %v2239 = vpop.permute.xlu0 %2238
    %2242 = vset.pattern.permute.xlu0 0
    %2243 = vperm.xlu0 %2242, %v2113
    %v2244 = vpop.permute.xlu0 %2243
    %2247 = vset.pattern.permute.xlu0 0
    %2248 = vperm.xlu0 %2247, %v2114
    %v2249 = vpop.permute.xlu0 %2248
    %2252 = vset.pattern.permute.xlu0 0
    %2253 = vperm.xlu0 %2252, %v2115
    %v2254 = vpop.permute.xlu0 %2253
    %2257 = vset.pattern.permute.xlu0 0
    %2258 = vperm.xlu0 %2257, %v2116
    %v2259 = vpop.permute.xlu0 %2258
    %2262 = vset.pattern.permute.xlu0 0
    %2263 = vperm.xlu0 %2262, %v2117
    %v2264 = vpop.permute.xlu0 %2263
    %2267 = vset.pattern.permute.xlu0 0
    %2268 = vperm.xlu0 %2267, %v2118
    %v2269 = vpop.permute.xlu0 %2268
    %2272 = vset.pattern.permute.xlu0 0
    %2273 = vperm.xlu0 %2272, %v2119
    %v2274 = vpop.permute.xlu0 %2273
    %2277 = vset.pattern.permute.xlu0 0
    %2278 = vperm.xlu0 %2277, %v2120
    %v2279 = vpop.permute.xlu0 %2278
    %v2281 = vmul.f32 %v2025, %v2124
    %v2282 = vmul.f32 %v2026, %v2129
    %v2283 = vmul.f32 %v2027, %v2134
    %v2284 = vmul.f32 %v2028, %v2139
    %v2285 = vmul.f32 %v2029, %v2144
    %v2286 = vmul.f32 %v2030, %v2149
    %v2287 = vmul.f32 %v2031, %v2154
    %v2288 = vmul.f32 %v2032, %v2159
    %v2289 = vmul.f32 %v2033, %v2164
    %v2290 = vmul.f32 %v2034, %v2169
    %v2291 = vmul.f32 %v2035, %v2174
    %v2292 = vmul.f32 %v2036, %v2179
    %v2293 = vmul.f32 %v2037, %v2184
    %v2294 = vmul.f32 %v2038, %v2189
    %v2295 = vmul.f32 %v2039, %v2194
    %v2296 = vmul.f32 %v2040, %v2199
    %v2297 = vmul.f32 %v2041, %v2204
    %v2298 = vmul.f32 %v2042, %v2209
    %v2299 = vmul.f32 %v2043, %v2214
    %v2300 = vmul.f32 %v2044, %v2219
    %v2301 = vmul.f32 %v2045, %v2224
    %v2302 = vmul.f32 %v2046, %v2229
    %v2303 = vmul.f32 %v2047, %v2234
    %v2304 = vmul.f32 %v2048, %v2239
    %v2305 = vmul.f32 %v2049, %v2244
    %v2306 = vmul.f32 %v2050, %v2249
    %v2307 = vmul.f32 %v2051, %v2254
    %v2308 = vmul.f32 %v2052, %v2259
    %v2309 = vmul.f32 %v2053, %v2264
    %v2310 = vmul.f32 %v2054, %v2269
    %v2311 = vmul.f32 %v2055, %v2274
    %v2312 = vmul.f32 %v2056, %v2279
    %v2313 = vpack.c.bf16 %v2282, %v2281
    %v2314 = vpack.c.bf16 %v2284, %v2283
    %v2315 = vpack.c.bf16 %v2286, %v2285
    %v2316 = vpack.c.bf16 %v2288, %v2287
    %v2317 = vpack.c.bf16 %v2290, %v2289
    %v2318 = vpack.c.bf16 %v2292, %v2291
    %v2319 = vpack.c.bf16 %v2294, %v2293
    %v2320 = vpack.c.bf16 %v2296, %v2295
    %v2321 = vpack.c.bf16 %v2298, %v2297
    %v2322 = vpack.c.bf16 %v2300, %v2299
    %v2323 = vpack.c.bf16 %v2302, %v2301
    %v2324 = vpack.c.bf16 %v2304, %v2303
    %v2325 = vpack.c.bf16 %v2306, %v2305
    %v2326 = vpack.c.bf16 %v2308, %v2307
    %v2327 = vpack.c.bf16 %v2310, %v2309
    %v2328 = vpack.c.bf16 %v2312, %v2311
    %v2337 = vunpack.c.l.b16 %v2313
    %v2338 = vunpack.c.h.b16 %v2313
    %v2339 = vunpack.c.l.b16 %v2314
    %v2340 = vunpack.c.h.b16 %v2314
    %v2341 = vunpack.c.l.b16 %v2315
    %v2342 = vunpack.c.h.b16 %v2315
    %v2343 = vunpack.c.l.b16 %v2316
    %v2344 = vunpack.c.h.b16 %v2316
    %v2345 = vunpack.c.l.b16 %v2317
    %v2346 = vunpack.c.h.b16 %v2317
    %v2347 = vunpack.c.l.b16 %v2318
    %v2348 = vunpack.c.h.b16 %v2318
    %v2349 = vunpack.c.l.b16 %v2319
    %v2350 = vunpack.c.h.b16 %v2319
    %v2351 = vunpack.c.l.b16 %v2320
    %v2352 = vunpack.c.h.b16 %v2320
    %v2353 = vpack.c.b16 %v2337, %v2337
    %v2354 = vpack.c.b16 %v2338, %v2338
    %v2355 = vpack.c.b16 %v2339, %v2339
    %v2356 = vpack.c.b16 %v2340, %v2340
    %v2357 = vpack.c.b16 %v2341, %v2341
    %v2358 = vpack.c.b16 %v2342, %v2342
    %v2359 = vpack.c.b16 %v2343, %v2343
    %v2360 = vpack.c.b16 %v2344, %v2344
    %v2361 = vpack.c.b16 %v2345, %v2345
    %v2362 = vpack.c.b16 %v2346, %v2346
    %v2363 = vpack.c.b16 %v2347, %v2347
    %v2364 = vpack.c.b16 %v2348, %v2348
    %v2365 = vpack.c.b16 %v2349, %v2349
    %v2366 = vpack.c.b16 %v2350, %v2350
    %v2367 = vpack.c.b16 %v2351, %v2351
    %v2368 = vpack.c.b16 %v2352, %v2352
    %2385 = vst [vmem:[%s3] sm:$0xf] %v2353
    %2386 = vst [vmem:[%s3 + $0x8] sm:$0xf] %v2354
    %2387 = vst [vmem:[%s3 + $0x10] sm:$0xf] %v2355
    %2388 = vst [vmem:[%s3 + $0x18] sm:$0xf] %v2356
    %2389 = vst [vmem:[%s3 + $0x20] sm:$0xf] %v2357
    %2390 = vst [vmem:[%s3 + $0x28] sm:$0xf] %v2358
    %2391 = vst [vmem:[%s3 + $0x30] sm:$0xf] %v2359
    %2392 = vst [vmem:[%s3 + $0x38] sm:$0xf] %v2360
    %2393 = vst [vmem:[%s3 + $0x40] sm:$0xf] %v2361
    %2394 = vst [vmem:[%s3 + $0x48] sm:$0xf] %v2362
    %2395 = vst [vmem:[%s3 + $0x50] sm:$0xf] %v2363
    %2396 = vst [vmem:[%s3 + $0x58] sm:$0xf] %v2364
    %2397 = vst [vmem:[%s3 + $0x60] sm:$0xf] %v2365
    %2398 = vst [vmem:[%s3 + $0x68] sm:$0xf] %v2366
    %2399 = vst [vmem:[%s3 + $0x70] sm:$0xf] %v2367
    %2400 = vst [vmem:[%s3 + $0x78] sm:$0xf] %v2368
    %v2409 = vunpack.c.l.b16 %v2321
    %v2410 = vunpack.c.h.b16 %v2321
    %v2411 = vunpack.c.l.b16 %v2322
    %v2412 = vunpack.c.h.b16 %v2322
    %v2413 = vunpack.c.l.b16 %v2323
    %v2414 = vunpack.c.h.b16 %v2323
    %v2415 = vunpack.c.l.b16 %v2324
    %v2416 = vunpack.c.h.b16 %v2324
    %v2417 = vunpack.c.l.b16 %v2325
    %v2418 = vunpack.c.h.b16 %v2325
    %v2419 = vunpack.c.l.b16 %v2326
    %v2420 = vunpack.c.h.b16 %v2326
    %v2421 = vunpack.c.l.b16 %v2327
    %v2422 = vunpack.c.h.b16 %v2327
    %v2423 = vunpack.c.l.b16 %v2328
    %v2424 = vunpack.c.h.b16 %v2328
    %v2425 = vpack.c.b16 %v2409, %v2409
    %v2426 = vpack.c.b16 %v2410, %v2410
    %v2427 = vpack.c.b16 %v2411, %v2411
    %v2428 = vpack.c.b16 %v2412, %v2412
    %v2429 = vpack.c.b16 %v2413, %v2413
    %v2430 = vpack.c.b16 %v2414, %v2414
    %v2431 = vpack.c.b16 %v2415, %v2415
    %v2432 = vpack.c.b16 %v2416, %v2416
    %v2433 = vpack.c.b16 %v2417, %v2417
    %v2434 = vpack.c.b16 %v2418, %v2418
    %v2435 = vpack.c.b16 %v2419, %v2419
    %v2436 = vpack.c.b16 %v2420, %v2420
    %v2437 = vpack.c.b16 %v2421, %v2421
    %v2438 = vpack.c.b16 %v2422, %v2422
    %v2439 = vpack.c.b16 %v2423, %v2423
    %v2440 = vpack.c.b16 %v2424, %v2424
    %2457 = vst [vmem:[%s3 + $0x4] sm:$0xf] %v2425
    %2458 = vst [vmem:[%s3 + $0xc] sm:$0xf] %v2426
    %2459 = vst [vmem:[%s3 + $0x14] sm:$0xf] %v2427
    %2460 = vst [vmem:[%s3 + $0x1c] sm:$0xf] %v2428
    %2461 = vst [vmem:[%s3 + $0x24] sm:$0xf] %v2429
    %2462 = vst [vmem:[%s3 + $0x2c] sm:$0xf] %v2430
    %2463 = vst [vmem:[%s3 + $0x34] sm:$0xf] %v2431
    %2464 = vst [vmem:[%s3 + $0x3c] sm:$0xf] %v2432
    %2465 = vst [vmem:[%s3 + $0x44] sm:$0xf] %v2433
    %2466 = vst [vmem:[%s3 + $0x4c] sm:$0xf] %v2434
    %2467 = vst [vmem:[%s3 + $0x54] sm:$0xf] %v2435
    %2468 = vst [vmem:[%s3 + $0x5c] sm:$0xf] %v2436
    %2469 = vst [vmem:[%s3 + $0x64] sm:$0xf] %v2437
    %2470 = vst [vmem:[%s3 + $0x6c] sm:$0xf] %v2438
    %2471 = vst [vmem:[%s3 + $0x74] sm:$0xf] %v2439
    %2472 = vst [vmem:[%s3 + $0x7c] sm:$0xf] %v2440
  $region25: #{gpt_forward.8} parent=0 // pred_fallthru
    _
  // Predicated region
  $region26: #{gpt_forward.8} parent=0 // pred_check
    _
  $region27: #{gpt_forward.8} parent=0 // pred_check_branch
    %2474 = sbr.rel (0) target = $region29
  $region28: #{gpt_forward.8} parent=0 // pred_region
    _
  $region29: #{gpt_forward.8} parent=0 // pred_fallthru
    _
  // Predicated region
  $region30: #{gpt_forward.8} parent=0 // pred_check
    _
  $region31: #{gpt_forward.8} parent=0 // pred_check_branch
    %2476 = sbr.rel (0) target = $region33
  $region32: #{gpt_forward.8} parent=0 // pred_region
    _
  $region33: #{gpt_forward.8} parent=0 // pred_fallthru
    _

// kernel: gpt_forward.7
$region0: #{gpt_forward.7}
  #allocation0 [shape = 'u32[]', space=smem, size = 0x4, offset = 0x4, fixed_abs, tag = 'smem constant byte address 0x4 - core index']
  #allocation1 [shape = 'u32[144,128]{1,0:T(1,128)}', space=vmem, size = 0x12000, scoped, tag = 'internal scratch']
  %s0 = inlined_call_operand.vmem [shape: bf16[128,256], index: 0, kind: input, shape index: {}]
  %s1 = inlined_call_operand.vmem [shape: bf16[256,768], index: 1, kind: input, shape index: {}]
  %s2 = inlined_call_operand.vmem [shape: f32[128,128], index: 2, kind: input, shape index: {}]
  %s3 = inlined_call_operand.vmem [shape: f32[128,128], index: 3, kind: input, shape index: {}]
  %s4 = inlined_call_operand.vmem [shape: f32[128,128], index: 4, kind: input, shape index: {}]
  %s5 = inlined_call_operand.vmem [shape: f32[128,128], index: 5, kind: input, shape index: {}]
  %s6 = inlined_call_operand.vmem [shape: bf16[2,128,128], index: 6, kind: output, shape index: {0}]
  %s7 = inlined_call_operand.vmem [shape: bf16[2,128,128], index: 7, kind: output, shape index: {1}]
  %s8 = inlined_call_operand.vmem [shape: bf16[2,128,128], index: 8, kind: output, shape index: {2}]
  %9 = xla_tuple %s6, %s7, %s8
  %s10 = sld [smem:[#allocation0]]
  $region50: #{gpt_forward.7} parent=0
    _
  %s12 = ssub.s32 1, %s10
  %s13 = scalar_select 0, %s12, %s10
  // Predicated region
  $region2: #{gpt_forward.7} parent=0 // pred_check
    _
  $region3: #{gpt_forward.7} parent=0 // pred_check_branch
    %15 = sbr.rel (0) target = $region5
  $region4: #{gpt_forward.7} parent=0 // pred_region
    _
  $region5: #{gpt_forward.7} parent=0 // pred_fallthru
    _
  // Predicated region
  $region6: #{gpt_forward.7} parent=0 // pred_check
    _
  $region7: #{gpt_forward.7} parent=0 // pred_check_branch
    %17 = sbr.rel (0) target = $region9
  $region8: #{gpt_forward.7} parent=0 // pred_region
    _
  $region9: #{gpt_forward.7} parent=0 // pred_fallthru
    _
  // Predicated region
  $region10: #{gpt_forward.7} parent=0 // pred_check
    _
  $region11: #{gpt_forward.7} parent=0 // pred_check_branch
    %19 = sbr.rel (0) target = $region13
  $region12: #{gpt_forward.7} parent=0 // pred_region
    _
  $region13: #{gpt_forward.7} parent=0 // pred_fallthru
    _
  // Predicated region
  $region14: #{gpt_forward.7} parent=0 // pred_check
    _
  $region15: #{gpt_forward.7} parent=0 // pred_check_branch
    %21 = sbr.rel (0) target = $region17
  $region16: #{gpt_forward.7} parent=0 // pred_region
    _
  $region17: #{gpt_forward.7} parent=0 // pred_fallthru
    _
  // Predicated region
  $region18: #{gpt_forward.7} parent=0 // pred_check
    _
  $region19: #{gpt_forward.7} parent=0 // pred_check_branch
    %23 = sbr.rel (0) target = $region21
  $region20: #{gpt_forward.7} parent=0 // pred_region
    _
  $region21: #{gpt_forward.7} parent=0 // pred_fallthru
    _
  // Predicated region
  $region22: #{gpt_forward.7} parent=0 // pred_check
    _
  $region23: #{gpt_forward.7} parent=0 // pred_check_branch
    %25 = sbr.rel (0) target = $region25
  $region24: #{gpt_forward.7} parent=0 // pred_region
    _
  $region25: #{gpt_forward.7} parent=0 // pred_fallthru
    _
  %v26 = vld [vmem:[%s0] sm:$0xff]
  %v27 = vld [vmem:[%s0 + $0x8] sm:$0xff]
  %v28 = vld [vmem:[%s0 + $0x10] sm:$0xff]
  %v29 = vld [vmem:[%s0 + $0x18] sm:$0xff]
  %v30 = vld [vmem:[%s0 + $0x20] sm:$0xff]
  %v31 = vld [vmem:[%s0 + $0x28] sm:$0xff]
  %v32 = vld [vmem:[%s0 + $0x30] sm:$0xff]
  %v33 = vld [vmem:[%s0 + $0x38] sm:$0xff]
  %v34 = vld [vmem:[%s0 + $0x40] sm:$0xff]
  %v35 = vld [vmem:[%s0 + $0x48] sm:$0xff]
  %v36 = vld [vmem:[%s0 + $0x50] sm:$0xff]
  %v37 = vld [vmem:[%s0 + $0x58] sm:$0xff]
  %v38 = vld [vmem:[%s0 + $0x60] sm:$0xff]
  %v39 = vld [vmem:[%s0 + $0x68] sm:$0xff]
  %v40 = vld [vmem:[%s0 + $0x70] sm:$0xff]
  %v41 = vld [vmem:[%s0 + $0x78] sm:$0xff]
  %v42 = vunpack.c.l.bf16 %v26
  %v43 = vunpack.c.h.bf16 %v26
  %v44 = vunpack.c.l.bf16 %v27
  %v45 = vunpack.c.h.bf16 %v27
  %v46 = vunpack.c.l.bf16 %v28
  %v47 = vunpack.c.h.bf16 %v28
  %v48 = vunpack.c.l.bf16 %v29
  %v49 = vunpack.c.h.bf16 %v29
  %v50 = vunpack.c.l.bf16 %v30
  %v51 = vunpack.c.h.bf16 %v30
  %v52 = vunpack.c.l.bf16 %v31
  %v53 = vunpack.c.h.bf16 %v31
  %v54 = vunpack.c.l.bf16 %v32
  %v55 = vunpack.c.h.bf16 %v32
  %v56 = vunpack.c.l.bf16 %v33
  %v57 = vunpack.c.h.bf16 %v33
  %v58 = vunpack.c.l.bf16 %v34
  %v59 = vunpack.c.h.bf16 %v34
  %v60 = vunpack.c.l.bf16 %v35
  %v61 = vunpack.c.h.bf16 %v35
  %v62 = vunpack.c.l.bf16 %v36
  %v63 = vunpack.c.h.bf16 %v36
  %v64 = vunpack.c.l.bf16 %v37
  %v65 = vunpack.c.h.bf16 %v37
  %v66 = vunpack.c.l.bf16 %v38
  %v67 = vunpack.c.h.bf16 %v38
  %v68 = vunpack.c.l.bf16 %v39
  %v69 = vunpack.c.h.bf16 %v39
  %v70 = vunpack.c.l.bf16 %v40
  %v71 = vunpack.c.h.bf16 %v40
  %v72 = vunpack.c.l.bf16 %v41
  %v73 = vunpack.c.h.bf16 %v41
  %v74 = vmul.f32 %v42, %v42
  %v75 = vmul.f32 %v43, %v43
  %v76 = vmul.f32 %v44, %v44
  %v77 = vmul.f32 %v45, %v45
  %v78 = vmul.f32 %v46, %v46
  %v79 = vmul.f32 %v47, %v47
  %v80 = vmul.f32 %v48, %v48
  %v81 = vmul.f32 %v49, %v49
  %v82 = vmul.f32 %v50, %v50
  %v83 = vmul.f32 %v51, %v51
  %v84 = vmul.f32 %v52, %v52
  %v85 = vmul.f32 %v53, %v53
  %v86 = vmul.f32 %v54, %v54
  %v87 = vmul.f32 %v55, %v55
  %v88 = vmul.f32 %v56, %v56
  %v89 = vmul.f32 %v57, %v57
  %v90 = vmul.f32 %v58, %v58
  %v91 = vmul.f32 %v59, %v59
  %v92 = vmul.f32 %v60, %v60
  %v93 = vmul.f32 %v61, %v61
  %v94 = vmul.f32 %v62, %v62
  %v95 = vmul.f32 %v63, %v63
  %v96 = vmul.f32 %v64, %v64
  %v97 = vmul.f32 %v65, %v65
  %v98 = vmul.f32 %v66, %v66
  %v99 = vmul.f32 %v67, %v67
  %v100 = vmul.f32 %v68, %v68
  %v101 = vmul.f32 %v69, %v69
  %v102 = vmul.f32 %v70, %v70
  %v103 = vmul.f32 %v71, %v71
  %v104 = vmul.f32 %v72, %v72
  %v105 = vmul.f32 %v73, %v73
  %v106 = vadd.f32 %v74, %v75
  %107 = vadd.xlane.f32.xlu0 %v106
  %v108 = vpop.xlane.xlu0 %107
  %v109 = vadd.f32 %v76, %v77
  %110 = vadd.xlane.f32.xlu0 %v109
  %v111 = vpop.xlane.xlu0 %110
  %v112 = vadd.f32 %v78, %v79
  %113 = vadd.xlane.f32.xlu0 %v112
  %v114 = vpop.xlane.xlu0 %113
  %v115 = vadd.f32 %v80, %v81
  %116 = vadd.xlane.f32.xlu0 %v115
  %v117 = vpop.xlane.xlu0 %116
  %v118 = vadd.f32 %v82, %v83
  %119 = vadd.xlane.f32.xlu0 %v118
  %v120 = vpop.xlane.xlu0 %119
  %v121 = vadd.f32 %v84, %v85
  %122 = vadd.xlane.f32.xlu0 %v121
  %v123 = vpop.xlane.xlu0 %122
  %v124 = vadd.f32 %v86, %v87
  %125 = vadd.xlane.f32.xlu0 %v124
  %v126 = vpop.xlane.xlu0 %125
  %v127 = vadd.f32 %v88, %v89
  %128 = vadd.xlane.f32.xlu0 %v127
  %v129 = vpop.xlane.xlu0 %128
  %v130 = vadd.f32 %v90, %v91
  %131 = vadd.xlane.f32.xlu0 %v130
  %v132 = vpop.xlane.xlu0 %131
  %v133 = vadd.f32 %v92, %v93
  %134 = vadd.xlane.f32.xlu0 %v133
  %v135 = vpop.xlane.xlu0 %134
  %v136 = vadd.f32 %v94, %v95
  %137 = vadd.xlane.f32.xlu0 %v136
  %v138 = vpop.xlane.xlu0 %137
  %v139 = vadd.f32 %v96, %v97
  %140 = vadd.xlane.f32.xlu0 %v139
  %v141 = vpop.xlane.xlu0 %140
  %v142 = vadd.f32 %v98, %v99
  %143 = vadd.xlane.f32.xlu0 %v142
  %v144 = vpop.xlane.xlu0 %143
  %v145 = vadd.f32 %v100, %v101
  %146 = vadd.xlane.f32.xlu0 %v145
  %v147 = vpop.xlane.xlu0 %146
  %v148 = vadd.f32 %v102, %v103
  %149 = vadd.xlane.f32.xlu0 %v148
  %v150 = vpop.xlane.xlu0 %149
  %v151 = vadd.f32 %v104, %v105
  %152 = vadd.xlane.f32.xlu0 %v151
  %v153 = vpop.xlane.xlu0 %152
  %v154 = vrcp.pop 256.0
  %v155 = vmul.f32 %v108, %v154
  %v156 = vmul.f32 %v111, %v154
  %v157 = vmul.f32 %v114, %v154
  %v158 = vmul.f32 %v117, %v154
  %v159 = vmul.f32 %v120, %v154
  %v160 = vmul.f32 %v123, %v154
  %v161 = vmul.f32 %v126, %v154
  %v162 = vmul.f32 %v129, %v154
  %v163 = vmul.f32 %v132, %v154
  %v164 = vmul.f32 %v135, %v154
  %v165 = vmul.f32 %v138, %v154
  %v166 = vmul.f32 %v141, %v154
  %v167 = vmul.f32 %v144, %v154
  %v168 = vmul.f32 %v147, %v154
  %v169 = vmul.f32 %v150, %v154
  %v170 = vmul.f32 %v153, %v154
  %v171 = vadd.f32 %v155, 1e-06
  %v172 = vadd.f32 %v156, 1e-06
  %v173 = vadd.f32 %v157, 1e-06
  %v174 = vadd.f32 %v158, 1e-06
  %v175 = vadd.f32 %v159, 1e-06
  %v176 = vadd.f32 %v160, 1e-06
  %v177 = vadd.f32 %v161, 1e-06
  %v178 = vadd.f32 %v162, 1e-06
  %v179 = vadd.f32 %v163, 1e-06
  %v180 = vadd.f32 %v164, 1e-06
  %v181 = vadd.f32 %v165, 1e-06
  %v182 = vadd.f32 %v166, 1e-06
  %v183 = vadd.f32 %v167, 1e-06
  %v184 = vadd.f32 %v168, 1e-06
  %v185 = vadd.f32 %v169, 1e-06
  %v186 = vadd.f32 %v170, 1e-06
  %v187 = vrsqrt.pop %v171
  %v188 = vrsqrt.pop %v172
  %v189 = vrsqrt.pop %v173
  %v190 = vrsqrt.pop %v174
  %v191 = vrsqrt.pop %v175
  %v192 = vrsqrt.pop %v176
  %v193 = vrsqrt.pop %v177
  %v194 = vrsqrt.pop %v178
  %v195 = vrsqrt.pop %v179
  %v196 = vrsqrt.pop %v180
  %v197 = vrsqrt.pop %v181
  %v198 = vrsqrt.pop %v182
  %v199 = vrsqrt.pop %v183
  %v200 = vrsqrt.pop %v184
  %v201 = vrsqrt.pop %v185
  %v202 = vrsqrt.pop %v186
  %v203 = vmul.f32 %v42, %v187
  %v204 = vmul.f32 %v43, %v187
  %v205 = vmul.f32 %v44, %v188
  %v206 = vmul.f32 %v45, %v188
  %v207 = vmul.f32 %v46, %v189
  %v208 = vmul.f32 %v47, %v189
  %v209 = vmul.f32 %v48, %v190
  %v210 = vmul.f32 %v49, %v190
  %v211 = vmul.f32 %v50, %v191
  %v212 = vmul.f32 %v51, %v191
  %v213 = vmul.f32 %v52, %v192
  %v214 = vmul.f32 %v53, %v192
  %v215 = vmul.f32 %v54, %v193
  %v216 = vmul.f32 %v55, %v193
  %v217 = vmul.f32 %v56, %v194
  %v218 = vmul.f32 %v57, %v194
  %v219 = vmul.f32 %v58, %v195
  %v220 = vmul.f32 %v59, %v195
  %v221 = vmul.f32 %v60, %v196
  %v222 = vmul.f32 %v61, %v196
  %v223 = vmul.f32 %v62, %v197
  %v224 = vmul.f32 %v63, %v197
  %v225 = vmul.f32 %v64, %v198
  %v226 = vmul.f32 %v65, %v198
  %v227 = vmul.f32 %v66, %v199
  %v228 = vmul.f32 %v67, %v199
  %v229 = vmul.f32 %v68, %v200
  %v230 = vmul.f32 %v69, %v200
  %v231 = vmul.f32 %v70, %v201
  %v232 = vmul.f32 %v71, %v201
  %v233 = vmul.f32 %v72, %v202
  %v234 = vmul.f32 %v73, %v202
  %v235 = vpack.c.bf16 %v205, %v203
  %v236 = vpack.c.bf16 %v206, %v204
  %v237 = vpack.c.bf16 %v209, %v207
  %v238 = vpack.c.bf16 %v210, %v208
  %v239 = vpack.c.bf16 %v213, %v211
  %v240 = vpack.c.bf16 %v214, %v212
  %v241 = vpack.c.bf16 %v217, %v215
  %v242 = vpack.c.bf16 %v218, %v216
  %v243 = vpack.c.bf16 %v221, %v219
  %v244 = vpack.c.bf16 %v222, %v220
  %v245 = vpack.c.bf16 %v225, %v223
  %v246 = vpack.c.bf16 %v226, %v224
  %v247 = vpack.c.bf16 %v229, %v227
  %v248 = vpack.c.bf16 %v230, %v228
  %v249 = vpack.c.bf16 %v233, %v231
  %v250 = vpack.c.bf16 %v234, %v232
  %v251 = vld [vmem:[%s1] sm:$0xff]
  %v252 = vld [vmem:[%s1 + $0x8] sm:$0xff]
  %v253 = vld [vmem:[%s1 + $0x10] sm:$0xff]
  %v254 = vld [vmem:[%s1 + $0x18] sm:$0xff]
  %v255 = vld [vmem:[%s1 + $0x20] sm:$0xff]
  %v256 = vld [vmem:[%s1 + $0x28] sm:$0xff]
  %v257 = vld [vmem:[%s1 + $0x30] sm:$0xff]
  %v258 = vld [vmem:[%s1 + $0x38] sm:$0xff]
  %v259 = vld [vmem:[%s1 + $0x40] sm:$0xff]
  %v260 = vld [vmem:[%s1 + $0x48] sm:$0xff]
  %v261 = vld [vmem:[%s1 + $0x50] sm:$0xff]
  %v262 = vld [vmem:[%s1 + $0x58] sm:$0xff]
  %v263 = vld [vmem:[%s1 + $0x60] sm:$0xff]
  %v264 = vld [vmem:[%s1 + $0x68] sm:$0xff]
  %v265 = vld [vmem:[%s1 + $0x70] sm:$0xff]
  %v266 = vld [vmem:[%s1 + $0x78] sm:$0xff]
  %v267 = vld [vmem:[%s1 + $0x80] sm:$0xff]
  %v268 = vld [vmem:[%s1 + $0x88] sm:$0xff]
  %v269 = vld [vmem:[%s1 + $0x90] sm:$0xff]
  %v270 = vld [vmem:[%s1 + $0x98] sm:$0xff]
  %v271 = vld [vmem:[%s1 + $0xa0] sm:$0xff]
  %v272 = vld [vmem:[%s1 + $0xa8] sm:$0xff]
  %v273 = vld [vmem:[%s1 + $0xb0] sm:$0xff]
  %v274 = vld [vmem:[%s1 + $0xb8] sm:$0xff]
  %v275 = vld [vmem:[%s1 + $0xc0] sm:$0xff]
  %v276 = vld [vmem:[%s1 + $0xc8] sm:$0xff]
  %v277 = vld [vmem:[%s1 + $0xd0] sm:$0xff]
  %v278 = vld [vmem:[%s1 + $0xd8] sm:$0xff]
  %v279 = vld [vmem:[%s1 + $0xe0] sm:$0xff]
  %v280 = vld [vmem:[%s1 + $0xe8] sm:$0xff]
  %v281 = vld [vmem:[%s1 + $0xf0] sm:$0xff]
  %v282 = vld [vmem:[%s1 + $0xf8] sm:$0xff]
  %v283 = vld [vmem:[%s1 + $0x100] sm:$0xff]
  %v284 = vld [vmem:[%s1 + $0x108] sm:$0xff]
  %v285 = vld [vmem:[%s1 + $0x110] sm:$0xff]
  %v286 = vld [vmem:[%s1 + $0x118] sm:$0xff]
  %v287 = vld [vmem:[%s1 + $0x120] sm:$0xff]
  %v288 = vld [vmem:[%s1 + $0x128] sm:$0xff]
  %v289 = vld [vmem:[%s1 + $0x130] sm:$0xff]
  %v290 = vld [vmem:[%s1 + $0x138] sm:$0xff]
  %v291 = vld [vmem:[%s1 + $0x140] sm:$0xff]
  %v292 = vld [vmem:[%s1 + $0x148] sm:$0xff]
  %v293 = vld [vmem:[%s1 + $0x150] sm:$0xff]
  %v294 = vld [vmem:[%s1 + $0x158] sm:$0xff]
  %v295 = vld [vmem:[%s1 + $0x160] sm:$0xff]
  %v296 = vld [vmem:[%s1 + $0x168] sm:$0xff]
  %v297 = vld [vmem:[%s1 + $0x170] sm:$0xff]
  %v298 = vld [vmem:[%s1 + $0x178] sm:$0xff]
  %v299 = vld [vmem:[%s1 + $0x180] sm:$0xff]
  %v300 = vld [vmem:[%s1 + $0x188] sm:$0xff]
  %v301 = vld [vmem:[%s1 + $0x190] sm:$0xff]
  %v302 = vld [vmem:[%s1 + $0x198] sm:$0xff]
  %v303 = vld [vmem:[%s1 + $0x1a0] sm:$0xff]
  %v304 = vld [vmem:[%s1 + $0x1a8] sm:$0xff]
  %v305 = vld [vmem:[%s1 + $0x1b0] sm:$0xff]
  %v306 = vld [vmem:[%s1 + $0x1b8] sm:$0xff]
  %v307 = vld [vmem:[%s1 + $0x1c0] sm:$0xff]
  %v308 = vld [vmem:[%s1 + $0x1c8] sm:$0xff]
  %v309 = vld [vmem:[%s1 + $0x1d0] sm:$0xff]
  %v310 = vld [vmem:[%s1 + $0x1d8] sm:$0xff]
  %v311 = vld [vmem:[%s1 + $0x1e0] sm:$0xff]
  %v312 = vld [vmem:[%s1 + $0x1e8] sm:$0xff]
  %v313 = vld [vmem:[%s1 + $0x1f0] sm:$0xff]
  %v314 = vld [vmem:[%s1 + $0x1f8] sm:$0xff]
  %v315 = vld [vmem:[%s1 + $0x200] sm:$0xff]
  %v316 = vld [vmem:[%s1 + $0x208] sm:$0xff]
  %v317 = vld [vmem:[%s1 + $0x210] sm:$0xff]
  %v318 = vld [vmem:[%s1 + $0x218] sm:$0xff]
  %v319 = vld [vmem:[%s1 + $0x220] sm:$0xff]
  %v320 = vld [vmem:[%s1 + $0x228] sm:$0xff]
  %v321 = vld [vmem:[%s1 + $0x230] sm:$0xff]
  %v322 = vld [vmem:[%s1 + $0x238] sm:$0xff]
  %v323 = vld [vmem:[%s1 + $0x240] sm:$0xff]
  %v324 = vld [vmem:[%s1 + $0x248] sm:$0xff]
  %v325 = vld [vmem:[%s1 + $0x250] sm:$0xff]
  %v326 = vld [vmem:[%s1 + $0x258] sm:$0xff]
  %v327 = vld [vmem:[%s1 + $0x260] sm:$0xff]
  %v328 = vld [vmem:[%s1 + $0x268] sm:$0xff]
  %v329 = vld [vmem:[%s1 + $0x270] sm:$0xff]
  %v330 = vld [vmem:[%s1 + $0x278] sm:$0xff]
  %v331 = vld [vmem:[%s1 + $0x280] sm:$0xff]
  %v332 = vld [vmem:[%s1 + $0x288] sm:$0xff]
  %v333 = vld [vmem:[%s1 + $0x290] sm:$0xff]
  %v334 = vld [vmem:[%s1 + $0x298] sm:$0xff]
  %v335 = vld [vmem:[%s1 + $0x2a0] sm:$0xff]
  %v336 = vld [vmem:[%s1 + $0x2a8] sm:$0xff]
  %v337 = vld [vmem:[%s1 + $0x2b0] sm:$0xff]
  %v338 = vld [vmem:[%s1 + $0x2b8] sm:$0xff]
  %v339 = vld [vmem:[%s1 + $0x2c0] sm:$0xff]
  %v340 = vld [vmem:[%s1 + $0x2c8] sm:$0xff]
  %v341 = vld [vmem:[%s1 + $0x2d0] sm:$0xff]
  %v342 = vld [vmem:[%s1 + $0x2d8] sm:$0xff]
  %v343 = vld [vmem:[%s1 + $0x2e0] sm:$0xff]
  %v344 = vld [vmem:[%s1 + $0x2e8] sm:$0xff]
  %v345 = vld [vmem:[%s1 + $0x2f0] sm:$0xff]
  %v346 = vld [vmem:[%s1 + $0x2f8] sm:$0xff]
  %v443 = vunpack.c.l.b16 %v251
  %v444 = vunpack.c.h.b16 %v251
  %v445 = vunpack.c.l.b16 %v252
  %v446 = vunpack.c.h.b16 %v252
  %v447 = vunpack.c.l.b16 %v253
  %v448 = vunpack.c.h.b16 %v253
  %v449 = vunpack.c.l.b16 %v254
  %v450 = vunpack.c.h.b16 %v254
  %v451 = vunpack.c.l.b16 %v255
  %v452 = vunpack.c.h.b16 %v255
  %v453 = vunpack.c.l.b16 %v256
  %v454 = vunpack.c.h.b16 %v256
  %v455 = vunpack.c.l.b16 %v257
  %v456 = vunpack.c.h.b16 %v257
  %v457 = vunpack.c.l.b16 %v258
  %v458 = vunpack.c.h.b16 %v258
  %v459 = vunpack.c.l.b16 %v259
  %v460 = vunpack.c.h.b16 %v259
  %v461 = vunpack.c.l.b16 %v260
  %v462 = vunpack.c.h.b16 %v260
  %v463 = vunpack.c.l.b16 %v261
  %v464 = vunpack.c.h.b16 %v261
  %v465 = vunpack.c.l.b16 %v262
  %v466 = vunpack.c.h.b16 %v262
  %v467 = vunpack.c.l.b16 %v263
  %v468 = vunpack.c.h.b16 %v263
  %v469 = vunpack.c.l.b16 %v264
  %v470 = vunpack.c.h.b16 %v264
  %v471 = vunpack.c.l.b16 %v265
  %v472 = vunpack.c.h.b16 %v265
  %v473 = vunpack.c.l.b16 %v266
  %v474 = vunpack.c.h.b16 %v266
  %v475 = vunpack.c.l.b16 %v267
  %v476 = vunpack.c.h.b16 %v267
  %v477 = vunpack.c.l.b16 %v268
  %v478 = vunpack.c.h.b16 %v268
  %v479 = vunpack.c.l.b16 %v269
  %v480 = vunpack.c.h.b16 %v269
  %v481 = vunpack.c.l.b16 %v270
  %v482 = vunpack.c.h.b16 %v270
  %v483 = vunpack.c.l.b16 %v271
  %v484 = vunpack.c.h.b16 %v271
  %v485 = vunpack.c.l.b16 %v272
  %v486 = vunpack.c.h.b16 %v272
  %v487 = vunpack.c.l.b16 %v273
  %v488 = vunpack.c.h.b16 %v273
  %v489 = vunpack.c.l.b16 %v274
  %v490 = vunpack.c.h.b16 %v274
  %v491 = vunpack.c.l.b16 %v275
  %v492 = vunpack.c.h.b16 %v275
  %v493 = vunpack.c.l.b16 %v276
  %v494 = vunpack.c.h.b16 %v276
  %v495 = vunpack.c.l.b16 %v277
  %v496 = vunpack.c.h.b16 %v277
  %v497 = vunpack.c.l.b16 %v278
  %v498 = vunpack.c.h.b16 %v278
  %v499 = vunpack.c.l.b16 %v279
  %v500 = vunpack.c.h.b16 %v279
  %v501 = vunpack.c.l.b16 %v280
  %v502 = vunpack.c.h.b16 %v280
  %v503 = vunpack.c.l.b16 %v281
  %v504 = vunpack.c.h.b16 %v281
  %v505 = vunpack.c.l.b16 %v282
  %v506 = vunpack.c.h.b16 %v282
  %v507 = vunpack.c.l.b16 %v283
  %v508 = vunpack.c.h.b16 %v283
  %v509 = vunpack.c.l.b16 %v284
  %v510 = vunpack.c.h.b16 %v284
  %v511 = vunpack.c.l.b16 %v285
  %v512 = vunpack.c.h.b16 %v285
  %v513 = vunpack.c.l.b16 %v286
  %v514 = vunpack.c.h.b16 %v286
  %v515 = vunpack.c.l.b16 %v287
  %v516 = vunpack.c.h.b16 %v287
  %v517 = vunpack.c.l.b16 %v288
  %v518 = vunpack.c.h.b16 %v288
  %v519 = vunpack.c.l.b16 %v289
  %v520 = vunpack.c.h.b16 %v289
  %v521 = vunpack.c.l.b16 %v290
  %v522 = vunpack.c.h.b16 %v290
  %v523 = vunpack.c.l.b16 %v291
  %v524 = vunpack.c.h.b16 %v291
  %v525 = vunpack.c.l.b16 %v292
  %v526 = vunpack.c.h.b16 %v292
  %v527 = vunpack.c.l.b16 %v293
  %v528 = vunpack.c.h.b16 %v293
  %v529 = vunpack.c.l.b16 %v294
  %v530 = vunpack.c.h.b16 %v294
  %v531 = vunpack.c.l.b16 %v295
  %v532 = vunpack.c.h.b16 %v295
  %v533 = vunpack.c.l.b16 %v296
  %v534 = vunpack.c.h.b16 %v296
  %v535 = vunpack.c.l.b16 %v297
  %v536 = vunpack.c.h.b16 %v297
  %v537 = vunpack.c.l.b16 %v298
  %v538 = vunpack.c.h.b16 %v298
  %v539 = vunpack.c.l.b16 %v299
  %v540 = vunpack.c.h.b16 %v299
  %v541 = vunpack.c.l.b16 %v300
  %v542 = vunpack.c.h.b16 %v300
  %v543 = vunpack.c.l.b16 %v301
  %v544 = vunpack.c.h.b16 %v301
  %v545 = vunpack.c.l.b16 %v302
  %v546 = vunpack.c.h.b16 %v302
  %v547 = vunpack.c.l.b16 %v303
  %v548 = vunpack.c.h.b16 %v303
  %v549 = vunpack.c.l.b16 %v304
  %v550 = vunpack.c.h.b16 %v304
  %v551 = vunpack.c.l.b16 %v305
  %v552 = vunpack.c.h.b16 %v305
  %v553 = vunpack.c.l.b16 %v306
  %v554 = vunpack.c.h.b16 %v306
  %v555 = vunpack.c.l.b16 %v307
  %v556 = vunpack.c.h.b16 %v307
  %v557 = vunpack.c.l.b16 %v308
  %v558 = vunpack.c.h.b16 %v308
  %v559 = vunpack.c.l.b16 %v309
  %v560 = vunpack.c.h.b16 %v309
  %v561 = vunpack.c.l.b16 %v310
  %v562 = vunpack.c.h.b16 %v310
  %v563 = vunpack.c.l.b16 %v311
  %v564 = vunpack.c.h.b16 %v311
  %v565 = vunpack.c.l.b16 %v312
  %v566 = vunpack.c.h.b16 %v312
  %v567 = vunpack.c.l.b16 %v313
  %v568 = vunpack.c.h.b16 %v313
  %v569 = vunpack.c.l.b16 %v314
  %v570 = vunpack.c.h.b16 %v314
  %v571 = vunpack.c.l.b16 %v315
  %v572 = vunpack.c.h.b16 %v315
  %v573 = vunpack.c.l.b16 %v316
  %v574 = vunpack.c.h.b16 %v316
  %v575 = vunpack.c.l.b16 %v317
  %v576 = vunpack.c.h.b16 %v317
  %v577 = vunpack.c.l.b16 %v318
  %v578 = vunpack.c.h.b16 %v318
  %v579 = vunpack.c.l.b16 %v319
  %v580 = vunpack.c.h.b16 %v319
  %v581 = vunpack.c.l.b16 %v320
  %v582 = vunpack.c.h.b16 %v320
  %v583 = vunpack.c.l.b16 %v321
  %v584 = vunpack.c.h.b16 %v321
  %v585 = vunpack.c.l.b16 %v322
  %v586 = vunpack.c.h.b16 %v322
  %v587 = vunpack.c.l.b16 %v323
  %v588 = vunpack.c.h.b16 %v323
  %v589 = vunpack.c.l.b16 %v324
  %v590 = vunpack.c.h.b16 %v324
  %v591 = vunpack.c.l.b16 %v325
  %v592 = vunpack.c.h.b16 %v325
  %v593 = vunpack.c.l.b16 %v326
  %v594 = vunpack.c.h.b16 %v326
  %v595 = vunpack.c.l.b16 %v327
  %v596 = vunpack.c.h.b16 %v327
  %v597 = vunpack.c.l.b16 %v328
  %v598 = vunpack.c.h.b16 %v328
  %v599 = vunpack.c.l.b16 %v329
  %v600 = vunpack.c.h.b16 %v329
  %v601 = vunpack.c.l.b16 %v330
  %v602 = vunpack.c.h.b16 %v330
  %v603 = vunpack.c.l.b16 %v331
  %v604 = vunpack.c.h.b16 %v331
  %v605 = vunpack.c.l.b16 %v332
  %v606 = vunpack.c.h.b16 %v332
  %v607 = vunpack.c.l.b16 %v333
  %v608 = vunpack.c.h.b16 %v333
  %v609 = vunpack.c.l.b16 %v334
  %v610 = vunpack.c.h.b16 %v334
  %v611 = vunpack.c.l.b16 %v335
  %v612 = vunpack.c.h.b16 %v335
  %v613 = vunpack.c.l.b16 %v336
  %v614 = vunpack.c.h.b16 %v336
  %v615 = vunpack.c.l.b16 %v337
  %v616 = vunpack.c.h.b16 %v337
  %v617 = vunpack.c.l.b16 %v338
  %v618 = vunpack.c.h.b16 %v338
  %v619 = vunpack.c.l.b16 %v339
  %v620 = vunpack.c.h.b16 %v339
  %v621 = vunpack.c.l.b16 %v340
  %v622 = vunpack.c.h.b16 %v340
  %v623 = vunpack.c.l.b16 %v341
  %v624 = vunpack.c.h.b16 %v341
  %v625 = vunpack.c.l.b16 %v342
  %v626 = vunpack.c.h.b16 %v342
  %v627 = vunpack.c.l.b16 %v343
  %v628 = vunpack.c.h.b16 %v343
  %v629 = vunpack.c.l.b16 %v344
  %v630 = vunpack.c.h.b16 %v344
  %v631 = vunpack.c.l.b16 %v345
  %v632 = vunpack.c.h.b16 %v345
  %v633 = vunpack.c.l.b16 %v346
  %v634 = vunpack.c.h.b16 %v346
  %v635 = vpack.c.b16 %v449, %v443
  %v636 = vpack.c.b16 %v450, %v444
  %v637 = vpack.c.b16 %v451, %v445
  %v638 = vpack.c.b16 %v452, %v446
  %v639 = vpack.c.b16 %v453, %v447
  %v640 = vpack.c.b16 %v454, %v448
  %v641 = vpack.c.b16 %v461, %v455
  %v642 = vpack.c.b16 %v462, %v456
  %v643 = vpack.c.b16 %v463, %v457
  %v644 = vpack.c.b16 %v464, %v458
  %v645 = vpack.c.b16 %v465, %v459
  %v646 = vpack.c.b16 %v466, %v460
  %v647 = vpack.c.b16 %v473, %v467
  %v648 = vpack.c.b16 %v474, %v468
  %v649 = vpack.c.b16 %v475, %v469
  %v650 = vpack.c.b16 %v476, %v470
  %v651 = vpack.c.b16 %v477, %v471
  %v652 = vpack.c.b16 %v478, %v472
  %v653 = vpack.c.b16 %v485, %v479
  %v654 = vpack.c.b16 %v486, %v480
  %v655 = vpack.c.b16 %v487, %v481
  %v656 = vpack.c.b16 %v488, %v482
  %v657 = vpack.c.b16 %v489, %v483
  %v658 = vpack.c.b16 %v490, %v484
  %v659 = vpack.c.b16 %v497, %v491
  %v660 = vpack.c.b16 %v498, %v492
  %v661 = vpack.c.b16 %v499, %v493
  %v662 = vpack.c.b16 %v500, %v494
  %v663 = vpack.c.b16 %v501, %v495
  %v664 = vpack.c.b16 %v502, %v496
  %v665 = vpack.c.b16 %v509, %v503
  %v666 = vpack.c.b16 %v510, %v504
  %v667 = vpack.c.b16 %v511, %v505
  %v668 = vpack.c.b16 %v512, %v506
  %v669 = vpack.c.b16 %v513, %v507
  %v670 = vpack.c.b16 %v514, %v508
  %v671 = vpack.c.b16 %v521, %v515
  %v672 = vpack.c.b16 %v522, %v516
  %v673 = vpack.c.b16 %v523, %v517
  %v674 = vpack.c.b16 %v524, %v518
  %v675 = vpack.c.b16 %v525, %v519
  %v676 = vpack.c.b16 %v526, %v520
  %v677 = vpack.c.b16 %v533, %v527
  %v678 = vpack.c.b16 %v534, %v528
  %v679 = vpack.c.b16 %v535, %v529
  %v680 = vpack.c.b16 %v536, %v530
  %v681 = vpack.c.b16 %v537, %v531
  %v682 = vpack.c.b16 %v538, %v532
  %v683 = vpack.c.b16 %v545, %v539
  %v684 = vpack.c.b16 %v546, %v540
  %v685 = vpack.c.b16 %v547, %v541
  %v686 = vpack.c.b16 %v548, %v542
  %v687 = vpack.c.b16 %v549, %v543
  %v688 = vpack.c.b16 %v550, %v544
  %v689 = vpack.c.b16 %v557, %v551
  %v690 = vpack.c.b16 %v558, %v552
  %v691 = vpack.c.b16 %v559, %v553
  %v692 = vpack.c.b16 %v560, %v554
  %v693 = vpack.c.b16 %v561, %v555
  %v694 = vpack.c.b16 %v562, %v556
  %v695 = vpack.c.b16 %v569, %v563
  %v696 = vpack.c.b16 %v570, %v564
  %v697 = vpack.c.b16 %v571, %v565
  %v698 = vpack.c.b16 %v572, %v566
  %v699 = vpack.c.b16 %v573, %v567
  %v700 = vpack.c.b16 %v574, %v568
  %v701 = vpack.c.b16 %v581, %v575
  %v702 = vpack.c.b16 %v582, %v576
  %v703 = vpack.c.b16 %v583, %v577
  %v704 = vpack.c.b16 %v584, %v578
  %v705 = vpack.c.b16 %v585, %v579
  %v706 = vpack.c.b16 %v586, %v580
  %v707 = vpack.c.b16 %v593, %v587
  %v708 = vpack.c.b16 %v594, %v588
  %v709 = vpack.c.b16 %v595, %v589
  %v710 = vpack.c.b16 %v596, %v590
  %v711 = vpack.c.b16 %v597, %v591
  %v712 = vpack.c.b16 %v598, %v592
  %v713 = vpack.c.b16 %v605, %v599
  %v714 = vpack.c.b16 %v606, %v600
  %v715 = vpack.c.b16 %v607, %v601
  %v716 = vpack.c.b16 %v608, %v602
  %v717 = vpack.c.b16 %v609, %v603
  %v718 = vpack.c.b16 %v610, %v604
  %v719 = vpack.c.b16 %v617, %v611
  %v720 = vpack.c.b16 %v618, %v612
  %v721 = vpack.c.b16 %v619, %v613
  %v722 = vpack.c.b16 %v620, %v614
  %v723 = vpack.c.b16 %v621, %v615
  %v724 = vpack.c.b16 %v622, %v616
  %v725 = vpack.c.b16 %v629, %v623
  %v726 = vpack.c.b16 %v630, %v624
  %v727 = vpack.c.b16 %v631, %v625
  %v728 = vpack.c.b16 %v632, %v626
  %v729 = vpack.c.b16 %v633, %v627
  %v730 = vpack.c.b16 %v634, %v628
  %827 = vmatprep.subr.bf16.mxu0 %v636
  %828 = vmatpush1.bf16.msra.mxu0 %v635
  %829 = vmatprep.subr.bf16.mxu0 %v642
  %830 = vmatpush1.bf16.msra.mxu0 %v641
  %831 = vmatprep.subr.bf16.mxu0 %v648
  %832 = vmatpush1.bf16.msra.mxu0 %v647
  %833 = vmatprep.subr.bf16.mxu0 %v654
  %834 = vmatpush1.bf16.msra.mxu0 %v653
  %835 = vmatprep.subr.bf16.mxu0 %v660
  %836 = vmatpush1.bf16.msra.mxu0 %v659
  %837 = vmatprep.subr.bf16.mxu0 %v666
  %838 = vmatpush1.bf16.msra.mxu0 %v665
  %839 = vmatprep.subr.bf16.mxu0 %v672
  %840 = vmatpush1.bf16.msra.mxu0 %v671
  %841 = vmatprep.subr.bf16.mxu0 %v678
  %842 = vmatpush1.bf16.msra.mxu0 %v677
  %843 = vmatprep.subr.bf16.mxu0 %v684
  %844 = vmatpush1.bf16.msra.mxu0 %v683
  %845 = vmatprep.subr.bf16.mxu0 %v690
  %846 = vmatpush1.bf16.msra.mxu0 %v689
  %847 = vmatprep.subr.bf16.mxu0 %v696
  %848 = vmatpush1.bf16.msra.mxu0 %v695
  %849 = vmatprep.subr.bf16.mxu0 %v702
  %850 = vmatpush1.bf16.msra.mxu0 %v701
  %851 = vmatprep.subr.bf16.mxu0 %v708
  %852 = vmatpush1.bf16.msra.mxu0 %v707
  %853 = vmatprep.subr.bf16.mxu0 %v714
  %854 = vmatpush1.bf16.msra.mxu0 %v713
  %855 = vmatprep.subr.bf16.mxu0 %v720
  %856 = vmatpush1.bf16.msra.mxu0 %v719
  %857 = vmatprep.subr.bf16.mxu0 %v726
  %858 = vmatpush1.bf16.msra.mxu0 %v725
  %859 = vmatprep.mubr.bf16.mxu0 %v236
  %860 = vmatmul.mubr.bf16.gmra.mrb[0].mxu0 %v235
  %v861 = vpop.f32.mrb[0].mxu0
  %v862 = vadd.f32 0.0, %v861
  %v863 = vpop.f32.mrb[0].mxu0
  %v864 = vadd.f32 0.0, %v863
  %v865 = vpop.f32.mrb[0].mxu0
  %v866 = vadd.f32 0.0, %v865
  %v867 = vpop.f32.mrb[0].mxu0
  %v868 = vadd.f32 0.0, %v867
  %869 = vmatprep.mubr.bf16.mxu0 %v238
  %870 = vmatmul.mubr.bf16.gmra.mrb[0].mxu0 %v237
  %v871 = vpop.f32.mrb[0].mxu0
  %v872 = vadd.f32 0.0, %v871
  %v873 = vpop.f32.mrb[0].mxu0
  %v874 = vadd.f32 0.0, %v873
  %v875 = vpop.f32.mrb[0].mxu0
  %v876 = vadd.f32 0.0, %v875
  %v877 = vpop.f32.mrb[0].mxu0
  %v878 = vadd.f32 0.0, %v877
  %879 = vmatprep.mubr.bf16.mxu0 %v240
  %880 = vmatmul.mubr.bf16.gmra.mrb[0].mxu0 %v239
  %v881 = vpop.f32.mrb[0].mxu0
  %v882 = vadd.f32 0.0, %v881
  %v883 = vpop.f32.mrb[0].mxu0
  %v884 = vadd.f32 0.0, %v883
  %v885 = vpop.f32.mrb[0].mxu0
  %v886 = vadd.f32 0.0, %v885
  %v887 = vpop.f32.mrb[0].mxu0
  %v888 = vadd.f32 0.0, %v887
  %889 = vmatprep.mubr.bf16.mxu0 %v242
  %890 = vmatmul.mubr.bf16.gmra.mrb[0].mxu0 %v241
  %v891 = vpop.f32.mrb[0].mxu0
  %v892 = vadd.f32 0.0, %v891
  %v893 = vpop.f32.mrb[0].mxu0
  %v894 = vadd.f32 0.0, %v893
  %v895 = vpop.f32.mrb[0].mxu0
  %v896 = vadd.f32 0.0, %v895
  %v897 = vpop.f32.mrb[0].mxu0
  %v898 = vadd.f32 0.0, %v897
  %899 = vmatprep.mubr.bf16.mxu0 %v244
  %900 = vmatmul.mubr.bf16.gmra.mrb[0].mxu0 %v243
  %v901 = vpop.f32.mrb[0].mxu0
  %v902 = vadd.f32 0.0, %v901
  %v903 = vpop.f32.mrb[0].mxu0
  %v904 = vadd.f32 0.0, %v903
  %v905 = vpop.f32.mrb[0].mxu0
  %v906 = vadd.f32 0.0, %v905
  %v907 = vpop.f32.mrb[0].mxu0
  %v908 = vadd.f32 0.0, %v907
  %909 = vmatprep.mubr.bf16.mxu0 %v246
  %910 = vmatmul.mubr.bf16.gmra.mrb[0].mxu0 %v245
  %v911 = vpop.f32.mrb[0].mxu0
  %v912 = vadd.f32 0.0, %v911
  %v913 = vpop.f32.mrb[0].mxu0
  %v914 = vadd.f32 0.0, %v913
  %v915 = vpop.f32.mrb[0].mxu0
  %v916 = vadd.f32 0.0, %v915
  %v917 = vpop.f32.mrb[0].mxu0
  %v918 = vadd.f32 0.0, %v917
  %919 = vmatprep.mubr.bf16.mxu0 %v248
  %920 = vmatmul.mubr.bf16.gmra.mrb[0].mxu0 %v247
  %v921 = vpop.f32.mrb[0].mxu0
  %v922 = vadd.f32 0.0, %v921
  %v923 = vpop.f32.mrb[0].mxu0
  %v924 = vadd.f32 0.0, %v923
  %v925 = vpop.f32.mrb[0].mxu0
  %v926 = vadd.f32 0.0, %v925
  %v927 = vpop.f32.mrb[0].mxu0
  %v928 = vadd.f32 0.0, %v927
  %929 = vmatprep.mubr.bf16.mxu0 %v250
  %930 = vmatmul.mubr.bf16.gmra.mrb[0].mxu0 %v249
  %v931 = vpop.f32.mrb[0].mxu0
  %v932 = vadd.f32 0.0, %v931
  %v933 = vpop.f32.mrb[0].mxu0
  %v934 = vadd.f32 0.0, %v933
  %v935 = vpop.f32.mrb[0].mxu0
  %v936 = vadd.f32 0.0, %v935
  %v937 = vpop.f32.mrb[0].mxu0
  %v938 = vadd.f32 0.0, %v937
  %939 = vdwg.mxu0
  %940 = vmatprep.subr.bf16.mxu0 %v638
  %941 = vmatpush1.bf16.msra.mxu0 %v637
  %942 = vmatprep.subr.bf16.mxu0 %v644
  %943 = vmatpush1.bf16.msra.mxu0 %v643
  %944 = vmatprep.subr.bf16.mxu0 %v650
  %945 = vmatpush1.bf16.msra.mxu0 %v649
  %946 = vmatprep.subr.bf16.mxu0 %v656
  %947 = vmatpush1.bf16.msra.mxu0 %v655
  %948 = vmatprep.subr.bf16.mxu0 %v662
  %949 = vmatpush1.bf16.msra.mxu0 %v661
  %950 = vmatprep.subr.bf16.mxu0 %v668
  %951 = vmatpush1.bf16.msra.mxu0 %v667
  %952 = vmatprep.subr.bf16.mxu0 %v674
  %953 = vmatpush1.bf16.msra.mxu0 %v673
  %954 = vmatprep.subr.bf16.mxu0 %v680
  %955 = vmatpush1.bf16.msra.mxu0 %v679
  %956 = vmatprep.subr.bf16.mxu0 %v686
  %957 = vmatpush1.bf16.msra.mxu0 %v685
  %958 = vmatprep.subr.bf16.mxu0 %v692
  %959 = vmatpush1.bf16.msra.mxu0 %v691
  %960 = vmatprep.subr.bf16.mxu0 %v698
  %961 = vmatpush1.bf16.msra.mxu0 %v697
  %962 = vmatprep.subr.bf16.mxu0 %v704
  %963 = vmatpush1.bf16.msra.mxu0 %v703
  %964 = vmatprep.subr.bf16.mxu0 %v710
  %965 = vmatpush1.bf16.msra.mxu0 %v709
  %966 = vmatprep.subr.bf16.mxu0 %v716
  %967 = vmatpush1.bf16.msra.mxu0 %v715
  %968 = vmatprep.subr.bf16.mxu0 %v722
  %969 = vmatpush1.bf16.msra.mxu0 %v721
  %970 = vmatprep.subr.bf16.mxu0 %v728
  %971 = vmatpush1.bf16.msra.mxu0 %v727
  %972 = vmatprep.mubr.bf16.mxu0 %v236
  %973 = vmatmul.mubr.bf16.gmra.mrb[0].mxu0 %v235
  %v974 = vpop.f32.mrb[0].mxu0
  %v975 = vadd.f32 0.0, %v974
  %v976 = vpop.f32.mrb[0].mxu0
  %v977 = vadd.f32 0.0, %v976
  %v978 = vpop.f32.mrb[0].mxu0
  %v979 = vadd.f32 0.0, %v978
  %v980 = vpop.f32.mrb[0].mxu0
  %v981 = vadd.f32 0.0, %v980
  %982 = vmatprep.mubr.bf16.mxu0 %v238
  %983 = vmatmul.mubr.bf16.gmra.mrb[0].mxu0 %v237
  %v984 = vpop.f32.mrb[0].mxu0
  %v985 = vadd.f32 0.0, %v984
  %v986 = vpop.f32.mrb[0].mxu0
  %v987 = vadd.f32 0.0, %v986
  %v988 = vpop.f32.mrb[0].mxu0
  %v989 = vadd.f32 0.0, %v988
  %v990 = vpop.f32.mrb[0].mxu0
  %v991 = vadd.f32 0.0, %v990
  %992 = vmatprep.mubr.bf16.mxu0 %v240
  %993 = vmatmul.mubr.bf16.gmra.mrb[0].mxu0 %v239
  %v994 = vpop.f32.mrb[0].mxu0
  %v995 = vadd.f32 0.0, %v994
  %v996 = vpop.f32.mrb[0].mxu0
  %v997 = vadd.f32 0.0, %v996
  %v998 = vpop.f32.mrb[0].mxu0
  %v999 = vadd.f32 0.0, %v998
  %v1000 = vpop.f32.mrb[0].mxu0
  %v1001 = vadd.f32 0.0, %v1000
  %1002 = vmatprep.mubr.bf16.mxu0 %v242
  %1003 = vmatmul.mubr.bf16.gmra.mrb[0].mxu0 %v241
  %v1004 = vpop.f32.mrb[0].mxu0
  %v1005 = vadd.f32 0.0, %v1004
  %v1006 = vpop.f32.mrb[0].mxu0
  %v1007 = vadd.f32 0.0, %v1006
  %v1008 = vpop.f32.mrb[0].mxu0
  %v1009 = vadd.f32 0.0, %v1008
  %v1010 = vpop.f32.mrb[0].mxu0
  %v1011 = vadd.f32 0.0, %v1010
  %1012 = vmatprep.mubr.bf16.mxu0 %v244
  %1013 = vmatmul.mubr.bf16.gmra.mrb[0].mxu0 %v243
  %v1014 = vpop.f32.mrb[0].mxu0
  %v1015 = vadd.f32 0.0, %v1014
  %v1016 = vpop.f32.mrb[0].mxu0
  %v1017 = vadd.f32 0.0, %v1016
  %v1018 = vpop.f32.mrb[0].mxu0
  %v1019 = vadd.f32 0.0, %v1018
  %v1020 = vpop.f32.mrb[0].mxu0
  %v1021 = vadd.f32 0.0, %v1020
  %1022 = vmatprep.mubr.bf16.mxu0 %v246
  %1023 = vmatmul.mubr.bf16.gmra.mrb[0].mxu0 %v245
  %v1024 = vpop.f32.mrb[0].mxu0
  %v1025 = vadd.f32 0.0, %v1024
  %v1026 = vpop.f32.mrb[0].mxu0
  %v1027 = vadd.f32 0.0, %v1026
  %v1028 = vpop.f32.mrb[0].mxu0
  %v1029 = vadd.f32 0.0, %v1028
  %v1030 = vpop.f32.mrb[0].mxu0
  %v1031 = vadd.f32 0.0, %v1030
  %1032 = vmatprep.mubr.bf16.mxu0 %v248
  %1033 = vmatmul.mubr.bf16.gmra.mrb[0].mxu0 %v247
  %v1034 = vpop.f32.mrb[0].mxu0
  %v1035 = vadd.f32 0.0, %v1034
  %v1036 = vpop.f32.mrb[0].mxu0
  %v1037 = vadd.f32 0.0, %v1036
  %v1038 = vpop.f32.mrb[0].mxu0
  %v1039 = vadd.f32 0.0, %v1038
  %v1040 = vpop.f32.mrb[0].mxu0
  %v1041 = vadd.f32 0.0, %v1040
  %1042 = vmatprep.mubr.bf16.mxu0 %v250
  %1043 = vmatmul.mubr.bf16.gmra.mrb[0].mxu0 %v249
  %v1044 = vpop.f32.mrb[0].mxu0
  %v1045 = vadd.f32 0.0, %v1044
  %v1046 = vpop.f32.mrb[0].mxu0
  %v1047 = vadd.f32 0.0, %v1046
  %v1048 = vpop.f32.mrb[0].mxu0
  %v1049 = vadd.f32 0.0, %v1048
  %v1050 = vpop.f32.mrb[0].mxu0
  %v1051 = vadd.f32 0.0, %v1050
  %1052 = vdwg.mxu0
  %1053 = vmatprep.subr.bf16.mxu0 %v640
  %1054 = vmatpush1.bf16.msra.mxu0 %v639
  %1055 = vmatprep.subr.bf16.mxu0 %v646
  %1056 = vmatpush1.bf16.msra.mxu0 %v645
  %1057 = vmatprep.subr.bf16.mxu0 %v652
  %1058 = vmatpush1.bf16.msra.mxu0 %v651
  %1059 = vmatprep.subr.bf16.mxu0 %v658
  %1060 = vmatpush1.bf16.msra.mxu0 %v657
  %1061 = vmatprep.subr.bf16.mxu0 %v664
  %1062 = vmatpush1.bf16.msra.mxu0 %v663
  %1063 = vmatprep.subr.bf16.mxu0 %v670
  %1064 = vmatpush1.bf16.msra.mxu0 %v669
  %1065 = vmatprep.subr.bf16.mxu0 %v676
  %1066 = vmatpush1.bf16.msra.mxu0 %v675
  %1067 = vmatprep.subr.bf16.mxu0 %v682
  %1068 = vmatpush1.bf16.msra.mxu0 %v681
  %1069 = vmatprep.subr.bf16.mxu0 %v688
  %1070 = vmatpush1.bf16.msra.mxu0 %v687
  %1071 = vmatprep.subr.bf16.mxu0 %v694
  %1072 = vmatpush1.bf16.msra.mxu0 %v693
  %1073 = vmatprep.subr.bf16.mxu0 %v700
  %1074 = vmatpush1.bf16.msra.mxu0 %v699
  %1075 = vmatprep.subr.bf16.mxu0 %v706
  %1076 = vmatpush1.bf16.msra.mxu0 %v705
  %1077 = vmatprep.subr.bf16.mxu0 %v712
  %1078 = vmatpush1.bf16.msra.mxu0 %v711
  %1079 = vmatprep.subr.bf16.mxu0 %v718
  %1080 = vmatpush1.bf16.msra.mxu0 %v717
  %1081 = vmatprep.subr.bf16.mxu0 %v724
  %1082 = vmatpush1.bf16.msra.mxu0 %v723
  %1083 = vmatprep.subr.bf16.mxu0 %v730
  %1084 = vmatpush1.bf16.msra.mxu0 %v729
  %1085 = vmatprep.mubr.bf16.mxu0 %v236
  %1086 = vmatmul.mubr.bf16.gmra.mrb[0].mxu0 %v235
  %v1087 = vpop.f32.mrb[0].mxu0
  %v1088 = vadd.f32 0.0, %v1087
  %v1089 = vpop.f32.mrb[0].mxu0
  %v1090 = vadd.f32 0.0, %v1089
  %v1091 = vpop.f32.mrb[0].mxu0
  %v1092 = vadd.f32 0.0, %v1091
  %v1093 = vpop.f32.mrb[0].mxu0
  %v1094 = vadd.f32 0.0, %v1093
  %1095 = vmatprep.mubr.bf16.mxu0 %v238
  %1096 = vmatmul.mubr.bf16.gmra.mrb[0].mxu0 %v237
  %v1097 = vpop.f32.mrb[0].mxu0
  %v1098 = vadd.f32 0.0, %v1097
  %v1099 = vpop.f32.mrb[0].mxu0
  %v1100 = vadd.f32 0.0, %v1099
  %v1101 = vpop.f32.mrb[0].mxu0
  %v1102 = vadd.f32 0.0, %v1101
  %v1103 = vpop.f32.mrb[0].mxu0
  %v1104 = vadd.f32 0.0, %v1103
  %1105 = vmatprep.mubr.bf16.mxu0 %v240
  %1106 = vmatmul.mubr.bf16.gmra.mrb[0].mxu0 %v239
  %v1107 = vpop.f32.mrb[0].mxu0
  %v1108 = vadd.f32 0.0, %v1107
  %v1109 = vpop.f32.mrb[0].mxu0
  %v1110 = vadd.f32 0.0, %v1109
  %v1111 = vpop.f32.mrb[0].mxu0
  %v1112 = vadd.f32 0.0, %v1111
  %v1113 = vpop.f32.mrb[0].mxu0
  %v1114 = vadd.f32 0.0, %v1113
  %1115 = vmatprep.mubr.bf16.mxu0 %v242
  %1116 = vmatmul.mubr.bf16.gmra.mrb[0].mxu0 %v241
  %v1117 = vpop.f32.mrb[0].mxu0
  %v1118 = vadd.f32 0.0, %v1117
  %v1119 = vpop.f32.mrb[0].mxu0
  %v1120 = vadd.f32 0.0, %v1119
  %v1121 = vpop.f32.mrb[0].mxu0
  %v1122 = vadd.f32 0.0, %v1121
  %v1123 = vpop.f32.mrb[0].mxu0
  %v1124 = vadd.f32 0.0, %v1123
  %1125 = vmatprep.mubr.bf16.mxu0 %v244
  %1126 = vmatmul.mubr.bf16.gmra.mrb[0].mxu0 %v243
  %v1127 = vpop.f32.mrb[0].mxu0
  %v1128 = vadd.f32 0.0, %v1127
  %v1129 = vpop.f32.mrb[0].mxu0
  %v1130 = vadd.f32 0.0, %v1129
  %v1131 = vpop.f32.mrb[0].mxu0
  %v1132 = vadd.f32 0.0, %v1131
  %v1133 = vpop.f32.mrb[0].mxu0
  %v1134 = vadd.f32 0.0, %v1133
  %1135 = vmatprep.mubr.bf16.mxu0 %v246
  %1136 = vmatmul.mubr.bf16.gmra.mrb[0].mxu0 %v245
  %v1137 = vpop.f32.mrb[0].mxu0
  %v1138 = vadd.f32 0.0, %v1137
  %v1139 = vpop.f32.mrb[0].mxu0
  %v1140 = vadd.f32 0.0, %v1139
  %v1141 = vpop.f32.mrb[0].mxu0
  %v1142 = vadd.f32 0.0, %v1141
  %v1143 = vpop.f32.mrb[0].mxu0
  %v1144 = vadd.f32 0.0, %v1143
  %1145 = vmatprep.mubr.bf16.mxu0 %v248
  %1146 = vmatmul.mubr.bf16.gmra.mrb[0].mxu0 %v247
  %v1147 = vpop.f32.mrb[0].mxu0
  %v1148 = vadd.f32 0.0, %v1147
  %v1149 = vpop.f32.mrb[0].mxu0
  %v1150 = vadd.f32 0.0, %v1149
  %v1151 = vpop.f32.mrb[0].mxu0
  %v1152 = vadd.f32 0.0, %v1151
  %v1153 = vpop.f32.mrb[0].mxu0
  %v1154 = vadd.f32 0.0, %v1153
  %1155 = vmatprep.mubr.bf16.mxu0 %v250
  %1156 = vmatmul.mubr.bf16.gmra.mrb[0].mxu0 %v249
  %v1157 = vpop.f32.mrb[0].mxu0
  %v1158 = vadd.f32 0.0, %v1157
  %v1159 = vpop.f32.mrb[0].mxu0
  %v1160 = vadd.f32 0.0, %v1159
  %v1161 = vpop.f32.mrb[0].mxu0
  %v1162 = vadd.f32 0.0, %v1161
  %v1163 = vpop.f32.mrb[0].mxu0
  %v1164 = vadd.f32 0.0, %v1163
  %1165 = vdwg.mxu0
  %v1166 = vpack.c.bf16 %v866, %v862
  %v1167 = vpack.c.bf16 %v868, %v864
  %v1168 = vpack.c.bf16 %v979, %v975
  %v1169 = vpack.c.bf16 %v981, %v977
  %v1170 = vpack.c.bf16 %v1092, %v1088
  %v1171 = vpack.c.bf16 %v1094, %v1090
  %v1172 = vpack.c.bf16 %v876, %v872
  %v1173 = vpack.c.bf16 %v878, %v874
  %v1174 = vpack.c.bf16 %v989, %v985
  %v1175 = vpack.c.bf16 %v991, %v987
  %v1176 = vpack.c.bf16 %v1102, %v1098
  %v1177 = vpack.c.bf16 %v1104, %v1100
  %v1178 = vpack.c.bf16 %v886, %v882
  %v1179 = vpack.c.bf16 %v888, %v884
  %v1180 = vpack.c.bf16 %v999, %v995
  %v1181 = vpack.c.bf16 %v1001, %v997
  %v1182 = vpack.c.bf16 %v1112, %v1108
  %v1183 = vpack.c.bf16 %v1114, %v1110
  %v1184 = vpack.c.bf16 %v896, %v892
  %v1185 = vpack.c.bf16 %v898, %v894
  %v1186 = vpack.c.bf16 %v1009, %v1005
  %v1187 = vpack.c.bf16 %v1011, %v1007
  %v1188 = vpack.c.bf16 %v1122, %v1118
  %v1189 = vpack.c.bf16 %v1124, %v1120
  %v1190 = vpack.c.bf16 %v906, %v902
  %v1191 = vpack.c.bf16 %v908, %v904
  %v1192 = vpack.c.bf16 %v1019, %v1015
  %v1193 = vpack.c.bf16 %v1021, %v1017
  %v1194 = vpack.c.bf16 %v1132, %v1128
  %v1195 = vpack.c.bf16 %v1134, %v1130
  %v1196 = vpack.c.bf16 %v916, %v912
  %v1197 = vpack.c.bf16 %v918, %v914
  %v1198 = vpack.c.bf16 %v1029, %v1025
  %v1199 = vpack.c.bf16 %v1031, %v1027
  %v1200 = vpack.c.bf16 %v1142, %v1138
  %v1201 = vpack.c.bf16 %v1144, %v1140
  %v1202 = vpack.c.bf16 %v926, %v922
  %v1203 = vpack.c.bf16 %v928, %v924
  %v1204 = vpack.c.bf16 %v1039, %v1035
  %v1205 = vpack.c.bf16 %v1041, %v1037
  %v1206 = vpack.c.bf16 %v1152, %v1148
  %v1207 = vpack.c.bf16 %v1154, %v1150
  %v1208 = vpack.c.bf16 %v936, %v932
  %v1209 = vpack.c.bf16 %v938, %v934
  %v1210 = vpack.c.bf16 %v1049, %v1045
  %v1211 = vpack.c.bf16 %v1051, %v1047
  %v1212 = vpack.c.bf16 %v1162, %v1158
  %v1213 = vpack.c.bf16 %v1164, %v1160
  %v1222 = vunpack.c.l.b16 %v1166
  %v1223 = vunpack.c.h.b16 %v1166
  %v1224 = vunpack.c.l.b16 %v1172
  %v1225 = vunpack.c.h.b16 %v1172
  %v1226 = vunpack.c.l.b16 %v1178
  %v1227 = vunpack.c.h.b16 %v1178
  %v1228 = vunpack.c.l.b16 %v1184
  %v1229 = vunpack.c.h.b16 %v1184
  %v1230 = vunpack.c.l.b16 %v1190
  %v1231 = vunpack.c.h.b16 %v1190
  %v1232 = vunpack.c.l.b16 %v1196
  %v1233 = vunpack.c.h.b16 %v1196
  %v1234 = vunpack.c.l.b16 %v1202
  %v1235 = vunpack.c.h.b16 %v1202
  %v1236 = vunpack.c.l.b16 %v1208
  %v1237 = vunpack.c.h.b16 %v1208
  %v1238 = vpack.c.b16 %v1222, %v1222
  %v1239 = vpack.c.b16 %v1223, %v1223
  %v1240 = vpack.c.b16 %v1224, %v1224
  %v1241 = vpack.c.b16 %v1225, %v1225
  %v1242 = vpack.c.b16 %v1226, %v1226
  %v1243 = vpack.c.b16 %v1227, %v1227
  %v1244 = vpack.c.b16 %v1228, %v1228
  %v1245 = vpack.c.b16 %v1229, %v1229
  %v1246 = vpack.c.b16 %v1230, %v1230
  %v1247 = vpack.c.b16 %v1231, %v1231
  %v1248 = vpack.c.b16 %v1232, %v1232
  %v1249 = vpack.c.b16 %v1233, %v1233
  %v1250 = vpack.c.b16 %v1234, %v1234
  %v1251 = vpack.c.b16 %v1235, %v1235
  %v1252 = vpack.c.b16 %v1236, %v1236
  %v1253 = vpack.c.b16 %v1237, %v1237
  %1270 = vst [vmem:[%s6] sm:$0xf] %v1238
  %1271 = vst [vmem:[%s6 + $0x4] sm:$0xf] %v1239
  %1272 = vst [vmem:[%s6 + $0x8] sm:$0xf] %v1240
  %1273 = vst [vmem:[%s6 + $0xc] sm:$0xf] %v1241
  %1274 = vst [vmem:[%s6 + $0x10] sm:$0xf] %v1242
  %1275 = vst [vmem:[%s6 + $0x14] sm:$0xf] %v1243
  %1276 = vst [vmem:[%s6 + $0x18] sm:$0xf] %v1244
  %1277 = vst [vmem:[%s6 + $0x1c] sm:$0xf] %v1245
  %1278 = vst [vmem:[%s6 + $0x20] sm:$0xf] %v1246
  %1279 = vst [vmem:[%s6 + $0x24] sm:$0xf] %v1247
  %1280 = vst [vmem:[%s6 + $0x28] sm:$0xf] %v1248
  %1281 = vst [vmem:[%s6 + $0x2c] sm:$0xf] %v1249
  %1282 = vst [vmem:[%s6 + $0x30] sm:$0xf] %v1250
  %1283 = vst [vmem:[%s6 + $0x34] sm:$0xf] %v1251
  %1284 = vst [vmem:[%s6 + $0x38] sm:$0xf] %v1252
  %1285 = vst [vmem:[%s6 + $0x3c] sm:$0xf] %v1253
  %v1294 = vunpack.c.l.b16 %v1168
  %v1295 = vunpack.c.h.b16 %v1168
  %v1296 = vunpack.c.l.b16 %v1174
  %v1297 = vunpack.c.h.b16 %v1174
  %v1298 = vunpack.c.l.b16 %v1180
  %v1299 = vunpack.c.h.b16 %v1180
  %v1300 = vunpack.c.l.b16 %v1186
  %v1301 = vunpack.c.h.b16 %v1186
  %v1302 = vunpack.c.l.b16 %v1192
  %v1303 = vunpack.c.h.b16 %v1192
  %v1304 = vunpack.c.l.b16 %v1198
  %v1305 = vunpack.c.h.b16 %v1198
  %v1306 = vunpack.c.l.b16 %v1204
  %v1307 = vunpack.c.h.b16 %v1204
  %v1308 = vunpack.c.l.b16 %v1210
  %v1309 = vunpack.c.h.b16 %v1210
  %v1310 = vpack.c.b16 %v1294, %v1294
  %v1311 = vpack.c.b16 %v1295, %v1295
  %v1312 = vpack.c.b16 %v1296, %v1296
  %v1313 = vpack.c.b16 %v1297, %v1297
  %v1314 = vpack.c.b16 %v1298, %v1298
  %v1315 = vpack.c.b16 %v1299, %v1299
  %v1316 = vpack.c.b16 %v1300, %v1300
  %v1317 = vpack.c.b16 %v1301, %v1301
  %v1318 = vpack.c.b16 %v1302, %v1302
  %v1319 = vpack.c.b16 %v1303, %v1303
  %v1320 = vpack.c.b16 %v1304, %v1304
  %v1321 = vpack.c.b16 %v1305, %v1305
  %v1322 = vpack.c.b16 %v1306, %v1306
  %v1323 = vpack.c.b16 %v1307, %v1307
  %v1324 = vpack.c.b16 %v1308, %v1308
  %v1325 = vpack.c.b16 %v1309, %v1309
  %1342 = vst [vmem:[%s7] sm:$0xf] %v1310
  %1343 = vst [vmem:[%s7 + $0x4] sm:$0xf] %v1311
  %1344 = vst [vmem:[%s7 + $0x8] sm:$0xf] %v1312
  %1345 = vst [vmem:[%s7 + $0xc] sm:$0xf] %v1313
  %1346 = vst [vmem:[%s7 + $0x10] sm:$0xf] %v1314
  %1347 = vst [vmem:[%s7 + $0x14] sm:$0xf] %v1315
  %1348 = vst [vmem:[%s7 + $0x18] sm:$0xf] %v1316
  %1349 = vst [vmem:[%s7 + $0x1c] sm:$0xf] %v1317
  %1350 = vst [vmem:[%s7 + $0x20] sm:$0xf] %v1318
  %1351 = vst [vmem:[%s7 + $0x24] sm:$0xf] %v1319
  %1352 = vst [vmem:[%s7 + $0x28] sm:$0xf] %v1320
  %1353 = vst [vmem:[%s7 + $0x2c] sm:$0xf] %v1321
  %1354 = vst [vmem:[%s7 + $0x30] sm:$0xf] %v1322
  %1355 = vst [vmem:[%s7 + $0x34] sm:$0xf] %v1323
  %1356 = vst [vmem:[%s7 + $0x38] sm:$0xf] %v1324
  %1357 = vst [vmem:[%s7 + $0x3c] sm:$0xf] %v1325
  %v1366 = vunpack.c.l.b16 %v1170
  %v1367 = vunpack.c.h.b16 %v1170
  %v1368 = vunpack.c.l.b16 %v1176
  %v1369 = vunpack.c.h.b16 %v1176
  %v1370 = vunpack.c.l.b16 %v1182
  %v1371 = vunpack.c.h.b16 %v1182
  %v1372 = vunpack.c.l.b16 %v1188
  %v1373 = vunpack.c.h.b16 %v1188
  %v1374 = vunpack.c.l.b16 %v1194
  %v1375 = vunpack.c.h.b16 %v1194
  %v1376 = vunpack.c.l.b16 %v1200
  %v1377 = vunpack.c.h.b16 %v1200
  %v1378 = vunpack.c.l.b16 %v1206
  %v1379 = vunpack.c.h.b16 %v1206
  %v1380 = vunpack.c.l.b16 %v1212
  %v1381 = vunpack.c.h.b16 %v1212
  %v1382 = vpack.c.b16 %v1366, %v1366
  %v1383 = vpack.c.b16 %v1367, %v1367
  %v1384 = vpack.c.b16 %v1368, %v1368
  %v1385 = vpack.c.b16 %v1369, %v1369
  %v1386 = vpack.c.b16 %v1370, %v1370
  %v1387 = vpack.c.b16 %v1371, %v1371
  %v1388 = vpack.c.b16 %v1372, %v1372
  %v1389 = vpack.c.b16 %v1373, %v1373
  %v1390 = vpack.c.b16 %v1374, %v1374
  %v1391 = vpack.c.b16 %v1375, %v1375
  %v1392 = vpack.c.b16 %v1376, %v1376
  %v1393 = vpack.c.b16 %v1377, %v1377
  %v1394 = vpack.c.b16 %v1378, %v1378
  %v1395 = vpack.c.b16 %v1379, %v1379
  %v1396 = vpack.c.b16 %v1380, %v1380
  %v1397 = vpack.c.b16 %v1381, %v1381
  %1414 = vst [vmem:[%s8] sm:$0xf] %v1382
  %1415 = vst [vmem:[%s8 + $0x4] sm:$0xf] %v1383
  %1416 = vst [vmem:[%s8 + $0x8] sm:$0xf] %v1384
  %1417 = vst [vmem:[%s8 + $0xc] sm:$0xf] %v1385
  %1418 = vst [vmem:[%s8 + $0x10] sm:$0xf] %v1386
  %1419 = vst [vmem:[%s8 + $0x14] sm:$0xf] %v1387
  %1420 = vst [vmem:[%s8 + $0x18] sm:$0xf] %v1388
  %1421 = vst [vmem:[%s8 + $0x1c] sm:$0xf] %v1389
  %1422 = vst [vmem:[%s8 + $0x20] sm:$0xf] %v1390
  %1423 = vst [vmem:[%s8 + $0x24] sm:$0xf] %v1391
  %1424 = vst [vmem:[%s8 + $0x28] sm:$0xf] %v1392
  %1425 = vst [vmem:[%s8 + $0x2c] sm:$0xf] %v1393
  %1426 = vst [vmem:[%s8 + $0x30] sm:$0xf] %v1394
  %1427 = vst [vmem:[%s8 + $0x34] sm:$0xf] %v1395
  %1428 = vst [vmem:[%s8 + $0x38] sm:$0xf] %v1396
  %1429 = vst [vmem:[%s8 + $0x3c] sm:$0xf] %v1397
  %v1438 = vunpack.c.l.b16 %v1167
  %v1439 = vunpack.c.h.b16 %v1167
  %v1440 = vunpack.c.l.b16 %v1173
  %v1441 = vunpack.c.h.b16 %v1173
  %v1442 = vunpack.c.l.b16 %v1179
  %v1443 = vunpack.c.h.b16 %v1179
  %v1444 = vunpack.c.l.b16 %v1185
  %v1445 = vunpack.c.h.b16 %v1185
  %v1446 = vunpack.c.l.b16 %v1191
  %v1447 = vunpack.c.h.b16 %v1191
  %v1448 = vunpack.c.l.b16 %v1197
  %v1449 = vunpack.c.h.b16 %v1197
  %v1450 = vunpack.c.l.b16 %v1203
  %v1451 = vunpack.c.h.b16 %v1203
  %v1452 = vunpack.c.l.b16 %v1209
  %v1453 = vunpack.c.h.b16 %v1209
  %v1454 = vpack.c.b16 %v1438, %v1438
  %v1455 = vpack.c.b16 %v1439, %v1439
  %v1456 = vpack.c.b16 %v1440, %v1440
  %v1457 = vpack.c.b16 %v1441, %v1441
  %v1458 = vpack.c.b16 %v1442, %v1442
  %v1459 = vpack.c.b16 %v1443, %v1443
  %v1460 = vpack.c.b16 %v1444, %v1444
  %v1461 = vpack.c.b16 %v1445, %v1445
  %v1462 = vpack.c.b16 %v1446, %v1446
  %v1463 = vpack.c.b16 %v1447, %v1447
  %v1464 = vpack.c.b16 %v1448, %v1448
  %v1465 = vpack.c.b16 %v1449, %v1449
  %v1466 = vpack.c.b16 %v1450, %v1450
  %v1467 = vpack.c.b16 %v1451, %v1451
  %v1468 = vpack.c.b16 %v1452, %v1452
  %v1469 = vpack.c.b16 %v1453, %v1453
  %s1486 = scalar_lea.vmem %s6, 64
  %1487 = vst [vmem:[%s1486] sm:$0xf] %v1454
  %1488 = vst [vmem:[%s1486 + $0x4] sm:$0xf] %v1455
  %1489 = vst [vmem:[%s1486 + $0x8] sm:$0xf] %v1456
  %1490 = vst [vmem:[%s1486 + $0xc] sm:$0xf] %v1457
  %1491 = vst [vmem:[%s1486 + $0x10] sm:$0xf] %v1458
  %1492 = vst [vmem:[%s1486 + $0x14] sm:$0xf] %v1459
  %1493 = vst [vmem:[%s1486 + $0x18] sm:$0xf] %v1460
  %1494 = vst [vmem:[%s1486 + $0x1c] sm:$0xf] %v1461
  %1495 = vst [vmem:[%s1486 + $0x20] sm:$0xf] %v1462
  %1496 = vst [vmem:[%s1486 + $0x24] sm:$0xf] %v1463
  %1497 = vst [vmem:[%s1486 + $0x28] sm:$0xf] %v1464
  %1498 = vst [vmem:[%s1486 + $0x2c] sm:$0xf] %v1465
  %1499 = vst [vmem:[%s1486 + $0x30] sm:$0xf] %v1466
  %1500 = vst [vmem:[%s1486 + $0x34] sm:$0xf] %v1467
  %1501 = vst [vmem:[%s1486 + $0x38] sm:$0xf] %v1468
  %1502 = vst [vmem:[%s1486 + $0x3c] sm:$0xf] %v1469
  %v1511 = vunpack.c.l.b16 %v1169
  %v1512 = vunpack.c.h.b16 %v1169
  %v1513 = vunpack.c.l.b16 %v1175
  %v1514 = vunpack.c.h.b16 %v1175
  %v1515 = vunpack.c.l.b16 %v1181
  %v1516 = vunpack.c.h.b16 %v1181
  %v1517 = vunpack.c.l.b16 %v1187
  %v1518 = vunpack.c.h.b16 %v1187
  %v1519 = vunpack.c.l.b16 %v1193
  %v1520 = vunpack.c.h.b16 %v1193
  %v1521 = vunpack.c.l.b16 %v1199
  %v1522 = vunpack.c.h.b16 %v1199
  %v1523 = vunpack.c.l.b16 %v1205
  %v1524 = vunpack.c.h.b16 %v1205
  %v1525 = vunpack.c.l.b16 %v1211
  %v1526 = vunpack.c.h.b16 %v1211
  %v1527 = vpack.c.b16 %v1511, %v1511
  %v1528 = vpack.c.b16 %v1512, %v1512
  %v1529 = vpack.c.b16 %v1513, %v1513
  %v1530 = vpack.c.b16 %v1514, %v1514
  %v1531 = vpack.c.b16 %v1515, %v1515
  %v1532 = vpack.c.b16 %v1516, %v1516
  %v1533 = vpack.c.b16 %v1517, %v1517
  %v1534 = vpack.c.b16 %v1518, %v1518
  %v1535 = vpack.c.b16 %v1519, %v1519
  %v1536 = vpack.c.b16 %v1520, %v1520
  %v1537 = vpack.c.b16 %v1521, %v1521
  %v1538 = vpack.c.b16 %v1522, %v1522
  %v1539 = vpack.c.b16 %v1523, %v1523
  %v1540 = vpack.c.b16 %v1524, %v1524
  %v1541 = vpack.c.b16 %v1525, %v1525
  %v1542 = vpack.c.b16 %v1526, %v1526
  %s1559 = scalar_lea.vmem %s7, 64
  %1560 = vst [vmem:[%s1559] sm:$0xf] %v1527
  %1561 = vst [vmem:[%s1559 + $0x4] sm:$0xf] %v1528
  %1562 = vst [vmem:[%s1559 + $0x8] sm:$0xf] %v1529
  %1563 = vst [vmem:[%s1559 + $0xc] sm:$0xf] %v1530
  %1564 = vst [vmem:[%s1559 + $0x10] sm:$0xf] %v1531
  %1565 = vst [vmem:[%s1559 + $0x14] sm:$0xf] %v1532
  %1566 = vst [vmem:[%s1559 + $0x18] sm:$0xf] %v1533
  %1567 = vst [vmem:[%s1559 + $0x1c] sm:$0xf] %v1534
  %1568 = vst [vmem:[%s1559 + $0x20] sm:$0xf] %v1535
  %1569 = vst [vmem:[%s1559 + $0x24] sm:$0xf] %v1536
  %1570 = vst [vmem:[%s1559 + $0x28] sm:$0xf] %v1537
  %1571 = vst [vmem:[%s1559 + $0x2c] sm:$0xf] %v1538
  %1572 = vst [vmem:[%s1559 + $0x30] sm:$0xf] %v1539
  %1573 = vst [vmem:[%s1559 + $0x34] sm:$0xf] %v1540
  %1574 = vst [vmem:[%s1559 + $0x38] sm:$0xf] %v1541
  %1575 = vst [vmem:[%s1559 + $0x3c] sm:$0xf] %v1542
  %v1584 = vunpack.c.l.b16 %v1171
  %v1585 = vunpack.c.h.b16 %v1171
  %v1586 = vunpack.c.l.b16 %v1177
  %v1587 = vunpack.c.h.b16 %v1177
  %v1588 = vunpack.c.l.b16 %v1183
  %v1589 = vunpack.c.h.b16 %v1183
  %v1590 = vunpack.c.l.b16 %v1189
  %v1591 = vunpack.c.h.b16 %v1189
  %v1592 = vunpack.c.l.b16 %v1195
  %v1593 = vunpack.c.h.b16 %v1195
  %v1594 = vunpack.c.l.b16 %v1201
  %v1595 = vunpack.c.h.b16 %v1201
  %v1596 = vunpack.c.l.b16 %v1207
  %v1597 = vunpack.c.h.b16 %v1207
  %v1598 = vunpack.c.l.b16 %v1213
  %v1599 = vunpack.c.h.b16 %v1213
  %v1600 = vpack.c.b16 %v1584, %v1584
  %v1601 = vpack.c.b16 %v1585, %v1585
  %v1602 = vpack.c.b16 %v1586, %v1586
  %v1603 = vpack.c.b16 %v1587, %v1587
  %v1604 = vpack.c.b16 %v1588, %v1588
  %v1605 = vpack.c.b16 %v1589, %v1589
  %v1606 = vpack.c.b16 %v1590, %v1590
  %v1607 = vpack.c.b16 %v1591, %v1591
  %v1608 = vpack.c.b16 %v1592, %v1592
  %v1609 = vpack.c.b16 %v1593, %v1593
  %v1610 = vpack.c.b16 %v1594, %v1594
  %v1611 = vpack.c.b16 %v1595, %v1595
  %v1612 = vpack.c.b16 %v1596, %v1596
  %v1613 = vpack.c.b16 %v1597, %v1597
  %v1614 = vpack.c.b16 %v1598, %v1598
  %v1615 = vpack.c.b16 %v1599, %v1599
  %s1632 = scalar_lea.vmem %s8, 64
  %1633 = vst [vmem:[%s1632] sm:$0xf] %v1600
  %1634 = vst [vmem:[%s1632 + $0x4] sm:$0xf] %v1601
  %1635 = vst [vmem:[%s1632 + $0x8] sm:$0xf] %v1602
  %1636 = vst [vmem:[%s1632 + $0xc] sm:$0xf] %v1603
  %1637 = vst [vmem:[%s1632 + $0x10] sm:$0xf] %v1604
  %1638 = vst [vmem:[%s1632 + $0x14] sm:$0xf] %v1605
  %1639 = vst [vmem:[%s1632 + $0x18] sm:$0xf] %v1606
  %1640 = vst [vmem:[%s1632 + $0x1c] sm:$0xf] %v1607
  %1641 = vst [vmem:[%s1632 + $0x20] sm:$0xf] %v1608
  %1642 = vst [vmem:[%s1632 + $0x24] sm:$0xf] %v1609
  %1643 = vst [vmem:[%s1632 + $0x28] sm:$0xf] %v1610
  %1644 = vst [vmem:[%s1632 + $0x2c] sm:$0xf] %v1611
  %1645 = vst [vmem:[%s1632 + $0x30] sm:$0xf] %v1612
  %1646 = vst [vmem:[%s1632 + $0x34] sm:$0xf] %v1613
  %1647 = vst [vmem:[%s1632 + $0x38] sm:$0xf] %v1614
  %1648 = vst [vmem:[%s1632 + $0x3c] sm:$0xf] %v1615
  %v1649 = vld [vmem:[%s6] sm:$0xf]
  %v1650 = vld [vmem:[%s6 + $0x4] sm:$0xf]
  %v1651 = vld [vmem:[%s6 + $0x8] sm:$0xf]
  %v1652 = vld [vmem:[%s6 + $0xc] sm:$0xf]
  %v1653 = vld [vmem:[%s6 + $0x10] sm:$0xf]
  %v1654 = vld [vmem:[%s6 + $0x14] sm:$0xf]
  %v1655 = vld [vmem:[%s6 + $0x18] sm:$0xf]
  %v1656 = vld [vmem:[%s6 + $0x1c] sm:$0xf]
  %v1657 = vld [vmem:[%s6 + $0x20] sm:$0xf]
  %v1658 = vld [vmem:[%s6 + $0x24] sm:$0xf]
  %v1659 = vld [vmem:[%s6 + $0x28] sm:$0xf]
  %v1660 = vld [vmem:[%s6 + $0x2c] sm:$0xf]
  %v1661 = vld [vmem:[%s6 + $0x30] sm:$0xf]
  %v1662 = vld [vmem:[%s6 + $0x34] sm:$0xf]
  %v1663 = vld [vmem:[%s6 + $0x38] sm:$0xf]
  %v1664 = vld [vmem:[%s6 + $0x3c] sm:$0xf]
  %v1665 = vld [vmem:[%s6 + $0x40] sm:$0xf]
  %v1666 = vld [vmem:[%s6 + $0x44] sm:$0xf]
  %v1667 = vld [vmem:[%s6 + $0x48] sm:$0xf]
  %v1668 = vld [vmem:[%s6 + $0x4c] sm:$0xf]
  %v1669 = vld [vmem:[%s6 + $0x50] sm:$0xf]
  %v1670 = vld [vmem:[%s6 + $0x54] sm:$0xf]
  %v1671 = vld [vmem:[%s6 + $0x58] sm:$0xf]
  %v1672 = vld [vmem:[%s6 + $0x5c] sm:$0xf]
  %v1673 = vld [vmem:[%s6 + $0x60] sm:$0xf]
  %v1674 = vld [vmem:[%s6 + $0x64] sm:$0xf]
  %v1675 = vld [vmem:[%s6 + $0x68] sm:$0xf]
  %v1676 = vld [vmem:[%s6 + $0x6c] sm:$0xf]
  %v1677 = vld [vmem:[%s6 + $0x70] sm:$0xf]
  %v1678 = vld [vmem:[%s6 + $0x74] sm:$0xf]
  %v1679 = vld [vmem:[%s6 + $0x78] sm:$0xf]
  %v1680 = vld [vmem:[%s6 + $0x7c] sm:$0xf]
  %v1681 = vunpack.c.l.bf16 %v1649
  %v1682 = vunpack.c.l.bf16 %v1650
  %v1683 = vunpack.c.l.bf16 %v1651
  %v1684 = vunpack.c.l.bf16 %v1652
  %v1685 = vunpack.c.l.bf16 %v1653
  %v1686 = vunpack.c.l.bf16 %v1654
  %v1687 = vunpack.c.l.bf16 %v1655
  %v1688 = vunpack.c.l.bf16 %v1656
  %v1689 = vunpack.c.l.bf16 %v1657
  %v1690 = vunpack.c.l.bf16 %v1658
  %v1691 = vunpack.c.l.bf16 %v1659
  %v1692 = vunpack.c.l.bf16 %v1660
  %v1693 = vunpack.c.l.bf16 %v1661
  %v1694 = vunpack.c.l.bf16 %v1662
  %v1695 = vunpack.c.l.bf16 %v1663
  %v1696 = vunpack.c.l.bf16 %v1664
  %v1697 = vunpack.c.l.bf16 %v1665
  %v1698 = vunpack.c.l.bf16 %v1666
  %v1699 = vunpack.c.l.bf16 %v1667
  %v1700 = vunpack.c.l.bf16 %v1668
  %v1701 = vunpack.c.l.bf16 %v1669
  %v1702 = vunpack.c.l.bf16 %v1670
  %v1703 = vunpack.c.l.bf16 %v1671
  %v1704 = vunpack.c.l.bf16 %v1672
  %v1705 = vunpack.c.l.bf16 %v1673
  %v1706 = vunpack.c.l.bf16 %v1674
  %v1707 = vunpack.c.l.bf16 %v1675
  %v1708 = vunpack.c.l.bf16 %v1676
  %v1709 = vunpack.c.l.bf16 %v1677
  %v1710 = vunpack.c.l.bf16 %v1678
  %v1711 = vunpack.c.l.bf16 %v1679
  %v1712 = vunpack.c.l.bf16 %v1680
  %v1713 = vmul.f32 %v1681, %v1681
  %v1714 = vmul.f32 %v1682, %v1682
  %v1715 = vmul.f32 %v1683, %v1683
  %v1716 = vmul.f32 %v1684, %v1684
  %v1717 = vmul.f32 %v1685, %v1685
  %v1718 = vmul.f32 %v1686, %v1686
  %v1719 = vmul.f32 %v1687, %v1687
  %v1720 = vmul.f32 %v1688, %v1688
  %v1721 = vmul.f32 %v1689, %v1689
  %v1722 = vmul.f32 %v1690, %v1690
  %v1723 = vmul.f32 %v1691, %v1691
  %v1724 = vmul.f32 %v1692, %v1692
  %v1725 = vmul.f32 %v1693, %v1693
  %v1726 = vmul.f32 %v1694, %v1694
  %v1727 = vmul.f32 %v1695, %v1695
  %v1728 = vmul.f32 %v1696, %v1696
  %v1729 = vmul.f32 %v1697, %v1697
  %v1730 = vmul.f32 %v1698, %v1698
  %v1731 = vmul.f32 %v1699, %v1699
  %v1732 = vmul.f32 %v1700, %v1700
  %v1733 = vmul.f32 %v1701, %v1701
  %v1734 = vmul.f32 %v1702, %v1702
  %v1735 = vmul.f32 %v1703, %v1703
  %v1736 = vmul.f32 %v1704, %v1704
  %v1737 = vmul.f32 %v1705, %v1705
  %v1738 = vmul.f32 %v1706, %v1706
  %v1739 = vmul.f32 %v1707, %v1707
  %v1740 = vmul.f32 %v1708, %v1708
  %v1741 = vmul.f32 %v1709, %v1709
  %v1742 = vmul.f32 %v1710, %v1710
  %v1743 = vmul.f32 %v1711, %v1711
  %v1744 = vmul.f32 %v1712, %v1712
  %1745 = vadd.xlane.f32.xlu0 %v1713
  %v1746 = vpop.xlane.xlu0 %1745
  %1747 = vadd.xlane.f32.xlu0 %v1714
  %v1748 = vpop.xlane.xlu0 %1747
  %1749 = vadd.xlane.f32.xlu0 %v1715
  %v1750 = vpop.xlane.xlu0 %1749
  %1751 = vadd.xlane.f32.xlu0 %v1716
  %v1752 = vpop.xlane.xlu0 %1751
  %1753 = vadd.xlane.f32.xlu0 %v1717
  %v1754 = vpop.xlane.xlu0 %1753
  %1755 = vadd.xlane.f32.xlu0 %v1718
  %v1756 = vpop.xlane.xlu0 %1755
  %1757 = vadd.xlane.f32.xlu0 %v1719
  %v1758 = vpop.xlane.xlu0 %1757
  %1759 = vadd.xlane.f32.xlu0 %v1720
  %v1760 = vpop.xlane.xlu0 %1759
  %1761 = vadd.xlane.f32.xlu0 %v1721
  %v1762 = vpop.xlane.xlu0 %1761
  %1763 = vadd.xlane.f32.xlu0 %v1722
  %v1764 = vpop.xlane.xlu0 %1763
  %1765 = vadd.xlane.f32.xlu0 %v1723
  %v1766 = vpop.xlane.xlu0 %1765
  %1767 = vadd.xlane.f32.xlu0 %v1724
  %v1768 = vpop.xlane.xlu0 %1767
  %1769 = vadd.xlane.f32.xlu0 %v1725
  %v1770 = vpop.xlane.xlu0 %1769
  %1771 = vadd.xlane.f32.xlu0 %v1726
  %v1772 = vpop.xlane.xlu0 %1771
  %1773 = vadd.xlane.f32.xlu0 %v1727
  %v1774 = vpop.xlane.xlu0 %1773
  %1775 = vadd.xlane.f32.xlu0 %v1728
  %v1776 = vpop.xlane.xlu0 %1775
  %1777 = vadd.xlane.f32.xlu0 %v1729
  %v1778 = vpop.xlane.xlu0 %1777
  %1779 = vadd.xlane.f32.xlu0 %v1730
  %v1780 = vpop.xlane.xlu0 %1779
  %1781 = vadd.xlane.f32.xlu0 %v1731
  %v1782 = vpop.xlane.xlu0 %1781
  %1783 = vadd.xlane.f32.xlu0 %v1732
  %v1784 = vpop.xlane.xlu0 %1783
  %1785 = vadd.xlane.f32.xlu0 %v1733
  %v1786 = vpop.xlane.xlu0 %1785
  %1787 = vadd.xlane.f32.xlu0 %v1734
  %v1788 = vpop.xlane.xlu0 %1787
  %1789 = vadd.xlane.f32.xlu0 %v1735
  %v1790 = vpop.xlane.xlu0 %1789
  %1791 = vadd.xlane.f32.xlu0 %v1736
  %v1792 = vpop.xlane.xlu0 %1791
  %1793 = vadd.xlane.f32.xlu0 %v1737
  %v1794 = vpop.xlane.xlu0 %1793
  %1795 = vadd.xlane.f32.xlu0 %v1738
  %v1796 = vpop.xlane.xlu0 %1795
  %1797 = vadd.xlane.f32.xlu0 %v1739
  %v1798 = vpop.xlane.xlu0 %1797
  %1799 = vadd.xlane.f32.xlu0 %v1740
  %v1800 = vpop.xlane.xlu0 %1799
  %1801 = vadd.xlane.f32.xlu0 %v1741
  %v1802 = vpop.xlane.xlu0 %1801
  %1803 = vadd.xlane.f32.xlu0 %v1742
  %v1804 = vpop.xlane.xlu0 %1803
  %1805 = vadd.xlane.f32.xlu0 %v1743
  %v1806 = vpop.xlane.xlu0 %1805
  %1807 = vadd.xlane.f32.xlu0 %v1744
  %v1808 = vpop.xlane.xlu0 %1807
  %v1809 = vrcp.pop 128.0
  %v1810 = vmul.f32 %v1746, %v1809
  %v1811 = vmul.f32 %v1748, %v1809
  %v1812 = vmul.f32 %v1750, %v1809
  %v1813 = vmul.f32 %v1752, %v1809
  %v1814 = vmul.f32 %v1754, %v1809
  %v1815 = vmul.f32 %v1756, %v1809
  %v1816 = vmul.f32 %v1758, %v1809
  %v1817 = vmul.f32 %v1760, %v1809
  %v1818 = vmul.f32 %v1762, %v1809
  %v1819 = vmul.f32 %v1764, %v1809
  %v1820 = vmul.f32 %v1766, %v1809
  %v1821 = vmul.f32 %v1768, %v1809
  %v1822 = vmul.f32 %v1770, %v1809
  %v1823 = vmul.f32 %v1772, %v1809
  %v1824 = vmul.f32 %v1774, %v1809
  %v1825 = vmul.f32 %v1776, %v1809
  %v1826 = vmul.f32 %v1778, %v1809
  %v1827 = vmul.f32 %v1780, %v1809
  %v1828 = vmul.f32 %v1782, %v1809
  %v1829 = vmul.f32 %v1784, %v1809
  %v1830 = vmul.f32 %v1786, %v1809
  %v1831 = vmul.f32 %v1788, %v1809
  %v1832 = vmul.f32 %v1790, %v1809
  %v1833 = vmul.f32 %v1792, %v1809
  %v1834 = vmul.f32 %v1794, %v1809
  %v1835 = vmul.f32 %v1796, %v1809
  %v1836 = vmul.f32 %v1798, %v1809
  %v1837 = vmul.f32 %v1800, %v1809
  %v1838 = vmul.f32 %v1802, %v1809
  %v1839 = vmul.f32 %v1804, %v1809
  %v1840 = vmul.f32 %v1806, %v1809
  %v1841 = vmul.f32 %v1808, %v1809
  %v1842 = vadd.f32 %v1810, 1e-06
  %v1843 = vadd.f32 %v1811, 1e-06
  %v1844 = vadd.f32 %v1812, 1e-06
  %v1845 = vadd.f32 %v1813, 1e-06
  %v1846 = vadd.f32 %v1814, 1e-06
  %v1847 = vadd.f32 %v1815, 1e-06
  %v1848 = vadd.f32 %v1816, 1e-06
  %v1849 = vadd.f32 %v1817, 1e-06
  %v1850 = vadd.f32 %v1818, 1e-06
  %v1851 = vadd.f32 %v1819, 1e-06
  %v1852 = vadd.f32 %v1820, 1e-06
  %v1853 = vadd.f32 %v1821, 1e-06
  %v1854 = vadd.f32 %v1822, 1e-06
  %v1855 = vadd.f32 %v1823, 1e-06
  %v1856 = vadd.f32 %v1824, 1e-06
  %v1857 = vadd.f32 %v1825, 1e-06
  %v1858 = vadd.f32 %v1826, 1e-06
  %v1859 = vadd.f32 %v1827, 1e-06
  %v1860 = vadd.f32 %v1828, 1e-06
  %v1861 = vadd.f32 %v1829, 1e-06
  %v1862 = vadd.f32 %v1830, 1e-06
  %v1863 = vadd.f32 %v1831, 1e-06
  %v1864 = vadd.f32 %v1832, 1e-06
  %v1865 = vadd.f32 %v1833, 1e-06
  %v1866 = vadd.f32 %v1834, 1e-06
  %v1867 = vadd.f32 %v1835, 1e-06
  %v1868 = vadd.f32 %v1836, 1e-06
  %v1869 = vadd.f32 %v1837, 1e-06
  %v1870 = vadd.f32 %v1838, 1e-06
  %v1871 = vadd.f32 %v1839, 1e-06
  %v1872 = vadd.f32 %v1840, 1e-06
  %v1873 = vadd.f32 %v1841, 1e-06
  %v1874 = vrsqrt.pop %v1842
  %v1875 = vrsqrt.pop %v1843
  %v1876 = vrsqrt.pop %v1844
  %v1877 = vrsqrt.pop %v1845
  %v1878 = vrsqrt.pop %v1846
  %v1879 = vrsqrt.pop %v1847
  %v1880 = vrsqrt.pop %v1848
  %v1881 = vrsqrt.pop %v1849
  %v1882 = vrsqrt.pop %v1850
  %v1883 = vrsqrt.pop %v1851
  %v1884 = vrsqrt.pop %v1852
  %v1885 = vrsqrt.pop %v1853
  %v1886 = vrsqrt.pop %v1854
  %v1887 = vrsqrt.pop %v1855
  %v1888 = vrsqrt.pop %v1856
  %v1889 = vrsqrt.pop %v1857
  %v1890 = vrsqrt.pop %v1858
  %v1891 = vrsqrt.pop %v1859
  %v1892 = vrsqrt.pop %v1860
  %v1893 = vrsqrt.pop %v1861
  %v1894 = vrsqrt.pop %v1862
  %v1895 = vrsqrt.pop %v1863
  %v1896 = vrsqrt.pop %v1864
  %v1897 = vrsqrt.pop %v1865
  %v1898 = vrsqrt.pop %v1866
  %v1899 = vrsqrt.pop %v1867
  %v1900 = vrsqrt.pop %v1868
  %v1901 = vrsqrt.pop %v1869
  %v1902 = vrsqrt.pop %v1870
  %v1903 = vrsqrt.pop %v1871
  %v1904 = vrsqrt.pop %v1872
  %v1905 = vrsqrt.pop %v1873
  %v1906 = vmul.f32 %v1681, %v1874
  %v1907 = vmul.f32 %v1682, %v1875
  %v1908 = vmul.f32 %v1683, %v1876
  %v1909 = vmul.f32 %v1684, %v1877
  %v1910 = vmul.f32 %v1685, %v1878
  %v1911 = vmul.f32 %v1686, %v1879
  %v1912 = vmul.f32 %v1687, %v1880
  %v1913 = vmul.f32 %v1688, %v1881
  %v1914 = vmul.f32 %v1689, %v1882
  %v1915 = vmul.f32 %v1690, %v1883
  %v1916 = vmul.f32 %v1691, %v1884
  %v1917 = vmul.f32 %v1692, %v1885
  %v1918 = vmul.f32 %v1693, %v1886
  %v1919 = vmul.f32 %v1694, %v1887
  %v1920 = vmul.f32 %v1695, %v1888
  %v1921 = vmul.f32 %v1696, %v1889
  %v1922 = vmul.f32 %v1697, %v1890
  %v1923 = vmul.f32 %v1698, %v1891
  %v1924 = vmul.f32 %v1699, %v1892
  %v1925 = vmul.f32 %v1700, %v1893
  %v1926 = vmul.f32 %v1701, %v1894
  %v1927 = vmul.f32 %v1702, %v1895
  %v1928 = vmul.f32 %v1703, %v1896
  %v1929 = vmul.f32 %v1704, %v1897
  %v1930 = vmul.f32 %v1705, %v1898
  %v1931 = vmul.f32 %v1706, %v1899
  %v1932 = vmul.f32 %v1707, %v1900
  %v1933 = vmul.f32 %v1708, %v1901
  %v1934 = vmul.f32 %v1709, %v1902
  %v1935 = vmul.f32 %v1710, %v1903
  %v1936 = vmul.f32 %v1711, %v1904
  %v1937 = vmul.f32 %v1712, %v1905
  %v1938 = vld [vmem:[%s7] sm:$0xf]
  %v1939 = vld [vmem:[%s7 + $0x4] sm:$0xf]
  %v1940 = vld [vmem:[%s7 + $0x8] sm:$0xf]
  %v1941 = vld [vmem:[%s7 + $0xc] sm:$0xf]
  %v1942 = vld [vmem:[%s7 + $0x10] sm:$0xf]
  %v1943 = vld [vmem:[%s7 + $0x14] sm:$0xf]
  %v1944 = vld [vmem:[%s7 + $0x18] sm:$0xf]
  %v1945 = vld [vmem:[%s7 + $0x1c] sm:$0xf]
  %v1946 = vld [vmem:[%s7 + $0x20] sm:$0xf]
  %v1947 = vld [vmem:[%s7 + $0x24] sm:$0xf]
  %v1948 = vld [vmem:[%s7 + $0x28] sm:$0xf]
  %v1949 = vld [vmem:[%s7 + $0x2c] sm:$0xf]
  %v1950 = vld [vmem:[%s7 + $0x30] sm:$0xf]
  %v1951 = vld [vmem:[%s7 + $0x34] sm:$0xf]
  %v1952 = vld [vmem:[%s7 + $0x38] sm:$0xf]
  %v1953 = vld [vmem:[%s7 + $0x3c] sm:$0xf]
  %v1954 = vld [vmem:[%s7 + $0x40] sm:$0xf]
  %v1955 = vld [vmem:[%s7 + $0x44] sm:$0xf]
  %v1956 = vld [vmem:[%s7 + $0x48] sm:$0xf]
  %v1957 = vld [vmem:[%s7 + $0x4c] sm:$0xf]
  %v1958 = vld [vmem:[%s7 + $0x50] sm:$0xf]
  %v1959 = vld [vmem:[%s7 + $0x54] sm:$0xf]
  %v1960 = vld [vmem:[%s7 + $0x58] sm:$0xf]
  %v1961 = vld [vmem:[%s7 + $0x5c] sm:$0xf]
  %v1962 = vld [vmem:[%s7 + $0x60] sm:$0xf]
  %v1963 = vld [vmem:[%s7 + $0x64] sm:$0xf]
  %v1964 = vld [vmem:[%s7 + $0x68] sm:$0xf]
  %v1965 = vld [vmem:[%s7 + $0x6c] sm:$0xf]
  %v1966 = vld [vmem:[%s7 + $0x70] sm:$0xf]
  %v1967 = vld [vmem:[%s7 + $0x74] sm:$0xf]
  %v1968 = vld [vmem:[%s7 + $0x78] sm:$0xf]
  %v1969 = vld [vmem:[%s7 + $0x7c] sm:$0xf]
  %v1970 = vunpack.c.l.bf16 %v1938
  %v1971 = vunpack.c.l.bf16 %v1939
  %v1972 = vunpack.c.l.bf16 %v1940
  %v1973 = vunpack.c.l.bf16 %v1941
  %v1974 = vunpack.c.l.bf16 %v1942
  %v1975 = vunpack.c.l.bf16 %v1943
  %v1976 = vunpack.c.l.bf16 %v1944
  %v1977 = vunpack.c.l.bf16 %v1945
  %v1978 = vunpack.c.l.bf16 %v1946
  %v1979 = vunpack.c.l.bf16 %v1947
  %v1980 = vunpack.c.l.bf16 %v1948
  %v1981 = vunpack.c.l.bf16 %v1949
  %v1982 = vunpack.c.l.bf16 %v1950
  %v1983 = vunpack.c.l.bf16 %v1951
  %v1984 = vunpack.c.l.bf16 %v1952
  %v1985 = vunpack.c.l.bf16 %v1953
  %v1986 = vunpack.c.l.bf16 %v1954
  %v1987 = vunpack.c.l.bf16 %v1955
  %v1988 = vunpack.c.l.bf16 %v1956
  %v1989 = vunpack.c.l.bf16 %v1957
  %v1990 = vunpack.c.l.bf16 %v1958
  %v1991 = vunpack.c.l.bf16 %v1959
  %v1992 = vunpack.c.l.bf16 %v1960
  %v1993 = vunpack.c.l.bf16 %v1961
  %v1994 = vunpack.c.l.bf16 %v1962
  %v1995 = vunpack.c.l.bf16 %v1963
  %v1996 = vunpack.c.l.bf16 %v1964
  %v1997 = vunpack.c.l.bf16 %v1965
  %v1998 = vunpack.c.l.bf16 %v1966
  %v1999 = vunpack.c.l.bf16 %v1967
  %v2000 = vunpack.c.l.bf16 %v1968
  %v2001 = vunpack.c.l.bf16 %v1969
  %v2002 = vmul.f32 %v1970, %v1970
  %v2003 = vmul.f32 %v1971, %v1971
  %v2004 = vmul.f32 %v1972, %v1972
  %v2005 = vmul.f32 %v1973, %v1973
  %v2006 = vmul.f32 %v1974, %v1974
  %v2007 = vmul.f32 %v1975, %v1975
  %v2008 = vmul.f32 %v1976, %v1976
  %v2009 = vmul.f32 %v1977, %v1977
  %v2010 = vmul.f32 %v1978, %v1978
  %v2011 = vmul.f32 %v1979, %v1979
  %v2012 = vmul.f32 %v1980, %v1980
  %v2013 = vmul.f32 %v1981, %v1981
  %v2014 = vmul.f32 %v1982, %v1982
  %v2015 = vmul.f32 %v1983, %v1983
  %v2016 = vmul.f32 %v1984, %v1984
  %v2017 = vmul.f32 %v1985, %v1985
  %v2018 = vmul.f32 %v1986, %v1986
  %v2019 = vmul.f32 %v1987, %v1987
  %v2020 = vmul.f32 %v1988, %v1988
  %v2021 = vmul.f32 %v1989, %v1989
  %v2022 = vmul.f32 %v1990, %v1990
  %v2023 = vmul.f32 %v1991, %v1991
  %v2024 = vmul.f32 %v1992, %v1992
  %v2025 = vmul.f32 %v1993, %v1993
  %v2026 = vmul.f32 %v1994, %v1994
  %v2027 = vmul.f32 %v1995, %v1995
  %v2028 = vmul.f32 %v1996, %v1996
  %v2029 = vmul.f32 %v1997, %v1997
  %v2030 = vmul.f32 %v1998, %v1998
  %v2031 = vmul.f32 %v1999, %v1999
  %v2032 = vmul.f32 %v2000, %v2000
  %v2033 = vmul.f32 %v2001, %v2001
  %2034 = vadd.xlane.f32.xlu0 %v2002
  %v2035 = vpop.xlane.xlu0 %2034
  %2036 = vadd.xlane.f32.xlu0 %v2003
  %v2037 = vpop.xlane.xlu0 %2036
  %2038 = vadd.xlane.f32.xlu0 %v2004
  %v2039 = vpop.xlane.xlu0 %2038
  %2040 = vadd.xlane.f32.xlu0 %v2005
  %v2041 = vpop.xlane.xlu0 %2040
  %2042 = vadd.xlane.f32.xlu0 %v2006
  %v2043 = vpop.xlane.xlu0 %2042
  %2044 = vadd.xlane.f32.xlu0 %v2007
  %v2045 = vpop.xlane.xlu0 %2044
  %2046 = vadd.xlane.f32.xlu0 %v2008
  %v2047 = vpop.xlane.xlu0 %2046
  %2048 = vadd.xlane.f32.xlu0 %v2009
  %v2049 = vpop.xlane.xlu0 %2048
  %2050 = vadd.xlane.f32.xlu0 %v2010
  %v2051 = vpop.xlane.xlu0 %2050
  %2052 = vadd.xlane.f32.xlu0 %v2011
  %v2053 = vpop.xlane.xlu0 %2052
  %2054 = vadd.xlane.f32.xlu0 %v2012
  %v2055 = vpop.xlane.xlu0 %2054
  %2056 = vadd.xlane.f32.xlu0 %v2013
  %v2057 = vpop.xlane.xlu0 %2056
  %2058 = vadd.xlane.f32.xlu0 %v2014
  %v2059 = vpop.xlane.xlu0 %2058
  %2060 = vadd.xlane.f32.xlu0 %v2015
  %v2061 = vpop.xlane.xlu0 %2060
  %2062 = vadd.xlane.f32.xlu0 %v2016
  %v2063 = vpop.xlane.xlu0 %2062
  %2064 = vadd.xlane.f32.xlu0 %v2017
  %v2065 = vpop.xlane.xlu0 %2064
  %2066 = vadd.xlane.f32.xlu0 %v2018
  %v2067 = vpop.xlane.xlu0 %2066
  %2068 = vadd.xlane.f32.xlu0 %v2019
  %v2069 = vpop.xlane.xlu0 %2068
  %2070 = vadd.xlane.f32.xlu0 %v2020
  %v2071 = vpop.xlane.xlu0 %2070
  %2072 = vadd.xlane.f32.xlu0 %v2021
  %v2073 = vpop.xlane.xlu0 %2072
  %2074 = vadd.xlane.f32.xlu0 %v2022
  %v2075 = vpop.xlane.xlu0 %2074
  %2076 = vadd.xlane.f32.xlu0 %v2023
  %v2077 = vpop.xlane.xlu0 %2076
  %2078 = vadd.xlane.f32.xlu0 %v2024
  %v2079 = vpop.xlane.xlu0 %2078
  %2080 = vadd.xlane.f32.xlu0 %v2025
  %v2081 = vpop.xlane.xlu0 %2080
  %2082 = vadd.xlane.f32.xlu0 %v2026
  %v2083 = vpop.xlane.xlu0 %2082
  %2084 = vadd.xlane.f32.xlu0 %v2027
  %v2085 = vpop.xlane.xlu0 %2084
  %2086 = vadd.xlane.f32.xlu0 %v2028
  %v2087 = vpop.xlane.xlu0 %2086
  %2088 = vadd.xlane.f32.xlu0 %v2029
  %v2089 = vpop.xlane.xlu0 %2088
  %2090 = vadd.xlane.f32.xlu0 %v2030
  %v2091 = vpop.xlane.xlu0 %2090
  %2092 = vadd.xlane.f32.xlu0 %v2031
  %v2093 = vpop.xlane.xlu0 %2092
  %2094 = vadd.xlane.f32.xlu0 %v2032
  %v2095 = vpop.xlane.xlu0 %2094
  %2096 = vadd.xlane.f32.xlu0 %v2033
  %v2097 = vpop.xlane.xlu0 %2096
  %v2098 = vmul.f32 %v2035, %v1809
  %v2099 = vmul.f32 %v2037, %v1809
  %v2100 = vmul.f32 %v2039, %v1809
  %v2101 = vmul.f32 %v2041, %v1809
  %v2102 = vmul.f32 %v2043, %v1809
  %v2103 = vmul.f32 %v2045, %v1809
  %v2104 = vmul.f32 %v2047, %v1809
  %v2105 = vmul.f32 %v2049, %v1809
  %v2106 = vmul.f32 %v2051, %v1809
  %v2107 = vmul.f32 %v2053, %v1809
  %v2108 = vmul.f32 %v2055, %v1809
  %v2109 = vmul.f32 %v2057, %v1809
  %v2110 = vmul.f32 %v2059, %v1809
  %v2111 = vmul.f32 %v2061, %v1809
  %v2112 = vmul.f32 %v2063, %v1809
  %v2113 = vmul.f32 %v2065, %v1809
  %v2114 = vmul.f32 %v2067, %v1809
  %v2115 = vmul.f32 %v2069, %v1809
  %v2116 = vmul.f32 %v2071, %v1809
  %v2117 = vmul.f32 %v2073, %v1809
  %v2118 = vmul.f32 %v2075, %v1809
  %v2119 = vmul.f32 %v2077, %v1809
  %v2120 = vmul.f32 %v2079, %v1809
  %v2121 = vmul.f32 %v2081, %v1809
  %v2122 = vmul.f32 %v2083, %v1809
  %v2123 = vmul.f32 %v2085, %v1809
  %v2124 = vmul.f32 %v2087, %v1809
  %v2125 = vmul.f32 %v2089, %v1809
  %v2126 = vmul.f32 %v2091, %v1809
  %v2127 = vmul.f32 %v2093, %v1809
  %v2128 = vmul.f32 %v2095, %v1809
  %v2129 = vmul.f32 %v2097, %v1809
  %v2130 = vadd.f32 %v2098, 1e-06
  %v2131 = vadd.f32 %v2099, 1e-06
  %v2132 = vadd.f32 %v2100, 1e-06
  %v2133 = vadd.f32 %v2101, 1e-06
  %v2134 = vadd.f32 %v2102, 1e-06
  %v2135 = vadd.f32 %v2103, 1e-06
  %v2136 = vadd.f32 %v2104, 1e-06
  %v2137 = vadd.f32 %v2105, 1e-06
  %v2138 = vadd.f32 %v2106, 1e-06
  %v2139 = vadd.f32 %v2107, 1e-06
  %v2140 = vadd.f32 %v2108, 1e-06
  %v2141 = vadd.f32 %v2109, 1e-06
  %v2142 = vadd.f32 %v2110, 1e-06
  %v2143 = vadd.f32 %v2111, 1e-06
  %v2144 = vadd.f32 %v2112, 1e-06
  %v2145 = vadd.f32 %v2113, 1e-06
  %v2146 = vadd.f32 %v2114, 1e-06
  %v2147 = vadd.f32 %v2115, 1e-06
  %v2148 = vadd.f32 %v2116, 1e-06
  %v2149 = vadd.f32 %v2117, 1e-06
  %v2150 = vadd.f32 %v2118, 1e-06
  %v2151 = vadd.f32 %v2119, 1e-06
  %v2152 = vadd.f32 %v2120, 1e-06
  %v2153 = vadd.f32 %v2121, 1e-06
  %v2154 = vadd.f32 %v2122, 1e-06
  %v2155 = vadd.f32 %v2123, 1e-06
  %v2156 = vadd.f32 %v2124, 1e-06
  %v2157 = vadd.f32 %v2125, 1e-06
  %v2158 = vadd.f32 %v2126, 1e-06
  %v2159 = vadd.f32 %v2127, 1e-06
  %v2160 = vadd.f32 %v2128, 1e-06
  %v2161 = vadd.f32 %v2129, 1e-06
  %v2162 = vrsqrt.pop %v2130
  %v2163 = vrsqrt.pop %v2131
  %v2164 = vrsqrt.pop %v2132
  %v2165 = vrsqrt.pop %v2133
  %v2166 = vrsqrt.pop %v2134
  %v2167 = vrsqrt.pop %v2135
  %v2168 = vrsqrt.pop %v2136
  %v2169 = vrsqrt.pop %v2137
  %v2170 = vrsqrt.pop %v2138
  %v2171 = vrsqrt.pop %v2139
  %v2172 = vrsqrt.pop %v2140
  %v2173 = vrsqrt.pop %v2141
  %v2174 = vrsqrt.pop %v2142
  %v2175 = vrsqrt.pop %v2143
  %v2176 = vrsqrt.pop %v2144
  %v2177 = vrsqrt.pop %v2145
  %v2178 = vrsqrt.pop %v2146
  %v2179 = vrsqrt.pop %v2147
  %v2180 = vrsqrt.pop %v2148
  %v2181 = vrsqrt.pop %v2149
  %v2182 = vrsqrt.pop %v2150
  %v2183 = vrsqrt.pop %v2151
  %v2184 = vrsqrt.pop %v2152
  %v2185 = vrsqrt.pop %v2153
  %v2186 = vrsqrt.pop %v2154
  %v2187 = vrsqrt.pop %v2155
  %v2188 = vrsqrt.pop %v2156
  %v2189 = vrsqrt.pop %v2157
  %v2190 = vrsqrt.pop %v2158
  %v2191 = vrsqrt.pop %v2159
  %v2192 = vrsqrt.pop %v2160
  %v2193 = vrsqrt.pop %v2161
  %v2194 = vmul.f32 %v1970, %v2162
  %v2195 = vmul.f32 %v1971, %v2163
  %v2196 = vmul.f32 %v1972, %v2164
  %v2197 = vmul.f32 %v1973, %v2165
  %v2198 = vmul.f32 %v1974, %v2166
  %v2199 = vmul.f32 %v1975, %v2167
  %v2200 = vmul.f32 %v1976, %v2168
  %v2201 = vmul.f32 %v1977, %v2169
  %v2202 = vmul.f32 %v1978, %v2170
  %v2203 = vmul.f32 %v1979, %v2171
  %v2204 = vmul.f32 %v1980, %v2172
  %v2205 = vmul.f32 %v1981, %v2173
  %v2206 = vmul.f32 %v1982, %v2174
  %v2207 = vmul.f32 %v1983, %v2175
  %v2208 = vmul.f32 %v1984, %v2176
  %v2209 = vmul.f32 %v1985, %v2177
  %v2210 = vmul.f32 %v1986, %v2178
  %v2211 = vmul.f32 %v1987, %v2179
  %v2212 = vmul.f32 %v1988, %v2180
  %v2213 = vmul.f32 %v1989, %v2181
  %v2214 = vmul.f32 %v1990, %v2182
  %v2215 = vmul.f32 %v1991, %v2183
  %v2216 = vmul.f32 %v1992, %v2184
  %v2217 = vmul.f32 %v1993, %v2185
  %v2218 = vmul.f32 %v1994, %v2186
  %v2219 = vmul.f32 %v1995, %v2187
  %v2220 = vmul.f32 %v1996, %v2188
  %v2221 = vmul.f32 %v1997, %v2189
  %v2222 = vmul.f32 %v1998, %v2190
  %v2223 = vmul.f32 %v1999, %v2191
  %v2224 = vmul.f32 %v2000, %v2192
  %v2225 = vmul.f32 %v2001, %v2193
  %v2226 = vld [vmem:[%s2] sm:$0xff]
  %v2227 = vld [vmem:[%s2 + $0x8] sm:$0xff]
  %v2228 = vld [vmem:[%s2 + $0x10] sm:$0xff]
  %v2229 = vld [vmem:[%s2 + $0x18] sm:$0xff]
  %v2230 = vld [vmem:[%s2 + $0x20] sm:$0xff]
  %v2231 = vld [vmem:[%s2 + $0x28] sm:$0xff]
  %v2232 = vld [vmem:[%s2 + $0x30] sm:$0xff]
  %v2233 = vld [vmem:[%s2 + $0x38] sm:$0xff]
  %v2234 = vld [vmem:[%s2 + $0x40] sm:$0xff]
  %v2235 = vld [vmem:[%s2 + $0x48] sm:$0xff]
  %v2236 = vld [vmem:[%s2 + $0x50] sm:$0xff]
  %v2237 = vld [vmem:[%s2 + $0x58] sm:$0xff]
  %v2238 = vld [vmem:[%s2 + $0x60] sm:$0xff]
  %v2239 = vld [vmem:[%s2 + $0x68] sm:$0xff]
  %v2240 = vld [vmem:[%s2 + $0x70] sm:$0xff]
  %v2241 = vld [vmem:[%s2 + $0x78] sm:$0xff]
  %v2242 = vmul.f32 %v1906, %v2226
  %v2243 = vmul.f32 %v1907, %v2227
  %v2244 = vmul.f32 %v1908, %v2228
  %v2245 = vmul.f32 %v1909, %v2229
  %v2246 = vmul.f32 %v1910, %v2230
  %v2247 = vmul.f32 %v1911, %v2231
  %v2248 = vmul.f32 %v1912, %v2232
  %v2249 = vmul.f32 %v1913, %v2233
  %v2250 = vmul.f32 %v1914, %v2234
  %v2251 = vmul.f32 %v1915, %v2235
  %v2252 = vmul.f32 %v1916, %v2236
  %v2253 = vmul.f32 %v1917, %v2237
  %v2254 = vmul.f32 %v1918, %v2238
  %v2255 = vmul.f32 %v1919, %v2239
  %v2256 = vmul.f32 %v1920, %v2240
  %v2257 = vmul.f32 %v1921, %v2241
  %v2258 = vmul.f32 %v1922, %v2226
  %v2259 = vmul.f32 %v1923, %v2227
  %v2260 = vmul.f32 %v1924, %v2228
  %v2261 = vmul.f32 %v1925, %v2229
  %v2262 = vmul.f32 %v1926, %v2230
  %v2263 = vmul.f32 %v1927, %v2231
  %v2264 = vmul.f32 %v1928, %v2232
  %v2265 = vmul.f32 %v1929, %v2233
  %v2266 = vmul.f32 %v1930, %v2234
  %v2267 = vmul.f32 %v1931, %v2235
  %v2268 = vmul.f32 %v1932, %v2236
  %v2269 = vmul.f32 %v1933, %v2237
  %v2270 = vmul.f32 %v1934, %v2238
  %v2271 = vmul.f32 %v1935, %v2239
  %v2272 = vmul.f32 %v1936, %v2240
  %v2273 = vmul.f32 %v1937, %v2241
  %2274 = vrot.lane.b32.xlu0 %v1906, 64
  %v2275 = vpop.permute.xlu0 %2274
  %2276 = vrot.lane.b32.xlu0 %v1907, 64
  %v2277 = vpop.permute.xlu0 %2276
  %2278 = vrot.lane.b32.xlu0 %v1908, 64
  %v2279 = vpop.permute.xlu0 %2278
  %2280 = vrot.lane.b32.xlu0 %v1909, 64
  %v2281 = vpop.permute.xlu0 %2280
  %2282 = vrot.lane.b32.xlu0 %v1910, 64
  %v2283 = vpop.permute.xlu0 %2282
  %2284 = vrot.lane.b32.xlu0 %v1911, 64
  %v2285 = vpop.permute.xlu0 %2284
  %2286 = vrot.lane.b32.xlu0 %v1912, 64
  %v2287 = vpop.permute.xlu0 %2286
  %2288 = vrot.lane.b32.xlu0 %v1913, 64
  %v2289 = vpop.permute.xlu0 %2288
  %2290 = vrot.lane.b32.xlu0 %v1914, 64
  %v2291 = vpop.permute.xlu0 %2290
  %2292 = vrot.lane.b32.xlu0 %v1915, 64
  %v2293 = vpop.permute.xlu0 %2292
  %2294 = vrot.lane.b32.xlu0 %v1916, 64
  %v2295 = vpop.permute.xlu0 %2294
  %2296 = vrot.lane.b32.xlu0 %v1917, 64
  %v2297 = vpop.permute.xlu0 %2296
  %2298 = vrot.lane.b32.xlu0 %v1918, 64
  %v2299 = vpop.permute.xlu0 %2298
  %2300 = vrot.lane.b32.xlu0 %v1919, 64
  %v2301 = vpop.permute.xlu0 %2300
  %2302 = vrot.lane.b32.xlu0 %v1920, 64
  %v2303 = vpop.permute.xlu0 %2302
  %2304 = vrot.lane.b32.xlu0 %v1921, 64
  %v2305 = vpop.permute.xlu0 %2304
  %2306 = vrot.lane.b32.xlu0 %v1922, 64
  %v2307 = vpop.permute.xlu0 %2306
  %2308 = vrot.lane.b32.xlu0 %v1923, 64
  %v2309 = vpop.permute.xlu0 %2308
  %2310 = vrot.lane.b32.xlu0 %v1924, 64
  %v2311 = vpop.permute.xlu0 %2310
  %2312 = vrot.lane.b32.xlu0 %v1925, 64
  %v2313 = vpop.permute.xlu0 %2312
  %2314 = vrot.lane.b32.xlu0 %v1926, 64
  %v2315 = vpop.permute.xlu0 %2314
  %2316 = vrot.lane.b32.xlu0 %v1927, 64
  %v2317 = vpop.permute.xlu0 %2316
  %2318 = vrot.lane.b32.xlu0 %v1928, 64
  %v2319 = vpop.permute.xlu0 %2318
  %2320 = vrot.lane.b32.xlu0 %v1929, 64
  %v2321 = vpop.permute.xlu0 %2320
  %2322 = vrot.lane.b32.xlu0 %v1930, 64
  %v2323 = vpop.permute.xlu0 %2322
  %2324 = vrot.lane.b32.xlu0 %v1931, 64
  %v2325 = vpop.permute.xlu0 %2324
  %2326 = vrot.lane.b32.xlu0 %v1932, 64
  %v2327 = vpop.permute.xlu0 %2326
  %2328 = vrot.lane.b32.xlu0 %v1933, 64
  %v2329 = vpop.permute.xlu0 %2328
  %2330 = vrot.lane.b32.xlu0 %v1934, 64
  %v2331 = vpop.permute.xlu0 %2330
  %2332 = vrot.lane.b32.xlu0 %v1935, 64
  %v2333 = vpop.permute.xlu0 %2332
  %2334 = vrot.lane.b32.xlu0 %v1936, 64
  %v2335 = vpop.permute.xlu0 %2334
  %2336 = vrot.lane.b32.xlu0 %v1937, 64
  %v2337 = vpop.permute.xlu0 %2336
  %v2338 = vld [vmem:[%s3] sm:$0xff]
  %v2339 = vld [vmem:[%s3 + $0x8] sm:$0xff]
  %v2340 = vld [vmem:[%s3 + $0x10] sm:$0xff]
  %v2341 = vld [vmem:[%s3 + $0x18] sm:$0xff]
  %v2342 = vld [vmem:[%s3 + $0x20] sm:$0xff]
  %v2343 = vld [vmem:[%s3 + $0x28] sm:$0xff]
  %v2344 = vld [vmem:[%s3 + $0x30] sm:$0xff]
  %v2345 = vld [vmem:[%s3 + $0x38] sm:$0xff]
  %v2346 = vld [vmem:[%s3 + $0x40] sm:$0xff]
  %v2347 = vld [vmem:[%s3 + $0x48] sm:$0xff]
  %v2348 = vld [vmem:[%s3 + $0x50] sm:$0xff]
  %v2349 = vld [vmem:[%s3 + $0x58] sm:$0xff]
  %v2350 = vld [vmem:[%s3 + $0x60] sm:$0xff]
  %v2351 = vld [vmem:[%s3 + $0x68] sm:$0xff]
  %v2352 = vld [vmem:[%s3 + $0x70] sm:$0xff]
  %v2353 = vld [vmem:[%s3 + $0x78] sm:$0xff]
  %v2354 = vmul.f32 %v2275, %v2338
  %v2355 = vmul.f32 %v2277, %v2339
  %v2356 = vmul.f32 %v2279, %v2340
  %v2357 = vmul.f32 %v2281, %v2341
  %v2358 = vmul.f32 %v2283, %v2342
  %v2359 = vmul.f32 %v2285, %v2343
  %v2360 = vmul.f32 %v2287, %v2344
  %v2361 = vmul.f32 %v2289, %v2345
  %v2362 = vmul.f32 %v2291, %v2346
  %v2363 = vmul.f32 %v2293, %v2347
  %v2364 = vmul.f32 %v2295, %v2348
  %v2365 = vmul.f32 %v2297, %v2349
  %v2366 = vmul.f32 %v2299, %v2350
  %v2367 = vmul.f32 %v2301, %v2351
  %v2368 = vmul.f32 %v2303, %v2352
  %v2369 = vmul.f32 %v2305, %v2353
  %v2370 = vmul.f32 %v2307, %v2338
  %v2371 = vmul.f32 %v2309, %v2339
  %v2372 = vmul.f32 %v2311, %v2340
  %v2373 = vmul.f32 %v2313, %v2341
  %v2374 = vmul.f32 %v2315, %v2342
  %v2375 = vmul.f32 %v2317, %v2343
  %v2376 = vmul.f32 %v2319, %v2344
  %v2377 = vmul.f32 %v2321, %v2345
  %v2378 = vmul.f32 %v2323, %v2346
  %v2379 = vmul.f32 %v2325, %v2347
  %v2380 = vmul.f32 %v2327, %v2348
  %v2381 = vmul.f32 %v2329, %v2349
  %v2382 = vmul.f32 %v2331, %v2350
  %v2383 = vmul.f32 %v2333, %v2351
  %v2384 = vmul.f32 %v2335, %v2352
  %v2385 = vmul.f32 %v2337, %v2353
  %v2386 = vadd.f32 %v2242, %v2354
  %v2387 = vadd.f32 %v2243, %v2355
  %v2388 = vadd.f32 %v2244, %v2356
  %v2389 = vadd.f32 %v2245, %v2357
  %v2390 = vadd.f32 %v2246, %v2358
  %v2391 = vadd.f32 %v2247, %v2359
  %v2392 = vadd.f32 %v2248, %v2360
  %v2393 = vadd.f32 %v2249, %v2361
  %v2394 = vadd.f32 %v2250, %v2362
  %v2395 = vadd.f32 %v2251, %v2363
  %v2396 = vadd.f32 %v2252, %v2364
  %v2397 = vadd.f32 %v2253, %v2365
  %v2398 = vadd.f32 %v2254, %v2366
  %v2399 = vadd.f32 %v2255, %v2367
  %v2400 = vadd.f32 %v2256, %v2368
  %v2401 = vadd.f32 %v2257, %v2369
  %v2402 = vadd.f32 %v2258, %v2370
  %v2403 = vadd.f32 %v2259, %v2371
  %v2404 = vadd.f32 %v2260, %v2372
  %v2405 = vadd.f32 %v2261, %v2373
  %v2406 = vadd.f32 %v2262, %v2374
  %v2407 = vadd.f32 %v2263, %v2375
  %v2408 = vadd.f32 %v2264, %v2376
  %v2409 = vadd.f32 %v2265, %v2377
  %v2410 = vadd.f32 %v2266, %v2378
  %v2411 = vadd.f32 %v2267, %v2379
  %v2412 = vadd.f32 %v2268, %v2380
  %v2413 = vadd.f32 %v2269, %v2381
  %v2414 = vadd.f32 %v2270, %v2382
  %v2415 = vadd.f32 %v2271, %v2383
  %v2416 = vadd.f32 %v2272, %v2384
  %v2417 = vadd.f32 %v2273, %v2385
  %v2418 = vld [vmem:[%s4] sm:$0xff]
  %v2419 = vld [vmem:[%s4 + $0x8] sm:$0xff]
  %v2420 = vld [vmem:[%s4 + $0x10] sm:$0xff]
  %v2421 = vld [vmem:[%s4 + $0x18] sm:$0xff]
  %v2422 = vld [vmem:[%s4 + $0x20] sm:$0xff]
  %v2423 = vld [vmem:[%s4 + $0x28] sm:$0xff]
  %v2424 = vld [vmem:[%s4 + $0x30] sm:$0xff]
  %v2425 = vld [vmem:[%s4 + $0x38] sm:$0xff]
  %v2426 = vld [vmem:[%s4 + $0x40] sm:$0xff]
  %v2427 = vld [vmem:[%s4 + $0x48] sm:$0xff]
  %v2428 = vld [vmem:[%s4 + $0x50] sm:$0xff]
  %v2429 = vld [vmem:[%s4 + $0x58] sm:$0xff]
  %v2430 = vld [vmem:[%s4 + $0x60] sm:$0xff]
  %v2431 = vld [vmem:[%s4 + $0x68] sm:$0xff]
  %v2432 = vld [vmem:[%s4 + $0x70] sm:$0xff]
  %v2433 = vld [vmem:[%s4 + $0x78] sm:$0xff]
  %v2434 = vmul.f32 %v2194, %v2418
  %v2435 = vmul.f32 %v2195, %v2419
  %v2436 = vmul.f32 %v2196, %v2420
  %v2437 = vmul.f32 %v2197, %v2421
  %v2438 = vmul.f32 %v2198, %v2422
  %v2439 = vmul.f32 %v2199, %v2423
  %v2440 = vmul.f32 %v2200, %v2424
  %v2441 = vmul.f32 %v2201, %v2425
  %v2442 = vmul.f32 %v2202, %v2426
  %v2443 = vmul.f32 %v2203, %v2427
  %v2444 = vmul.f32 %v2204, %v2428
  %v2445 = vmul.f32 %v2205, %v2429
  %v2446 = vmul.f32 %v2206, %v2430
  %v2447 = vmul.f32 %v2207, %v2431
  %v2448 = vmul.f32 %v2208, %v2432
  %v2449 = vmul.f32 %v2209, %v2433
  %v2450 = vmul.f32 %v2210, %v2418
  %v2451 = vmul.f32 %v2211, %v2419
  %v2452 = vmul.f32 %v2212, %v2420
  %v2453 = vmul.f32 %v2213, %v2421
  %v2454 = vmul.f32 %v2214, %v2422
  %v2455 = vmul.f32 %v2215, %v2423
  %v2456 = vmul.f32 %v2216, %v2424
  %v2457 = vmul.f32 %v2217, %v2425
  %v2458 = vmul.f32 %v2218, %v2426
  %v2459 = vmul.f32 %v2219, %v2427
  %v2460 = vmul.f32 %v2220, %v2428
  %v2461 = vmul.f32 %v2221, %v2429
  %v2462 = vmul.f32 %v2222, %v2430
  %v2463 = vmul.f32 %v2223, %v2431
  %v2464 = vmul.f32 %v2224, %v2432
  %v2465 = vmul.f32 %v2225, %v2433
  %2466 = vrot.lane.b32.xlu0 %v2194, 64
  %v2467 = vpop.permute.xlu0 %2466
  %2468 = vrot.lane.b32.xlu0 %v2195, 64
  %v2469 = vpop.permute.xlu0 %2468
  %2470 = vrot.lane.b32.xlu0 %v2196, 64
  %v2471 = vpop.permute.xlu0 %2470
  %2472 = vrot.lane.b32.xlu0 %v2197, 64
  %v2473 = vpop.permute.xlu0 %2472
  %2474 = vrot.lane.b32.xlu0 %v2198, 64
  %v2475 = vpop.permute.xlu0 %2474
  %2476 = vrot.lane.b32.xlu0 %v2199, 64
  %v2477 = vpop.permute.xlu0 %2476
  %2478 = vrot.lane.b32.xlu0 %v2200, 64
  %v2479 = vpop.permute.xlu0 %2478
  %2480 = vrot.lane.b32.xlu0 %v2201, 64
  %v2481 = vpop.permute.xlu0 %2480
  %2482 = vrot.lane.b32.xlu0 %v2202, 64
  %v2483 = vpop.permute.xlu0 %2482
  %2484 = vrot.lane.b32.xlu0 %v2203, 64
  %v2485 = vpop.permute.xlu0 %2484
  %2486 = vrot.lane.b32.xlu0 %v2204, 64
  %v2487 = vpop.permute.xlu0 %2486
  %2488 = vrot.lane.b32.xlu0 %v2205, 64
  %v2489 = vpop.permute.xlu0 %2488
  %2490 = vrot.lane.b32.xlu0 %v2206, 64
  %v2491 = vpop.permute.xlu0 %2490
  %2492 = vrot.lane.b32.xlu0 %v2207, 64
  %v2493 = vpop.permute.xlu0 %2492
  %2494 = vrot.lane.b32.xlu0 %v2208, 64
  %v2495 = vpop.permute.xlu0 %2494
  %2496 = vrot.lane.b32.xlu0 %v2209, 64
  %v2497 = vpop.permute.xlu0 %2496
  %2498 = vrot.lane.b32.xlu0 %v2210, 64
  %v2499 = vpop.permute.xlu0 %2498
  %2500 = vrot.lane.b32.xlu0 %v2211, 64
  %v2501 = vpop.permute.xlu0 %2500
  %2502 = vrot.lane.b32.xlu0 %v2212, 64
  %v2503 = vpop.permute.xlu0 %2502
  %2504 = vrot.lane.b32.xlu0 %v2213, 64
  %v2505 = vpop.permute.xlu0 %2504
  %2506 = vrot.lane.b32.xlu0 %v2214, 64
  %v2507 = vpop.permute.xlu0 %2506
  %2508 = vrot.lane.b32.xlu0 %v2215, 64
  %v2509 = vpop.permute.xlu0 %2508
  %2510 = vrot.lane.b32.xlu0 %v2216, 64
  %v2511 = vpop.permute.xlu0 %2510
  %2512 = vrot.lane.b32.xlu0 %v2217, 64
  %v2513 = vpop.permute.xlu0 %2512
  %2514 = vrot.lane.b32.xlu0 %v2218, 64
  %v2515 = vpop.permute.xlu0 %2514
  %2516 = vrot.lane.b32.xlu0 %v2219, 64
  %v2517 = vpop.permute.xlu0 %2516
  %2518 = vrot.lane.b32.xlu0 %v2220, 64
  %v2519 = vpop.permute.xlu0 %2518
  %2520 = vrot.lane.b32.xlu0 %v2221, 64
  %v2521 = vpop.permute.xlu0 %2520
  %2522 = vrot.lane.b32.xlu0 %v2222, 64
  %v2523 = vpop.permute.xlu0 %2522
  %2524 = vrot.lane.b32.xlu0 %v2223, 64
  %v2525 = vpop.permute.xlu0 %2524
  %2526 = vrot.lane.b32.xlu0 %v2224, 64
  %v2527 = vpop.permute.xlu0 %2526
  %2528 = vrot.lane.b32.xlu0 %v2225, 64
  %v2529 = vpop.permute.xlu0 %2528
  %v2530 = vld [vmem:[%s5] sm:$0xff]
  %v2531 = vld [vmem:[%s5 + $0x8] sm:$0xff]
  %v2532 = vld [vmem:[%s5 + $0x10] sm:$0xff]
  %v2533 = vld [vmem:[%s5 + $0x18] sm:$0xff]
  %v2534 = vld [vmem:[%s5 + $0x20] sm:$0xff]
  %v2535 = vld [vmem:[%s5 + $0x28] sm:$0xff]
  %v2536 = vld [vmem:[%s5 + $0x30] sm:$0xff]
  %v2537 = vld [vmem:[%s5 + $0x38] sm:$0xff]
  %v2538 = vld [vmem:[%s5 + $0x40] sm:$0xff]
  %v2539 = vld [vmem:[%s5 + $0x48] sm:$0xff]
  %v2540 = vld [vmem:[%s5 + $0x50] sm:$0xff]
  %v2541 = vld [vmem:[%s5 + $0x58] sm:$0xff]
  %v2542 = vld [vmem:[%s5 + $0x60] sm:$0xff]
  %v2543 = vld [vmem:[%s5 + $0x68] sm:$0xff]
  %v2544 = vld [vmem:[%s5 + $0x70] sm:$0xff]
  %v2545 = vld [vmem:[%s5 + $0x78] sm:$0xff]
  %v2546 = vmul.f32 %v2467, %v2530
  %v2547 = vmul.f32 %v2469, %v2531
  %v2548 = vmul.f32 %v2471, %v2532
  %v2549 = vmul.f32 %v2473, %v2533
  %v2550 = vmul.f32 %v2475, %v2534
  %v2551 = vmul.f32 %v2477, %v2535
  %v2552 = vmul.f32 %v2479, %v2536
  %v2553 = vmul.f32 %v2481, %v2537
  %v2554 = vmul.f32 %v2483, %v2538
  %v2555 = vmul.f32 %v2485, %v2539
  %v2556 = vmul.f32 %v2487, %v2540
  %v2557 = vmul.f32 %v2489, %v2541
  %v2558 = vmul.f32 %v2491, %v2542
  %v2559 = vmul.f32 %v2493, %v2543
  %v2560 = vmul.f32 %v2495, %v2544
  %v2561 = vmul.f32 %v2497, %v2545
  %v2562 = vmul.f32 %v2499, %v2530
  %v2563 = vmul.f32 %v2501, %v2531
  %v2564 = vmul.f32 %v2503, %v2532
  %v2565 = vmul.f32 %v2505, %v2533
  %v2566 = vmul.f32 %v2507, %v2534
  %v2567 = vmul.f32 %v2509, %v2535
  %v2568 = vmul.f32 %v2511, %v2536
  %v2569 = vmul.f32 %v2513, %v2537
  %v2570 = vmul.f32 %v2515, %v2538
  %v2571 = vmul.f32 %v2517, %v2539
  %v2572 = vmul.f32 %v2519, %v2540
  %v2573 = vmul.f32 %v2521, %v2541
  %v2574 = vmul.f32 %v2523, %v2542
  %v2575 = vmul.f32 %v2525, %v2543
  %v2576 = vmul.f32 %v2527, %v2544
  %v2577 = vmul.f32 %v2529, %v2545
  %v2578 = vadd.f32 %v2434, %v2546
  %v2579 = vadd.f32 %v2435, %v2547
  %v2580 = vadd.f32 %v2436, %v2548
  %v2581 = vadd.f32 %v2437, %v2549
  %v2582 = vadd.f32 %v2438, %v2550
  %v2583 = vadd.f32 %v2439, %v2551
  %v2584 = vadd.f32 %v2440, %v2552
  %v2585 = vadd.f32 %v2441, %v2553
  %v2586 = vadd.f32 %v2442, %v2554
  %v2587 = vadd.f32 %v2443, %v2555
  %v2588 = vadd.f32 %v2444, %v2556
  %v2589 = vadd.f32 %v2445, %v2557
  %v2590 = vadd.f32 %v2446, %v2558
  %v2591 = vadd.f32 %v2447, %v2559
  %v2592 = vadd.f32 %v2448, %v2560
  %v2593 = vadd.f32 %v2449, %v2561
  %v2594 = vadd.f32 %v2450, %v2562
  %v2595 = vadd.f32 %v2451, %v2563
  %v2596 = vadd.f32 %v2452, %v2564
  %v2597 = vadd.f32 %v2453, %v2565
  %v2598 = vadd.f32 %v2454, %v2566
  %v2599 = vadd.f32 %v2455, %v2567
  %v2600 = vadd.f32 %v2456, %v2568
  %v2601 = vadd.f32 %v2457, %v2569
  %v2602 = vadd.f32 %v2458, %v2570
  %v2603 = vadd.f32 %v2459, %v2571
  %v2604 = vadd.f32 %v2460, %v2572
  %v2605 = vadd.f32 %v2461, %v2573
  %v2606 = vadd.f32 %v2462, %v2574
  %v2607 = vadd.f32 %v2463, %v2575
  %v2608 = vadd.f32 %v2464, %v2576
  %v2609 = vadd.f32 %v2465, %v2577
  %v2610 = vpack.c.bf16 %v2387, %v2386
  %v2611 = vpack.c.bf16 %v2389, %v2388
  %v2612 = vpack.c.bf16 %v2391, %v2390
  %v2613 = vpack.c.bf16 %v2393, %v2392
  %v2614 = vpack.c.bf16 %v2395, %v2394
  %v2615 = vpack.c.bf16 %v2397, %v2396
  %v2616 = vpack.c.bf16 %v2399, %v2398
  %v2617 = vpack.c.bf16 %v2401, %v2400
  %v2618 = vpack.c.bf16 %v2403, %v2402
  %v2619 = vpack.c.bf16 %v2405, %v2404
  %v2620 = vpack.c.bf16 %v2407, %v2406
  %v2621 = vpack.c.bf16 %v2409, %v2408
  %v2622 = vpack.c.bf16 %v2411, %v2410
  %v2623 = vpack.c.bf16 %v2413, %v2412
  %v2624 = vpack.c.bf16 %v2415, %v2414
  %v2625 = vpack.c.bf16 %v2417, %v2416
  %v2642 = vunpack.c.l.b16 %v2610
  %v2643 = vunpack.c.h.b16 %v2610
  %v2644 = vunpack.c.l.b16 %v2611
  %v2645 = vunpack.c.h.b16 %v2611
  %v2646 = vunpack.c.l.b16 %v2612
  %v2647 = vunpack.c.h.b16 %v2612
  %v2648 = vunpack.c.l.b16 %v2613
  %v2649 = vunpack.c.h.b16 %v2613
  %v2650 = vunpack.c.l.b16 %v2614
  %v2651 = vunpack.c.h.b16 %v2614
  %v2652 = vunpack.c.l.b16 %v2615
  %v2653 = vunpack.c.h.b16 %v2615
  %v2654 = vunpack.c.l.b16 %v2616
  %v2655 = vunpack.c.h.b16 %v2616
  %v2656 = vunpack.c.l.b16 %v2617
  %v2657 = vunpack.c.h.b16 %v2617
  %v2658 = vunpack.c.l.b16 %v2618
  %v2659 = vunpack.c.h.b16 %v2618
  %v2660 = vunpack.c.l.b16 %v2619
  %v2661 = vunpack.c.h.b16 %v2619
  %v2662 = vunpack.c.l.b16 %v2620
  %v2663 = vunpack.c.h.b16 %v2620
  %v2664 = vunpack.c.l.b16 %v2621
  %v2665 = vunpack.c.h.b16 %v2621
  %v2666 = vunpack.c.l.b16 %v2622
  %v2667 = vunpack.c.h.b16 %v2622
  %v2668 = vunpack.c.l.b16 %v2623
  %v2669 = vunpack.c.h.b16 %v2623
  %v2670 = vunpack.c.l.b16 %v2624
  %v2671 = vunpack.c.h.b16 %v2624
  %v2672 = vunpack.c.l.b16 %v2625
  %v2673 = vunpack.c.h.b16 %v2625
  %v2674 = vpack.c.b16 %v2642, %v2642
  %v2675 = vpack.c.b16 %v2643, %v2643
  %v2676 = vpack.c.b16 %v2644, %v2644
  %v2677 = vpack.c.b16 %v2645, %v2645
  %v2678 = vpack.c.b16 %v2646, %v2646
  %v2679 = vpack.c.b16 %v2647, %v2647
  %v2680 = vpack.c.b16 %v2648, %v2648
  %v2681 = vpack.c.b16 %v2649, %v2649
  %v2682 = vpack.c.b16 %v2650, %v2650
  %v2683 = vpack.c.b16 %v2651, %v2651
  %v2684 = vpack.c.b16 %v2652, %v2652
  %v2685 = vpack.c.b16 %v2653, %v2653
  %v2686 = vpack.c.b16 %v2654, %v2654
  %v2687 = vpack.c.b16 %v2655, %v2655
  %v2688 = vpack.c.b16 %v2656, %v2656
  %v2689 = vpack.c.b16 %v2657, %v2657
  %v2690 = vpack.c.b16 %v2658, %v2658
  %v2691 = vpack.c.b16 %v2659, %v2659
  %v2692 = vpack.c.b16 %v2660, %v2660
  %v2693 = vpack.c.b16 %v2661, %v2661
  %v2694 = vpack.c.b16 %v2662, %v2662
  %v2695 = vpack.c.b16 %v2663, %v2663
  %v2696 = vpack.c.b16 %v2664, %v2664
  %v2697 = vpack.c.b16 %v2665, %v2665
  %v2698 = vpack.c.b16 %v2666, %v2666
  %v2699 = vpack.c.b16 %v2667, %v2667
  %v2700 = vpack.c.b16 %v2668, %v2668
  %v2701 = vpack.c.b16 %v2669, %v2669
  %v2702 = vpack.c.b16 %v2670, %v2670
  %v2703 = vpack.c.b16 %v2671, %v2671
  %v2704 = vpack.c.b16 %v2672, %v2672
  %v2705 = vpack.c.b16 %v2673, %v2673
  %2738 = vst [vmem:[%s6] sm:$0xf] %v2674
  %2739 = vst [vmem:[%s6 + $0x4] sm:$0xf] %v2675
  %2740 = vst [vmem:[%s6 + $0x8] sm:$0xf] %v2676
  %2741 = vst [vmem:[%s6 + $0xc] sm:$0xf] %v2677
  %2742 = vst [vmem:[%s6 + $0x10] sm:$0xf] %v2678
  %2743 = vst [vmem:[%s6 + $0x14] sm:$0xf] %v2679
  %2744 = vst [vmem:[%s6 + $0x18] sm:$0xf] %v2680
  %2745 = vst [vmem:[%s6 + $0x1c] sm:$0xf] %v2681
  %2746 = vst [vmem:[%s6 + $0x20] sm:$0xf] %v2682
  %2747 = vst [vmem:[%s6 + $0x24] sm:$0xf] %v2683
  %2748 = vst [vmem:[%s6 + $0x28] sm:$0xf] %v2684
  %2749 = vst [vmem:[%s6 + $0x2c] sm:$0xf] %v2685
  %2750 = vst [vmem:[%s6 + $0x30] sm:$0xf] %v2686
  %2751 = vst [vmem:[%s6 + $0x34] sm:$0xf] %v2687
  %2752 = vst [vmem:[%s6 + $0x38] sm:$0xf] %v2688
  %2753 = vst [vmem:[%s6 + $0x3c] sm:$0xf] %v2689
  %2754 = vst [vmem:[%s6 + $0x40] sm:$0xf] %v2690
  %2755 = vst [vmem:[%s6 + $0x44] sm:$0xf] %v2691
  %2756 = vst [vmem:[%s6 + $0x48] sm:$0xf] %v2692
  %2757 = vst [vmem:[%s6 + $0x4c] sm:$0xf] %v2693
  %2758 = vst [vmem:[%s6 + $0x50] sm:$0xf] %v2694
  %2759 = vst [vmem:[%s6 + $0x54] sm:$0xf] %v2695
  %2760 = vst [vmem:[%s6 + $0x58] sm:$0xf] %v2696
  %2761 = vst [vmem:[%s6 + $0x5c] sm:$0xf] %v2697
  %2762 = vst [vmem:[%s6 + $0x60] sm:$0xf] %v2698
  %2763 = vst [vmem:[%s6 + $0x64] sm:$0xf] %v2699
  %2764 = vst [vmem:[%s6 + $0x68] sm:$0xf] %v2700
  %2765 = vst [vmem:[%s6 + $0x6c] sm:$0xf] %v2701
  %2766 = vst [vmem:[%s6 + $0x70] sm:$0xf] %v2702
  %2767 = vst [vmem:[%s6 + $0x74] sm:$0xf] %v2703
  %2768 = vst [vmem:[%s6 + $0x78] sm:$0xf] %v2704
  %2769 = vst [vmem:[%s6 + $0x7c] sm:$0xf] %v2705
  %v2770 = vpack.c.bf16 %v2579, %v2578
  %v2771 = vpack.c.bf16 %v2581, %v2580
  %v2772 = vpack.c.bf16 %v2583, %v2582
  %v2773 = vpack.c.bf16 %v2585, %v2584
  %v2774 = vpack.c.bf16 %v2587, %v2586
  %v2775 = vpack.c.bf16 %v2589, %v2588
  %v2776 = vpack.c.bf16 %v2591, %v2590
  %v2777 = vpack.c.bf16 %v2593, %v2592
  %v2778 = vpack.c.bf16 %v2595, %v2594
  %v2779 = vpack.c.bf16 %v2597, %v2596
  %v2780 = vpack.c.bf16 %v2599, %v2598
  %v2781 = vpack.c.bf16 %v2601, %v2600
  %v2782 = vpack.c.bf16 %v2603, %v2602
  %v2783 = vpack.c.bf16 %v2605, %v2604
  %v2784 = vpack.c.bf16 %v2607, %v2606
  %v2785 = vpack.c.bf16 %v2609, %v2608
  %v2802 = vunpack.c.l.b16 %v2770
  %v2803 = vunpack.c.h.b16 %v2770
  %v2804 = vunpack.c.l.b16 %v2771
  %v2805 = vunpack.c.h.b16 %v2771
  %v2806 = vunpack.c.l.b16 %v2772
  %v2807 = vunpack.c.h.b16 %v2772
  %v2808 = vunpack.c.l.b16 %v2773
  %v2809 = vunpack.c.h.b16 %v2773
  %v2810 = vunpack.c.l.b16 %v2774
  %v2811 = vunpack.c.h.b16 %v2774
  %v2812 = vunpack.c.l.b16 %v2775
  %v2813 = vunpack.c.h.b16 %v2775
  %v2814 = vunpack.c.l.b16 %v2776
  %v2815 = vunpack.c.h.b16 %v2776
  %v2816 = vunpack.c.l.b16 %v2777
  %v2817 = vunpack.c.h.b16 %v2777
  %v2818 = vunpack.c.l.b16 %v2778
  %v2819 = vunpack.c.h.b16 %v2778
  %v2820 = vunpack.c.l.b16 %v2779
  %v2821 = vunpack.c.h.b16 %v2779
  %v2822 = vunpack.c.l.b16 %v2780
  %v2823 = vunpack.c.h.b16 %v2780
  %v2824 = vunpack.c.l.b16 %v2781
  %v2825 = vunpack.c.h.b16 %v2781
  %v2826 = vunpack.c.l.b16 %v2782
  %v2827 = vunpack.c.h.b16 %v2782
  %v2828 = vunpack.c.l.b16 %v2783
  %v2829 = vunpack.c.h.b16 %v2783
  %v2830 = vunpack.c.l.b16 %v2784
  %v2831 = vunpack.c.h.b16 %v2784
  %v2832 = vunpack.c.l.b16 %v2785
  %v2833 = vunpack.c.h.b16 %v2785
  %v2834 = vpack.c.b16 %v2802, %v2802
  %v2835 = vpack.c.b16 %v2803, %v2803
  %v2836 = vpack.c.b16 %v2804, %v2804
  %v2837 = vpack.c.b16 %v2805, %v2805
  %v2838 = vpack.c.b16 %v2806, %v2806
  %v2839 = vpack.c.b16 %v2807, %v2807
  %v2840 = vpack.c.b16 %v2808, %v2808
  %v2841 = vpack.c.b16 %v2809, %v2809
  %v2842 = vpack.c.b16 %v2810, %v2810
  %v2843 = vpack.c.b16 %v2811, %v2811
  %v2844 = vpack.c.b16 %v2812, %v2812
  %v2845 = vpack.c.b16 %v2813, %v2813
  %v2846 = vpack.c.b16 %v2814, %v2814
  %v2847 = vpack.c.b16 %v2815, %v2815
  %v2848 = vpack.c.b16 %v2816, %v2816
  %v2849 = vpack.c.b16 %v2817, %v2817
  %v2850 = vpack.c.b16 %v2818, %v2818
  %v2851 = vpack.c.b16 %v2819, %v2819
  %v2852 = vpack.c.b16 %v2820, %v2820
  %v2853 = vpack.c.b16 %v2821, %v2821
  %v2854 = vpack.c.b16 %v2822, %v2822
  %v2855 = vpack.c.b16 %v2823, %v2823
  %v2856 = vpack.c.b16 %v2824, %v2824
  %v2857 = vpack.c.b16 %v2825, %v2825
  %v2858 = vpack.c.b16 %v2826, %v2826
  %v2859 = vpack.c.b16 %v2827, %v2827
  %v2860 = vpack.c.b16 %v2828, %v2828
  %v2861 = vpack.c.b16 %v2829, %v2829
  %v2862 = vpack.c.b16 %v2830, %v2830
  %v2863 = vpack.c.b16 %v2831, %v2831
  %v2864 = vpack.c.b16 %v2832, %v2832
  %v2865 = vpack.c.b16 %v2833, %v2833
  %2898 = vst [vmem:[%s7] sm:$0xf] %v2834
  %2899 = vst [vmem:[%s7 + $0x4] sm:$0xf] %v2835
  %2900 = vst [vmem:[%s7 + $0x8] sm:$0xf] %v2836
  %2901 = vst [vmem:[%s7 + $0xc] sm:$0xf] %v2837
  %2902 = vst [vmem:[%s7 + $0x10] sm:$0xf] %v2838
  %2903 = vst [vmem:[%s7 + $0x14] sm:$0xf] %v2839
  %2904 = vst [vmem:[%s7 + $0x18] sm:$0xf] %v2840
  %2905 = vst [vmem:[%s7 + $0x1c] sm:$0xf] %v2841
  %2906 = vst [vmem:[%s7 + $0x20] sm:$0xf] %v2842
  %2907 = vst [vmem:[%s7 + $0x24] sm:$0xf] %v2843
  %2908 = vst [vmem:[%s7 + $0x28] sm:$0xf] %v2844
  %2909 = vst [vmem:[%s7 + $0x2c] sm:$0xf] %v2845
  %2910 = vst [vmem:[%s7 + $0x30] sm:$0xf] %v2846
  %2911 = vst [vmem:[%s7 + $0x34] sm:$0xf] %v2847
  %2912 = vst [vmem:[%s7 + $0x38] sm:$0xf] %v2848
  %2913 = vst [vmem:[%s7 + $0x3c] sm:$0xf] %v2849
  %2914 = vst [vmem:[%s7 + $0x40] sm:$0xf] %v2850
  %2915 = vst [vmem:[%s7 + $0x44] sm:$0xf] %v2851
  %2916 = vst [vmem:[%s7 + $0x48] sm:$0xf] %v2852
  %2917 = vst [vmem:[%s7 + $0x4c] sm:$0xf] %v2853
  %2918 = vst [vmem:[%s7 + $0x50] sm:$0xf] %v2854
  %2919 = vst [vmem:[%s7 + $0x54] sm:$0xf] %v2855
  %2920 = vst [vmem:[%s7 + $0x58] sm:$0xf] %v2856
  %2921 = vst [vmem:[%s7 + $0x5c] sm:$0xf] %v2857
  %2922 = vst [vmem:[%s7 + $0x60] sm:$0xf] %v2858
  %2923 = vst [vmem:[%s7 + $0x64] sm:$0xf] %v2859
  %2924 = vst [vmem:[%s7 + $0x68] sm:$0xf] %v2860
  %2925 = vst [vmem:[%s7 + $0x6c] sm:$0xf] %v2861
  %2926 = vst [vmem:[%s7 + $0x70] sm:$0xf] %v2862
  %2927 = vst [vmem:[%s7 + $0x74] sm:$0xf] %v2863
  %2928 = vst [vmem:[%s7 + $0x78] sm:$0xf] %v2864
  %2929 = vst [vmem:[%s7 + $0x7c] sm:$0xf] %v2865
  // Predicated region
  $region26: #{gpt_forward.7} parent=0 // pred_check
    _
  $region27: #{gpt_forward.7} parent=0 // pred_check_branch
    %2931 = sbr.rel (0) target = $region29
  $region28: #{gpt_forward.7} parent=0 // pred_region
    _
  $region29: #{gpt_forward.7} parent=0 // pred_fallthru
    _
  // Predicated region
  $region30: #{gpt_forward.7} parent=0 // pred_check
    _
  $region31: #{gpt_forward.7} parent=0 // pred_check_branch
    %2933 = sbr.rel (0) target = $region33
  $region32: #{gpt_forward.7} parent=0 // pred_region
    _
  $region33: #{gpt_forward.7} parent=0 // pred_fallthru
    _
  // Predicated region
  $region34: #{gpt_forward.7} parent=0 // pred_check
    _
  $region35: #{gpt_forward.7} parent=0 // pred_check_branch
    %2935 = sbr.rel (0) target = $region37
  $region36: #{gpt_forward.7} parent=0 // pred_region
    _
  $region37: #{gpt_forward.7} parent=0 // pred_fallthru
    _
  // Predicated region
  $region38: #{gpt_forward.7} parent=0 // pred_check
    _
  $region39: #{gpt_forward.7} parent=0 // pred_check_branch
    %2937 = sbr.rel (0) target = $region41
  $region40: #{gpt_forward.7} parent=0 // pred_region
    _
  $region41: #{gpt_forward.7} parent=0 // pred_fallthru
    _
  // Predicated region
  $region42: #{gpt_forward.7} parent=0 // pred_check
    _
  $region43: #{gpt_forward.7} parent=0 // pred_check_branch
    %2939 = sbr.rel (0) target = $region45
  $region44: #{gpt_forward.7} parent=0 // pred_region
    _
  $region45: #{gpt_forward.7} parent=0 // pred_fallthru
    _
  // Predicated region
  $region46: #{gpt_forward.7} parent=0 // pred_check
    _
  $region47: #{gpt_forward.7} parent=0 // pred_check_branch
    %2941 = sbr.rel (0) target = $region49
  $region48: #{gpt_forward.7} parent=0 // pred_region
    _
  $region49: #{gpt_forward.7} parent=0 // pred_fallthru
    _

// kernel: gpt_forward.13
$region0: #{gpt_forward.13}
  #allocation0 [shape = 'u32[]', space=smem, size = 0x4, offset = 0x4, fixed_abs, tag = 'smem constant byte address 0x4 - core index']
  #allocation1 [shape = 'u32[144,128]{1,0:T(1,128)}', space=vmem, size = 0x12000, scoped, tag = 'internal scratch']
  #allocation2 [shape = 'f32[128,1]{1,0:T(8,128)}', space=vmem, size = 0x10000, scoped, tag = 'scratch operand']
  #allocation3 [shape = 'f32[128,1]{1,0:T(8,128)}', space=vmem, size = 0x10000, scoped, tag = 'scratch operand']
  #allocation4 [shape = 'f32[128,1]{1,0:T(8,128)}', space=vmem, size = 0x10000, scoped, tag = 'scratch operand']
  %s0 = inlined_call_operand.vmem [shape: bf16[128,256], index: 0, kind: input, shape index: {}]
  %s1 = inlined_call_operand.vmem [shape: bf16[256,128], index: 1, kind: input, shape index: {}]
  %s2 = inlined_call_operand.vmem [shape: s32[128,1], index: 2, kind: input, shape index: {}]
  %s3 = inlined_call_operand.vmem [shape: f32[128,1], index: 3, kind: output, shape index: {}]
  %s4 = sld [smem:[#allocation0]]
  $region26: #{gpt_forward.13} parent=0
    _
  %s6 = ssub.s32 1, %s4
  %s7 = scalar_select 0, %s6, %s4
  // Predicated region
  $region2: #{gpt_forward.13} parent=0 // pred_check
    _
  $region3: #{gpt_forward.13} parent=0 // pred_check_branch
    %9 = sbr.rel (0) target = $region5
  $region4: #{gpt_forward.13} parent=0 // pred_region
    _
  $region5: #{gpt_forward.13} parent=0 // pred_fallthru
    _
  // Predicated region
  $region6: #{gpt_forward.13} parent=0 // pred_check
    _
  $region7: #{gpt_forward.13} parent=0 // pred_check_branch
    %11 = sbr.rel (0) target = $region9
  $region8: #{gpt_forward.13} parent=0 // pred_region
    _
  $region9: #{gpt_forward.13} parent=0 // pred_fallthru
    _
  // Predicated region
  $region10: #{gpt_forward.13} parent=0 // pred_check
    _
  $region11: #{gpt_forward.13} parent=0 // pred_check_branch
    %13 = sbr.rel (0) target = $region13
  $region12: #{gpt_forward.13} parent=0 // pred_region
    _
  $region13: #{gpt_forward.13} parent=0 // pred_fallthru
    _
  %s15 = smul.u32 0, 128
  %p16 = scmp.eq.s32.totalorder 0, 0
  // Predicated region
  $region14: #{gpt_forward.13} parent=0 // pred_check
    %p17 = pneg %p16
  $region15: #{gpt_forward.13} parent=0 // pred_check_branch
    %19 = sbr.rel (%p17) target = $region17
  $region16: #{gpt_forward.13} parent=0 // pred_region
    %s20 = scalar_lea.vmem [#allocation2], %s15
    %vm21 = vcmask 7168
    %22 = vst.msk [vmem:[%s20] sm:$0xff] %vm21, -inf
    %23 = vst.msk [vmem:[%s20 + $0x8] sm:$0xff] %vm21, -inf
    %24 = vst.msk [vmem:[%s20 + $0x10] sm:$0xff] %vm21, -inf
    %25 = vst.msk [vmem:[%s20 + $0x18] sm:$0xff] %vm21, -inf
    %26 = vst.msk [vmem:[%s20 + $0x20] sm:$0xff] %vm21, -inf
    %27 = vst.msk [vmem:[%s20 + $0x28] sm:$0xff] %vm21, -inf
    %28 = vst.msk [vmem:[%s20 + $0x30] sm:$0xff] %vm21, -inf
    %29 = vst.msk [vmem:[%s20 + $0x38] sm:$0xff] %vm21, -inf
    %30 = vst.msk [vmem:[%s20 + $0x40] sm:$0xff] %vm21, -inf
    %31 = vst.msk [vmem:[%s20 + $0x48] sm:$0xff] %vm21, -inf
    %32 = vst.msk [vmem:[%s20 + $0x50] sm:$0xff] %vm21, -inf
    %33 = vst.msk [vmem:[%s20 + $0x58] sm:$0xff] %vm21, -inf
    %34 = vst.msk [vmem:[%s20 + $0x60] sm:$0xff] %vm21, -inf
    %35 = vst.msk [vmem:[%s20 + $0x68] sm:$0xff] %vm21, -inf
    %36 = vst.msk [vmem:[%s20 + $0x70] sm:$0xff] %vm21, -inf
    %37 = vst.msk [vmem:[%s20 + $0x78] sm:$0xff] %vm21, -inf
    %s38 = scalar_lea.vmem [#allocation3], %s15
    %39 = vst.msk [vmem:[%s38] sm:$0xff] %vm21, 0.0
    %40 = vst.msk [vmem:[%s38 + $0x8] sm:$0xff] %vm21, 0.0
    %41 = vst.msk [vmem:[%s38 + $0x10] sm:$0xff] %vm21, 0.0
    %42 = vst.msk [vmem:[%s38 + $0x18] sm:$0xff] %vm21, 0.0
    %43 = vst.msk [vmem:[%s38 + $0x20] sm:$0xff] %vm21, 0.0
    %44 = vst.msk [vmem:[%s38 + $0x28] sm:$0xff] %vm21, 0.0
    %45 = vst.msk [vmem:[%s38 + $0x30] sm:$0xff] %vm21, 0.0
    %46 = vst.msk [vmem:[%s38 + $0x38] sm:$0xff] %vm21, 0.0
    %47 = vst.msk [vmem:[%s38 + $0x40] sm:$0xff] %vm21, 0.0
    %48 = vst.msk [vmem:[%s38 + $0x48] sm:$0xff] %vm21, 0.0
    %49 = vst.msk [vmem:[%s38 + $0x50] sm:$0xff] %vm21, 0.0
    %50 = vst.msk [vmem:[%s38 + $0x58] sm:$0xff] %vm21, 0.0
    %51 = vst.msk [vmem:[%s38 + $0x60] sm:$0xff] %vm21, 0.0
    %52 = vst.msk [vmem:[%s38 + $0x68] sm:$0xff] %vm21, 0.0
    %53 = vst.msk [vmem:[%s38 + $0x70] sm:$0xff] %vm21, 0.0
    %54 = vst.msk [vmem:[%s38 + $0x78] sm:$0xff] %vm21, 0.0
    %s55 = scalar_lea.vmem [#allocation4], %s15
    %56 = vst.msk [vmem:[%s55] sm:$0xff] %vm21, 0.0
    %57 = vst.msk [vmem:[%s55 + $0x8] sm:$0xff] %vm21, 0.0
    %58 = vst.msk [vmem:[%s55 + $0x10] sm:$0xff] %vm21, 0.0
    %59 = vst.msk [vmem:[%s55 + $0x18] sm:$0xff] %vm21, 0.0
    %60 = vst.msk [vmem:[%s55 + $0x20] sm:$0xff] %vm21, 0.0
    %61 = vst.msk [vmem:[%s55 + $0x28] sm:$0xff] %vm21, 0.0
    %62 = vst.msk [vmem:[%s55 + $0x30] sm:$0xff] %vm21, 0.0
    %63 = vst.msk [vmem:[%s55 + $0x38] sm:$0xff] %vm21, 0.0
    %64 = vst.msk [vmem:[%s55 + $0x40] sm:$0xff] %vm21, 0.0
    %65 = vst.msk [vmem:[%s55 + $0x48] sm:$0xff] %vm21, 0.0
    %66 = vst.msk [vmem:[%s55 + $0x50] sm:$0xff] %vm21, 0.0
    %67 = vst.msk [vmem:[%s55 + $0x58] sm:$0xff] %vm21, 0.0
    %68 = vst.msk [vmem:[%s55 + $0x60] sm:$0xff] %vm21, 0.0
    %69 = vst.msk [vmem:[%s55 + $0x68] sm:$0xff] %vm21, 0.0
    %70 = vst.msk [vmem:[%s55 + $0x70] sm:$0xff] %vm21, 0.0
    %71 = vst.msk [vmem:[%s55 + $0x78] sm:$0xff] %vm21, 0.0
  $region17: #{gpt_forward.13} parent=0 // pred_fallthru
    _
  %v72 = vld [vmem:[%s0] sm:$0xff]
  %v73 = vld [vmem:[%s0 + $0x8] sm:$0xff]
  %v74 = vld [vmem:[%s0 + $0x10] sm:$0xff]
  %v75 = vld [vmem:[%s0 + $0x18] sm:$0xff]
  %v76 = vld [vmem:[%s0 + $0x20] sm:$0xff]
  %v77 = vld [vmem:[%s0 + $0x28] sm:$0xff]
  %v78 = vld [vmem:[%s0 + $0x30] sm:$0xff]
  %v79 = vld [vmem:[%s0 + $0x38] sm:$0xff]
  %v80 = vld [vmem:[%s0 + $0x40] sm:$0xff]
  %v81 = vld [vmem:[%s0 + $0x48] sm:$0xff]
  %v82 = vld [vmem:[%s0 + $0x50] sm:$0xff]
  %v83 = vld [vmem:[%s0 + $0x58] sm:$0xff]
  %v84 = vld [vmem:[%s0 + $0x60] sm:$0xff]
  %v85 = vld [vmem:[%s0 + $0x68] sm:$0xff]
  %v86 = vld [vmem:[%s0 + $0x70] sm:$0xff]
  %v87 = vld [vmem:[%s0 + $0x78] sm:$0xff]
  %v88 = vld [vmem:[%s1] sm:$0xf]
  %v89 = vld [vmem:[%s1 + $0x4] sm:$0xf]
  %v90 = vld [vmem:[%s1 + $0x8] sm:$0xf]
  %v91 = vld [vmem:[%s1 + $0xc] sm:$0xf]
  %v92 = vld [vmem:[%s1 + $0x10] sm:$0xf]
  %v93 = vld [vmem:[%s1 + $0x14] sm:$0xf]
  %v94 = vld [vmem:[%s1 + $0x18] sm:$0xf]
  %v95 = vld [vmem:[%s1 + $0x1c] sm:$0xf]
  %v96 = vld [vmem:[%s1 + $0x20] sm:$0xf]
  %v97 = vld [vmem:[%s1 + $0x24] sm:$0xf]
  %v98 = vld [vmem:[%s1 + $0x28] sm:$0xf]
  %v99 = vld [vmem:[%s1 + $0x2c] sm:$0xf]
  %v100 = vld [vmem:[%s1 + $0x30] sm:$0xf]
  %v101 = vld [vmem:[%s1 + $0x34] sm:$0xf]
  %v102 = vld [vmem:[%s1 + $0x38] sm:$0xf]
  %v103 = vld [vmem:[%s1 + $0x3c] sm:$0xf]
  %v104 = vld [vmem:[%s1 + $0x40] sm:$0xf]
  %v105 = vld [vmem:[%s1 + $0x44] sm:$0xf]
  %v106 = vld [vmem:[%s1 + $0x48] sm:$0xf]
  %v107 = vld [vmem:[%s1 + $0x4c] sm:$0xf]
  %v108 = vld [vmem:[%s1 + $0x50] sm:$0xf]
  %v109 = vld [vmem:[%s1 + $0x54] sm:$0xf]
  %v110 = vld [vmem:[%s1 + $0x58] sm:$0xf]
  %v111 = vld [vmem:[%s1 + $0x5c] sm:$0xf]
  %v112 = vld [vmem:[%s1 + $0x60] sm:$0xf]
  %v113 = vld [vmem:[%s1 + $0x64] sm:$0xf]
  %v114 = vld [vmem:[%s1 + $0x68] sm:$0xf]
  %v115 = vld [vmem:[%s1 + $0x6c] sm:$0xf]
  %v116 = vld [vmem:[%s1 + $0x70] sm:$0xf]
  %v117 = vld [vmem:[%s1 + $0x74] sm:$0xf]
  %v118 = vld [vmem:[%s1 + $0x78] sm:$0xf]
  %v119 = vld [vmem:[%s1 + $0x7c] sm:$0xf]
  %v136 = vunpack.c.l.b16 %v72
  %v137 = vunpack.c.h.b16 %v72
  %v138 = vunpack.c.l.b16 %v73
  %v139 = vunpack.c.h.b16 %v73
  %v140 = vunpack.c.l.b16 %v74
  %v141 = vunpack.c.h.b16 %v74
  %v142 = vunpack.c.l.b16 %v75
  %v143 = vunpack.c.h.b16 %v75
  %v144 = vunpack.c.l.b16 %v76
  %v145 = vunpack.c.h.b16 %v76
  %v146 = vunpack.c.l.b16 %v77
  %v147 = vunpack.c.h.b16 %v77
  %v148 = vunpack.c.l.b16 %v78
  %v149 = vunpack.c.h.b16 %v78
  %v150 = vunpack.c.l.b16 %v79
  %v151 = vunpack.c.h.b16 %v79
  %v152 = vunpack.c.l.b16 %v80
  %v153 = vunpack.c.h.b16 %v80
  %v154 = vunpack.c.l.b16 %v81
  %v155 = vunpack.c.h.b16 %v81
  %v156 = vunpack.c.l.b16 %v82
  %v157 = vunpack.c.h.b16 %v82
  %v158 = vunpack.c.l.b16 %v83
  %v159 = vunpack.c.h.b16 %v83
  %v160 = vunpack.c.l.b16 %v84
  %v161 = vunpack.c.h.b16 %v84
  %v162 = vunpack.c.l.b16 %v85
  %v163 = vunpack.c.h.b16 %v85
  %v164 = vunpack.c.l.b16 %v86
  %v165 = vunpack.c.h.b16 %v86
  %v166 = vunpack.c.l.b16 %v87
  %v167 = vunpack.c.h.b16 %v87
  %v168 = vpack.c.b16 %v138, %v136
  %v169 = vpack.c.b16 %v139, %v137
  %v170 = vpack.c.b16 %v142, %v140
  %v171 = vpack.c.b16 %v143, %v141
  %v172 = vpack.c.b16 %v146, %v144
  %v173 = vpack.c.b16 %v147, %v145
  %v174 = vpack.c.b16 %v150, %v148
  %v175 = vpack.c.b16 %v151, %v149
  %v176 = vpack.c.b16 %v154, %v152
  %v177 = vpack.c.b16 %v155, %v153
  %v178 = vpack.c.b16 %v158, %v156
  %v179 = vpack.c.b16 %v159, %v157
  %v180 = vpack.c.b16 %v162, %v160
  %v181 = vpack.c.b16 %v163, %v161
  %v182 = vpack.c.b16 %v166, %v164
  %v183 = vpack.c.b16 %v167, %v165
  %v232 = vunpack.c.l.b16 %v88
  %v233 = vunpack.c.l.b16 %v89
  %v234 = vunpack.c.l.b16 %v90
  %v235 = vunpack.c.l.b16 %v91
  %v236 = vunpack.c.l.b16 %v92
  %v237 = vunpack.c.l.b16 %v93
  %v238 = vunpack.c.l.b16 %v94
  %v239 = vunpack.c.l.b16 %v95
  %v240 = vunpack.c.l.b16 %v96
  %v241 = vunpack.c.l.b16 %v97
  %v242 = vunpack.c.l.b16 %v98
  %v243 = vunpack.c.l.b16 %v99
  %v244 = vunpack.c.l.b16 %v100
  %v245 = vunpack.c.l.b16 %v101
  %v246 = vunpack.c.l.b16 %v102
  %v247 = vunpack.c.l.b16 %v103
  %v248 = vunpack.c.l.b16 %v104
  %v249 = vunpack.c.l.b16 %v105
  %v250 = vunpack.c.l.b16 %v106
  %v251 = vunpack.c.l.b16 %v107
  %v252 = vunpack.c.l.b16 %v108
  %v253 = vunpack.c.l.b16 %v109
  %v254 = vunpack.c.l.b16 %v110
  %v255 = vunpack.c.l.b16 %v111
  %v256 = vunpack.c.l.b16 %v112
  %v257 = vunpack.c.l.b16 %v113
  %v258 = vunpack.c.l.b16 %v114
  %v259 = vunpack.c.l.b16 %v115
  %v260 = vunpack.c.l.b16 %v116
  %v261 = vunpack.c.l.b16 %v117
  %v262 = vunpack.c.l.b16 %v118
  %v263 = vunpack.c.l.b16 %v119
  %v264 = vpack.c.b16 %v233, %v232
  %v265 = vpack.c.b16 %v235, %v234
  %v266 = vpack.c.b16 %v237, %v236
  %v267 = vpack.c.b16 %v239, %v238
  %v268 = vpack.c.b16 %v241, %v240
  %v269 = vpack.c.b16 %v243, %v242
  %v270 = vpack.c.b16 %v245, %v244
  %v271 = vpack.c.b16 %v247, %v246
  %v272 = vpack.c.b16 %v249, %v248
  %v273 = vpack.c.b16 %v251, %v250
  %v274 = vpack.c.b16 %v253, %v252
  %v275 = vpack.c.b16 %v255, %v254
  %v276 = vpack.c.b16 %v257, %v256
  %v277 = vpack.c.b16 %v259, %v258
  %v278 = vpack.c.b16 %v261, %v260
  %v279 = vpack.c.b16 %v263, %v262
  %296 = vmatprep.subr.bf16.mxu0 0
  %297 = vmatpush1.bf16.msra.mxu0 %v264
  %298 = vmatprep.subr.bf16.mxu0 0
  %299 = vmatpush1.bf16.msra.mxu0 %v265
  %300 = vmatprep.subr.bf16.mxu0 0
  %301 = vmatpush1.bf16.msra.mxu0 %v266
  %302 = vmatprep.subr.bf16.mxu0 0
  %303 = vmatpush1.bf16.msra.mxu0 %v267
  %304 = vmatprep.subr.bf16.mxu0 0
  %305 = vmatpush1.bf16.msra.mxu0 %v268
  %306 = vmatprep.subr.bf16.mxu0 0
  %307 = vmatpush1.bf16.msra.mxu0 %v269
  %308 = vmatprep.subr.bf16.mxu0 0
  %309 = vmatpush1.bf16.msra.mxu0 %v270
  %310 = vmatprep.subr.bf16.mxu0 0
  %311 = vmatpush1.bf16.msra.mxu0 %v271
  %312 = vmatprep.subr.bf16.mxu0 0
  %313 = vmatpush1.bf16.msra.mxu0 %v272
  %314 = vmatprep.subr.bf16.mxu0 0
  %315 = vmatpush1.bf16.msra.mxu0 %v273
  %316 = vmatprep.subr.bf16.mxu0 0
  %317 = vmatpush1.bf16.msra.mxu0 %v274
  %318 = vmatprep.subr.bf16.mxu0 0
  %319 = vmatpush1.bf16.msra.mxu0 %v275
  %320 = vmatprep.subr.bf16.mxu0 0
  %321 = vmatpush1.bf16.msra.mxu0 %v276
  %322 = vmatprep.subr.bf16.mxu0 0
  %323 = vmatpush1.bf16.msra.mxu0 %v277
  %324 = vmatprep.subr.bf16.mxu0 0
  %325 = vmatpush1.bf16.msra.mxu0 %v278
  %326 = vmatprep.subr.bf16.mxu0 0
  %327 = vmatpush1.bf16.msra.mxu0 %v279
  %328 = vmatprep.mubr.bf16.mxu0 %v169
  %329 = vmatmul.mubr.bf16.gmra.mrb[0].mxu0 %v168
  %v330 = vpop.f32.mrb[0].mxu0
  %v331 = vadd.f32 0.0, %v330
  %v332 = vpop.f32.mrb[0].mxu0
  %v333 = vpop.f32.mrb[0].mxu0
  %v334 = vadd.f32 0.0, %v333
  %v335 = vpop.f32.mrb[0].mxu0
  %336 = vmatprep.mubr.bf16.mxu0 %v171
  %337 = vmatmul.mubr.bf16.gmra.mrb[0].mxu0 %v170
  %v338 = vpop.f32.mrb[0].mxu0
  %v339 = vadd.f32 0.0, %v338
  %v340 = vpop.f32.mrb[0].mxu0
  %v341 = vpop.f32.mrb[0].mxu0
  %v342 = vadd.f32 0.0, %v341
  %v343 = vpop.f32.mrb[0].mxu0
  %344 = vmatprep.mubr.bf16.mxu0 %v173
  %345 = vmatmul.mubr.bf16.gmra.mrb[0].mxu0 %v172
  %v346 = vpop.f32.mrb[0].mxu0
  %v347 = vadd.f32 0.0, %v346
  %v348 = vpop.f32.mrb[0].mxu0
  %v349 = vpop.f32.mrb[0].mxu0
  %v350 = vadd.f32 0.0, %v349
  %v351 = vpop.f32.mrb[0].mxu0
  %352 = vmatprep.mubr.bf16.mxu0 %v175
  %353 = vmatmul.mubr.bf16.gmra.mrb[0].mxu0 %v174
  %v354 = vpop.f32.mrb[0].mxu0
  %v355 = vadd.f32 0.0, %v354
  %v356 = vpop.f32.mrb[0].mxu0
  %v357 = vpop.f32.mrb[0].mxu0
  %v358 = vadd.f32 0.0, %v357
  %v359 = vpop.f32.mrb[0].mxu0
  %360 = vmatprep.mubr.bf16.mxu0 %v177
  %361 = vmatmul.mubr.bf16.gmra.mrb[0].mxu0 %v176
  %v362 = vpop.f32.mrb[0].mxu0
  %v363 = vadd.f32 0.0, %v362
  %v364 = vpop.f32.mrb[0].mxu0
  %v365 = vpop.f32.mrb[0].mxu0
  %v366 = vadd.f32 0.0, %v365
  %v367 = vpop.f32.mrb[0].mxu0
  %368 = vmatprep.mubr.bf16.mxu0 %v179
  %369 = vmatmul.mubr.bf16.gmra.mrb[0].mxu0 %v178
  %v370 = vpop.f32.mrb[0].mxu0
  %v371 = vadd.f32 0.0, %v370
  %v372 = vpop.f32.mrb[0].mxu0
  %v373 = vpop.f32.mrb[0].mxu0
  %v374 = vadd.f32 0.0, %v373
  %v375 = vpop.f32.mrb[0].mxu0
  %376 = vmatprep.mubr.bf16.mxu0 %v181
  %377 = vmatmul.mubr.bf16.gmra.mrb[0].mxu0 %v180
  %v378 = vpop.f32.mrb[0].mxu0
  %v379 = vadd.f32 0.0, %v378
  %v380 = vpop.f32.mrb[0].mxu0
  %v381 = vpop.f32.mrb[0].mxu0
  %v382 = vadd.f32 0.0, %v381
  %v383 = vpop.f32.mrb[0].mxu0
  %384 = vmatprep.mubr.bf16.mxu0 %v183
  %385 = vmatmul.mubr.bf16.gmra.mrb[0].mxu0 %v182
  %v386 = vpop.f32.mrb[0].mxu0
  %v387 = vadd.f32 0.0, %v386
  %v388 = vpop.f32.mrb[0].mxu0
  %v389 = vpop.f32.mrb[0].mxu0
  %v390 = vadd.f32 0.0, %v389
  %v391 = vpop.f32.mrb[0].mxu0
  %392 = vdwg.mxu0
  %s393 = scalar_lea.vmem [#allocation2], %s15
  %v394 = vld [vmem:[%s393] sm:$0xff]
  %v395 = vld [vmem:[%s393 + $0x8] sm:$0xff]
  %v396 = vld [vmem:[%s393 + $0x10] sm:$0xff]
  %v397 = vld [vmem:[%s393 + $0x18] sm:$0xff]
  %v398 = vld [vmem:[%s393 + $0x20] sm:$0xff]
  %v399 = vld [vmem:[%s393 + $0x28] sm:$0xff]
  %v400 = vld [vmem:[%s393 + $0x30] sm:$0xff]
  %v401 = vld [vmem:[%s393 + $0x38] sm:$0xff]
  %v402 = vld [vmem:[%s393 + $0x40] sm:$0xff]
  %v403 = vld [vmem:[%s393 + $0x48] sm:$0xff]
  %v404 = vld [vmem:[%s393 + $0x50] sm:$0xff]
  %v405 = vld [vmem:[%s393 + $0x58] sm:$0xff]
  %v406 = vld [vmem:[%s393 + $0x60] sm:$0xff]
  %v407 = vld [vmem:[%s393 + $0x68] sm:$0xff]
  %v408 = vld [vmem:[%s393 + $0x70] sm:$0xff]
  %v409 = vld [vmem:[%s393 + $0x78] sm:$0xff]
  %410 = vmax.xlane.f32.xlu0 %v331
  %v411 = vpop.xlane.xlu0 %410
  %412 = vmax.xlane.f32.xlu0 %v334
  %v413 = vpop.xlane.xlu0 %412
  %414 = vmax.xlane.f32.xlu0 %v339
  %v415 = vpop.xlane.xlu0 %414
  %416 = vmax.xlane.f32.xlu0 %v342
  %v417 = vpop.xlane.xlu0 %416
  %418 = vmax.xlane.f32.xlu0 %v347
  %v419 = vpop.xlane.xlu0 %418
  %420 = vmax.xlane.f32.xlu0 %v350
  %v421 = vpop.xlane.xlu0 %420
  %422 = vmax.xlane.f32.xlu0 %v355
  %v423 = vpop.xlane.xlu0 %422
  %424 = vmax.xlane.f32.xlu0 %v358
  %v425 = vpop.xlane.xlu0 %424
  %426 = vmax.xlane.f32.xlu0 %v363
  %v427 = vpop.xlane.xlu0 %426
  %428 = vmax.xlane.f32.xlu0 %v366
  %v429 = vpop.xlane.xlu0 %428
  %430 = vmax.xlane.f32.xlu0 %v371
  %v431 = vpop.xlane.xlu0 %430
  %432 = vmax.xlane.f32.xlu0 %v374
  %v433 = vpop.xlane.xlu0 %432
  %434 = vmax.xlane.f32.xlu0 %v379
  %v435 = vpop.xlane.xlu0 %434
  %436 = vmax.xlane.f32.xlu0 %v382
  %v437 = vpop.xlane.xlu0 %436
  %438 = vmax.xlane.f32.xlu0 %v387
  %v439 = vpop.xlane.xlu0 %438
  %440 = vmax.xlane.f32.xlu0 %v390
  %v441 = vpop.xlane.xlu0 %440
  %v442 = vmax.f32 %v394, %v411
  %v443 = vmax.f32 %v395, %v413
  %v444 = vmax.f32 %v396, %v415
  %v445 = vmax.f32 %v397, %v417
  %v446 = vmax.f32 %v398, %v419
  %v447 = vmax.f32 %v399, %v421
  %v448 = vmax.f32 %v400, %v423
  %v449 = vmax.f32 %v401, %v425
  %v450 = vmax.f32 %v402, %v427
  %v451 = vmax.f32 %v403, %v429
  %v452 = vmax.f32 %v404, %v431
  %v453 = vmax.f32 %v405, %v433
  %v454 = vmax.f32 %v406, %v435
  %v455 = vmax.f32 %v407, %v437
  %v456 = vmax.f32 %v408, %v439
  %v457 = vmax.f32 %v409, %v441
  %s458 = scalar_lea.vmem [#allocation3], %s15
  %v459 = vld [vmem:[%s458] sm:$0xff]
  %v460 = vld [vmem:[%s458 + $0x8] sm:$0xff]
  %v461 = vld [vmem:[%s458 + $0x10] sm:$0xff]
  %v462 = vld [vmem:[%s458 + $0x18] sm:$0xff]
  %v463 = vld [vmem:[%s458 + $0x20] sm:$0xff]
  %v464 = vld [vmem:[%s458 + $0x28] sm:$0xff]
  %v465 = vld [vmem:[%s458 + $0x30] sm:$0xff]
  %v466 = vld [vmem:[%s458 + $0x38] sm:$0xff]
  %v467 = vld [vmem:[%s458 + $0x40] sm:$0xff]
  %v468 = vld [vmem:[%s458 + $0x48] sm:$0xff]
  %v469 = vld [vmem:[%s458 + $0x50] sm:$0xff]
  %v470 = vld [vmem:[%s458 + $0x58] sm:$0xff]
  %v471 = vld [vmem:[%s458 + $0x60] sm:$0xff]
  %v472 = vld [vmem:[%s458 + $0x68] sm:$0xff]
  %v473 = vld [vmem:[%s458 + $0x70] sm:$0xff]
  %v474 = vld [vmem:[%s458 + $0x78] sm:$0xff]
  %v475 = vsub.f32 %v394, %v442
  %v476 = vsub.f32 %v395, %v443
  %v477 = vsub.f32 %v396, %v444
  %v478 = vsub.f32 %v397, %v445
  %v479 = vsub.f32 %v398, %v446
  %v480 = vsub.f32 %v399, %v447
  %v481 = vsub.f32 %v400, %v448
  %v482 = vsub.f32 %v401, %v449
  %v483 = vsub.f32 %v402, %v450
  %v484 = vsub.f32 %v403, %v451
  %v485 = vsub.f32 %v404, %v452
  %v486 = vsub.f32 %v405, %v453
  %v487 = vsub.f32 %v406, %v454
  %v488 = vsub.f32 %v407, %v455
  %v489 = vsub.f32 %v408, %v456
  %v490 = vsub.f32 %v409, %v457
  %v491 = vmul.f32 %v475, 1.442695
  %v492 = vpow.pop %v491
  %v493 = vmul.f32 %v476, 1.442695
  %v494 = vpow.pop %v493
  %v495 = vmul.f32 %v477, 1.442695
  %v496 = vpow.pop %v495
  %v497 = vmul.f32 %v478, 1.442695
  %v498 = vpow.pop %v497
  %v499 = vmul.f32 %v479, 1.442695
  %v500 = vpow.pop %v499
  %v501 = vmul.f32 %v480, 1.442695
  %v502 = vpow.pop %v501
  %v503 = vmul.f32 %v481, 1.442695
  %v504 = vpow.pop %v503
  %v505 = vmul.f32 %v482, 1.442695
  %v506 = vpow.pop %v505
  %v507 = vmul.f32 %v483, 1.442695
  %v508 = vpow.pop %v507
  %v509 = vmul.f32 %v484, 1.442695
  %v510 = vpow.pop %v509
  %v511 = vmul.f32 %v485, 1.442695
  %v512 = vpow.pop %v511
  %v513 = vmul.f32 %v486, 1.442695
  %v514 = vpow.pop %v513
  %v515 = vmul.f32 %v487, 1.442695
  %v516 = vpow.pop %v515
  %v517 = vmul.f32 %v488, 1.442695
  %v518 = vpow.pop %v517
  %v519 = vmul.f32 %v489, 1.442695
  %v520 = vpow.pop %v519
  %v521 = vmul.f32 %v490, 1.442695
  %v522 = vpow.pop %v521
  %v523 = vmul.f32 %v459, %v492
  %v524 = vmul.f32 %v460, %v494
  %v525 = vmul.f32 %v461, %v496
  %v526 = vmul.f32 %v462, %v498
  %v527 = vmul.f32 %v463, %v500
  %v528 = vmul.f32 %v464, %v502
  %v529 = vmul.f32 %v465, %v504
  %v530 = vmul.f32 %v466, %v506
  %v531 = vmul.f32 %v467, %v508
  %v532 = vmul.f32 %v468, %v510
  %v533 = vmul.f32 %v469, %v512
  %v534 = vmul.f32 %v470, %v514
  %v535 = vmul.f32 %v471, %v516
  %v536 = vmul.f32 %v472, %v518
  %v537 = vmul.f32 %v473, %v520
  %v538 = vmul.f32 %v474, %v522
  %540 = vset.pattern.permute.xlu0 0
  %541 = vperm.xlu0 %540, %v442
  %v542 = vpop.permute.xlu0 %541
  %545 = vset.pattern.permute.xlu0 0
  %546 = vperm.xlu0 %545, %v443
  %v547 = vpop.permute.xlu0 %546
  %550 = vset.pattern.permute.xlu0 0
  %551 = vperm.xlu0 %550, %v444
  %v552 = vpop.permute.xlu0 %551
  %555 = vset.pattern.permute.xlu0 0
  %556 = vperm.xlu0 %555, %v445
  %v557 = vpop.permute.xlu0 %556
  %560 = vset.pattern.permute.xlu0 0
  %561 = vperm.xlu0 %560, %v446
  %v562 = vpop.permute.xlu0 %561
  %565 = vset.pattern.permute.xlu0 0
  %566 = vperm.xlu0 %565, %v447
  %v567 = vpop.permute.xlu0 %566
  %570 = vset.pattern.permute.xlu0 0
  %571 = vperm.xlu0 %570, %v448
  %v572 = vpop.permute.xlu0 %571
  %575 = vset.pattern.permute.xlu0 0
  %576 = vperm.xlu0 %575, %v449
  %v577 = vpop.permute.xlu0 %576
  %580 = vset.pattern.permute.xlu0 0
  %581 = vperm.xlu0 %580, %v450
  %v582 = vpop.permute.xlu0 %581
  %585 = vset.pattern.permute.xlu0 0
  %586 = vperm.xlu0 %585, %v451
  %v587 = vpop.permute.xlu0 %586
  %590 = vset.pattern.permute.xlu0 0
  %591 = vperm.xlu0 %590, %v452
  %v592 = vpop.permute.xlu0 %591
  %595 = vset.pattern.permute.xlu0 0
  %596 = vperm.xlu0 %595, %v453
  %v597 = vpop.permute.xlu0 %596
  %600 = vset.pattern.permute.xlu0 0
  %601 = vperm.xlu0 %600, %v454
  %v602 = vpop.permute.xlu0 %601
  %605 = vset.pattern.permute.xlu0 0
  %606 = vperm.xlu0 %605, %v455
  %v607 = vpop.permute.xlu0 %606
  %610 = vset.pattern.permute.xlu0 0
  %611 = vperm.xlu0 %610, %v456
  %v612 = vpop.permute.xlu0 %611
  %615 = vset.pattern.permute.xlu0 0
  %616 = vperm.xlu0 %615, %v457
  %v617 = vpop.permute.xlu0 %616
  %v619 = vsub.f32 %v331, %v542
  %v620 = vsub.f32 %v334, %v547
  %v621 = vsub.f32 %v339, %v552
  %v622 = vsub.f32 %v342, %v557
  %v623 = vsub.f32 %v347, %v562
  %v624 = vsub.f32 %v350, %v567
  %v625 = vsub.f32 %v355, %v572
  %v626 = vsub.f32 %v358, %v577
  %v627 = vsub.f32 %v363, %v582
  %v628 = vsub.f32 %v366, %v587
  %v629 = vsub.f32 %v371, %v592
  %v630 = vsub.f32 %v374, %v597
  %v631 = vsub.f32 %v379, %v602
  %v632 = vsub.f32 %v382, %v607
  %v633 = vsub.f32 %v387, %v612
  %v634 = vsub.f32 %v390, %v617
  %v635 = vmul.f32 %v619, 1.442695
  %v636 = vpow.pop %v635
  %v637 = vmul.f32 %v620, 1.442695
  %v638 = vpow.pop %v637
  %v639 = vmul.f32 %v621, 1.442695
  %v640 = vpow.pop %v639
  %v641 = vmul.f32 %v622, 1.442695
  %v642 = vpow.pop %v641
  %v643 = vmul.f32 %v623, 1.442695
  %v644 = vpow.pop %v643
  %v645 = vmul.f32 %v624, 1.442695
  %v646 = vpow.pop %v645
  %v647 = vmul.f32 %v625, 1.442695
  %v648 = vpow.pop %v647
  %v649 = vmul.f32 %v626, 1.442695
  %v650 = vpow.pop %v649
  %v651 = vmul.f32 %v627, 1.442695
  %v652 = vpow.pop %v651
  %v653 = vmul.f32 %v628, 1.442695
  %v654 = vpow.pop %v653
  %v655 = vmul.f32 %v629, 1.442695
  %v656 = vpow.pop %v655
  %v657 = vmul.f32 %v630, 1.442695
  %v658 = vpow.pop %v657
  %v659 = vmul.f32 %v631, 1.442695
  %v660 = vpow.pop %v659
  %v661 = vmul.f32 %v632, 1.442695
  %v662 = vpow.pop %v661
  %v663 = vmul.f32 %v633, 1.442695
  %v664 = vpow.pop %v663
  %v665 = vmul.f32 %v634, 1.442695
  %v666 = vpow.pop %v665
  %667 = vadd.xlane.f32.xlu0 %v636
  %v668 = vpop.xlane.xlu0 %667
  %669 = vadd.xlane.f32.xlu0 %v638
  %v670 = vpop.xlane.xlu0 %669
  %671 = vadd.xlane.f32.xlu0 %v640
  %v672 = vpop.xlane.xlu0 %671
  %673 = vadd.xlane.f32.xlu0 %v642
  %v674 = vpop.xlane.xlu0 %673
  %675 = vadd.xlane.f32.xlu0 %v644
  %v676 = vpop.xlane.xlu0 %675
  %677 = vadd.xlane.f32.xlu0 %v646
  %v678 = vpop.xlane.xlu0 %677
  %679 = vadd.xlane.f32.xlu0 %v648
  %v680 = vpop.xlane.xlu0 %679
  %681 = vadd.xlane.f32.xlu0 %v650
  %v682 = vpop.xlane.xlu0 %681
  %683 = vadd.xlane.f32.xlu0 %v652
  %v684 = vpop.xlane.xlu0 %683
  %685 = vadd.xlane.f32.xlu0 %v654
  %v686 = vpop.xlane.xlu0 %685
  %687 = vadd.xlane.f32.xlu0 %v656
  %v688 = vpop.xlane.xlu0 %687
  %689 = vadd.xlane.f32.xlu0 %v658
  %v690 = vpop.xlane.xlu0 %689
  %691 = vadd.xlane.f32.xlu0 %v660
  %v692 = vpop.xlane.xlu0 %691
  %693 = vadd.xlane.f32.xlu0 %v662
  %v694 = vpop.xlane.xlu0 %693
  %695 = vadd.xlane.f32.xlu0 %v664
  %v696 = vpop.xlane.xlu0 %695
  %697 = vadd.xlane.f32.xlu0 %v666
  %v698 = vpop.xlane.xlu0 %697
  %v699 = vadd.f32 %v523, %v668
  %v700 = vadd.f32 %v524, %v670
  %v701 = vadd.f32 %v525, %v672
  %v702 = vadd.f32 %v526, %v674
  %v703 = vadd.f32 %v527, %v676
  %v704 = vadd.f32 %v528, %v678
  %v705 = vadd.f32 %v529, %v680
  %v706 = vadd.f32 %v530, %v682
  %v707 = vadd.f32 %v531, %v684
  %v708 = vadd.f32 %v532, %v686
  %v709 = vadd.f32 %v533, %v688
  %v710 = vadd.f32 %v534, %v690
  %v711 = vadd.f32 %v535, %v692
  %v712 = vadd.f32 %v536, %v694
  %v713 = vadd.f32 %v537, %v696
  %v714 = vadd.f32 %v538, %v698
  %vm715 = vcmask 7168
  %716 = vst.msk [vmem:[%s458] sm:$0xff] %vm715, %v699
  %717 = vst.msk [vmem:[%s458 + $0x8] sm:$0xff] %vm715, %v700
  %718 = vst.msk [vmem:[%s458 + $0x10] sm:$0xff] %vm715, %v701
  %719 = vst.msk [vmem:[%s458 + $0x18] sm:$0xff] %vm715, %v702
  %720 = vst.msk [vmem:[%s458 + $0x20] sm:$0xff] %vm715, %v703
  %721 = vst.msk [vmem:[%s458 + $0x28] sm:$0xff] %vm715, %v704
  %722 = vst.msk [vmem:[%s458 + $0x30] sm:$0xff] %vm715, %v705
  %723 = vst.msk [vmem:[%s458 + $0x38] sm:$0xff] %vm715, %v706
  %724 = vst.msk [vmem:[%s458 + $0x40] sm:$0xff] %vm715, %v707
  %725 = vst.msk [vmem:[%s458 + $0x48] sm:$0xff] %vm715, %v708
  %726 = vst.msk [vmem:[%s458 + $0x50] sm:$0xff] %vm715, %v709
  %727 = vst.msk [vmem:[%s458 + $0x58] sm:$0xff] %vm715, %v710
  %728 = vst.msk [vmem:[%s458 + $0x60] sm:$0xff] %vm715, %v711
  %729 = vst.msk [vmem:[%s458 + $0x68] sm:$0xff] %vm715, %v712
  %730 = vst.msk [vmem:[%s458 + $0x70] sm:$0xff] %vm715, %v713
  %731 = vst.msk [vmem:[%s458 + $0x78] sm:$0xff] %vm715, %v714
  %732 = vst.msk [vmem:[%s393] sm:$0xff] %vm715, %v442
  %733 = vst.msk [vmem:[%s393 + $0x8] sm:$0xff] %vm715, %v443
  %734 = vst.msk [vmem:[%s393 + $0x10] sm:$0xff] %vm715, %v444
  %735 = vst.msk [vmem:[%s393 + $0x18] sm:$0xff] %vm715, %v445
  %736 = vst.msk [vmem:[%s393 + $0x20] sm:$0xff] %vm715, %v446
  %737 = vst.msk [vmem:[%s393 + $0x28] sm:$0xff] %vm715, %v447
  %738 = vst.msk [vmem:[%s393 + $0x30] sm:$0xff] %vm715, %v448
  %739 = vst.msk [vmem:[%s393 + $0x38] sm:$0xff] %vm715, %v449
  %740 = vst.msk [vmem:[%s393 + $0x40] sm:$0xff] %vm715, %v450
  %741 = vst.msk [vmem:[%s393 + $0x48] sm:$0xff] %vm715, %v451
  %742 = vst.msk [vmem:[%s393 + $0x50] sm:$0xff] %vm715, %v452
  %743 = vst.msk [vmem:[%s393 + $0x58] sm:$0xff] %vm715, %v453
  %744 = vst.msk [vmem:[%s393 + $0x60] sm:$0xff] %vm715, %v454
  %745 = vst.msk [vmem:[%s393 + $0x68] sm:$0xff] %vm715, %v455
  %746 = vst.msk [vmem:[%s393 + $0x70] sm:$0xff] %vm715, %v456
  %747 = vst.msk [vmem:[%s393 + $0x78] sm:$0xff] %vm715, %v457
  %s748 = smul.u32 0, 128
  %v749 = vlaneseq
  %v750 = vand.u32 %v749, 127
  %v751 = vstv %s748
  %v752 = vadd.s32 %v751, %v750
  %v753 = vld [vmem:[%s2] sm:$0xff]
  %v754 = vld [vmem:[%s2 + $0x8] sm:$0xff]
  %v755 = vld [vmem:[%s2 + $0x10] sm:$0xff]
  %v756 = vld [vmem:[%s2 + $0x18] sm:$0xff]
  %v757 = vld [vmem:[%s2 + $0x20] sm:$0xff]
  %v758 = vld [vmem:[%s2 + $0x28] sm:$0xff]
  %v759 = vld [vmem:[%s2 + $0x30] sm:$0xff]
  %v760 = vld [vmem:[%s2 + $0x38] sm:$0xff]
  %v761 = vld [vmem:[%s2 + $0x40] sm:$0xff]
  %v762 = vld [vmem:[%s2 + $0x48] sm:$0xff]
  %v763 = vld [vmem:[%s2 + $0x50] sm:$0xff]
  %v764 = vld [vmem:[%s2 + $0x58] sm:$0xff]
  %v765 = vld [vmem:[%s2 + $0x60] sm:$0xff]
  %v766 = vld [vmem:[%s2 + $0x68] sm:$0xff]
  %v767 = vld [vmem:[%s2 + $0x70] sm:$0xff]
  %v768 = vld [vmem:[%s2 + $0x78] sm:$0xff]
  %769 = vset.pattern.permute.xlu0 0
  %770 = vperm.xlu0 %769, %v753
  %v771 = vpop.permute.xlu0 %770
  %772 = vset.pattern.permute.xlu0 0
  %773 = vperm.xlu0 %772, %v754
  %v774 = vpop.permute.xlu0 %773
  %775 = vset.pattern.permute.xlu0 0
  %776 = vperm.xlu0 %775, %v755
  %v777 = vpop.permute.xlu0 %776
  %778 = vset.pattern.permute.xlu0 0
  %779 = vperm.xlu0 %778, %v756
  %v780 = vpop.permute.xlu0 %779
  %781 = vset.pattern.permute.xlu0 0
  %782 = vperm.xlu0 %781, %v757
  %v783 = vpop.permute.xlu0 %782
  %784 = vset.pattern.permute.xlu0 0
  %785 = vperm.xlu0 %784, %v758
  %v786 = vpop.permute.xlu0 %785
  %787 = vset.pattern.permute.xlu0 0
  %788 = vperm.xlu0 %787, %v759
  %v789 = vpop.permute.xlu0 %788
  %790 = vset.pattern.permute.xlu0 0
  %791 = vperm.xlu0 %790, %v760
  %v792 = vpop.permute.xlu0 %791
  %793 = vset.pattern.permute.xlu0 0
  %794 = vperm.xlu0 %793, %v761
  %v795 = vpop.permute.xlu0 %794
  %796 = vset.pattern.permute.xlu0 0
  %797 = vperm.xlu0 %796, %v762
  %v798 = vpop.permute.xlu0 %797
  %799 = vset.pattern.permute.xlu0 0
  %800 = vperm.xlu0 %799, %v763
  %v801 = vpop.permute.xlu0 %800
  %802 = vset.pattern.permute.xlu0 0
  %803 = vperm.xlu0 %802, %v764
  %v804 = vpop.permute.xlu0 %803
  %805 = vset.pattern.permute.xlu0 0
  %806 = vperm.xlu0 %805, %v765
  %v807 = vpop.permute.xlu0 %806
  %808 = vset.pattern.permute.xlu0 0
  %809 = vperm.xlu0 %808, %v766
  %v810 = vpop.permute.xlu0 %809
  %811 = vset.pattern.permute.xlu0 0
  %812 = vperm.xlu0 %811, %v767
  %v813 = vpop.permute.xlu0 %812
  %814 = vset.pattern.permute.xlu0 0
  %815 = vperm.xlu0 %814, %v768
  %v816 = vpop.permute.xlu0 %815
  %vm817 = vcmp.eq.s32.totalorder %v752, %v771
  %vm818 = vcmp.eq.s32.totalorder %v752, %v774
  %vm819 = vcmp.eq.s32.totalorder %v752, %v777
  %vm820 = vcmp.eq.s32.totalorder %v752, %v780
  %vm821 = vcmp.eq.s32.totalorder %v752, %v783
  %vm822 = vcmp.eq.s32.totalorder %v752, %v786
  %vm823 = vcmp.eq.s32.totalorder %v752, %v789
  %vm824 = vcmp.eq.s32.totalorder %v752, %v792
  %vm825 = vcmp.eq.s32.totalorder %v752, %v795
  %vm826 = vcmp.eq.s32.totalorder %v752, %v798
  %vm827 = vcmp.eq.s32.totalorder %v752, %v801
  %vm828 = vcmp.eq.s32.totalorder %v752, %v804
  %vm829 = vcmp.eq.s32.totalorder %v752, %v807
  %vm830 = vcmp.eq.s32.totalorder %v752, %v810
  %vm831 = vcmp.eq.s32.totalorder %v752, %v813
  %vm832 = vcmp.eq.s32.totalorder %v752, %v816
  %s833 = scalar_lea.vmem [#allocation4], %s15
  %v834 = vld [vmem:[%s833] sm:$0xff]
  %v835 = vld [vmem:[%s833 + $0x8] sm:$0xff]
  %v836 = vld [vmem:[%s833 + $0x10] sm:$0xff]
  %v837 = vld [vmem:[%s833 + $0x18] sm:$0xff]
  %v838 = vld [vmem:[%s833 + $0x20] sm:$0xff]
  %v839 = vld [vmem:[%s833 + $0x28] sm:$0xff]
  %v840 = vld [vmem:[%s833 + $0x30] sm:$0xff]
  %v841 = vld [vmem:[%s833 + $0x38] sm:$0xff]
  %v842 = vld [vmem:[%s833 + $0x40] sm:$0xff]
  %v843 = vld [vmem:[%s833 + $0x48] sm:$0xff]
  %v844 = vld [vmem:[%s833 + $0x50] sm:$0xff]
  %v845 = vld [vmem:[%s833 + $0x58] sm:$0xff]
  %v846 = vld [vmem:[%s833 + $0x60] sm:$0xff]
  %v847 = vld [vmem:[%s833 + $0x68] sm:$0xff]
  %v848 = vld [vmem:[%s833 + $0x70] sm:$0xff]
  %v849 = vld [vmem:[%s833 + $0x78] sm:$0xff]
  %v850 = vsel %vm817, %v331, 0.0
  %v851 = vsel %vm818, %v334, 0.0
  %v852 = vsel %vm819, %v339, 0.0
  %v853 = vsel %vm820, %v342, 0.0
  %v854 = vsel %vm821, %v347, 0.0
  %v855 = vsel %vm822, %v350, 0.0
  %v856 = vsel %vm823, %v355, 0.0
  %v857 = vsel %vm824, %v358, 0.0
  %v858 = vsel %vm825, %v363, 0.0
  %v859 = vsel %vm826, %v366, 0.0
  %v860 = vsel %vm827, %v371, 0.0
  %v861 = vsel %vm828, %v374, 0.0
  %v862 = vsel %vm829, %v379, 0.0
  %v863 = vsel %vm830, %v382, 0.0
  %v864 = vsel %vm831, %v387, 0.0
  %v865 = vsel %vm832, %v390, 0.0
  %866 = vadd.xlane.f32.xlu0 %v850
  %v867 = vpop.xlane.xlu0 %866
  %868 = vadd.xlane.f32.xlu0 %v851
  %v869 = vpop.xlane.xlu0 %868
  %870 = vadd.xlane.f32.xlu0 %v852
  %v871 = vpop.xlane.xlu0 %870
  %872 = vadd.xlane.f32.xlu0 %v853
  %v873 = vpop.xlane.xlu0 %872
  %874 = vadd.xlane.f32.xlu0 %v854
  %v875 = vpop.xlane.xlu0 %874
  %876 = vadd.xlane.f32.xlu0 %v855
  %v877 = vpop.xlane.xlu0 %876
  %878 = vadd.xlane.f32.xlu0 %v856
  %v879 = vpop.xlane.xlu0 %878
  %880 = vadd.xlane.f32.xlu0 %v857
  %v881 = vpop.xlane.xlu0 %880
  %882 = vadd.xlane.f32.xlu0 %v858
  %v883 = vpop.xlane.xlu0 %882
  %884 = vadd.xlane.f32.xlu0 %v859
  %v885 = vpop.xlane.xlu0 %884
  %886 = vadd.xlane.f32.xlu0 %v860
  %v887 = vpop.xlane.xlu0 %886
  %888 = vadd.xlane.f32.xlu0 %v861
  %v889 = vpop.xlane.xlu0 %888
  %890 = vadd.xlane.f32.xlu0 %v862
  %v891 = vpop.xlane.xlu0 %890
  %892 = vadd.xlane.f32.xlu0 %v863
  %v893 = vpop.xlane.xlu0 %892
  %894 = vadd.xlane.f32.xlu0 %v864
  %v895 = vpop.xlane.xlu0 %894
  %896 = vadd.xlane.f32.xlu0 %v865
  %v897 = vpop.xlane.xlu0 %896
  %v898 = vadd.f32 %v834, %v867
  %v899 = vadd.f32 %v835, %v869
  %v900 = vadd.f32 %v836, %v871
  %v901 = vadd.f32 %v837, %v873
  %v902 = vadd.f32 %v838, %v875
  %v903 = vadd.f32 %v839, %v877
  %v904 = vadd.f32 %v840, %v879
  %v905 = vadd.f32 %v841, %v881
  %v906 = vadd.f32 %v842, %v883
  %v907 = vadd.f32 %v843, %v885
  %v908 = vadd.f32 %v844, %v887
  %v909 = vadd.f32 %v845, %v889
  %v910 = vadd.f32 %v846, %v891
  %v911 = vadd.f32 %v847, %v893
  %v912 = vadd.f32 %v848, %v895
  %v913 = vadd.f32 %v849, %v897
  %914 = vst.msk [vmem:[%s833] sm:$0xff] %vm715, %v898
  %915 = vst.msk [vmem:[%s833 + $0x8] sm:$0xff] %vm715, %v899
  %916 = vst.msk [vmem:[%s833 + $0x10] sm:$0xff] %vm715, %v900
  %917 = vst.msk [vmem:[%s833 + $0x18] sm:$0xff] %vm715, %v901
  %918 = vst.msk [vmem:[%s833 + $0x20] sm:$0xff] %vm715, %v902
  %919 = vst.msk [vmem:[%s833 + $0x28] sm:$0xff] %vm715, %v903
  %920 = vst.msk [vmem:[%s833 + $0x30] sm:$0xff] %vm715, %v904
  %921 = vst.msk [vmem:[%s833 + $0x38] sm:$0xff] %vm715, %v905
  %922 = vst.msk [vmem:[%s833 + $0x40] sm:$0xff] %vm715, %v906
  %923 = vst.msk [vmem:[%s833 + $0x48] sm:$0xff] %vm715, %v907
  %924 = vst.msk [vmem:[%s833 + $0x50] sm:$0xff] %vm715, %v908
  %925 = vst.msk [vmem:[%s833 + $0x58] sm:$0xff] %vm715, %v909
  %926 = vst.msk [vmem:[%s833 + $0x60] sm:$0xff] %vm715, %v910
  %927 = vst.msk [vmem:[%s833 + $0x68] sm:$0xff] %vm715, %v911
  %928 = vst.msk [vmem:[%s833 + $0x70] sm:$0xff] %vm715, %v912
  %929 = vst.msk [vmem:[%s833 + $0x78] sm:$0xff] %vm715, %v913
  %v930 = vld [vmem:[%s393] sm:$0xff]
  %v931 = vld [vmem:[%s393 + $0x8] sm:$0xff]
  %v932 = vld [vmem:[%s393 + $0x10] sm:$0xff]
  %v933 = vld [vmem:[%s393 + $0x18] sm:$0xff]
  %v934 = vld [vmem:[%s393 + $0x20] sm:$0xff]
  %v935 = vld [vmem:[%s393 + $0x28] sm:$0xff]
  %v936 = vld [vmem:[%s393 + $0x30] sm:$0xff]
  %v937 = vld [vmem:[%s393 + $0x38] sm:$0xff]
  %v938 = vld [vmem:[%s393 + $0x40] sm:$0xff]
  %v939 = vld [vmem:[%s393 + $0x48] sm:$0xff]
  %v940 = vld [vmem:[%s393 + $0x50] sm:$0xff]
  %v941 = vld [vmem:[%s393 + $0x58] sm:$0xff]
  %v942 = vld [vmem:[%s393 + $0x60] sm:$0xff]
  %v943 = vld [vmem:[%s393 + $0x68] sm:$0xff]
  %v944 = vld [vmem:[%s393 + $0x70] sm:$0xff]
  %v945 = vld [vmem:[%s393 + $0x78] sm:$0xff]
  %v946 = vld [vmem:[%s458] sm:$0xff]
  %v947 = vld [vmem:[%s458 + $0x8] sm:$0xff]
  %v948 = vld [vmem:[%s458 + $0x10] sm:$0xff]
  %v949 = vld [vmem:[%s458 + $0x18] sm:$0xff]
  %v950 = vld [vmem:[%s458 + $0x20] sm:$0xff]
  %v951 = vld [vmem:[%s458 + $0x28] sm:$0xff]
  %v952 = vld [vmem:[%s458 + $0x30] sm:$0xff]
  %v953 = vld [vmem:[%s458 + $0x38] sm:$0xff]
  %v954 = vld [vmem:[%s458 + $0x40] sm:$0xff]
  %v955 = vld [vmem:[%s458 + $0x48] sm:$0xff]
  %v956 = vld [vmem:[%s458 + $0x50] sm:$0xff]
  %v957 = vld [vmem:[%s458 + $0x58] sm:$0xff]
  %v958 = vld [vmem:[%s458 + $0x60] sm:$0xff]
  %v959 = vld [vmem:[%s458 + $0x68] sm:$0xff]
  %v960 = vld [vmem:[%s458 + $0x70] sm:$0xff]
  %v961 = vld [vmem:[%s458 + $0x78] sm:$0xff]
  %v962 = vlog2.pop %v946
  %v963 = vmul.f32 %v962, 0.6931472
  %v964 = vlog2.pop %v947
  %v965 = vmul.f32 %v964, 0.6931472
  %v966 = vlog2.pop %v948
  %v967 = vmul.f32 %v966, 0.6931472
  %v968 = vlog2.pop %v949
  %v969 = vmul.f32 %v968, 0.6931472
  %v970 = vlog2.pop %v950
  %v971 = vmul.f32 %v970, 0.6931472
  %v972 = vlog2.pop %v951
  %v973 = vmul.f32 %v972, 0.6931472
  %v974 = vlog2.pop %v952
  %v975 = vmul.f32 %v974, 0.6931472
  %v976 = vlog2.pop %v953
  %v977 = vmul.f32 %v976, 0.6931472
  %v978 = vlog2.pop %v954
  %v979 = vmul.f32 %v978, 0.6931472
  %v980 = vlog2.pop %v955
  %v981 = vmul.f32 %v980, 0.6931472
  %v982 = vlog2.pop %v956
  %v983 = vmul.f32 %v982, 0.6931472
  %v984 = vlog2.pop %v957
  %v985 = vmul.f32 %v984, 0.6931472
  %v986 = vlog2.pop %v958
  %v987 = vmul.f32 %v986, 0.6931472
  %v988 = vlog2.pop %v959
  %v989 = vmul.f32 %v988, 0.6931472
  %v990 = vlog2.pop %v960
  %v991 = vmul.f32 %v990, 0.6931472
  %v992 = vlog2.pop %v961
  %v993 = vmul.f32 %v992, 0.6931472
  %v994 = vadd.f32 %v930, %v963
  %v995 = vadd.f32 %v931, %v965
  %v996 = vadd.f32 %v932, %v967
  %v997 = vadd.f32 %v933, %v969
  %v998 = vadd.f32 %v934, %v971
  %v999 = vadd.f32 %v935, %v973
  %v1000 = vadd.f32 %v936, %v975
  %v1001 = vadd.f32 %v937, %v977
  %v1002 = vadd.f32 %v938, %v979
  %v1003 = vadd.f32 %v939, %v981
  %v1004 = vadd.f32 %v940, %v983
  %v1005 = vadd.f32 %v941, %v985
  %v1006 = vadd.f32 %v942, %v987
  %v1007 = vadd.f32 %v943, %v989
  %v1008 = vadd.f32 %v944, %v991
  %v1009 = vadd.f32 %v945, %v993
  %v1010 = vld [vmem:[%s833] sm:$0xff]
  %v1011 = vld [vmem:[%s833 + $0x8] sm:$0xff]
  %v1012 = vld [vmem:[%s833 + $0x10] sm:$0xff]
  %v1013 = vld [vmem:[%s833 + $0x18] sm:$0xff]
  %v1014 = vld [vmem:[%s833 + $0x20] sm:$0xff]
  %v1015 = vld [vmem:[%s833 + $0x28] sm:$0xff]
  %v1016 = vld [vmem:[%s833 + $0x30] sm:$0xff]
  %v1017 = vld [vmem:[%s833 + $0x38] sm:$0xff]
  %v1018 = vld [vmem:[%s833 + $0x40] sm:$0xff]
  %v1019 = vld [vmem:[%s833 + $0x48] sm:$0xff]
  %v1020 = vld [vmem:[%s833 + $0x50] sm:$0xff]
  %v1021 = vld [vmem:[%s833 + $0x58] sm:$0xff]
  %v1022 = vld [vmem:[%s833 + $0x60] sm:$0xff]
  %v1023 = vld [vmem:[%s833 + $0x68] sm:$0xff]
  %v1024 = vld [vmem:[%s833 + $0x70] sm:$0xff]
  %v1025 = vld [vmem:[%s833 + $0x78] sm:$0xff]
  %v1026 = vsub.f32 %v994, %v1010
  %v1027 = vsub.f32 %v995, %v1011
  %v1028 = vsub.f32 %v996, %v1012
  %v1029 = vsub.f32 %v997, %v1013
  %v1030 = vsub.f32 %v998, %v1014
  %v1031 = vsub.f32 %v999, %v1015
  %v1032 = vsub.f32 %v1000, %v1016
  %v1033 = vsub.f32 %v1001, %v1017
  %v1034 = vsub.f32 %v1002, %v1018
  %v1035 = vsub.f32 %v1003, %v1019
  %v1036 = vsub.f32 %v1004, %v1020
  %v1037 = vsub.f32 %v1005, %v1021
  %v1038 = vsub.f32 %v1006, %v1022
  %v1039 = vsub.f32 %v1007, %v1023
  %v1040 = vsub.f32 %v1008, %v1024
  %v1041 = vsub.f32 %v1009, %v1025
  %v1042 = vlaneseq
  %v1043 = vshrl.u32 %v1042, 7
  %v1044 = vadd.s32 %v1043, 8
  %v1045 = vadd.s32 %v1043, 16
  %v1046 = vadd.s32 %v1043, 24
  %v1047 = vadd.s32 %v1043, 32
  %v1048 = vadd.s32 %v1043, 40
  %v1049 = vadd.s32 %v1043, 48
  %v1050 = vadd.s32 %v1043, 56
  %v1051 = vadd.s32 %v1043, 64
  %v1052 = vadd.s32 %v1043, 72
  %v1053 = vadd.s32 %v1043, 80
  %v1054 = vadd.s32 %v1043, 88
  %v1055 = vadd.s32 %v1043, 96
  %v1056 = vadd.s32 %v1043, 104
  %v1057 = vadd.s32 %v1043, 112
  %v1058 = vadd.s32 %v1043, 120
  %v1059 = vstv %s15
  %v1060 = vadd.s32 %v1059, %v1043
  %v1061 = vadd.s32 %v1059, %v1044
  %v1062 = vadd.s32 %v1059, %v1045
  %v1063 = vadd.s32 %v1059, %v1046
  %v1064 = vadd.s32 %v1059, %v1047
  %v1065 = vadd.s32 %v1059, %v1048
  %v1066 = vadd.s32 %v1059, %v1049
  %v1067 = vadd.s32 %v1059, %v1050
  %v1068 = vadd.s32 %v1059, %v1051
  %v1069 = vadd.s32 %v1059, %v1052
  %v1070 = vadd.s32 %v1059, %v1053
  %v1071 = vadd.s32 %v1059, %v1054
  %v1072 = vadd.s32 %v1059, %v1055
  %v1073 = vadd.s32 %v1059, %v1056
  %v1074 = vadd.s32 %v1059, %v1057
  %v1075 = vadd.s32 %v1059, %v1058
  %vm1076 = vcmp.lt.s32.totalorder %v1060, 96
  %vm1077 = vcmp.lt.s32.totalorder %v1061, 96
  %vm1078 = vcmp.lt.s32.totalorder %v1062, 96
  %vm1079 = vcmp.lt.s32.totalorder %v1063, 96
  %vm1080 = vcmp.lt.s32.totalorder %v1064, 96
  %vm1081 = vcmp.lt.s32.totalorder %v1065, 96
  %vm1082 = vcmp.lt.s32.totalorder %v1066, 96
  %vm1083 = vcmp.lt.s32.totalorder %v1067, 96
  %vm1084 = vcmp.lt.s32.totalorder %v1068, 96
  %vm1085 = vcmp.lt.s32.totalorder %v1069, 96
  %vm1086 = vcmp.lt.s32.totalorder %v1070, 96
  %vm1087 = vcmp.lt.s32.totalorder %v1071, 96
  %vm1088 = vcmp.lt.s32.totalorder %v1072, 96
  %vm1089 = vcmp.lt.s32.totalorder %v1073, 96
  %vm1090 = vcmp.lt.s32.totalorder %v1074, 96
  %vm1091 = vcmp.lt.s32.totalorder %v1075, 96
  %v1092 = vsel %vm1076, %v1026, 0.0
  %v1093 = vsel %vm1077, %v1027, 0.0
  %v1094 = vsel %vm1078, %v1028, 0.0
  %v1095 = vsel %vm1079, %v1029, 0.0
  %v1096 = vsel %vm1080, %v1030, 0.0
  %v1097 = vsel %vm1081, %v1031, 0.0
  %v1098 = vsel %vm1082, %v1032, 0.0
  %v1099 = vsel %vm1083, %v1033, 0.0
  %v1100 = vsel %vm1084, %v1034, 0.0
  %v1101 = vsel %vm1085, %v1035, 0.0
  %v1102 = vsel %vm1086, %v1036, 0.0
  %v1103 = vsel %vm1087, %v1037, 0.0
  %v1104 = vsel %vm1088, %v1038, 0.0
  %v1105 = vsel %vm1089, %v1039, 0.0
  %v1106 = vsel %vm1090, %v1040, 0.0
  %v1107 = vsel %vm1091, %v1041, 0.0
  %1108 = vst.msk [vmem:[%s3] sm:$0xff] %vm715, %v1092
  %1109 = vst.msk [vmem:[%s3 + $0x8] sm:$0xff] %vm715, %v1093
  %1110 = vst.msk [vmem:[%s3 + $0x10] sm:$0xff] %vm715, %v1094
  %1111 = vst.msk [vmem:[%s3 + $0x18] sm:$0xff] %vm715, %v1095
  %1112 = vst.msk [vmem:[%s3 + $0x20] sm:$0xff] %vm715, %v1096
  %1113 = vst.msk [vmem:[%s3 + $0x28] sm:$0xff] %vm715, %v1097
  %1114 = vst.msk [vmem:[%s3 + $0x30] sm:$0xff] %vm715, %v1098
  %1115 = vst.msk [vmem:[%s3 + $0x38] sm:$0xff] %vm715, %v1099
  %1116 = vst.msk [vmem:[%s3 + $0x40] sm:$0xff] %vm715, %v1100
  %1117 = vst.msk [vmem:[%s3 + $0x48] sm:$0xff] %vm715, %v1101
  %1118 = vst.msk [vmem:[%s3 + $0x50] sm:$0xff] %vm715, %v1102
  %1119 = vst.msk [vmem:[%s3 + $0x58] sm:$0xff] %vm715, %v1103
  %1120 = vst.msk [vmem:[%s3 + $0x60] sm:$0xff] %vm715, %v1104
  %1121 = vst.msk [vmem:[%s3 + $0x68] sm:$0xff] %vm715, %v1105
  %1122 = vst.msk [vmem:[%s3 + $0x70] sm:$0xff] %vm715, %v1106
  %1123 = vst.msk [vmem:[%s3 + $0x78] sm:$0xff] %vm715, %v1107
  // Predicated region
  $region18: #{gpt_forward.13} parent=0 // pred_check
    _
  $region19: #{gpt_forward.13} parent=0 // pred_check_branch
    %1125 = sbr.rel (0) target = $region21
  $region20: #{gpt_forward.13} parent=0 // pred_region
    _
  $region21: #{gpt_forward.13} parent=0 // pred_fallthru
    _
  // Predicated region
  $region22: #{gpt_forward.13} parent=0 // pred_check
    _
  $region23: #{gpt_forward.13} parent=0 // pred_check_branch
    %1127 = sbr.rel (0) target = $region25
  $region24: #{gpt_forward.13} parent=0 // pred_region
    _
  $region25: #{gpt_forward.13} parent=0 // pred_fallthru
    _

// kernel: gpt_forward.9
$region0: #{gpt_forward.9}
  #allocation0 [shape = 'u32[]', space=smem, size = 0x4, offset = 0x4, fixed_abs, tag = 'smem constant byte address 0x4 - core index']
  #allocation1 [shape = 'u32[144,128]{1,0:T(1,128)}', space=vmem, size = 0x12000, scoped, tag = 'internal scratch']
  %s0 = inlined_call_operand.vmem [shape: bf16[128,256], index: 0, kind: input, shape index: {}]
  %s1 = inlined_call_operand.vmem [shape: bf16[128,256], index: 1, kind: input, shape index: {}]
  %s2 = inlined_call_operand.vmem [shape: bf16[256,256], index: 2, kind: input, shape index: {}]
  %s3 = inlined_call_operand.vmem [shape: bf16[256,1024], index: 3, kind: input, shape index: {}]
  %s4 = inlined_call_operand.vmem [shape: bf16[1024,256], index: 4, kind: input, shape index: {}]
  %s5 = inlined_call_operand.vmem [shape: bf16[128,256], index: 5, kind: output, shape index: {}]
  %s6 = sld [smem:[#allocation0]]
  $region30: #{gpt_forward.9} parent=0
    _
  %s8 = ssub.s32 1, %s6
  %s9 = scalar_select 0, %s8, %s6
  // Predicated region
  $region2: #{gpt_forward.9} parent=0 // pred_check
    _
  $region3: #{gpt_forward.9} parent=0 // pred_check_branch
    %11 = sbr.rel (0) target = $region5
  $region4: #{gpt_forward.9} parent=0 // pred_region
    _
  $region5: #{gpt_forward.9} parent=0 // pred_fallthru
    _
  // Predicated region
  $region6: #{gpt_forward.9} parent=0 // pred_check
    _
  $region7: #{gpt_forward.9} parent=0 // pred_check_branch
    %13 = sbr.rel (0) target = $region9
  $region8: #{gpt_forward.9} parent=0 // pred_region
    _
  $region9: #{gpt_forward.9} parent=0 // pred_fallthru
    _
  // Predicated region
  $region10: #{gpt_forward.9} parent=0 // pred_check
    _
  $region11: #{gpt_forward.9} parent=0 // pred_check_branch
    %15 = sbr.rel (0) target = $region13
  $region12: #{gpt_forward.9} parent=0 // pred_region
    _
  $region13: #{gpt_forward.9} parent=0 // pred_fallthru
    _
  // Predicated region
  $region14: #{gpt_forward.9} parent=0 // pred_check
    _
  $region15: #{gpt_forward.9} parent=0 // pred_check_branch
    %17 = sbr.rel (0) target = $region17
  $region16: #{gpt_forward.9} parent=0 // pred_region
    _
  $region17: #{gpt_forward.9} parent=0 // pred_fallthru
    _
  // Predicated region
  $region18: #{gpt_forward.9} parent=0 // pred_check
    _
  $region19: #{gpt_forward.9} parent=0 // pred_check_branch
    %19 = sbr.rel (0) target = $region21
  $region20: #{gpt_forward.9} parent=0 // pred_region
    _
  $region21: #{gpt_forward.9} parent=0 // pred_fallthru
    _
  %v21 = vld [vmem:[%s1] sm:$0xff]
  %v22 = vld [vmem:[%s1 + $0x8] sm:$0xff]
  %v23 = vld [vmem:[%s1 + $0x10] sm:$0xff]
  %v24 = vld [vmem:[%s1 + $0x18] sm:$0xff]
  %v25 = vld [vmem:[%s1 + $0x20] sm:$0xff]
  %v26 = vld [vmem:[%s1 + $0x28] sm:$0xff]
  %v27 = vld [vmem:[%s1 + $0x30] sm:$0xff]
  %v28 = vld [vmem:[%s1 + $0x38] sm:$0xff]
  %v29 = vld [vmem:[%s1 + $0x40] sm:$0xff]
  %v30 = vld [vmem:[%s1 + $0x48] sm:$0xff]
  %v31 = vld [vmem:[%s1 + $0x50] sm:$0xff]
  %v32 = vld [vmem:[%s1 + $0x58] sm:$0xff]
  %v33 = vld [vmem:[%s1 + $0x60] sm:$0xff]
  %v34 = vld [vmem:[%s1 + $0x68] sm:$0xff]
  %v35 = vld [vmem:[%s1 + $0x70] sm:$0xff]
  %v36 = vld [vmem:[%s1 + $0x78] sm:$0xff]
  %v37 = vld [vmem:[%s0] sm:$0xff]
  %v38 = vld [vmem:[%s0 + $0x8] sm:$0xff]
  %v39 = vld [vmem:[%s0 + $0x10] sm:$0xff]
  %v40 = vld [vmem:[%s0 + $0x18] sm:$0xff]
  %v41 = vld [vmem:[%s0 + $0x20] sm:$0xff]
  %v42 = vld [vmem:[%s0 + $0x28] sm:$0xff]
  %v43 = vld [vmem:[%s0 + $0x30] sm:$0xff]
  %v44 = vld [vmem:[%s0 + $0x38] sm:$0xff]
  %v45 = vld [vmem:[%s0 + $0x40] sm:$0xff]
  %v46 = vld [vmem:[%s0 + $0x48] sm:$0xff]
  %v47 = vld [vmem:[%s0 + $0x50] sm:$0xff]
  %v48 = vld [vmem:[%s0 + $0x58] sm:$0xff]
  %v49 = vld [vmem:[%s0 + $0x60] sm:$0xff]
  %v50 = vld [vmem:[%s0 + $0x68] sm:$0xff]
  %v51 = vld [vmem:[%s0 + $0x70] sm:$0xff]
  %v52 = vld [vmem:[%s0 + $0x78] sm:$0xff]
  %v53 = vld [vmem:[%s2] sm:$0xff]
  %v54 = vld [vmem:[%s2 + $0x8] sm:$0xff]
  %v55 = vld [vmem:[%s2 + $0x10] sm:$0xff]
  %v56 = vld [vmem:[%s2 + $0x18] sm:$0xff]
  %v57 = vld [vmem:[%s2 + $0x20] sm:$0xff]
  %v58 = vld [vmem:[%s2 + $0x28] sm:$0xff]
  %v59 = vld [vmem:[%s2 + $0x30] sm:$0xff]
  %v60 = vld [vmem:[%s2 + $0x38] sm:$0xff]
  %v61 = vld [vmem:[%s2 + $0x40] sm:$0xff]
  %v62 = vld [vmem:[%s2 + $0x48] sm:$0xff]
  %v63 = vld [vmem:[%s2 + $0x50] sm:$0xff]
  %v64 = vld [vmem:[%s2 + $0x58] sm:$0xff]
  %v65 = vld [vmem:[%s2 + $0x60] sm:$0xff]
  %v66 = vld [vmem:[%s2 + $0x68] sm:$0xff]
  %v67 = vld [vmem:[%s2 + $0x70] sm:$0xff]
  %v68 = vld [vmem:[%s2 + $0x78] sm:$0xff]
  %v69 = vld [vmem:[%s2 + $0x80] sm:$0xff]
  %v70 = vld [vmem:[%s2 + $0x88] sm:$0xff]
  %v71 = vld [vmem:[%s2 + $0x90] sm:$0xff]
  %v72 = vld [vmem:[%s2 + $0x98] sm:$0xff]
  %v73 = vld [vmem:[%s2 + $0xa0] sm:$0xff]
  %v74 = vld [vmem:[%s2 + $0xa8] sm:$0xff]
  %v75 = vld [vmem:[%s2 + $0xb0] sm:$0xff]
  %v76 = vld [vmem:[%s2 + $0xb8] sm:$0xff]
  %v77 = vld [vmem:[%s2 + $0xc0] sm:$0xff]
  %v78 = vld [vmem:[%s2 + $0xc8] sm:$0xff]
  %v79 = vld [vmem:[%s2 + $0xd0] sm:$0xff]
  %v80 = vld [vmem:[%s2 + $0xd8] sm:$0xff]
  %v81 = vld [vmem:[%s2 + $0xe0] sm:$0xff]
  %v82 = vld [vmem:[%s2 + $0xe8] sm:$0xff]
  %v83 = vld [vmem:[%s2 + $0xf0] sm:$0xff]
  %v84 = vld [vmem:[%s2 + $0xf8] sm:$0xff]
  %v101 = vunpack.c.l.b16 %v37
  %v102 = vunpack.c.h.b16 %v37
  %v103 = vunpack.c.l.b16 %v38
  %v104 = vunpack.c.h.b16 %v38
  %v105 = vunpack.c.l.b16 %v39
  %v106 = vunpack.c.h.b16 %v39
  %v107 = vunpack.c.l.b16 %v40
  %v108 = vunpack.c.h.b16 %v40
  %v109 = vunpack.c.l.b16 %v41
  %v110 = vunpack.c.h.b16 %v41
  %v111 = vunpack.c.l.b16 %v42
  %v112 = vunpack.c.h.b16 %v42
  %v113 = vunpack.c.l.b16 %v43
  %v114 = vunpack.c.h.b16 %v43
  %v115 = vunpack.c.l.b16 %v44
  %v116 = vunpack.c.h.b16 %v44
  %v117 = vunpack.c.l.b16 %v45
  %v118 = vunpack.c.h.b16 %v45
  %v119 = vunpack.c.l.b16 %v46
  %v120 = vunpack.c.h.b16 %v46
  %v121 = vunpack.c.l.b16 %v47
  %v122 = vunpack.c.h.b16 %v47
  %v123 = vunpack.c.l.b16 %v48
  %v124 = vunpack.c.h.b16 %v48
  %v125 = vunpack.c.l.b16 %v49
  %v126 = vunpack.c.h.b16 %v49
  %v127 = vunpack.c.l.b16 %v50
  %v128 = vunpack.c.h.b16 %v50
  %v129 = vunpack.c.l.b16 %v51
  %v130 = vunpack.c.h.b16 %v51
  %v131 = vunpack.c.l.b16 %v52
  %v132 = vunpack.c.h.b16 %v52
  %v133 = vpack.c.b16 %v103, %v101
  %v134 = vpack.c.b16 %v104, %v102
  %v135 = vpack.c.b16 %v107, %v105
  %v136 = vpack.c.b16 %v108, %v106
  %v137 = vpack.c.b16 %v111, %v109
  %v138 = vpack.c.b16 %v112, %v110
  %v139 = vpack.c.b16 %v115, %v113
  %v140 = vpack.c.b16 %v116, %v114
  %v141 = vpack.c.b16 %v119, %v117
  %v142 = vpack.c.b16 %v120, %v118
  %v143 = vpack.c.b16 %v123, %v121
  %v144 = vpack.c.b16 %v124, %v122
  %v145 = vpack.c.b16 %v127, %v125
  %v146 = vpack.c.b16 %v128, %v126
  %v147 = vpack.c.b16 %v131, %v129
  %v148 = vpack.c.b16 %v132, %v130
  %v197 = vunpack.c.l.b16 %v53
  %v198 = vunpack.c.h.b16 %v53
  %v199 = vunpack.c.l.b16 %v54
  %v200 = vunpack.c.h.b16 %v54
  %v201 = vunpack.c.l.b16 %v55
  %v202 = vunpack.c.h.b16 %v55
  %v203 = vunpack.c.l.b16 %v56
  %v204 = vunpack.c.h.b16 %v56
  %v205 = vunpack.c.l.b16 %v57
  %v206 = vunpack.c.h.b16 %v57
  %v207 = vunpack.c.l.b16 %v58
  %v208 = vunpack.c.h.b16 %v58
  %v209 = vunpack.c.l.b16 %v59
  %v210 = vunpack.c.h.b16 %v59
  %v211 = vunpack.c.l.b16 %v60
  %v212 = vunpack.c.h.b16 %v60
  %v213 = vunpack.c.l.b16 %v61
  %v214 = vunpack.c.h.b16 %v61
  %v215 = vunpack.c.l.b16 %v62
  %v216 = vunpack.c.h.b16 %v62
  %v217 = vunpack.c.l.b16 %v63
  %v218 = vunpack.c.h.b16 %v63
  %v219 = vunpack.c.l.b16 %v64
  %v220 = vunpack.c.h.b16 %v64
  %v221 = vunpack.c.l.b16 %v65
  %v222 = vunpack.c.h.b16 %v65
  %v223 = vunpack.c.l.b16 %v66
  %v224 = vunpack.c.h.b16 %v66
  %v225 = vunpack.c.l.b16 %v67
  %v226 = vunpack.c.h.b16 %v67
  %v227 = vunpack.c.l.b16 %v68
  %v228 = vunpack.c.h.b16 %v68
  %v229 = vunpack.c.l.b16 %v69
  %v230 = vunpack.c.h.b16 %v69
  %v231 = vunpack.c.l.b16 %v70
  %v232 = vunpack.c.h.b16 %v70
  %v233 = vunpack.c.l.b16 %v71
  %v234 = vunpack.c.h.b16 %v71
  %v235 = vunpack.c.l.b16 %v72
  %v236 = vunpack.c.h.b16 %v72
  %v237 = vunpack.c.l.b16 %v73
  %v238 = vunpack.c.h.b16 %v73
  %v239 = vunpack.c.l.b16 %v74
  %v240 = vunpack.c.h.b16 %v74
  %v241 = vunpack.c.l.b16 %v75
  %v242 = vunpack.c.h.b16 %v75
  %v243 = vunpack.c.l.b16 %v76
  %v244 = vunpack.c.h.b16 %v76
  %v245 = vunpack.c.l.b16 %v77
  %v246 = vunpack.c.h.b16 %v77
  %v247 = vunpack.c.l.b16 %v78
  %v248 = vunpack.c.h.b16 %v78
  %v249 = vunpack.c.l.b16 %v79
  %v250 = vunpack.c.h.b16 %v79
  %v251 = vunpack.c.l.b16 %v80
  %v252 = vunpack.c.h.b16 %v80
  %v253 = vunpack.c.l.b16 %v81
  %v254 = vunpack.c.h.b16 %v81
  %v255 = vunpack.c.l.b16 %v82
  %v256 = vunpack.c.h.b16 %v82
  %v257 = vunpack.c.l.b16 %v83
  %v258 = vunpack.c.h.b16 %v83
  %v259 = vunpack.c.l.b16 %v84
  %v260 = vunpack.c.h.b16 %v84
  %v261 = vpack.c.b16 %v199, %v197
  %v262 = vpack.c.b16 %v200, %v198
  %v263 = vpack.c.b16 %v203, %v201
  %v264 = vpack.c.b16 %v204, %v202
  %v265 = vpack.c.b16 %v207, %v205
  %v266 = vpack.c.b16 %v208, %v206
  %v267 = vpack.c.b16 %v211, %v209
  %v268 = vpack.c.b16 %v212, %v210
  %v269 = vpack.c.b16 %v215, %v213
  %v270 = vpack.c.b16 %v216, %v214
  %v271 = vpack.c.b16 %v219, %v217
  %v272 = vpack.c.b16 %v220, %v218
  %v273 = vpack.c.b16 %v223, %v221
  %v274 = vpack.c.b16 %v224, %v222
  %v275 = vpack.c.b16 %v227, %v225
  %v276 = vpack.c.b16 %v228, %v226
  %v277 = vpack.c.b16 %v231, %v229
  %v278 = vpack.c.b16 %v232, %v230
  %v279 = vpack.c.b16 %v235, %v233
  %v280 = vpack.c.b16 %v236, %v234
  %v281 = vpack.c.b16 %v239, %v237
  %v282 = vpack.c.b16 %v240, %v238
  %v283 = vpack.c.b16 %v243, %v241
  %v284 = vpack.c.b16 %v244, %v242
  %v285 = vpack.c.b16 %v247, %v245
  %v286 = vpack.c.b16 %v248, %v246
  %v287 = vpack.c.b16 %v251, %v249
  %v288 = vpack.c.b16 %v252, %v250
  %v289 = vpack.c.b16 %v255, %v253
  %v290 = vpack.c.b16 %v256, %v254
  %v291 = vpack.c.b16 %v259, %v257
  %v292 = vpack.c.b16 %v260, %v258
  %325 = vmatprep.subr.bf16.mxu0 %v262
  %326 = vmatpush1.bf16.msra.mxu0 %v261
  %327 = vmatprep.subr.bf16.mxu0 %v264
  %328 = vmatpush1.bf16.msra.mxu0 %v263
  %329 = vmatprep.subr.bf16.mxu0 %v266
  %330 = vmatpush1.bf16.msra.mxu0 %v265
  %331 = vmatprep.subr.bf16.mxu0 %v268
  %332 = vmatpush1.bf16.msra.mxu0 %v267
  %333 = vmatprep.subr.bf16.mxu0 %v270
  %334 = vmatpush1.bf16.msra.mxu0 %v269
  %335 = vmatprep.subr.bf16.mxu0 %v272
  %336 = vmatpush1.bf16.msra.mxu0 %v271
  %337 = vmatprep.subr.bf16.mxu0 %v274
  %338 = vmatpush1.bf16.msra.mxu0 %v273
  %339 = vmatprep.subr.bf16.mxu0 %v276
  %340 = vmatpush1.bf16.msra.mxu0 %v275
  %341 = vmatprep.subr.bf16.mxu0 %v278
  %342 = vmatpush1.bf16.msra.mxu0 %v277
  %343 = vmatprep.subr.bf16.mxu0 %v280
  %344 = vmatpush1.bf16.msra.mxu0 %v279
  %345 = vmatprep.subr.bf16.mxu0 %v282
  %346 = vmatpush1.bf16.msra.mxu0 %v281
  %347 = vmatprep.subr.bf16.mxu0 %v284
  %348 = vmatpush1.bf16.msra.mxu0 %v283
  %349 = vmatprep.subr.bf16.mxu0 %v286
  %350 = vmatpush1.bf16.msra.mxu0 %v285
  %351 = vmatprep.subr.bf16.mxu0 %v288
  %352 = vmatpush1.bf16.msra.mxu0 %v287
  %353 = vmatprep.subr.bf16.mxu0 %v290
  %354 = vmatpush1.bf16.msra.mxu0 %v289
  %355 = vmatprep.subr.bf16.mxu0 %v292
  %356 = vmatpush1.bf16.msra.mxu0 %v291
  %357 = vmatprep.mubr.bf16.mxu0 %v134
  %358 = vmatmul.mubr.bf16.gmra.mrb[0].mxu0 %v133
  %v359 = vpop.f32.mrb[0].mxu0
  %v360 = vadd.f32 0.0, %v359
  %v361 = vpop.f32.mrb[0].mxu0
  %v362 = vadd.f32 0.0, %v361
  %v363 = vpop.f32.mrb[0].mxu0
  %v364 = vadd.f32 0.0, %v363
  %v365 = vpop.f32.mrb[0].mxu0
  %v366 = vadd.f32 0.0, %v365
  %367 = vmatprep.mubr.bf16.mxu0 %v136
  %368 = vmatmul.mubr.bf16.gmra.mrb[0].mxu0 %v135
  %v369 = vpop.f32.mrb[0].mxu0
  %v370 = vadd.f32 0.0, %v369
  %v371 = vpop.f32.mrb[0].mxu0
  %v372 = vadd.f32 0.0, %v371
  %v373 = vpop.f32.mrb[0].mxu0
  %v374 = vadd.f32 0.0, %v373
  %v375 = vpop.f32.mrb[0].mxu0
  %v376 = vadd.f32 0.0, %v375
  %377 = vmatprep.mubr.bf16.mxu0 %v138
  %378 = vmatmul.mubr.bf16.gmra.mrb[0].mxu0 %v137
  %v379 = vpop.f32.mrb[0].mxu0
  %v380 = vadd.f32 0.0, %v379
  %v381 = vpop.f32.mrb[0].mxu0
  %v382 = vadd.f32 0.0, %v381
  %v383 = vpop.f32.mrb[0].mxu0
  %v384 = vadd.f32 0.0, %v383
  %v385 = vpop.f32.mrb[0].mxu0
  %v386 = vadd.f32 0.0, %v385
  %387 = vmatprep.mubr.bf16.mxu0 %v140
  %388 = vmatmul.mubr.bf16.gmra.mrb[0].mxu0 %v139
  %v389 = vpop.f32.mrb[0].mxu0
  %v390 = vadd.f32 0.0, %v389
  %v391 = vpop.f32.mrb[0].mxu0
  %v392 = vadd.f32 0.0, %v391
  %v393 = vpop.f32.mrb[0].mxu0
  %v394 = vadd.f32 0.0, %v393
  %v395 = vpop.f32.mrb[0].mxu0
  %v396 = vadd.f32 0.0, %v395
  %397 = vmatprep.mubr.bf16.mxu0 %v142
  %398 = vmatmul.mubr.bf16.gmra.mrb[0].mxu0 %v141
  %v399 = vpop.f32.mrb[0].mxu0
  %v400 = vadd.f32 0.0, %v399
  %v401 = vpop.f32.mrb[0].mxu0
  %v402 = vadd.f32 0.0, %v401
  %v403 = vpop.f32.mrb[0].mxu0
  %v404 = vadd.f32 0.0, %v403
  %v405 = vpop.f32.mrb[0].mxu0
  %v406 = vadd.f32 0.0, %v405
  %407 = vmatprep.mubr.bf16.mxu0 %v144
  %408 = vmatmul.mubr.bf16.gmra.mrb[0].mxu0 %v143
  %v409 = vpop.f32.mrb[0].mxu0
  %v410 = vadd.f32 0.0, %v409
  %v411 = vpop.f32.mrb[0].mxu0
  %v412 = vadd.f32 0.0, %v411
  %v413 = vpop.f32.mrb[0].mxu0
  %v414 = vadd.f32 0.0, %v413
  %v415 = vpop.f32.mrb[0].mxu0
  %v416 = vadd.f32 0.0, %v415
  %417 = vmatprep.mubr.bf16.mxu0 %v146
  %418 = vmatmul.mubr.bf16.gmra.mrb[0].mxu0 %v145
  %v419 = vpop.f32.mrb[0].mxu0
  %v420 = vadd.f32 0.0, %v419
  %v421 = vpop.f32.mrb[0].mxu0
  %v422 = vadd.f32 0.0, %v421
  %v423 = vpop.f32.mrb[0].mxu0
  %v424 = vadd.f32 0.0, %v423
  %v425 = vpop.f32.mrb[0].mxu0
  %v426 = vadd.f32 0.0, %v425
  %427 = vmatprep.mubr.bf16.mxu0 %v148
  %428 = vmatmul.mubr.bf16.gmra.mrb[0].mxu0 %v147
  %v429 = vpop.f32.mrb[0].mxu0
  %v430 = vadd.f32 0.0, %v429
  %v431 = vpop.f32.mrb[0].mxu0
  %v432 = vadd.f32 0.0, %v431
  %v433 = vpop.f32.mrb[0].mxu0
  %v434 = vadd.f32 0.0, %v433
  %v435 = vpop.f32.mrb[0].mxu0
  %v436 = vadd.f32 0.0, %v435
  %437 = vdwg.mxu0
  %v438 = vpack.c.bf16 %v364, %v360
  %v439 = vpack.c.bf16 %v366, %v362
  %v440 = vpack.c.bf16 %v374, %v370
  %v441 = vpack.c.bf16 %v376, %v372
  %v442 = vpack.c.bf16 %v384, %v380
  %v443 = vpack.c.bf16 %v386, %v382
  %v444 = vpack.c.bf16 %v394, %v390
  %v445 = vpack.c.bf16 %v396, %v392
  %v446 = vpack.c.bf16 %v404, %v400
  %v447 = vpack.c.bf16 %v406, %v402
  %v448 = vpack.c.bf16 %v414, %v410
  %v449 = vpack.c.bf16 %v416, %v412
  %v450 = vpack.c.bf16 %v424, %v420
  %v451 = vpack.c.bf16 %v426, %v422
  %v452 = vpack.c.bf16 %v434, %v430
  %v453 = vpack.c.bf16 %v436, %v432
  %v470 = vunpack.c.l.b16 %v438
  %v471 = vunpack.c.l.b16 %v439
  %v472 = vunpack.c.h.b16 %v438
  %v473 = vunpack.c.h.b16 %v439
  %v474 = vunpack.c.l.b16 %v440
  %v475 = vunpack.c.l.b16 %v441
  %v476 = vunpack.c.h.b16 %v440
  %v477 = vunpack.c.h.b16 %v441
  %v478 = vunpack.c.l.b16 %v442
  %v479 = vunpack.c.l.b16 %v443
  %v480 = vunpack.c.h.b16 %v442
  %v481 = vunpack.c.h.b16 %v443
  %v482 = vunpack.c.l.b16 %v444
  %v483 = vunpack.c.l.b16 %v445
  %v484 = vunpack.c.h.b16 %v444
  %v485 = vunpack.c.h.b16 %v445
  %v486 = vunpack.c.l.b16 %v446
  %v487 = vunpack.c.l.b16 %v447
  %v488 = vunpack.c.h.b16 %v446
  %v489 = vunpack.c.h.b16 %v447
  %v490 = vunpack.c.l.b16 %v448
  %v491 = vunpack.c.l.b16 %v449
  %v492 = vunpack.c.h.b16 %v448
  %v493 = vunpack.c.h.b16 %v449
  %v494 = vunpack.c.l.b16 %v450
  %v495 = vunpack.c.l.b16 %v451
  %v496 = vunpack.c.h.b16 %v450
  %v497 = vunpack.c.h.b16 %v451
  %v498 = vunpack.c.l.b16 %v452
  %v499 = vunpack.c.l.b16 %v453
  %v500 = vunpack.c.h.b16 %v452
  %v501 = vunpack.c.h.b16 %v453
  %v502 = vpack.c.b16 %v471, %v470
  %v503 = vpack.c.b16 %v473, %v472
  %v504 = vpack.c.b16 %v475, %v474
  %v505 = vpack.c.b16 %v477, %v476
  %v506 = vpack.c.b16 %v479, %v478
  %v507 = vpack.c.b16 %v481, %v480
  %v508 = vpack.c.b16 %v483, %v482
  %v509 = vpack.c.b16 %v485, %v484
  %v510 = vpack.c.b16 %v487, %v486
  %v511 = vpack.c.b16 %v489, %v488
  %v512 = vpack.c.b16 %v491, %v490
  %v513 = vpack.c.b16 %v493, %v492
  %v514 = vpack.c.b16 %v495, %v494
  %v515 = vpack.c.b16 %v497, %v496
  %v516 = vpack.c.b16 %v499, %v498
  %v517 = vpack.c.b16 %v501, %v500
  %v534 = vadd.bf16 %v21, %v502
  %v535 = vadd.bf16 %v22, %v503
  %v536 = vadd.bf16 %v23, %v504
  %v537 = vadd.bf16 %v24, %v505
  %v538 = vadd.bf16 %v25, %v506
  %v539 = vadd.bf16 %v26, %v507
  %v540 = vadd.bf16 %v27, %v508
  %v541 = vadd.bf16 %v28, %v509
  %v542 = vadd.bf16 %v29, %v510
  %v543 = vadd.bf16 %v30, %v511
  %v544 = vadd.bf16 %v31, %v512
  %v545 = vadd.bf16 %v32, %v513
  %v546 = vadd.bf16 %v33, %v514
  %v547 = vadd.bf16 %v34, %v515
  %v548 = vadd.bf16 %v35, %v516
  %v549 = vadd.bf16 %v36, %v517
  %v550 = vunpack.c.l.bf16 %v534
  %v551 = vunpack.c.h.bf16 %v534
  %v552 = vunpack.c.l.bf16 %v535
  %v553 = vunpack.c.h.bf16 %v535
  %v554 = vunpack.c.l.bf16 %v536
  %v555 = vunpack.c.h.bf16 %v536
  %v556 = vunpack.c.l.bf16 %v537
  %v557 = vunpack.c.h.bf16 %v537
  %v558 = vunpack.c.l.bf16 %v538
  %v559 = vunpack.c.h.bf16 %v538
  %v560 = vunpack.c.l.bf16 %v539
  %v561 = vunpack.c.h.bf16 %v539
  %v562 = vunpack.c.l.bf16 %v540
  %v563 = vunpack.c.h.bf16 %v540
  %v564 = vunpack.c.l.bf16 %v541
  %v565 = vunpack.c.h.bf16 %v541
  %v566 = vunpack.c.l.bf16 %v542
  %v567 = vunpack.c.h.bf16 %v542
  %v568 = vunpack.c.l.bf16 %v543
  %v569 = vunpack.c.h.bf16 %v543
  %v570 = vunpack.c.l.bf16 %v544
  %v571 = vunpack.c.h.bf16 %v544
  %v572 = vunpack.c.l.bf16 %v545
  %v573 = vunpack.c.h.bf16 %v545
  %v574 = vunpack.c.l.bf16 %v546
  %v575 = vunpack.c.h.bf16 %v546
  %v576 = vunpack.c.l.bf16 %v547
  %v577 = vunpack.c.h.bf16 %v547
  %v578 = vunpack.c.l.bf16 %v548
  %v579 = vunpack.c.h.bf16 %v548
  %v580 = vunpack.c.l.bf16 %v549
  %v581 = vunpack.c.h.bf16 %v549
  %v582 = vmul.f32 %v550, %v550
  %v583 = vmul.f32 %v551, %v551
  %v584 = vmul.f32 %v552, %v552
  %v585 = vmul.f32 %v553, %v553
  %v586 = vmul.f32 %v554, %v554
  %v587 = vmul.f32 %v555, %v555
  %v588 = vmul.f32 %v556, %v556
  %v589 = vmul.f32 %v557, %v557
  %v590 = vmul.f32 %v558, %v558
  %v591 = vmul.f32 %v559, %v559
  %v592 = vmul.f32 %v560, %v560
  %v593 = vmul.f32 %v561, %v561
  %v594 = vmul.f32 %v562, %v562
  %v595 = vmul.f32 %v563, %v563
  %v596 = vmul.f32 %v564, %v564
  %v597 = vmul.f32 %v565, %v565
  %v598 = vmul.f32 %v566, %v566
  %v599 = vmul.f32 %v567, %v567
  %v600 = vmul.f32 %v568, %v568
  %v601 = vmul.f32 %v569, %v569
  %v602 = vmul.f32 %v570, %v570
  %v603 = vmul.f32 %v571, %v571
  %v604 = vmul.f32 %v572, %v572
  %v605 = vmul.f32 %v573, %v573
  %v606 = vmul.f32 %v574, %v574
  %v607 = vmul.f32 %v575, %v575
  %v608 = vmul.f32 %v576, %v576
  %v609 = vmul.f32 %v577, %v577
  %v610 = vmul.f32 %v578, %v578
  %v611 = vmul.f32 %v579, %v579
  %v612 = vmul.f32 %v580, %v580
  %v613 = vmul.f32 %v581, %v581
  %v614 = vadd.f32 %v582, %v583
  %615 = vadd.xlane.f32.xlu0 %v614
  %v616 = vpop.xlane.xlu0 %615
  %v617 = vadd.f32 %v584, %v585
  %618 = vadd.xlane.f32.xlu0 %v617
  %v619 = vpop.xlane.xlu0 %618
  %v620 = vadd.f32 %v586, %v587
  %621 = vadd.xlane.f32.xlu0 %v620
  %v622 = vpop.xlane.xlu0 %621
  %v623 = vadd.f32 %v588, %v589
  %624 = vadd.xlane.f32.xlu0 %v623
  %v625 = vpop.xlane.xlu0 %624
  %v626 = vadd.f32 %v590, %v591
  %627 = vadd.xlane.f32.xlu0 %v626
  %v628 = vpop.xlane.xlu0 %627
  %v629 = vadd.f32 %v592, %v593
  %630 = vadd.xlane.f32.xlu0 %v629
  %v631 = vpop.xlane.xlu0 %630
  %v632 = vadd.f32 %v594, %v595
  %633 = vadd.xlane.f32.xlu0 %v632
  %v634 = vpop.xlane.xlu0 %633
  %v635 = vadd.f32 %v596, %v597
  %636 = vadd.xlane.f32.xlu0 %v635
  %v637 = vpop.xlane.xlu0 %636
  %v638 = vadd.f32 %v598, %v599
  %639 = vadd.xlane.f32.xlu0 %v638
  %v640 = vpop.xlane.xlu0 %639
  %v641 = vadd.f32 %v600, %v601
  %642 = vadd.xlane.f32.xlu0 %v641
  %v643 = vpop.xlane.xlu0 %642
  %v644 = vadd.f32 %v602, %v603
  %645 = vadd.xlane.f32.xlu0 %v644
  %v646 = vpop.xlane.xlu0 %645
  %v647 = vadd.f32 %v604, %v605
  %648 = vadd.xlane.f32.xlu0 %v647
  %v649 = vpop.xlane.xlu0 %648
  %v650 = vadd.f32 %v606, %v607
  %651 = vadd.xlane.f32.xlu0 %v650
  %v652 = vpop.xlane.xlu0 %651
  %v653 = vadd.f32 %v608, %v609
  %654 = vadd.xlane.f32.xlu0 %v653
  %v655 = vpop.xlane.xlu0 %654
  %v656 = vadd.f32 %v610, %v611
  %657 = vadd.xlane.f32.xlu0 %v656
  %v658 = vpop.xlane.xlu0 %657
  %v659 = vadd.f32 %v612, %v613
  %660 = vadd.xlane.f32.xlu0 %v659
  %v661 = vpop.xlane.xlu0 %660
  %v662 = vrcp.pop 256.0
  %v663 = vmul.f32 %v616, %v662
  %v664 = vmul.f32 %v619, %v662
  %v665 = vmul.f32 %v622, %v662
  %v666 = vmul.f32 %v625, %v662
  %v667 = vmul.f32 %v628, %v662
  %v668 = vmul.f32 %v631, %v662
  %v669 = vmul.f32 %v634, %v662
  %v670 = vmul.f32 %v637, %v662
  %v671 = vmul.f32 %v640, %v662
  %v672 = vmul.f32 %v643, %v662
  %v673 = vmul.f32 %v646, %v662
  %v674 = vmul.f32 %v649, %v662
  %v675 = vmul.f32 %v652, %v662
  %v676 = vmul.f32 %v655, %v662
  %v677 = vmul.f32 %v658, %v662
  %v678 = vmul.f32 %v661, %v662
  %v679 = vadd.f32 %v663, 1e-06
  %v680 = vadd.f32 %v664, 1e-06
  %v681 = vadd.f32 %v665, 1e-06
  %v682 = vadd.f32 %v666, 1e-06
  %v683 = vadd.f32 %v667, 1e-06
  %v684 = vadd.f32 %v668, 1e-06
  %v685 = vadd.f32 %v669, 1e-06
  %v686 = vadd.f32 %v670, 1e-06
  %v687 = vadd.f32 %v671, 1e-06
  %v688 = vadd.f32 %v672, 1e-06
  %v689 = vadd.f32 %v673, 1e-06
  %v690 = vadd.f32 %v674, 1e-06
  %v691 = vadd.f32 %v675, 1e-06
  %v692 = vadd.f32 %v676, 1e-06
  %v693 = vadd.f32 %v677, 1e-06
  %v694 = vadd.f32 %v678, 1e-06
  %v695 = vrsqrt.pop %v679
  %v696 = vrsqrt.pop %v680
  %v697 = vrsqrt.pop %v681
  %v698 = vrsqrt.pop %v682
  %v699 = vrsqrt.pop %v683
  %v700 = vrsqrt.pop %v684
  %v701 = vrsqrt.pop %v685
  %v702 = vrsqrt.pop %v686
  %v703 = vrsqrt.pop %v687
  %v704 = vrsqrt.pop %v688
  %v705 = vrsqrt.pop %v689
  %v706 = vrsqrt.pop %v690
  %v707 = vrsqrt.pop %v691
  %v708 = vrsqrt.pop %v692
  %v709 = vrsqrt.pop %v693
  %v710 = vrsqrt.pop %v694
  %v711 = vmul.f32 %v550, %v695
  %v712 = vmul.f32 %v551, %v695
  %v713 = vmul.f32 %v552, %v696
  %v714 = vmul.f32 %v553, %v696
  %v715 = vmul.f32 %v554, %v697
  %v716 = vmul.f32 %v555, %v697
  %v717 = vmul.f32 %v556, %v698
  %v718 = vmul.f32 %v557, %v698
  %v719 = vmul.f32 %v558, %v699
  %v720 = vmul.f32 %v559, %v699
  %v721 = vmul.f32 %v560, %v700
  %v722 = vmul.f32 %v561, %v700
  %v723 = vmul.f32 %v562, %v701
  %v724 = vmul.f32 %v563, %v701
  %v725 = vmul.f32 %v564, %v702
  %v726 = vmul.f32 %v565, %v702
  %v727 = vmul.f32 %v566, %v703
  %v728 = vmul.f32 %v567, %v703
  %v729 = vmul.f32 %v568, %v704
  %v730 = vmul.f32 %v569, %v704
  %v731 = vmul.f32 %v570, %v705
  %v732 = vmul.f32 %v571, %v705
  %v733 = vmul.f32 %v572, %v706
  %v734 = vmul.f32 %v573, %v706
  %v735 = vmul.f32 %v574, %v707
  %v736 = vmul.f32 %v575, %v707
  %v737 = vmul.f32 %v576, %v708
  %v738 = vmul.f32 %v577, %v708
  %v739 = vmul.f32 %v578, %v709
  %v740 = vmul.f32 %v579, %v709
  %v741 = vmul.f32 %v580, %v710
  %v742 = vmul.f32 %v581, %v710
  %v743 = vpack.c.bf16 %v713, %v711
  %v744 = vpack.c.bf16 %v714, %v712
  %v745 = vpack.c.bf16 %v717, %v715
  %v746 = vpack.c.bf16 %v718, %v716
  %v747 = vpack.c.bf16 %v721, %v719
  %v748 = vpack.c.bf16 %v722, %v720
  %v749 = vpack.c.bf16 %v725, %v723
  %v750 = vpack.c.bf16 %v726, %v724
  %v751 = vpack.c.bf16 %v729, %v727
  %v752 = vpack.c.bf16 %v730, %v728
  %v753 = vpack.c.bf16 %v733, %v731
  %v754 = vpack.c.bf16 %v734, %v732
  %v755 = vpack.c.bf16 %v737, %v735
  %v756 = vpack.c.bf16 %v738, %v736
  %v757 = vpack.c.bf16 %v741, %v739
  %v758 = vpack.c.bf16 %v742, %v740
  %v759 = vld [vmem:[%s3] sm:$0xff]
  %v760 = vld [vmem:[%s3 + $0x8] sm:$0xff]
  %v761 = vld [vmem:[%s3 + $0x10] sm:$0xff]
  %v762 = vld [vmem:[%s3 + $0x18] sm:$0xff]
  %v763 = vld [vmem:[%s3 + $0x20] sm:$0xff]
  %v764 = vld [vmem:[%s3 + $0x28] sm:$0xff]
  %v765 = vld [vmem:[%s3 + $0x30] sm:$0xff]
  %v766 = vld [vmem:[%s3 + $0x38] sm:$0xff]
  %v767 = vld [vmem:[%s3 + $0x40] sm:$0xff]
  %v768 = vld [vmem:[%s3 + $0x48] sm:$0xff]
  %v769 = vld [vmem:[%s3 + $0x50] sm:$0xff]
  %v770 = vld [vmem:[%s3 + $0x58] sm:$0xff]
  %v771 = vld [vmem:[%s3 + $0x60] sm:$0xff]
  %v772 = vld [vmem:[%s3 + $0x68] sm:$0xff]
  %v773 = vld [vmem:[%s3 + $0x70] sm:$0xff]
  %v774 = vld [vmem:[%s3 + $0x78] sm:$0xff]
  %v775 = vld [vmem:[%s3 + $0x80] sm:$0xff]
  %v776 = vld [vmem:[%s3 + $0x88] sm:$0xff]
  %v777 = vld [vmem:[%s3 + $0x90] sm:$0xff]
  %v778 = vld [vmem:[%s3 + $0x98] sm:$0xff]
  %v779 = vld [vmem:[%s3 + $0xa0] sm:$0xff]
  %v780 = vld [vmem:[%s3 + $0xa8] sm:$0xff]
  %v781 = vld [vmem:[%s3 + $0xb0] sm:$0xff]
  %v782 = vld [vmem:[%s3 + $0xb8] sm:$0xff]
  %v783 = vld [vmem:[%s3 + $0xc0] sm:$0xff]
  %v784 = vld [vmem:[%s3 + $0xc8] sm:$0xff]
  %v785 = vld [vmem:[%s3 + $0xd0] sm:$0xff]
  %v786 = vld [vmem:[%s3 + $0xd8] sm:$0xff]
  %v787 = vld [vmem:[%s3 + $0xe0] sm:$0xff]
  %v788 = vld [vmem:[%s3 + $0xe8] sm:$0xff]
  %v789 = vld [vmem:[%s3 + $0xf0] sm:$0xff]
  %v790 = vld [vmem:[%s3 + $0xf8] sm:$0xff]
  %v791 = vld [vmem:[%s3 + $0x100] sm:$0xff]
  %v792 = vld [vmem:[%s3 + $0x108] sm:$0xff]
  %v793 = vld [vmem:[%s3 + $0x110] sm:$0xff]
  %v794 = vld [vmem:[%s3 + $0x118] sm:$0xff]
  %v795 = vld [vmem:[%s3 + $0x120] sm:$0xff]
  %v796 = vld [vmem:[%s3 + $0x128] sm:$0xff]
  %v797 = vld [vmem:[%s3 + $0x130] sm:$0xff]
  %v798 = vld [vmem:[%s3 + $0x138] sm:$0xff]
  %v799 = vld [vmem:[%s3 + $0x140] sm:$0xff]
  %v800 = vld [vmem:[%s3 + $0x148] sm:$0xff]
  %v801 = vld [vmem:[%s3 + $0x150] sm:$0xff]
  %v802 = vld [vmem:[%s3 + $0x158] sm:$0xff]
  %v803 = vld [vmem:[%s3 + $0x160] sm:$0xff]
  %v804 = vld [vmem:[%s3 + $0x168] sm:$0xff]
  %v805 = vld [vmem:[%s3 + $0x170] sm:$0xff]
  %v806 = vld [vmem:[%s3 + $0x178] sm:$0xff]
  %v807 = vld [vmem:[%s3 + $0x180] sm:$0xff]
  %v808 = vld [vmem:[%s3 + $0x188] sm:$0xff]
  %v809 = vld [vmem:[%s3 + $0x190] sm:$0xff]
  %v810 = vld [vmem:[%s3 + $0x198] sm:$0xff]
  %v811 = vld [vmem:[%s3 + $0x1a0] sm:$0xff]
  %v812 = vld [vmem:[%s3 + $0x1a8] sm:$0xff]
  %v813 = vld [vmem:[%s3 + $0x1b0] sm:$0xff]
  %v814 = vld [vmem:[%s3 + $0x1b8] sm:$0xff]
  %v815 = vld [vmem:[%s3 + $0x1c0] sm:$0xff]
  %v816 = vld [vmem:[%s3 + $0x1c8] sm:$0xff]
  %v817 = vld [vmem:[%s3 + $0x1d0] sm:$0xff]
  %v818 = vld [vmem:[%s3 + $0x1d8] sm:$0xff]
  %v819 = vld [vmem:[%s3 + $0x1e0] sm:$0xff]
  %v820 = vld [vmem:[%s3 + $0x1e8] sm:$0xff]
  %v821 = vld [vmem:[%s3 + $0x1f0] sm:$0xff]
  %v822 = vld [vmem:[%s3 + $0x1f8] sm:$0xff]
  %v823 = vld [vmem:[%s3 + $0x200] sm:$0xff]
  %v824 = vld [vmem:[%s3 + $0x208] sm:$0xff]
  %v825 = vld [vmem:[%s3 + $0x210] sm:$0xff]
  %v826 = vld [vmem:[%s3 + $0x218] sm:$0xff]
  %v827 = vld [vmem:[%s3 + $0x220] sm:$0xff]
  %v828 = vld [vmem:[%s3 + $0x228] sm:$0xff]
  %v829 = vld [vmem:[%s3 + $0x230] sm:$0xff]
  %v830 = vld [vmem:[%s3 + $0x238] sm:$0xff]
  %v831 = vld [vmem:[%s3 + $0x240] sm:$0xff]
  %v832 = vld [vmem:[%s3 + $0x248] sm:$0xff]
  %v833 = vld [vmem:[%s3 + $0x250] sm:$0xff]
  %v834 = vld [vmem:[%s3 + $0x258] sm:$0xff]
  %v835 = vld [vmem:[%s3 + $0x260] sm:$0xff]
  %v836 = vld [vmem:[%s3 + $0x268] sm:$0xff]
  %v837 = vld [vmem:[%s3 + $0x270] sm:$0xff]
  %v838 = vld [vmem:[%s3 + $0x278] sm:$0xff]
  %v839 = vld [vmem:[%s3 + $0x280] sm:$0xff]
  %v840 = vld [vmem:[%s3 + $0x288] sm:$0xff]
  %v841 = vld [vmem:[%s3 + $0x290] sm:$0xff]
  %v842 = vld [vmem:[%s3 + $0x298] sm:$0xff]
  %v843 = vld [vmem:[%s3 + $0x2a0] sm:$0xff]
  %v844 = vld [vmem:[%s3 + $0x2a8] sm:$0xff]
  %v845 = vld [vmem:[%s3 + $0x2b0] sm:$0xff]
  %v846 = vld [vmem:[%s3 + $0x2b8] sm:$0xff]
  %v847 = vld [vmem:[%s3 + $0x2c0] sm:$0xff]
  %v848 = vld [vmem:[%s3 + $0x2c8] sm:$0xff]
  %v849 = vld [vmem:[%s3 + $0x2d0] sm:$0xff]
  %v850 = vld [vmem:[%s3 + $0x2d8] sm:$0xff]
  %v851 = vld [vmem:[%s3 + $0x2e0] sm:$0xff]
  %v852 = vld [vmem:[%s3 + $0x2e8] sm:$0xff]
  %v853 = vld [vmem:[%s3 + $0x2f0] sm:$0xff]
  %v854 = vld [vmem:[%s3 + $0x2f8] sm:$0xff]
  %v855 = vld [vmem:[%s3 + $0x300] sm:$0xff]
  %v856 = vld [vmem:[%s3 + $0x308] sm:$0xff]
  %v857 = vld [vmem:[%s3 + $0x310] sm:$0xff]
  %v858 = vld [vmem:[%s3 + $0x318] sm:$0xff]
  %v859 = vld [vmem:[%s3 + $0x320] sm:$0xff]
  %v860 = vld [vmem:[%s3 + $0x328] sm:$0xff]
  %v861 = vld [vmem:[%s3 + $0x330] sm:$0xff]
  %v862 = vld [vmem:[%s3 + $0x338] sm:$0xff]
  %v863 = vld [vmem:[%s3 + $0x340] sm:$0xff]
  %v864 = vld [vmem:[%s3 + $0x348] sm:$0xff]
  %v865 = vld [vmem:[%s3 + $0x350] sm:$0xff]
  %v866 = vld [vmem:[%s3 + $0x358] sm:$0xff]
  %v867 = vld [vmem:[%s3 + $0x360] sm:$0xff]
  %v868 = vld [vmem:[%s3 + $0x368] sm:$0xff]
  %v869 = vld [vmem:[%s3 + $0x370] sm:$0xff]
  %v870 = vld [vmem:[%s3 + $0x378] sm:$0xff]
  %v871 = vld [vmem:[%s3 + $0x380] sm:$0xff]
  %v872 = vld [vmem:[%s3 + $0x388] sm:$0xff]
  %v873 = vld [vmem:[%s3 + $0x390] sm:$0xff]
  %v874 = vld [vmem:[%s3 + $0x398] sm:$0xff]
  %v875 = vld [vmem:[%s3 + $0x3a0] sm:$0xff]
  %v876 = vld [vmem:[%s3 + $0x3a8] sm:$0xff]
  %v877 = vld [vmem:[%s3 + $0x3b0] sm:$0xff]
  %v878 = vld [vmem:[%s3 + $0x3b8] sm:$0xff]
  %v879 = vld [vmem:[%s3 + $0x3c0] sm:$0xff]
  %v880 = vld [vmem:[%s3 + $0x3c8] sm:$0xff]
  %v881 = vld [vmem:[%s3 + $0x3d0] sm:$0xff]
  %v882 = vld [vmem:[%s3 + $0x3d8] sm:$0xff]
  %v883 = vld [vmem:[%s3 + $0x3e0] sm:$0xff]
  %v884 = vld [vmem:[%s3 + $0x3e8] sm:$0xff]
  %v885 = vld [vmem:[%s3 + $0x3f0] sm:$0xff]
  %v886 = vld [vmem:[%s3 + $0x3f8] sm:$0xff]
  %v1015 = vunpack.c.l.b16 %v759
  %v1016 = vunpack.c.h.b16 %v759
  %v1017 = vunpack.c.l.b16 %v760
  %v1018 = vunpack.c.h.b16 %v760
  %v1019 = vunpack.c.l.b16 %v761
  %v1020 = vunpack.c.h.b16 %v761
  %v1021 = vunpack.c.l.b16 %v762
  %v1022 = vunpack.c.h.b16 %v762
  %v1023 = vunpack.c.l.b16 %v763
  %v1024 = vunpack.c.h.b16 %v763
  %v1025 = vunpack.c.l.b16 %v764
  %v1026 = vunpack.c.h.b16 %v764
  %v1027 = vunpack.c.l.b16 %v765
  %v1028 = vunpack.c.h.b16 %v765
  %v1029 = vunpack.c.l.b16 %v766
  %v1030 = vunpack.c.h.b16 %v766
  %v1031 = vunpack.c.l.b16 %v767
  %v1032 = vunpack.c.h.b16 %v767
  %v1033 = vunpack.c.l.b16 %v768
  %v1034 = vunpack.c.h.b16 %v768
  %v1035 = vunpack.c.l.b16 %v769
  %v1036 = vunpack.c.h.b16 %v769
  %v1037 = vunpack.c.l.b16 %v770
  %v1038 = vunpack.c.h.b16 %v770
  %v1039 = vunpack.c.l.b16 %v771
  %v1040 = vunpack.c.h.b16 %v771
  %v1041 = vunpack.c.l.b16 %v772
  %v1042 = vunpack.c.h.b16 %v772
  %v1043 = vunpack.c.l.b16 %v773
  %v1044 = vunpack.c.h.b16 %v773
  %v1045 = vunpack.c.l.b16 %v774
  %v1046 = vunpack.c.h.b16 %v774
  %v1047 = vunpack.c.l.b16 %v775
  %v1048 = vunpack.c.h.b16 %v775
  %v1049 = vunpack.c.l.b16 %v776
  %v1050 = vunpack.c.h.b16 %v776
  %v1051 = vunpack.c.l.b16 %v777
  %v1052 = vunpack.c.h.b16 %v777
  %v1053 = vunpack.c.l.b16 %v778
  %v1054 = vunpack.c.h.b16 %v778
  %v1055 = vunpack.c.l.b16 %v779
  %v1056 = vunpack.c.h.b16 %v779
  %v1057 = vunpack.c.l.b16 %v780
  %v1058 = vunpack.c.h.b16 %v780
  %v1059 = vunpack.c.l.b16 %v781
  %v1060 = vunpack.c.h.b16 %v781
  %v1061 = vunpack.c.l.b16 %v782
  %v1062 = vunpack.c.h.b16 %v782
  %v1063 = vunpack.c.l.b16 %v783
  %v1064 = vunpack.c.h.b16 %v783
  %v1065 = vunpack.c.l.b16 %v784
  %v1066 = vunpack.c.h.b16 %v784
  %v1067 = vunpack.c.l.b16 %v785
  %v1068 = vunpack.c.h.b16 %v785
  %v1069 = vunpack.c.l.b16 %v786
  %v1070 = vunpack.c.h.b16 %v786
  %v1071 = vunpack.c.l.b16 %v787
  %v1072 = vunpack.c.h.b16 %v787
  %v1073 = vunpack.c.l.b16 %v788
  %v1074 = vunpack.c.h.b16 %v788
  %v1075 = vunpack.c.l.b16 %v789
  %v1076 = vunpack.c.h.b16 %v789
  %v1077 = vunpack.c.l.b16 %v790
  %v1078 = vunpack.c.h.b16 %v790
  %v1079 = vunpack.c.l.b16 %v791
  %v1080 = vunpack.c.h.b16 %v791
  %v1081 = vunpack.c.l.b16 %v792
  %v1082 = vunpack.c.h.b16 %v792
  %v1083 = vunpack.c.l.b16 %v793
  %v1084 = vunpack.c.h.b16 %v793
  %v1085 = vunpack.c.l.b16 %v794
  %v1086 = vunpack.c.h.b16 %v794
  %v1087 = vunpack.c.l.b16 %v795
  %v1088 = vunpack.c.h.b16 %v795
  %v1089 = vunpack.c.l.b16 %v796
  %v1090 = vunpack.c.h.b16 %v796
  %v1091 = vunpack.c.l.b16 %v797
  %v1092 = vunpack.c.h.b16 %v797
  %v1093 = vunpack.c.l.b16 %v798
  %v1094 = vunpack.c.h.b16 %v798
  %v1095 = vunpack.c.l.b16 %v799
  %v1096 = vunpack.c.h.b16 %v799
  %v1097 = vunpack.c.l.b16 %v800
  %v1098 = vunpack.c.h.b16 %v800
  %v1099 = vunpack.c.l.b16 %v801
  %v1100 = vunpack.c.h.b16 %v801
  %v1101 = vunpack.c.l.b16 %v802
  %v1102 = vunpack.c.h.b16 %v802
  %v1103 = vunpack.c.l.b16 %v803
  %v1104 = vunpack.c.h.b16 %v803
  %v1105 = vunpack.c.l.b16 %v804
  %v1106 = vunpack.c.h.b16 %v804
  %v1107 = vunpack.c.l.b16 %v805
  %v1108 = vunpack.c.h.b16 %v805
  %v1109 = vunpack.c.l.b16 %v806
  %v1110 = vunpack.c.h.b16 %v806
  %v1111 = vunpack.c.l.b16 %v807
  %v1112 = vunpack.c.h.b16 %v807
  %v1113 = vunpack.c.l.b16 %v808
  %v1114 = vunpack.c.h.b16 %v808
  %v1115 = vunpack.c.l.b16 %v809
  %v1116 = vunpack.c.h.b16 %v809
  %v1117 = vunpack.c.l.b16 %v810
  %v1118 = vunpack.c.h.b16 %v810
  %v1119 = vunpack.c.l.b16 %v811
  %v1120 = vunpack.c.h.b16 %v811
  %v1121 = vunpack.c.l.b16 %v812
  %v1122 = vunpack.c.h.b16 %v812
  %v1123 = vunpack.c.l.b16 %v813
  %v1124 = vunpack.c.h.b16 %v813
  %v1125 = vunpack.c.l.b16 %v814
  %v1126 = vunpack.c.h.b16 %v814
  %v1127 = vunpack.c.l.b16 %v815
  %v1128 = vunpack.c.h.b16 %v815
  %v1129 = vunpack.c.l.b16 %v816
  %v1130 = vunpack.c.h.b16 %v816
  %v1131 = vunpack.c.l.b16 %v817
  %v1132 = vunpack.c.h.b16 %v817
  %v1133 = vunpack.c.l.b16 %v818
  %v1134 = vunpack.c.h.b16 %v818
  %v1135 = vunpack.c.l.b16 %v819
  %v1136 = vunpack.c.h.b16 %v819
  %v1137 = vunpack.c.l.b16 %v820
  %v1138 = vunpack.c.h.b16 %v820
  %v1139 = vunpack.c.l.b16 %v821
  %v1140 = vunpack.c.h.b16 %v821
  %v1141 = vunpack.c.l.b16 %v822
  %v1142 = vunpack.c.h.b16 %v822
  %v1143 = vunpack.c.l.b16 %v823
  %v1144 = vunpack.c.h.b16 %v823
  %v1145 = vunpack.c.l.b16 %v824
  %v1146 = vunpack.c.h.b16 %v824
  %v1147 = vunpack.c.l.b16 %v825
  %v1148 = vunpack.c.h.b16 %v825
  %v1149 = vunpack.c.l.b16 %v826
  %v1150 = vunpack.c.h.b16 %v826
  %v1151 = vunpack.c.l.b16 %v827
  %v1152 = vunpack.c.h.b16 %v827
  %v1153 = vunpack.c.l.b16 %v828
  %v1154 = vunpack.c.h.b16 %v828
  %v1155 = vunpack.c.l.b16 %v829
  %v1156 = vunpack.c.h.b16 %v829
  %v1157 = vunpack.c.l.b16 %v830
  %v1158 = vunpack.c.h.b16 %v830
  %v1159 = vunpack.c.l.b16 %v831
  %v1160 = vunpack.c.h.b16 %v831
  %v1161 = vunpack.c.l.b16 %v832
  %v1162 = vunpack.c.h.b16 %v832
  %v1163 = vunpack.c.l.b16 %v833
  %v1164 = vunpack.c.h.b16 %v833
  %v1165 = vunpack.c.l.b16 %v834
  %v1166 = vunpack.c.h.b16 %v834
  %v1167 = vunpack.c.l.b16 %v835
  %v1168 = vunpack.c.h.b16 %v835
  %v1169 = vunpack.c.l.b16 %v836
  %v1170 = vunpack.c.h.b16 %v836
  %v1171 = vunpack.c.l.b16 %v837
  %v1172 = vunpack.c.h.b16 %v837
  %v1173 = vunpack.c.l.b16 %v838
  %v1174 = vunpack.c.h.b16 %v838
  %v1175 = vunpack.c.l.b16 %v839
  %v1176 = vunpack.c.h.b16 %v839
  %v1177 = vunpack.c.l.b16 %v840
  %v1178 = vunpack.c.h.b16 %v840
  %v1179 = vunpack.c.l.b16 %v841
  %v1180 = vunpack.c.h.b16 %v841
  %v1181 = vunpack.c.l.b16 %v842
  %v1182 = vunpack.c.h.b16 %v842
  %v1183 = vunpack.c.l.b16 %v843
  %v1184 = vunpack.c.h.b16 %v843
  %v1185 = vunpack.c.l.b16 %v844
  %v1186 = vunpack.c.h.b16 %v844
  %v1187 = vunpack.c.l.b16 %v845
  %v1188 = vunpack.c.h.b16 %v845
  %v1189 = vunpack.c.l.b16 %v846
  %v1190 = vunpack.c.h.b16 %v846
  %v1191 = vunpack.c.l.b16 %v847
  %v1192 = vunpack.c.h.b16 %v847
  %v1193 = vunpack.c.l.b16 %v848
  %v1194 = vunpack.c.h.b16 %v848
  %v1195 = vunpack.c.l.b16 %v849
  %v1196 = vunpack.c.h.b16 %v849
  %v1197 = vunpack.c.l.b16 %v850
  %v1198 = vunpack.c.h.b16 %v850
  %v1199 = vunpack.c.l.b16 %v851
  %v1200 = vunpack.c.h.b16 %v851
  %v1201 = vunpack.c.l.b16 %v852
  %v1202 = vunpack.c.h.b16 %v852
  %v1203 = vunpack.c.l.b16 %v853
  %v1204 = vunpack.c.h.b16 %v853
  %v1205 = vunpack.c.l.b16 %v854
  %v1206 = vunpack.c.h.b16 %v854
  %v1207 = vunpack.c.l.b16 %v855
  %v1208 = vunpack.c.h.b16 %v855
  %v1209 = vunpack.c.l.b16 %v856
  %v1210 = vunpack.c.h.b16 %v856
  %v1211 = vunpack.c.l.b16 %v857
  %v1212 = vunpack.c.h.b16 %v857
  %v1213 = vunpack.c.l.b16 %v858
  %v1214 = vunpack.c.h.b16 %v858
  %v1215 = vunpack.c.l.b16 %v859
  %v1216 = vunpack.c.h.b16 %v859
  %v1217 = vunpack.c.l.b16 %v860
  %v1218 = vunpack.c.h.b16 %v860
  %v1219 = vunpack.c.l.b16 %v861
  %v1220 = vunpack.c.h.b16 %v861
  %v1221 = vunpack.c.l.b16 %v862
  %v1222 = vunpack.c.h.b16 %v862
  %v1223 = vunpack.c.l.b16 %v863
  %v1224 = vunpack.c.h.b16 %v863
  %v1225 = vunpack.c.l.b16 %v864
  %v1226 = vunpack.c.h.b16 %v864
  %v1227 = vunpack.c.l.b16 %v865
  %v1228 = vunpack.c.h.b16 %v865
  %v1229 = vunpack.c.l.b16 %v866
  %v1230 = vunpack.c.h.b16 %v866
  %v1231 = vunpack.c.l.b16 %v867
  %v1232 = vunpack.c.h.b16 %v867
  %v1233 = vunpack.c.l.b16 %v868
  %v1234 = vunpack.c.h.b16 %v868
  %v1235 = vunpack.c.l.b16 %v869
  %v1236 = vunpack.c.h.b16 %v869
  %v1237 = vunpack.c.l.b16 %v870
  %v1238 = vunpack.c.h.b16 %v870
  %v1239 = vunpack.c.l.b16 %v871
  %v1240 = vunpack.c.h.b16 %v871
  %v1241 = vunpack.c.l.b16 %v872
  %v1242 = vunpack.c.h.b16 %v872
  %v1243 = vunpack.c.l.b16 %v873
  %v1244 = vunpack.c.h.b16 %v873
  %v1245 = vunpack.c.l.b16 %v874
  %v1246 = vunpack.c.h.b16 %v874
  %v1247 = vunpack.c.l.b16 %v875
  %v1248 = vunpack.c.h.b16 %v875
  %v1249 = vunpack.c.l.b16 %v876
  %v1250 = vunpack.c.h.b16 %v876
  %v1251 = vunpack.c.l.b16 %v877
  %v1252 = vunpack.c.h.b16 %v877
  %v1253 = vunpack.c.l.b16 %v878
  %v1254 = vunpack.c.h.b16 %v878
  %v1255 = vunpack.c.l.b16 %v879
  %v1256 = vunpack.c.h.b16 %v879
  %v1257 = vunpack.c.l.b16 %v880
  %v1258 = vunpack.c.h.b16 %v880
  %v1259 = vunpack.c.l.b16 %v881
  %v1260 = vunpack.c.h.b16 %v881
  %v1261 = vunpack.c.l.b16 %v882
  %v1262 = vunpack.c.h.b16 %v882
  %v1263 = vunpack.c.l.b16 %v883
  %v1264 = vunpack.c.h.b16 %v883
  %v1265 = vunpack.c.l.b16 %v884
  %v1266 = vunpack.c.h.b16 %v884
  %v1267 = vunpack.c.l.b16 %v885
  %v1268 = vunpack.c.h.b16 %v885
  %v1269 = vunpack.c.l.b16 %v886
  %v1270 = vunpack.c.h.b16 %v886
  %v1271 = vpack.c.b16 %v1023, %v1015
  %v1272 = vpack.c.b16 %v1024, %v1016
  %v1273 = vpack.c.b16 %v1025, %v1017
  %v1274 = vpack.c.b16 %v1026, %v1018
  %v1275 = vpack.c.b16 %v1027, %v1019
  %v1276 = vpack.c.b16 %v1028, %v1020
  %v1277 = vpack.c.b16 %v1029, %v1021
  %v1278 = vpack.c.b16 %v1030, %v1022
  %v1279 = vpack.c.b16 %v1039, %v1031
  %v1280 = vpack.c.b16 %v1040, %v1032
  %v1281 = vpack.c.b16 %v1041, %v1033
  %v1282 = vpack.c.b16 %v1042, %v1034
  %v1283 = vpack.c.b16 %v1043, %v1035
  %v1284 = vpack.c.b16 %v1044, %v1036
  %v1285 = vpack.c.b16 %v1045, %v1037
  %v1286 = vpack.c.b16 %v1046, %v1038
  %v1287 = vpack.c.b16 %v1055, %v1047
  %v1288 = vpack.c.b16 %v1056, %v1048
  %v1289 = vpack.c.b16 %v1057, %v1049
  %v1290 = vpack.c.b16 %v1058, %v1050
  %v1291 = vpack.c.b16 %v1059, %v1051
  %v1292 = vpack.c.b16 %v1060, %v1052
  %v1293 = vpack.c.b16 %v1061, %v1053
  %v1294 = vpack.c.b16 %v1062, %v1054
  %v1295 = vpack.c.b16 %v1071, %v1063
  %v1296 = vpack.c.b16 %v1072, %v1064
  %v1297 = vpack.c.b16 %v1073, %v1065
  %v1298 = vpack.c.b16 %v1074, %v1066
  %v1299 = vpack.c.b16 %v1075, %v1067
  %v1300 = vpack.c.b16 %v1076, %v1068
  %v1301 = vpack.c.b16 %v1077, %v1069
  %v1302 = vpack.c.b16 %v1078, %v1070
  %v1303 = vpack.c.b16 %v1087, %v1079
  %v1304 = vpack.c.b16 %v1088, %v1080
  %v1305 = vpack.c.b16 %v1089, %v1081
  %v1306 = vpack.c.b16 %v1090, %v1082
  %v1307 = vpack.c.b16 %v1091, %v1083
  %v1308 = vpack.c.b16 %v1092, %v1084
  %v1309 = vpack.c.b16 %v1093, %v1085
  %v1310 = vpack.c.b16 %v1094, %v1086
  %v1311 = vpack.c.b16 %v1103, %v1095
  %v1312 = vpack.c.b16 %v1104, %v1096
  %v1313 = vpack.c.b16 %v1105, %v1097
  %v1314 = vpack.c.b16 %v1106, %v1098
  %v1315 = vpack.c.b16 %v1107, %v1099
  %v1316 = vpack.c.b16 %v1108, %v1100
  %v1317 = vpack.c.b16 %v1109, %v1101
  %v1318 = vpack.c.b16 %v1110, %v1102
  %v1319 = vpack.c.b16 %v1119, %v1111
  %v1320 = vpack.c.b16 %v1120, %v1112
  %v1321 = vpack.c.b16 %v1121, %v1113
  %v1322 = vpack.c.b16 %v1122, %v1114
  %v1323 = vpack.c.b16 %v1123, %v1115
  %v1324 = vpack.c.b16 %v1124, %v1116
  %v1325 = vpack.c.b16 %v1125, %v1117
  %v1326 = vpack.c.b16 %v1126, %v1118
  %v1327 = vpack.c.b16 %v1135, %v1127
  %v1328 = vpack.c.b16 %v1136, %v1128
  %v1329 = vpack.c.b16 %v1137, %v1129
  %v1330 = vpack.c.b16 %v1138, %v1130
  %v1331 = vpack.c.b16 %v1139, %v1131
  %v1332 = vpack.c.b16 %v1140, %v1132
  %v1333 = vpack.c.b16 %v1141, %v1133
  %v1334 = vpack.c.b16 %v1142, %v1134
  %v1335 = vpack.c.b16 %v1151, %v1143
  %v1336 = vpack.c.b16 %v1152, %v1144
  %v1337 = vpack.c.b16 %v1153, %v1145
  %v1338 = vpack.c.b16 %v1154, %v1146
  %v1339 = vpack.c.b16 %v1155, %v1147
  %v1340 = vpack.c.b16 %v1156, %v1148
  %v1341 = vpack.c.b16 %v1157, %v1149
  %v1342 = vpack.c.b16 %v1158, %v1150
  %v1343 = vpack.c.b16 %v1167, %v1159
  %v1344 = vpack.c.b16 %v1168, %v1160
  %v1345 = vpack.c.b16 %v1169, %v1161
  %v1346 = vpack.c.b16 %v1170, %v1162
  %v1347 = vpack.c.b16 %v1171, %v1163
  %v1348 = vpack.c.b16 %v1172, %v1164
  %v1349 = vpack.c.b16 %v1173, %v1165
  %v1350 = vpack.c.b16 %v1174, %v1166
  %v1351 = vpack.c.b16 %v1183, %v1175
  %v1352 = vpack.c.b16 %v1184, %v1176
  %v1353 = vpack.c.b16 %v1185, %v1177
  %v1354 = vpack.c.b16 %v1186, %v1178
  %v1355 = vpack.c.b16 %v1187, %v1179
  %v1356 = vpack.c.b16 %v1188, %v1180
  %v1357 = vpack.c.b16 %v1189, %v1181
  %v1358 = vpack.c.b16 %v1190, %v1182
  %v1359 = vpack.c.b16 %v1199, %v1191
  %v1360 = vpack.c.b16 %v1200, %v1192
  %v1361 = vpack.c.b16 %v1201, %v1193
  %v1362 = vpack.c.b16 %v1202, %v1194
  %v1363 = vpack.c.b16 %v1203, %v1195
  %v1364 = vpack.c.b16 %v1204, %v1196
  %v1365 = vpack.c.b16 %v1205, %v1197
  %v1366 = vpack.c.b16 %v1206, %v1198
  %v1367 = vpack.c.b16 %v1215, %v1207
  %v1368 = vpack.c.b16 %v1216, %v1208
  %v1369 = vpack.c.b16 %v1217, %v1209
  %v1370 = vpack.c.b16 %v1218, %v1210
  %v1371 = vpack.c.b16 %v1219, %v1211
  %v1372 = vpack.c.b16 %v1220, %v1212
  %v1373 = vpack.c.b16 %v1221, %v1213
  %v1374 = vpack.c.b16 %v1222, %v1214
  %v1375 = vpack.c.b16 %v1231, %v1223
  %v1376 = vpack.c.b16 %v1232, %v1224
  %v1377 = vpack.c.b16 %v1233, %v1225
  %v1378 = vpack.c.b16 %v1234, %v1226
  %v1379 = vpack.c.b16 %v1235, %v1227
  %v1380 = vpack.c.b16 %v1236, %v1228
  %v1381 = vpack.c.b16 %v1237, %v1229
  %v1382 = vpack.c.b16 %v1238, %v1230
  %v1383 = vpack.c.b16 %v1247, %v1239
  %v1384 = vpack.c.b16 %v1248, %v1240
  %v1385 = vpack.c.b16 %v1249, %v1241
  %v1386 = vpack.c.b16 %v1250, %v1242
  %v1387 = vpack.c.b16 %v1251, %v1243
  %v1388 = vpack.c.b16 %v1252, %v1244
  %v1389 = vpack.c.b16 %v1253, %v1245
  %v1390 = vpack.c.b16 %v1254, %v1246
  %v1391 = vpack.c.b16 %v1263, %v1255
  %v1392 = vpack.c.b16 %v1264, %v1256
  %v1393 = vpack.c.b16 %v1265, %v1257
  %v1394 = vpack.c.b16 %v1266, %v1258
  %v1395 = vpack.c.b16 %v1267, %v1259
  %v1396 = vpack.c.b16 %v1268, %v1260
  %v1397 = vpack.c.b16 %v1269, %v1261
  %v1398 = vpack.c.b16 %v1270, %v1262
  %1527 = vmatprep.subr.bf16.mxu0 %v1272
  %1528 = vmatpush1.bf16.msra.mxu0 %v1271
  %1529 = vmatprep.subr.bf16.mxu0 %v1280
  %1530 = vmatpush1.bf16.msra.mxu0 %v1279
  %1531 = vmatprep.subr.bf16.mxu0 %v1288
  %1532 = vmatpush1.bf16.msra.mxu0 %v1287
  %1533 = vmatprep.subr.bf16.mxu0 %v1296
  %1534 = vmatpush1.bf16.msra.mxu0 %v1295
  %1535 = vmatprep.subr.bf16.mxu0 %v1304
  %1536 = vmatpush1.bf16.msra.mxu0 %v1303
  %1537 = vmatprep.subr.bf16.mxu0 %v1312
  %1538 = vmatpush1.bf16.msra.mxu0 %v1311
  %1539 = vmatprep.subr.bf16.mxu0 %v1320
  %1540 = vmatpush1.bf16.msra.mxu0 %v1319
  %1541 = vmatprep.subr.bf16.mxu0 %v1328
  %1542 = vmatpush1.bf16.msra.mxu0 %v1327
  %1543 = vmatprep.subr.bf16.mxu0 %v1336
  %1544 = vmatpush1.bf16.msra.mxu0 %v1335
  %1545 = vmatprep.subr.bf16.mxu0 %v1344
  %1546 = vmatpush1.bf16.msra.mxu0 %v1343
  %1547 = vmatprep.subr.bf16.mxu0 %v1352
  %1548 = vmatpush1.bf16.msra.mxu0 %v1351
  %1549 = vmatprep.subr.bf16.mxu0 %v1360
  %1550 = vmatpush1.bf16.msra.mxu0 %v1359
  %1551 = vmatprep.subr.bf16.mxu0 %v1368
  %1552 = vmatpush1.bf16.msra.mxu0 %v1367
  %1553 = vmatprep.subr.bf16.mxu0 %v1376
  %1554 = vmatpush1.bf16.msra.mxu0 %v1375
  %1555 = vmatprep.subr.bf16.mxu0 %v1384
  %1556 = vmatpush1.bf16.msra.mxu0 %v1383
  %1557 = vmatprep.subr.bf16.mxu0 %v1392
  %1558 = vmatpush1.bf16.msra.mxu0 %v1391
  %1559 = vmatprep.mubr.bf16.mxu0 %v744
  %1560 = vmatmul.mubr.bf16.gmra.mrb[0].mxu0 %v743
  %v1561 = vpop.f32.mrb[0].mxu0
  %v1562 = vadd.f32 0.0, %v1561
  %v1563 = vpop.f32.mrb[0].mxu0
  %v1564 = vadd.f32 0.0, %v1563
  %v1565 = vpop.f32.mrb[0].mxu0
  %v1566 = vadd.f32 0.0, %v1565
  %v1567 = vpop.f32.mrb[0].mxu0
  %v1568 = vadd.f32 0.0, %v1567
  %1569 = vmatprep.mubr.bf16.mxu0 %v746
  %1570 = vmatmul.mubr.bf16.gmra.mrb[0].mxu0 %v745
  %v1571 = vpop.f32.mrb[0].mxu0
  %v1572 = vadd.f32 0.0, %v1571
  %v1573 = vpop.f32.mrb[0].mxu0
  %v1574 = vadd.f32 0.0, %v1573
  %v1575 = vpop.f32.mrb[0].mxu0
  %v1576 = vadd.f32 0.0, %v1575
  %v1577 = vpop.f32.mrb[0].mxu0
  %v1578 = vadd.f32 0.0, %v1577
  %1579 = vmatprep.mubr.bf16.mxu0 %v748
  %1580 = vmatmul.mubr.bf16.gmra.mrb[0].mxu0 %v747
  %v1581 = vpop.f32.mrb[0].mxu0
  %v1582 = vadd.f32 0.0, %v1581
  %v1583 = vpop.f32.mrb[0].mxu0
  %v1584 = vadd.f32 0.0, %v1583
  %v1585 = vpop.f32.mrb[0].mxu0
  %v1586 = vadd.f32 0.0, %v1585
  %v1587 = vpop.f32.mrb[0].mxu0
  %v1588 = vadd.f32 0.0, %v1587
  %1589 = vmatprep.mubr.bf16.mxu0 %v750
  %1590 = vmatmul.mubr.bf16.gmra.mrb[0].mxu0 %v749
  %v1591 = vpop.f32.mrb[0].mxu0
  %v1592 = vadd.f32 0.0, %v1591
  %v1593 = vpop.f32.mrb[0].mxu0
  %v1594 = vadd.f32 0.0, %v1593
  %v1595 = vpop.f32.mrb[0].mxu0
  %v1596 = vadd.f32 0.0, %v1595
  %v1597 = vpop.f32.mrb[0].mxu0
  %v1598 = vadd.f32 0.0, %v1597
  %1599 = vmatprep.mubr.bf16.mxu0 %v752
  %1600 = vmatmul.mubr.bf16.gmra.mrb[0].mxu0 %v751
  %v1601 = vpop.f32.mrb[0].mxu0
  %v1602 = vadd.f32 0.0, %v1601
  %v1603 = vpop.f32.mrb[0].mxu0
  %v1604 = vadd.f32 0.0, %v1603
  %v1605 = vpop.f32.mrb[0].mxu0
  %v1606 = vadd.f32 0.0, %v1605
  %v1607 = vpop.f32.mrb[0].mxu0
  %v1608 = vadd.f32 0.0, %v1607
  %1609 = vmatprep.mubr.bf16.mxu0 %v754
  %1610 = vmatmul.mubr.bf16.gmra.mrb[0].mxu0 %v753
  %v1611 = vpop.f32.mrb[0].mxu0
  %v1612 = vadd.f32 0.0, %v1611
  %v1613 = vpop.f32.mrb[0].mxu0
  %v1614 = vadd.f32 0.0, %v1613
  %v1615 = vpop.f32.mrb[0].mxu0
  %v1616 = vadd.f32 0.0, %v1615
  %v1617 = vpop.f32.mrb[0].mxu0
  %v1618 = vadd.f32 0.0, %v1617
  %1619 = vmatprep.mubr.bf16.mxu0 %v756
  %1620 = vmatmul.mubr.bf16.gmra.mrb[0].mxu0 %v755
  %v1621 = vpop.f32.mrb[0].mxu0
  %v1622 = vadd.f32 0.0, %v1621
  %v1623 = vpop.f32.mrb[0].mxu0
  %v1624 = vadd.f32 0.0, %v1623
  %v1625 = vpop.f32.mrb[0].mxu0
  %v1626 = vadd.f32 0.0, %v1625
  %v1627 = vpop.f32.mrb[0].mxu0
  %v1628 = vadd.f32 0.0, %v1627
  %1629 = vmatprep.mubr.bf16.mxu0 %v758
  %1630 = vmatmul.mubr.bf16.gmra.mrb[0].mxu0 %v757
  %v1631 = vpop.f32.mrb[0].mxu0
  %v1632 = vadd.f32 0.0, %v1631
  %v1633 = vpop.f32.mrb[0].mxu0
  %v1634 = vadd.f32 0.0, %v1633
  %v1635 = vpop.f32.mrb[0].mxu0
  %v1636 = vadd.f32 0.0, %v1635
  %v1637 = vpop.f32.mrb[0].mxu0
  %v1638 = vadd.f32 0.0, %v1637
  %1639 = vdwg.mxu0
  %1640 = vmatprep.subr.bf16.mxu0 %v1274
  %1641 = vmatpush1.bf16.msra.mxu0 %v1273
  %1642 = vmatprep.subr.bf16.mxu0 %v1282
  %1643 = vmatpush1.bf16.msra.mxu0 %v1281
  %1644 = vmatprep.subr.bf16.mxu0 %v1290
  %1645 = vmatpush1.bf16.msra.mxu0 %v1289
  %1646 = vmatprep.subr.bf16.mxu0 %v1298
  %1647 = vmatpush1.bf16.msra.mxu0 %v1297
  %1648 = vmatprep.subr.bf16.mxu0 %v1306
  %1649 = vmatpush1.bf16.msra.mxu0 %v1305
  %1650 = vmatprep.subr.bf16.mxu0 %v1314
  %1651 = vmatpush1.bf16.msra.mxu0 %v1313
  %1652 = vmatprep.subr.bf16.mxu0 %v1322
  %1653 = vmatpush1.bf16.msra.mxu0 %v1321
  %1654 = vmatprep.subr.bf16.mxu0 %v1330
  %1655 = vmatpush1.bf16.msra.mxu0 %v1329
  %1656 = vmatprep.subr.bf16.mxu0 %v1338
  %1657 = vmatpush1.bf16.msra.mxu0 %v1337
  %1658 = vmatprep.subr.bf16.mxu0 %v1346
  %1659 = vmatpush1.bf16.msra.mxu0 %v1345
  %1660 = vmatprep.subr.bf16.mxu0 %v1354
  %1661 = vmatpush1.bf16.msra.mxu0 %v1353
  %1662 = vmatprep.subr.bf16.mxu0 %v1362
  %1663 = vmatpush1.bf16.msra.mxu0 %v1361
  %1664 = vmatprep.subr.bf16.mxu0 %v1370
  %1665 = vmatpush1.bf16.msra.mxu0 %v1369
  %1666 = vmatprep.subr.bf16.mxu0 %v1378
  %1667 = vmatpush1.bf16.msra.mxu0 %v1377
  %1668 = vmatprep.subr.bf16.mxu0 %v1386
  %1669 = vmatpush1.bf16.msra.mxu0 %v1385
  %1670 = vmatprep.subr.bf16.mxu0 %v1394
  %1671 = vmatpush1.bf16.msra.mxu0 %v1393
  %1672 = vmatprep.mubr.bf16.mxu0 %v744
  %1673 = vmatmul.mubr.bf16.gmra.mrb[0].mxu0 %v743
  %v1674 = vpop.f32.mrb[0].mxu0
  %v1675 = vadd.f32 0.0, %v1674
  %v1676 = vpop.f32.mrb[0].mxu0
  %v1677 = vadd.f32 0.0, %v1676
  %v1678 = vpop.f32.mrb[0].mxu0
  %v1679 = vadd.f32 0.0, %v1678
  %v1680 = vpop.f32.mrb[0].mxu0
  %v1681 = vadd.f32 0.0, %v1680
  %1682 = vmatprep.mubr.bf16.mxu0 %v746
  %1683 = vmatmul.mubr.bf16.gmra.mrb[0].mxu0 %v745
  %v1684 = vpop.f32.mrb[0].mxu0
  %v1685 = vadd.f32 0.0, %v1684
  %v1686 = vpop.f32.mrb[0].mxu0
  %v1687 = vadd.f32 0.0, %v1686
  %v1688 = vpop.f32.mrb[0].mxu0
  %v1689 = vadd.f32 0.0, %v1688
  %v1690 = vpop.f32.mrb[0].mxu0
  %v1691 = vadd.f32 0.0, %v1690
  %1692 = vmatprep.mubr.bf16.mxu0 %v748
  %1693 = vmatmul.mubr.bf16.gmra.mrb[0].mxu0 %v747
  %v1694 = vpop.f32.mrb[0].mxu0
  %v1695 = vadd.f32 0.0, %v1694
  %v1696 = vpop.f32.mrb[0].mxu0
  %v1697 = vadd.f32 0.0, %v1696
  %v1698 = vpop.f32.mrb[0].mxu0
  %v1699 = vadd.f32 0.0, %v1698
  %v1700 = vpop.f32.mrb[0].mxu0
  %v1701 = vadd.f32 0.0, %v1700
  %1702 = vmatprep.mubr.bf16.mxu0 %v750
  %1703 = vmatmul.mubr.bf16.gmra.mrb[0].mxu0 %v749
  %v1704 = vpop.f32.mrb[0].mxu0
  %v1705 = vadd.f32 0.0, %v1704
  %v1706 = vpop.f32.mrb[0].mxu0
  %v1707 = vadd.f32 0.0, %v1706
  %v1708 = vpop.f32.mrb[0].mxu0
  %v1709 = vadd.f32 0.0, %v1708
  %v1710 = vpop.f32.mrb[0].mxu0
  %v1711 = vadd.f32 0.0, %v1710
  %1712 = vmatprep.mubr.bf16.mxu0 %v752
  %1713 = vmatmul.mubr.bf16.gmra.mrb[0].mxu0 %v751
  %v1714 = vpop.f32.mrb[0].mxu0
  %v1715 = vadd.f32 0.0, %v1714
  %v1716 = vpop.f32.mrb[0].mxu0
  %v1717 = vadd.f32 0.0, %v1716
  %v1718 = vpop.f32.mrb[0].mxu0
  %v1719 = vadd.f32 0.0, %v1718
  %v1720 = vpop.f32.mrb[0].mxu0
  %v1721 = vadd.f32 0.0, %v1720
  %1722 = vmatprep.mubr.bf16.mxu0 %v754
  %1723 = vmatmul.mubr.bf16.gmra.mrb[0].mxu0 %v753
  %v1724 = vpop.f32.mrb[0].mxu0
  %v1725 = vadd.f32 0.0, %v1724
  %v1726 = vpop.f32.mrb[0].mxu0
  %v1727 = vadd.f32 0.0, %v1726
  %v1728 = vpop.f32.mrb[0].mxu0
  %v1729 = vadd.f32 0.0, %v1728
  %v1730 = vpop.f32.mrb[0].mxu0
  %v1731 = vadd.f32 0.0, %v1730
  %1732 = vmatprep.mubr.bf16.mxu0 %v756
  %1733 = vmatmul.mubr.bf16.gmra.mrb[0].mxu0 %v755
  %v1734 = vpop.f32.mrb[0].mxu0
  %v1735 = vadd.f32 0.0, %v1734
  %v1736 = vpop.f32.mrb[0].mxu0
  %v1737 = vadd.f32 0.0, %v1736
  %v1738 = vpop.f32.mrb[0].mxu0
  %v1739 = vadd.f32 0.0, %v1738
  %v1740 = vpop.f32.mrb[0].mxu0
  %v1741 = vadd.f32 0.0, %v1740
  %1742 = vmatprep.mubr.bf16.mxu0 %v758
  %1743 = vmatmul.mubr.bf16.gmra.mrb[0].mxu0 %v757
  %v1744 = vpop.f32.mrb[0].mxu0
  %v1745 = vadd.f32 0.0, %v1744
  %v1746 = vpop.f32.mrb[0].mxu0
  %v1747 = vadd.f32 0.0, %v1746
  %v1748 = vpop.f32.mrb[0].mxu0
  %v1749 = vadd.f32 0.0, %v1748
  %v1750 = vpop.f32.mrb[0].mxu0
  %v1751 = vadd.f32 0.0, %v1750
  %1752 = vdwg.mxu0
  %1753 = vmatprep.subr.bf16.mxu0 %v1276
  %1754 = vmatpush1.bf16.msra.mxu0 %v1275
  %1755 = vmatprep.subr.bf16.mxu0 %v1284
  %1756 = vmatpush1.bf16.msra.mxu0 %v1283
  %1757 = vmatprep.subr.bf16.mxu0 %v1292
  %1758 = vmatpush1.bf16.msra.mxu0 %v1291
  %1759 = vmatprep.subr.bf16.mxu0 %v1300
  %1760 = vmatpush1.bf16.msra.mxu0 %v1299
  %1761 = vmatprep.subr.bf16.mxu0 %v1308
  %1762 = vmatpush1.bf16.msra.mxu0 %v1307
  %1763 = vmatprep.subr.bf16.mxu0 %v1316
  %1764 = vmatpush1.bf16.msra.mxu0 %v1315
  %1765 = vmatprep.subr.bf16.mxu0 %v1324
  %1766 = vmatpush1.bf16.msra.mxu0 %v1323
  %1767 = vmatprep.subr.bf16.mxu0 %v1332
  %1768 = vmatpush1.bf16.msra.mxu0 %v1331
  %1769 = vmatprep.subr.bf16.mxu0 %v1340
  %1770 = vmatpush1.bf16.msra.mxu0 %v1339
  %1771 = vmatprep.subr.bf16.mxu0 %v1348
  %1772 = vmatpush1.bf16.msra.mxu0 %v1347
  %1773 = vmatprep.subr.bf16.mxu0 %v1356
  %1774 = vmatpush1.bf16.msra.mxu0 %v1355
  %1775 = vmatprep.subr.bf16.mxu0 %v1364
  %1776 = vmatpush1.bf16.msra.mxu0 %v1363
  %1777 = vmatprep.subr.bf16.mxu0 %v1372
  %1778 = vmatpush1.bf16.msra.mxu0 %v1371
  %1779 = vmatprep.subr.bf16.mxu0 %v1380
  %1780 = vmatpush1.bf16.msra.mxu0 %v1379
  %1781 = vmatprep.subr.bf16.mxu0 %v1388
  %1782 = vmatpush1.bf16.msra.mxu0 %v1387
  %1783 = vmatprep.subr.bf16.mxu0 %v1396
  %1784 = vmatpush1.bf16.msra.mxu0 %v1395
  %1785 = vmatprep.mubr.bf16.mxu0 %v744
  %1786 = vmatmul.mubr.bf16.gmra.mrb[0].mxu0 %v743
  %v1787 = vpop.f32.mrb[0].mxu0
  %v1788 = vadd.f32 0.0, %v1787
  %v1789 = vpop.f32.mrb[0].mxu0
  %v1790 = vadd.f32 0.0, %v1789
  %v1791 = vpop.f32.mrb[0].mxu0
  %v1792 = vadd.f32 0.0, %v1791
  %v1793 = vpop.f32.mrb[0].mxu0
  %v1794 = vadd.f32 0.0, %v1793
  %1795 = vmatprep.mubr.bf16.mxu0 %v746
  %1796 = vmatmul.mubr.bf16.gmra.mrb[0].mxu0 %v745
  %v1797 = vpop.f32.mrb[0].mxu0
  %v1798 = vadd.f32 0.0, %v1797
  %v1799 = vpop.f32.mrb[0].mxu0
  %v1800 = vadd.f32 0.0, %v1799
  %v1801 = vpop.f32.mrb[0].mxu0
  %v1802 = vadd.f32 0.0, %v1801
  %v1803 = vpop.f32.mrb[0].mxu0
  %v1804 = vadd.f32 0.0, %v1803
  %1805 = vmatprep.mubr.bf16.mxu0 %v748
  %1806 = vmatmul.mubr.bf16.gmra.mrb[0].mxu0 %v747
  %v1807 = vpop.f32.mrb[0].mxu0
  %v1808 = vadd.f32 0.0, %v1807
  %v1809 = vpop.f32.mrb[0].mxu0
  %v1810 = vadd.f32 0.0, %v1809
  %v1811 = vpop.f32.mrb[0].mxu0
  %v1812 = vadd.f32 0.0, %v1811
  %v1813 = vpop.f32.mrb[0].mxu0
  %v1814 = vadd.f32 0.0, %v1813
  %1815 = vmatprep.mubr.bf16.mxu0 %v750
  %1816 = vmatmul.mubr.bf16.gmra.mrb[0].mxu0 %v749
  %v1817 = vpop.f32.mrb[0].mxu0
  %v1818 = vadd.f32 0.0, %v1817
  %v1819 = vpop.f32.mrb[0].mxu0
  %v1820 = vadd.f32 0.0, %v1819
  %v1821 = vpop.f32.mrb[0].mxu0
  %v1822 = vadd.f32 0.0, %v1821
  %v1823 = vpop.f32.mrb[0].mxu0
  %v1824 = vadd.f32 0.0, %v1823
  %1825 = vmatprep.mubr.bf16.mxu0 %v752
  %1826 = vmatmul.mubr.bf16.gmra.mrb[0].mxu0 %v751
  %v1827 = vpop.f32.mrb[0].mxu0
  %v1828 = vadd.f32 0.0, %v1827
  %v1829 = vpop.f32.mrb[0].mxu0
  %v1830 = vadd.f32 0.0, %v1829
  %v1831 = vpop.f32.mrb[0].mxu0
  %v1832 = vadd.f32 0.0, %v1831
  %v1833 = vpop.f32.mrb[0].mxu0
  %v1834 = vadd.f32 0.0, %v1833
  %1835 = vmatprep.mubr.bf16.mxu0 %v754
  %1836 = vmatmul.mubr.bf16.gmra.mrb[0].mxu0 %v753
  %v1837 = vpop.f32.mrb[0].mxu0
  %v1838 = vadd.f32 0.0, %v1837
  %v1839 = vpop.f32.mrb[0].mxu0
  %v1840 = vadd.f32 0.0, %v1839
  %v1841 = vpop.f32.mrb[0].mxu0
  %v1842 = vadd.f32 0.0, %v1841
  %v1843 = vpop.f32.mrb[0].mxu0
  %v1844 = vadd.f32 0.0, %v1843
  %1845 = vmatprep.mubr.bf16.mxu0 %v756
  %1846 = vmatmul.mubr.bf16.gmra.mrb[0].mxu0 %v755
  %v1847 = vpop.f32.mrb[0].mxu0
  %v1848 = vadd.f32 0.0, %v1847
  %v1849 = vpop.f32.mrb[0].mxu0
  %v1850 = vadd.f32 0.0, %v1849
  %v1851 = vpop.f32.mrb[0].mxu0
  %v1852 = vadd.f32 0.0, %v1851
  %v1853 = vpop.f32.mrb[0].mxu0
  %v1854 = vadd.f32 0.0, %v1853
  %1855 = vmatprep.mubr.bf16.mxu0 %v758
  %1856 = vmatmul.mubr.bf16.gmra.mrb[0].mxu0 %v757
  %v1857 = vpop.f32.mrb[0].mxu0
  %v1858 = vadd.f32 0.0, %v1857
  %v1859 = vpop.f32.mrb[0].mxu0
  %v1860 = vadd.f32 0.0, %v1859
  %v1861 = vpop.f32.mrb[0].mxu0
  %v1862 = vadd.f32 0.0, %v1861
  %v1863 = vpop.f32.mrb[0].mxu0
  %v1864 = vadd.f32 0.0, %v1863
  %1865 = vdwg.mxu0
  %1866 = vmatprep.subr.bf16.mxu0 %v1278
  %1867 = vmatpush1.bf16.msra.mxu0 %v1277
  %1868 = vmatprep.subr.bf16.mxu0 %v1286
  %1869 = vmatpush1.bf16.msra.mxu0 %v1285
  %1870 = vmatprep.subr.bf16.mxu0 %v1294
  %1871 = vmatpush1.bf16.msra.mxu0 %v1293
  %1872 = vmatprep.subr.bf16.mxu0 %v1302
  %1873 = vmatpush1.bf16.msra.mxu0 %v1301
  %1874 = vmatprep.subr.bf16.mxu0 %v1310
  %1875 = vmatpush1.bf16.msra.mxu0 %v1309
  %1876 = vmatprep.subr.bf16.mxu0 %v1318
  %1877 = vmatpush1.bf16.msra.mxu0 %v1317
  %1878 = vmatprep.subr.bf16.mxu0 %v1326
  %1879 = vmatpush1.bf16.msra.mxu0 %v1325
  %1880 = vmatprep.subr.bf16.mxu0 %v1334
  %1881 = vmatpush1.bf16.msra.mxu0 %v1333
  %1882 = vmatprep.subr.bf16.mxu0 %v1342
  %1883 = vmatpush1.bf16.msra.mxu0 %v1341
  %1884 = vmatprep.subr.bf16.mxu0 %v1350
  %1885 = vmatpush1.bf16.msra.mxu0 %v1349
  %1886 = vmatprep.subr.bf16.mxu0 %v1358
  %1887 = vmatpush1.bf16.msra.mxu0 %v1357
  %1888 = vmatprep.subr.bf16.mxu0 %v1366
  %1889 = vmatpush1.bf16.msra.mxu0 %v1365
  %1890 = vmatprep.subr.bf16.mxu0 %v1374
  %1891 = vmatpush1.bf16.msra.mxu0 %v1373
  %1892 = vmatprep.subr.bf16.mxu0 %v1382
  %1893 = vmatpush1.bf16.msra.mxu0 %v1381
  %1894 = vmatprep.subr.bf16.mxu0 %v1390
  %1895 = vmatpush1.bf16.msra.mxu0 %v1389
  %1896 = vmatprep.subr.bf16.mxu0 %v1398
  %1897 = vmatpush1.bf16.msra.mxu0 %v1397
  %1898 = vmatprep.mubr.bf16.mxu0 %v744
  %1899 = vmatmul.mubr.bf16.gmra.mrb[0].mxu0 %v743
  %v1900 = vpop.f32.mrb[0].mxu0
  %v1901 = vadd.f32 0.0, %v1900
  %v1902 = vpop.f32.mrb[0].mxu0
  %v1903 = vadd.f32 0.0, %v1902
  %v1904 = vpop.f32.mrb[0].mxu0
  %v1905 = vadd.f32 0.0, %v1904
  %v1906 = vpop.f32.mrb[0].mxu0
  %v1907 = vadd.f32 0.0, %v1906
  %1908 = vmatprep.mubr.bf16.mxu0 %v746
  %1909 = vmatmul.mubr.bf16.gmra.mrb[0].mxu0 %v745
  %v1910 = vpop.f32.mrb[0].mxu0
  %v1911 = vadd.f32 0.0, %v1910
  %v1912 = vpop.f32.mrb[0].mxu0
  %v1913 = vadd.f32 0.0, %v1912
  %v1914 = vpop.f32.mrb[0].mxu0
  %v1915 = vadd.f32 0.0, %v1914
  %v1916 = vpop.f32.mrb[0].mxu0
  %v1917 = vadd.f32 0.0, %v1916
  %1918 = vmatprep.mubr.bf16.mxu0 %v748
  %1919 = vmatmul.mubr.bf16.gmra.mrb[0].mxu0 %v747
  %v1920 = vpop.f32.mrb[0].mxu0
  %v1921 = vadd.f32 0.0, %v1920
  %v1922 = vpop.f32.mrb[0].mxu0
  %v1923 = vadd.f32 0.0, %v1922
  %v1924 = vpop.f32.mrb[0].mxu0
  %v1925 = vadd.f32 0.0, %v1924
  %v1926 = vpop.f32.mrb[0].mxu0
  %v1927 = vadd.f32 0.0, %v1926
  %1928 = vmatprep.mubr.bf16.mxu0 %v750
  %1929 = vmatmul.mubr.bf16.gmra.mrb[0].mxu0 %v749
  %v1930 = vpop.f32.mrb[0].mxu0
  %v1931 = vadd.f32 0.0, %v1930
  %v1932 = vpop.f32.mrb[0].mxu0
  %v1933 = vadd.f32 0.0, %v1932
  %v1934 = vpop.f32.mrb[0].mxu0
  %v1935 = vadd.f32 0.0, %v1934
  %v1936 = vpop.f32.mrb[0].mxu0
  %v1937 = vadd.f32 0.0, %v1936
  %1938 = vmatprep.mubr.bf16.mxu0 %v752
  %1939 = vmatmul.mubr.bf16.gmra.mrb[0].mxu0 %v751
  %v1940 = vpop.f32.mrb[0].mxu0
  %v1941 = vadd.f32 0.0, %v1940
  %v1942 = vpop.f32.mrb[0].mxu0
  %v1943 = vadd.f32 0.0, %v1942
  %v1944 = vpop.f32.mrb[0].mxu0
  %v1945 = vadd.f32 0.0, %v1944
  %v1946 = vpop.f32.mrb[0].mxu0
  %v1947 = vadd.f32 0.0, %v1946
  %1948 = vmatprep.mubr.bf16.mxu0 %v754
  %1949 = vmatmul.mubr.bf16.gmra.mrb[0].mxu0 %v753
  %v1950 = vpop.f32.mrb[0].mxu0
  %v1951 = vadd.f32 0.0, %v1950
  %v1952 = vpop.f32.mrb[0].mxu0
  %v1953 = vadd.f32 0.0, %v1952
  %v1954 = vpop.f32.mrb[0].mxu0
  %v1955 = vadd.f32 0.0, %v1954
  %v1956 = vpop.f32.mrb[0].mxu0
  %v1957 = vadd.f32 0.0, %v1956
  %1958 = vmatprep.mubr.bf16.mxu0 %v756
  %1959 = vmatmul.mubr.bf16.gmra.mrb[0].mxu0 %v755
  %v1960 = vpop.f32.mrb[0].mxu0
  %v1961 = vadd.f32 0.0, %v1960
  %v1962 = vpop.f32.mrb[0].mxu0
  %v1963 = vadd.f32 0.0, %v1962
  %v1964 = vpop.f32.mrb[0].mxu0
  %v1965 = vadd.f32 0.0, %v1964
  %v1966 = vpop.f32.mrb[0].mxu0
  %v1967 = vadd.f32 0.0, %v1966
  %1968 = vmatprep.mubr.bf16.mxu0 %v758
  %1969 = vmatmul.mubr.bf16.gmra.mrb[0].mxu0 %v757
  %v1970 = vpop.f32.mrb[0].mxu0
  %v1971 = vadd.f32 0.0, %v1970
  %v1972 = vpop.f32.mrb[0].mxu0
  %v1973 = vadd.f32 0.0, %v1972
  %v1974 = vpop.f32.mrb[0].mxu0
  %v1975 = vadd.f32 0.0, %v1974
  %v1976 = vpop.f32.mrb[0].mxu0
  %v1977 = vadd.f32 0.0, %v1976
  %1978 = vdwg.mxu0
  %v1979 = vpack.c.bf16 %v1566, %v1562
  %v1980 = vpack.c.bf16 %v1568, %v1564
  %v1981 = vpack.c.bf16 %v1679, %v1675
  %v1982 = vpack.c.bf16 %v1681, %v1677
  %v1983 = vpack.c.bf16 %v1792, %v1788
  %v1984 = vpack.c.bf16 %v1794, %v1790
  %v1985 = vpack.c.bf16 %v1905, %v1901
  %v1986 = vpack.c.bf16 %v1907, %v1903
  %v1987 = vpack.c.bf16 %v1576, %v1572
  %v1988 = vpack.c.bf16 %v1578, %v1574
  %v1989 = vpack.c.bf16 %v1689, %v1685
  %v1990 = vpack.c.bf16 %v1691, %v1687
  %v1991 = vpack.c.bf16 %v1802, %v1798
  %v1992 = vpack.c.bf16 %v1804, %v1800
  %v1993 = vpack.c.bf16 %v1915, %v1911
  %v1994 = vpack.c.bf16 %v1917, %v1913
  %v1995 = vpack.c.bf16 %v1586, %v1582
  %v1996 = vpack.c.bf16 %v1588, %v1584
  %v1997 = vpack.c.bf16 %v1699, %v1695
  %v1998 = vpack.c.bf16 %v1701, %v1697
  %v1999 = vpack.c.bf16 %v1812, %v1808
  %v2000 = vpack.c.bf16 %v1814, %v1810
  %v2001 = vpack.c.bf16 %v1925, %v1921
  %v2002 = vpack.c.bf16 %v1927, %v1923
  %v2003 = vpack.c.bf16 %v1596, %v1592
  %v2004 = vpack.c.bf16 %v1598, %v1594
  %v2005 = vpack.c.bf16 %v1709, %v1705
  %v2006 = vpack.c.bf16 %v1711, %v1707
  %v2007 = vpack.c.bf16 %v1822, %v1818
  %v2008 = vpack.c.bf16 %v1824, %v1820
  %v2009 = vpack.c.bf16 %v1935, %v1931
  %v2010 = vpack.c.bf16 %v1937, %v1933
  %v2011 = vpack.c.bf16 %v1606, %v1602
  %v2012 = vpack.c.bf16 %v1608, %v1604
  %v2013 = vpack.c.bf16 %v1719, %v1715
  %v2014 = vpack.c.bf16 %v1721, %v1717
  %v2015 = vpack.c.bf16 %v1832, %v1828
  %v2016 = vpack.c.bf16 %v1834, %v1830
  %v2017 = vpack.c.bf16 %v1945, %v1941
  %v2018 = vpack.c.bf16 %v1947, %v1943
  %v2019 = vpack.c.bf16 %v1616, %v1612
  %v2020 = vpack.c.bf16 %v1618, %v1614
  %v2021 = vpack.c.bf16 %v1729, %v1725
  %v2022 = vpack.c.bf16 %v1731, %v1727
  %v2023 = vpack.c.bf16 %v1842, %v1838
  %v2024 = vpack.c.bf16 %v1844, %v1840
  %v2025 = vpack.c.bf16 %v1955, %v1951
  %v2026 = vpack.c.bf16 %v1957, %v1953
  %v2027 = vpack.c.bf16 %v1626, %v1622
  %v2028 = vpack.c.bf16 %v1628, %v1624
  %v2029 = vpack.c.bf16 %v1739, %v1735
  %v2030 = vpack.c.bf16 %v1741, %v1737
  %v2031 = vpack.c.bf16 %v1852, %v1848
  %v2032 = vpack.c.bf16 %v1854, %v1850
  %v2033 = vpack.c.bf16 %v1965, %v1961
  %v2034 = vpack.c.bf16 %v1967, %v1963
  %v2035 = vpack.c.bf16 %v1636, %v1632
  %v2036 = vpack.c.bf16 %v1638, %v1634
  %v2037 = vpack.c.bf16 %v1749, %v1745
  %v2038 = vpack.c.bf16 %v1751, %v1747
  %v2039 = vpack.c.bf16 %v1862, %v1858
  %v2040 = vpack.c.bf16 %v1864, %v1860
  %v2041 = vpack.c.bf16 %v1975, %v1971
  %v2042 = vpack.c.bf16 %v1977, %v1973
  %v2043 = vmax.bf16 %v1979, 0
  %v2044 = vmax.bf16 %v1980, 0
  %v2045 = vmax.bf16 %v1981, 0
  %v2046 = vmax.bf16 %v1982, 0
  %v2047 = vmax.bf16 %v1983, 0
  %v2048 = vmax.bf16 %v1984, 0
  %v2049 = vmax.bf16 %v1985, 0
  %v2050 = vmax.bf16 %v1986, 0
  %v2051 = vmax.bf16 %v1987, 0
  %v2052 = vmax.bf16 %v1988, 0
  %v2053 = vmax.bf16 %v1989, 0
  %v2054 = vmax.bf16 %v1990, 0
  %v2055 = vmax.bf16 %v1991, 0
  %v2056 = vmax.bf16 %v1992, 0
  %v2057 = vmax.bf16 %v1993, 0
  %v2058 = vmax.bf16 %v1994, 0
  %v2059 = vmax.bf16 %v1995, 0
  %v2060 = vmax.bf16 %v1996, 0
  %v2061 = vmax.bf16 %v1997, 0
  %v2062 = vmax.bf16 %v1998, 0
  %v2063 = vmax.bf16 %v1999, 0
  %v2064 = vmax.bf16 %v2000, 0
  %v2065 = vmax.bf16 %v2001, 0
  %v2066 = vmax.bf16 %v2002, 0
  %v2067 = vmax.bf16 %v2003, 0
  %v2068 = vmax.bf16 %v2004, 0
  %v2069 = vmax.bf16 %v2005, 0
  %v2070 = vmax.bf16 %v2006, 0
  %v2071 = vmax.bf16 %v2007, 0
  %v2072 = vmax.bf16 %v2008, 0
  %v2073 = vmax.bf16 %v2009, 0
  %v2074 = vmax.bf16 %v2010, 0
  %v2075 = vmax.bf16 %v2011, 0
  %v2076 = vmax.bf16 %v2012, 0
  %v2077 = vmax.bf16 %v2013, 0
  %v2078 = vmax.bf16 %v2014, 0
  %v2079 = vmax.bf16 %v2015, 0
  %v2080 = vmax.bf16 %v2016, 0
  %v2081 = vmax.bf16 %v2017, 0
  %v2082 = vmax.bf16 %v2018, 0
  %v2083 = vmax.bf16 %v2019, 0
  %v2084 = vmax.bf16 %v2020, 0
  %v2085 = vmax.bf16 %v2021, 0
  %v2086 = vmax.bf16 %v2022, 0
  %v2087 = vmax.bf16 %v2023, 0
  %v2088 = vmax.bf16 %v2024, 0
  %v2089 = vmax.bf16 %v2025, 0
  %v2090 = vmax.bf16 %v2026, 0
  %v2091 = vmax.bf16 %v2027, 0
  %v2092 = vmax.bf16 %v2028, 0
  %v2093 = vmax.bf16 %v2029, 0
  %v2094 = vmax.bf16 %v2030, 0
  %v2095 = vmax.bf16 %v2031, 0
  %v2096 = vmax.bf16 %v2032, 0
  %v2097 = vmax.bf16 %v2033, 0
  %v2098 = vmax.bf16 %v2034, 0
  %v2099 = vmax.bf16 %v2035, 0
  %v2100 = vmax.bf16 %v2036, 0
  %v2101 = vmax.bf16 %v2037, 0
  %v2102 = vmax.bf16 %v2038, 0
  %v2103 = vmax.bf16 %v2039, 0
  %v2104 = vmax.bf16 %v2040, 0
  %v2105 = vmax.bf16 %v2041, 0
  %v2106 = vmax.bf16 %v2042, 0
  %v2107 = vmul.bf16 %v2043, %v2043
  %v2108 = vmul.bf16 %v2044, %v2044
  %v2109 = vmul.bf16 %v2045, %v2045
  %v2110 = vmul.bf16 %v2046, %v2046
  %v2111 = vmul.bf16 %v2047, %v2047
  %v2112 = vmul.bf16 %v2048, %v2048
  %v2113 = vmul.bf16 %v2049, %v2049
  %v2114 = vmul.bf16 %v2050, %v2050
  %v2115 = vmul.bf16 %v2051, %v2051
  %v2116 = vmul.bf16 %v2052, %v2052
  %v2117 = vmul.bf16 %v2053, %v2053
  %v2118 = vmul.bf16 %v2054, %v2054
  %v2119 = vmul.bf16 %v2055, %v2055
  %v2120 = vmul.bf16 %v2056, %v2056
  %v2121 = vmul.bf16 %v2057, %v2057
  %v2122 = vmul.bf16 %v2058, %v2058
  %v2123 = vmul.bf16 %v2059, %v2059
  %v2124 = vmul.bf16 %v2060, %v2060
  %v2125 = vmul.bf16 %v2061, %v2061
  %v2126 = vmul.bf16 %v2062, %v2062
  %v2127 = vmul.bf16 %v2063, %v2063
  %v2128 = vmul.bf16 %v2064, %v2064
  %v2129 = vmul.bf16 %v2065, %v2065
  %v2130 = vmul.bf16 %v2066, %v2066
  %v2131 = vmul.bf16 %v2067, %v2067
  %v2132 = vmul.bf16 %v2068, %v2068
  %v2133 = vmul.bf16 %v2069, %v2069
  %v2134 = vmul.bf16 %v2070, %v2070
  %v2135 = vmul.bf16 %v2071, %v2071
  %v2136 = vmul.bf16 %v2072, %v2072
  %v2137 = vmul.bf16 %v2073, %v2073
  %v2138 = vmul.bf16 %v2074, %v2074
  %v2139 = vmul.bf16 %v2075, %v2075
  %v2140 = vmul.bf16 %v2076, %v2076
  %v2141 = vmul.bf16 %v2077, %v2077
  %v2142 = vmul.bf16 %v2078, %v2078
  %v2143 = vmul.bf16 %v2079, %v2079
  %v2144 = vmul.bf16 %v2080, %v2080
  %v2145 = vmul.bf16 %v2081, %v2081
  %v2146 = vmul.bf16 %v2082, %v2082
  %v2147 = vmul.bf16 %v2083, %v2083
  %v2148 = vmul.bf16 %v2084, %v2084
  %v2149 = vmul.bf16 %v2085, %v2085
  %v2150 = vmul.bf16 %v2086, %v2086
  %v2151 = vmul.bf16 %v2087, %v2087
  %v2152 = vmul.bf16 %v2088, %v2088
  %v2153 = vmul.bf16 %v2089, %v2089
  %v2154 = vmul.bf16 %v2090, %v2090
  %v2155 = vmul.bf16 %v2091, %v2091
  %v2156 = vmul.bf16 %v2092, %v2092
  %v2157 = vmul.bf16 %v2093, %v2093
  %v2158 = vmul.bf16 %v2094, %v2094
  %v2159 = vmul.bf16 %v2095, %v2095
  %v2160 = vmul.bf16 %v2096, %v2096
  %v2161 = vmul.bf16 %v2097, %v2097
  %v2162 = vmul.bf16 %v2098, %v2098
  %v2163 = vmul.bf16 %v2099, %v2099
  %v2164 = vmul.bf16 %v2100, %v2100
  %v2165 = vmul.bf16 %v2101, %v2101
  %v2166 = vmul.bf16 %v2102, %v2102
  %v2167 = vmul.bf16 %v2103, %v2103
  %v2168 = vmul.bf16 %v2104, %v2104
  %v2169 = vmul.bf16 %v2105, %v2105
  %v2170 = vmul.bf16 %v2106, %v2106
  %v2171 = vld [vmem:[%s4] sm:$0xff]
  %v2172 = vld [vmem:[%s4 + $0x8] sm:$0xff]
  %v2173 = vld [vmem:[%s4 + $0x10] sm:$0xff]
  %v2174 = vld [vmem:[%s4 + $0x18] sm:$0xff]
  %v2175 = vld [vmem:[%s4 + $0x20] sm:$0xff]
  %v2176 = vld [vmem:[%s4 + $0x28] sm:$0xff]
  %v2177 = vld [vmem:[%s4 + $0x30] sm:$0xff]
  %v2178 = vld [vmem:[%s4 + $0x38] sm:$0xff]
  %v2179 = vld [vmem:[%s4 + $0x40] sm:$0xff]
  %v2180 = vld [vmem:[%s4 + $0x48] sm:$0xff]
  %v2181 = vld [vmem:[%s4 + $0x50] sm:$0xff]
  %v2182 = vld [vmem:[%s4 + $0x58] sm:$0xff]
  %v2183 = vld [vmem:[%s4 + $0x60] sm:$0xff]
  %v2184 = vld [vmem:[%s4 + $0x68] sm:$0xff]
  %v2185 = vld [vmem:[%s4 + $0x70] sm:$0xff]
  %v2186 = vld [vmem:[%s4 + $0x78] sm:$0xff]
  %v2187 = vld [vmem:[%s4 + $0x80] sm:$0xff]
  %v2188 = vld [vmem:[%s4 + $0x88] sm:$0xff]
  %v2189 = vld [vmem:[%s4 + $0x90] sm:$0xff]
  %v2190 = vld [vmem:[%s4 + $0x98] sm:$0xff]
  %v2191 = vld [vmem:[%s4 + $0xa0] sm:$0xff]
  %v2192 = vld [vmem:[%s4 + $0xa8] sm:$0xff]
  %v2193 = vld [vmem:[%s4 + $0xb0] sm:$0xff]
  %v2194 = vld [vmem:[%s4 + $0xb8] sm:$0xff]
  %v2195 = vld [vmem:[%s4 + $0xc0] sm:$0xff]
  %v2196 = vld [vmem:[%s4 + $0xc8] sm:$0xff]
  %v2197 = vld [vmem:[%s4 + $0xd0] sm:$0xff]
  %v2198 = vld [vmem:[%s4 + $0xd8] sm:$0xff]
  %v2199 = vld [vmem:[%s4 + $0xe0] sm:$0xff]
  %v2200 = vld [vmem:[%s4 + $0xe8] sm:$0xff]
  %v2201 = vld [vmem:[%s4 + $0xf0] sm:$0xff]
  %v2202 = vld [vmem:[%s4 + $0xf8] sm:$0xff]
  %v2203 = vld [vmem:[%s4 + $0x100] sm:$0xff]
  %v2204 = vld [vmem:[%s4 + $0x108] sm:$0xff]
  %v2205 = vld [vmem:[%s4 + $0x110] sm:$0xff]
  %v2206 = vld [vmem:[%s4 + $0x118] sm:$0xff]
  %v2207 = vld [vmem:[%s4 + $0x120] sm:$0xff]
  %v2208 = vld [vmem:[%s4 + $0x128] sm:$0xff]
  %v2209 = vld [vmem:[%s4 + $0x130] sm:$0xff]
  %v2210 = vld [vmem:[%s4 + $0x138] sm:$0xff]
  %v2211 = vld [vmem:[%s4 + $0x140] sm:$0xff]
  %v2212 = vld [vmem:[%s4 + $0x148] sm:$0xff]
  %v2213 = vld [vmem:[%s4 + $0x150] sm:$0xff]
  %v2214 = vld [vmem:[%s4 + $0x158] sm:$0xff]
  %v2215 = vld [vmem:[%s4 + $0x160] sm:$0xff]
  %v2216 = vld [vmem:[%s4 + $0x168] sm:$0xff]
  %v2217 = vld [vmem:[%s4 + $0x170] sm:$0xff]
  %v2218 = vld [vmem:[%s4 + $0x178] sm:$0xff]
  %v2219 = vld [vmem:[%s4 + $0x180] sm:$0xff]
  %v2220 = vld [vmem:[%s4 + $0x188] sm:$0xff]
  %v2221 = vld [vmem:[%s4 + $0x190] sm:$0xff]
  %v2222 = vld [vmem:[%s4 + $0x198] sm:$0xff]
  %v2223 = vld [vmem:[%s4 + $0x1a0] sm:$0xff]
  %v2224 = vld [vmem:[%s4 + $0x1a8] sm:$0xff]
  %v2225 = vld [vmem:[%s4 + $0x1b0] sm:$0xff]
  %v2226 = vld [vmem:[%s4 + $0x1b8] sm:$0xff]
  %v2227 = vld [vmem:[%s4 + $0x1c0] sm:$0xff]
  %v2228 = vld [vmem:[%s4 + $0x1c8] sm:$0xff]
  %v2229 = vld [vmem:[%s4 + $0x1d0] sm:$0xff]
  %v2230 = vld [vmem:[%s4 + $0x1d8] sm:$0xff]
  %v2231 = vld [vmem:[%s4 + $0x1e0] sm:$0xff]
  %v2232 = vld [vmem:[%s4 + $0x1e8] sm:$0xff]
  %v2233 = vld [vmem:[%s4 + $0x1f0] sm:$0xff]
  %v2234 = vld [vmem:[%s4 + $0x1f8] sm:$0xff]
  %v2235 = vld [vmem:[%s4 + $0x200] sm:$0xff]
  %v2236 = vld [vmem:[%s4 + $0x208] sm:$0xff]
  %v2237 = vld [vmem:[%s4 + $0x210] sm:$0xff]
  %v2238 = vld [vmem:[%s4 + $0x218] sm:$0xff]
  %v2239 = vld [vmem:[%s4 + $0x220] sm:$0xff]
  %v2240 = vld [vmem:[%s4 + $0x228] sm:$0xff]
  %v2241 = vld [vmem:[%s4 + $0x230] sm:$0xff]
  %v2242 = vld [vmem:[%s4 + $0x238] sm:$0xff]
  %v2243 = vld [vmem:[%s4 + $0x240] sm:$0xff]
  %v2244 = vld [vmem:[%s4 + $0x248] sm:$0xff]
  %v2245 = vld [vmem:[%s4 + $0x250] sm:$0xff]
  %v2246 = vld [vmem:[%s4 + $0x258] sm:$0xff]
  %v2247 = vld [vmem:[%s4 + $0x260] sm:$0xff]
  %v2248 = vld [vmem:[%s4 + $0x268] sm:$0xff]
  %v2249 = vld [vmem:[%s4 + $0x270] sm:$0xff]
  %v2250 = vld [vmem:[%s4 + $0x278] sm:$0xff]
  %v2251 = vld [vmem:[%s4 + $0x280] sm:$0xff]
  %v2252 = vld [vmem:[%s4 + $0x288] sm:$0xff]
  %v2253 = vld [vmem:[%s4 + $0x290] sm:$0xff]
  %v2254 = vld [vmem:[%s4 + $0x298] sm:$0xff]
  %v2255 = vld [vmem:[%s4 + $0x2a0] sm:$0xff]
  %v2256 = vld [vmem:[%s4 + $0x2a8] sm:$0xff]
  %v2257 = vld [vmem:[%s4 + $0x2b0] sm:$0xff]
  %v2258 = vld [vmem:[%s4 + $0x2b8] sm:$0xff]
  %v2259 = vld [vmem:[%s4 + $0x2c0] sm:$0xff]
  %v2260 = vld [vmem:[%s4 + $0x2c8] sm:$0xff]
  %v2261 = vld [vmem:[%s4 + $0x2d0] sm:$0xff]
  %v2262 = vld [vmem:[%s4 + $0x2d8] sm:$0xff]
  %v2263 = vld [vmem:[%s4 + $0x2e0] sm:$0xff]
  %v2264 = vld [vmem:[%s4 + $0x2e8] sm:$0xff]
  %v2265 = vld [vmem:[%s4 + $0x2f0] sm:$0xff]
  %v2266 = vld [vmem:[%s4 + $0x2f8] sm:$0xff]
  %v2267 = vld [vmem:[%s4 + $0x300] sm:$0xff]
  %v2268 = vld [vmem:[%s4 + $0x308] sm:$0xff]
  %v2269 = vld [vmem:[%s4 + $0x310] sm:$0xff]
  %v2270 = vld [vmem:[%s4 + $0x318] sm:$0xff]
  %v2271 = vld [vmem:[%s4 + $0x320] sm:$0xff]
  %v2272 = vld [vmem:[%s4 + $0x328] sm:$0xff]
  %v2273 = vld [vmem:[%s4 + $0x330] sm:$0xff]
  %v2274 = vld [vmem:[%s4 + $0x338] sm:$0xff]
  %v2275 = vld [vmem:[%s4 + $0x340] sm:$0xff]
  %v2276 = vld [vmem:[%s4 + $0x348] sm:$0xff]
  %v2277 = vld [vmem:[%s4 + $0x350] sm:$0xff]
  %v2278 = vld [vmem:[%s4 + $0x358] sm:$0xff]
  %v2279 = vld [vmem:[%s4 + $0x360] sm:$0xff]
  %v2280 = vld [vmem:[%s4 + $0x368] sm:$0xff]
  %v2281 = vld [vmem:[%s4 + $0x370] sm:$0xff]
  %v2282 = vld [vmem:[%s4 + $0x378] sm:$0xff]
  %v2283 = vld [vmem:[%s4 + $0x380] sm:$0xff]
  %v2284 = vld [vmem:[%s4 + $0x388] sm:$0xff]
  %v2285 = vld [vmem:[%s4 + $0x390] sm:$0xff]
  %v2286 = vld [vmem:[%s4 + $0x398] sm:$0xff]
  %v2287 = vld [vmem:[%s4 + $0x3a0] sm:$0xff]
  %v2288 = vld [vmem:[%s4 + $0x3a8] sm:$0xff]
  %v2289 = vld [vmem:[%s4 + $0x3b0] sm:$0xff]
  %v2290 = vld [vmem:[%s4 + $0x3b8] sm:$0xff]
  %v2291 = vld [vmem:[%s4 + $0x3c0] sm:$0xff]
  %v2292 = vld [vmem:[%s4 + $0x3c8] sm:$0xff]
  %v2293 = vld [vmem:[%s4 + $0x3d0] sm:$0xff]
  %v2294 = vld [vmem:[%s4 + $0x3d8] sm:$0xff]
  %v2295 = vld [vmem:[%s4 + $0x3e0] sm:$0xff]
  %v2296 = vld [vmem:[%s4 + $0x3e8] sm:$0xff]
  %v2297 = vld [vmem:[%s4 + $0x3f0] sm:$0xff]
  %v2298 = vld [vmem:[%s4 + $0x3f8] sm:$0xff]
  %v2427 = vunpack.c.l.b16 %v2171
  %v2428 = vunpack.c.h.b16 %v2171
  %v2429 = vunpack.c.l.b16 %v2172
  %v2430 = vunpack.c.h.b16 %v2172
  %v2431 = vunpack.c.l.b16 %v2173
  %v2432 = vunpack.c.h.b16 %v2173
  %v2433 = vunpack.c.l.b16 %v2174
  %v2434 = vunpack.c.h.b16 %v2174
  %v2435 = vunpack.c.l.b16 %v2175
  %v2436 = vunpack.c.h.b16 %v2175
  %v2437 = vunpack.c.l.b16 %v2176
  %v2438 = vunpack.c.h.b16 %v2176
  %v2439 = vunpack.c.l.b16 %v2177
  %v2440 = vunpack.c.h.b16 %v2177
  %v2441 = vunpack.c.l.b16 %v2178
  %v2442 = vunpack.c.h.b16 %v2178
  %v2443 = vunpack.c.l.b16 %v2179
  %v2444 = vunpack.c.h.b16 %v2179
  %v2445 = vunpack.c.l.b16 %v2180
  %v2446 = vunpack.c.h.b16 %v2180
  %v2447 = vunpack.c.l.b16 %v2181
  %v2448 = vunpack.c.h.b16 %v2181
  %v2449 = vunpack.c.l.b16 %v2182
  %v2450 = vunpack.c.h.b16 %v2182
  %v2451 = vunpack.c.l.b16 %v2183
  %v2452 = vunpack.c.h.b16 %v2183
  %v2453 = vunpack.c.l.b16 %v2184
  %v2454 = vunpack.c.h.b16 %v2184
  %v2455 = vunpack.c.l.b16 %v2185
  %v2456 = vunpack.c.h.b16 %v2185
  %v2457 = vunpack.c.l.b16 %v2186
  %v2458 = vunpack.c.h.b16 %v2186
  %v2459 = vunpack.c.l.b16 %v2187
  %v2460 = vunpack.c.h.b16 %v2187
  %v2461 = vunpack.c.l.b16 %v2188
  %v2462 = vunpack.c.h.b16 %v2188
  %v2463 = vunpack.c.l.b16 %v2189
  %v2464 = vunpack.c.h.b16 %v2189
  %v2465 = vunpack.c.l.b16 %v2190
  %v2466 = vunpack.c.h.b16 %v2190
  %v2467 = vunpack.c.l.b16 %v2191
  %v2468 = vunpack.c.h.b16 %v2191
  %v2469 = vunpack.c.l.b16 %v2192
  %v2470 = vunpack.c.h.b16 %v2192
  %v2471 = vunpack.c.l.b16 %v2193
  %v2472 = vunpack.c.h.b16 %v2193
  %v2473 = vunpack.c.l.b16 %v2194
  %v2474 = vunpack.c.h.b16 %v2194
  %v2475 = vunpack.c.l.b16 %v2195
  %v2476 = vunpack.c.h.b16 %v2195
  %v2477 = vunpack.c.l.b16 %v2196
  %v2478 = vunpack.c.h.b16 %v2196
  %v2479 = vunpack.c.l.b16 %v2197
  %v2480 = vunpack.c.h.b16 %v2197
  %v2481 = vunpack.c.l.b16 %v2198
  %v2482 = vunpack.c.h.b16 %v2198
  %v2483 = vunpack.c.l.b16 %v2199
  %v2484 = vunpack.c.h.b16 %v2199
  %v2485 = vunpack.c.l.b16 %v2200
  %v2486 = vunpack.c.h.b16 %v2200
  %v2487 = vunpack.c.l.b16 %v2201
  %v2488 = vunpack.c.h.b16 %v2201
  %v2489 = vunpack.c.l.b16 %v2202
  %v2490 = vunpack.c.h.b16 %v2202
  %v2491 = vunpack.c.l.b16 %v2203
  %v2492 = vunpack.c.h.b16 %v2203
  %v2493 = vunpack.c.l.b16 %v2204
  %v2494 = vunpack.c.h.b16 %v2204
  %v2495 = vunpack.c.l.b16 %v2205
  %v2496 = vunpack.c.h.b16 %v2205
  %v2497 = vunpack.c.l.b16 %v2206
  %v2498 = vunpack.c.h.b16 %v2206
  %v2499 = vunpack.c.l.b16 %v2207
  %v2500 = vunpack.c.h.b16 %v2207
  %v2501 = vunpack.c.l.b16 %v2208
  %v2502 = vunpack.c.h.b16 %v2208
  %v2503 = vunpack.c.l.b16 %v2209
  %v2504 = vunpack.c.h.b16 %v2209
  %v2505 = vunpack.c.l.b16 %v2210
  %v2506 = vunpack.c.h.b16 %v2210
  %v2507 = vunpack.c.l.b16 %v2211
  %v2508 = vunpack.c.h.b16 %v2211
  %v2509 = vunpack.c.l.b16 %v2212
  %v2510 = vunpack.c.h.b16 %v2212
  %v2511 = vunpack.c.l.b16 %v2213
  %v2512 = vunpack.c.h.b16 %v2213
  %v2513 = vunpack.c.l.b16 %v2214
  %v2514 = vunpack.c.h.b16 %v2214
  %v2515 = vunpack.c.l.b16 %v2215
  %v2516 = vunpack.c.h.b16 %v2215
  %v2517 = vunpack.c.l.b16 %v2216
  %v2518 = vunpack.c.h.b16 %v2216
  %v2519 = vunpack.c.l.b16 %v2217
  %v2520 = vunpack.c.h.b16 %v2217
  %v2521 = vunpack.c.l.b16 %v2218
  %v2522 = vunpack.c.h.b16 %v2218
  %v2523 = vunpack.c.l.b16 %v2219
  %v2524 = vunpack.c.h.b16 %v2219
  %v2525 = vunpack.c.l.b16 %v2220
  %v2526 = vunpack.c.h.b16 %v2220
  %v2527 = vunpack.c.l.b16 %v2221
  %v2528 = vunpack.c.h.b16 %v2221
  %v2529 = vunpack.c.l.b16 %v2222
  %v2530 = vunpack.c.h.b16 %v2222
  %v2531 = vunpack.c.l.b16 %v2223
  %v2532 = vunpack.c.h.b16 %v2223
  %v2533 = vunpack.c.l.b16 %v2224
  %v2534 = vunpack.c.h.b16 %v2224
  %v2535 = vunpack.c.l.b16 %v2225
  %v2536 = vunpack.c.h.b16 %v2225
  %v2537 = vunpack.c.l.b16 %v2226
  %v2538 = vunpack.c.h.b16 %v2226
  %v2539 = vunpack.c.l.b16 %v2227
  %v2540 = vunpack.c.h.b16 %v2227
  %v2541 = vunpack.c.l.b16 %v2228
  %v2542 = vunpack.c.h.b16 %v2228
  %v2543 = vunpack.c.l.b16 %v2229
  %v2544 = vunpack.c.h.b16 %v2229
  %v2545 = vunpack.c.l.b16 %v2230
  %v2546 = vunpack.c.h.b16 %v2230
  %v2547 = vunpack.c.l.b16 %v2231
  %v2548 = vunpack.c.h.b16 %v2231
  %v2549 = vunpack.c.l.b16 %v2232
  %v2550 = vunpack.c.h.b16 %v2232
  %v2551 = vunpack.c.l.b16 %v2233
  %v2552 = vunpack.c.h.b16 %v2233
  %v2553 = vunpack.c.l.b16 %v2234
  %v2554 = vunpack.c.h.b16 %v2234
  %v2555 = vunpack.c.l.b16 %v2235
  %v2556 = vunpack.c.h.b16 %v2235
  %v2557 = vunpack.c.l.b16 %v2236
  %v2558 = vunpack.c.h.b16 %v2236
  %v2559 = vunpack.c.l.b16 %v2237
  %v2560 = vunpack.c.h.b16 %v2237
  %v2561 = vunpack.c.l.b16 %v2238
  %v2562 = vunpack.c.h.b16 %v2238
  %v2563 = vunpack.c.l.b16 %v2239
  %v2564 = vunpack.c.h.b16 %v2239
  %v2565 = vunpack.c.l.b16 %v2240
  %v2566 = vunpack.c.h.b16 %v2240
  %v2567 = vunpack.c.l.b16 %v2241
  %v2568 = vunpack.c.h.b16 %v2241
  %v2569 = vunpack.c.l.b16 %v2242
  %v2570 = vunpack.c.h.b16 %v2242
  %v2571 = vunpack.c.l.b16 %v2243
  %v2572 = vunpack.c.h.b16 %v2243
  %v2573 = vunpack.c.l.b16 %v2244
  %v2574 = vunpack.c.h.b16 %v2244
  %v2575 = vunpack.c.l.b16 %v2245
  %v2576 = vunpack.c.h.b16 %v2245
  %v2577 = vunpack.c.l.b16 %v2246
  %v2578 = vunpack.c.h.b16 %v2246
  %v2579 = vunpack.c.l.b16 %v2247
  %v2580 = vunpack.c.h.b16 %v2247
  %v2581 = vunpack.c.l.b16 %v2248
  %v2582 = vunpack.c.h.b16 %v2248
  %v2583 = vunpack.c.l.b16 %v2249
  %v2584 = vunpack.c.h.b16 %v2249
  %v2585 = vunpack.c.l.b16 %v2250
  %v2586 = vunpack.c.h.b16 %v2250
  %v2587 = vunpack.c.l.b16 %v2251
  %v2588 = vunpack.c.h.b16 %v2251
  %v2589 = vunpack.c.l.b16 %v2252
  %v2590 = vunpack.c.h.b16 %v2252
  %v2591 = vunpack.c.l.b16 %v2253
  %v2592 = vunpack.c.h.b16 %v2253
  %v2593 = vunpack.c.l.b16 %v2254
  %v2594 = vunpack.c.h.b16 %v2254
  %v2595 = vunpack.c.l.b16 %v2255
  %v2596 = vunpack.c.h.b16 %v2255
  %v2597 = vunpack.c.l.b16 %v2256
  %v2598 = vunpack.c.h.b16 %v2256
  %v2599 = vunpack.c.l.b16 %v2257
  %v2600 = vunpack.c.h.b16 %v2257
  %v2601 = vunpack.c.l.b16 %v2258
  %v2602 = vunpack.c.h.b16 %v2258
  %v2603 = vunpack.c.l.b16 %v2259
  %v2604 = vunpack.c.h.b16 %v2259
  %v2605 = vunpack.c.l.b16 %v2260
  %v2606 = vunpack.c.h.b16 %v2260
  %v2607 = vunpack.c.l.b16 %v2261
  %v2608 = vunpack.c.h.b16 %v2261
  %v2609 = vunpack.c.l.b16 %v2262
  %v2610 = vunpack.c.h.b16 %v2262
  %v2611 = vunpack.c.l.b16 %v2263
  %v2612 = vunpack.c.h.b16 %v2263
  %v2613 = vunpack.c.l.b16 %v2264
  %v2614 = vunpack.c.h.b16 %v2264
  %v2615 = vunpack.c.l.b16 %v2265
  %v2616 = vunpack.c.h.b16 %v2265
  %v2617 = vunpack.c.l.b16 %v2266
  %v2618 = vunpack.c.h.b16 %v2266
  %v2619 = vunpack.c.l.b16 %v2267
  %v2620 = vunpack.c.h.b16 %v2267
  %v2621 = vunpack.c.l.b16 %v2268
  %v2622 = vunpack.c.h.b16 %v2268
  %v2623 = vunpack.c.l.b16 %v2269
  %v2624 = vunpack.c.h.b16 %v2269
  %v2625 = vunpack.c.l.b16 %v2270
  %v2626 = vunpack.c.h.b16 %v2270
  %v2627 = vunpack.c.l.b16 %v2271
  %v2628 = vunpack.c.h.b16 %v2271
  %v2629 = vunpack.c.l.b16 %v2272
  %v2630 = vunpack.c.h.b16 %v2272
  %v2631 = vunpack.c.l.b16 %v2273
  %v2632 = vunpack.c.h.b16 %v2273
  %v2633 = vunpack.c.l.b16 %v2274
  %v2634 = vunpack.c.h.b16 %v2274
  %v2635 = vunpack.c.l.b16 %v2275
  %v2636 = vunpack.c.h.b16 %v2275
  %v2637 = vunpack.c.l.b16 %v2276
  %v2638 = vunpack.c.h.b16 %v2276
  %v2639 = vunpack.c.l.b16 %v2277
  %v2640 = vunpack.c.h.b16 %v2277
  %v2641 = vunpack.c.l.b16 %v2278
  %v2642 = vunpack.c.h.b16 %v2278
  %v2643 = vunpack.c.l.b16 %v2279
  %v2644 = vunpack.c.h.b16 %v2279
  %v2645 = vunpack.c.l.b16 %v2280
  %v2646 = vunpack.c.h.b16 %v2280
  %v2647 = vunpack.c.l.b16 %v2281
  %v2648 = vunpack.c.h.b16 %v2281
  %v2649 = vunpack.c.l.b16 %v2282
  %v2650 = vunpack.c.h.b16 %v2282
  %v2651 = vunpack.c.l.b16 %v2283
  %v2652 = vunpack.c.h.b16 %v2283
  %v2653 = vunpack.c.l.b16 %v2284
  %v2654 = vunpack.c.h.b16 %v2284
  %v2655 = vunpack.c.l.b16 %v2285
  %v2656 = vunpack.c.h.b16 %v2285
  %v2657 = vunpack.c.l.b16 %v2286
  %v2658 = vunpack.c.h.b16 %v2286
  %v2659 = vunpack.c.l.b16 %v2287
  %v2660 = vunpack.c.h.b16 %v2287
  %v2661 = vunpack.c.l.b16 %v2288
  %v2662 = vunpack.c.h.b16 %v2288
  %v2663 = vunpack.c.l.b16 %v2289
  %v2664 = vunpack.c.h.b16 %v2289
  %v2665 = vunpack.c.l.b16 %v2290
  %v2666 = vunpack.c.h.b16 %v2290
  %v2667 = vunpack.c.l.b16 %v2291
  %v2668 = vunpack.c.h.b16 %v2291
  %v2669 = vunpack.c.l.b16 %v2292
  %v2670 = vunpack.c.h.b16 %v2292
  %v2671 = vunpack.c.l.b16 %v2293
  %v2672 = vunpack.c.h.b16 %v2293
  %v2673 = vunpack.c.l.b16 %v2294
  %v2674 = vunpack.c.h.b16 %v2294
  %v2675 = vunpack.c.l.b16 %v2295
  %v2676 = vunpack.c.h.b16 %v2295
  %v2677 = vunpack.c.l.b16 %v2296
  %v2678 = vunpack.c.h.b16 %v2296
  %v2679 = vunpack.c.l.b16 %v2297
  %v2680 = vunpack.c.h.b16 %v2297
  %v2681 = vunpack.c.l.b16 %v2298
  %v2682 = vunpack.c.h.b16 %v2298
  %v2683 = vpack.c.b16 %v2429, %v2427
  %v2684 = vpack.c.b16 %v2430, %v2428
  %v2685 = vpack.c.b16 %v2433, %v2431
  %v2686 = vpack.c.b16 %v2434, %v2432
  %v2687 = vpack.c.b16 %v2437, %v2435
  %v2688 = vpack.c.b16 %v2438, %v2436
  %v2689 = vpack.c.b16 %v2441, %v2439
  %v2690 = vpack.c.b16 %v2442, %v2440
  %v2691 = vpack.c.b16 %v2445, %v2443
  %v2692 = vpack.c.b16 %v2446, %v2444
  %v2693 = vpack.c.b16 %v2449, %v2447
  %v2694 = vpack.c.b16 %v2450, %v2448
  %v2695 = vpack.c.b16 %v2453, %v2451
  %v2696 = vpack.c.b16 %v2454, %v2452
  %v2697 = vpack.c.b16 %v2457, %v2455
  %v2698 = vpack.c.b16 %v2458, %v2456
  %v2699 = vpack.c.b16 %v2461, %v2459
  %v2700 = vpack.c.b16 %v2462, %v2460
  %v2701 = vpack.c.b16 %v2465, %v2463
  %v2702 = vpack.c.b16 %v2466, %v2464
  %v2703 = vpack.c.b16 %v2469, %v2467
  %v2704 = vpack.c.b16 %v2470, %v2468
  %v2705 = vpack.c.b16 %v2473, %v2471
  %v2706 = vpack.c.b16 %v2474, %v2472
  %v2707 = vpack.c.b16 %v2477, %v2475
  %v2708 = vpack.c.b16 %v2478, %v2476
  %v2709 = vpack.c.b16 %v2481, %v2479
  %v2710 = vpack.c.b16 %v2482, %v2480
  %v2711 = vpack.c.b16 %v2485, %v2483
  %v2712 = vpack.c.b16 %v2486, %v2484
  %v2713 = vpack.c.b16 %v2489, %v2487
  %v2714 = vpack.c.b16 %v2490, %v2488
  %v2715 = vpack.c.b16 %v2493, %v2491
  %v2716 = vpack.c.b16 %v2494, %v2492
  %v2717 = vpack.c.b16 %v2497, %v2495
  %v2718 = vpack.c.b16 %v2498, %v2496
  %v2719 = vpack.c.b16 %v2501, %v2499
  %v2720 = vpack.c.b16 %v2502, %v2500
  %v2721 = vpack.c.b16 %v2505, %v2503
  %v2722 = vpack.c.b16 %v2506, %v2504
  %v2723 = vpack.c.b16 %v2509, %v2507
  %v2724 = vpack.c.b16 %v2510, %v2508
  %v2725 = vpack.c.b16 %v2513, %v2511
  %v2726 = vpack.c.b16 %v2514, %v2512
  %v2727 = vpack.c.b16 %v2517, %v2515
  %v2728 = vpack.c.b16 %v2518, %v2516
  %v2729 = vpack.c.b16 %v2521, %v2519
  %v2730 = vpack.c.b16 %v2522, %v2520
  %v2731 = vpack.c.b16 %v2525, %v2523
  %v2732 = vpack.c.b16 %v2526, %v2524
  %v2733 = vpack.c.b16 %v2529, %v2527
  %v2734 = vpack.c.b16 %v2530, %v2528
  %v2735 = vpack.c.b16 %v2533, %v2531
  %v2736 = vpack.c.b16 %v2534, %v2532
  %v2737 = vpack.c.b16 %v2537, %v2535
  %v2738 = vpack.c.b16 %v2538, %v2536
  %v2739 = vpack.c.b16 %v2541, %v2539
  %v2740 = vpack.c.b16 %v2542, %v2540
  %v2741 = vpack.c.b16 %v2545, %v2543
  %v2742 = vpack.c.b16 %v2546, %v2544
  %v2743 = vpack.c.b16 %v2549, %v2547
  %v2744 = vpack.c.b16 %v2550, %v2548
  %v2745 = vpack.c.b16 %v2553, %v2551
  %v2746 = vpack.c.b16 %v2554, %v2552
  %v2747 = vpack.c.b16 %v2557, %v2555
  %v2748 = vpack.c.b16 %v2558, %v2556
  %v2749 = vpack.c.b16 %v2561, %v2559
  %v2750 = vpack.c.b16 %v2562, %v2560
  %v2751 = vpack.c.b16 %v2565, %v2563
  %v2752 = vpack.c.b16 %v2566, %v2564
  %v2753 = vpack.c.b16 %v2569, %v2567
  %v2754 = vpack.c.b16 %v2570, %v2568
  %v2755 = vpack.c.b16 %v2573, %v2571
  %v2756 = vpack.c.b16 %v2574, %v2572
  %v2757 = vpack.c.b16 %v2577, %v2575
  %v2758 = vpack.c.b16 %v2578, %v2576
  %v2759 = vpack.c.b16 %v2581, %v2579
  %v2760 = vpack.c.b16 %v2582, %v2580
  %v2761 = vpack.c.b16 %v2585, %v2583
  %v2762 = vpack.c.b16 %v2586, %v2584
  %v2763 = vpack.c.b16 %v2589, %v2587
  %v2764 = vpack.c.b16 %v2590, %v2588
  %v2765 = vpack.c.b16 %v2593, %v2591
  %v2766 = vpack.c.b16 %v2594, %v2592
  %v2767 = vpack.c.b16 %v2597, %v2595
  %v2768 = vpack.c.b16 %v2598, %v2596
  %v2769 = vpack.c.b16 %v2601, %v2599
  %v2770 = vpack.c.b16 %v2602, %v2600
  %v2771 = vpack.c.b16 %v2605, %v2603
  %v2772 = vpack.c.b16 %v2606, %v2604
  %v2773 = vpack.c.b16 %v2609, %v2607
  %v2774 = vpack.c.b16 %v2610, %v2608
  %v2775 = vpack.c.b16 %v2613, %v2611
  %v2776 = vpack.c.b16 %v2614, %v2612
  %v2777 = vpack.c.b16 %v2617, %v2615
  %v2778 = vpack.c.b16 %v2618, %v2616
  %v2779 = vpack.c.b16 %v2621, %v2619
  %v2780 = vpack.c.b16 %v2622, %v2620
  %v2781 = vpack.c.b16 %v2625, %v2623
  %v2782 = vpack.c.b16 %v2626, %v2624
  %v2783 = vpack.c.b16 %v2629, %v2627
  %v2784 = vpack.c.b16 %v2630, %v2628
  %v2785 = vpack.c.b16 %v2633, %v2631
  %v2786 = vpack.c.b16 %v2634, %v2632
  %v2787 = vpack.c.b16 %v2637, %v2635
  %v2788 = vpack.c.b16 %v2638, %v2636
  %v2789 = vpack.c.b16 %v2641, %v2639
  %v2790 = vpack.c.b16 %v2642, %v2640
  %v2791 = vpack.c.b16 %v2645, %v2643
  %v2792 = vpack.c.b16 %v2646, %v2644
  %v2793 = vpack.c.b16 %v2649, %v2647
  %v2794 = vpack.c.b16 %v2650, %v2648
  %v2795 = vpack.c.b16 %v2653, %v2651
  %v2796 = vpack.c.b16 %v2654, %v2652
  %v2797 = vpack.c.b16 %v2657, %v2655
  %v2798 = vpack.c.b16 %v2658, %v2656
  %v2799 = vpack.c.b16 %v2661, %v2659
  %v2800 = vpack.c.b16 %v2662, %v2660
  %v2801 = vpack.c.b16 %v2665, %v2663
  %v2802 = vpack.c.b16 %v2666, %v2664
  %v2803 = vpack.c.b16 %v2669, %v2667
  %v2804 = vpack.c.b16 %v2670, %v2668
  %v2805 = vpack.c.b16 %v2673, %v2671
  %v2806 = vpack.c.b16 %v2674, %v2672
  %v2807 = vpack.c.b16 %v2677, %v2675
  %v2808 = vpack.c.b16 %v2678, %v2676
  %v2809 = vpack.c.b16 %v2681, %v2679
  %v2810 = vpack.c.b16 %v2682, %v2680
  %2939 = vmatprep.subr.bf16.mxu0 %v2684
  %2940 = vmatpush1.bf16.msra.mxu0 %v2683
  %2941 = vmatprep.subr.bf16.mxu0 %v2686
  %2942 = vmatpush1.bf16.msra.mxu0 %v2685
  %2943 = vmatprep.subr.bf16.mxu0 %v2688
  %2944 = vmatpush1.bf16.msra.mxu0 %v2687
  %2945 = vmatprep.subr.bf16.mxu0 %v2690
  %2946 = vmatpush1.bf16.msra.mxu0 %v2689
  %2947 = vmatprep.subr.bf16.mxu0 %v2692
  %2948 = vmatpush1.bf16.msra.mxu0 %v2691
  %2949 = vmatprep.subr.bf16.mxu0 %v2694
  %2950 = vmatpush1.bf16.msra.mxu0 %v2693
  %2951 = vmatprep.subr.bf16.mxu0 %v2696
  %2952 = vmatpush1.bf16.msra.mxu0 %v2695
  %2953 = vmatprep.subr.bf16.mxu0 %v2698
  %2954 = vmatpush1.bf16.msra.mxu0 %v2697
  %2955 = vmatprep.subr.bf16.mxu0 %v2700
  %2956 = vmatpush1.bf16.msra.mxu0 %v2699
  %2957 = vmatprep.subr.bf16.mxu0 %v2702
  %2958 = vmatpush1.bf16.msra.mxu0 %v2701
  %2959 = vmatprep.subr.bf16.mxu0 %v2704
  %2960 = vmatpush1.bf16.msra.mxu0 %v2703
  %2961 = vmatprep.subr.bf16.mxu0 %v2706
  %2962 = vmatpush1.bf16.msra.mxu0 %v2705
  %2963 = vmatprep.subr.bf16.mxu0 %v2708
  %2964 = vmatpush1.bf16.msra.mxu0 %v2707
  %2965 = vmatprep.subr.bf16.mxu0 %v2710
  %2966 = vmatpush1.bf16.msra.mxu0 %v2709
  %2967 = vmatprep.subr.bf16.mxu0 %v2712
  %2968 = vmatpush1.bf16.msra.mxu0 %v2711
  %2969 = vmatprep.subr.bf16.mxu0 %v2714
  %2970 = vmatpush1.bf16.msra.mxu0 %v2713
  %2971 = vmatprep.mubr.bf16.mxu0 %v2108
  %2972 = vmatmul.mubr.bf16.gmra.mrb[0].mxu0 %v2107
  %v2973 = vpop.f32.mrb[0].mxu0
  %v2974 = vadd.f32 0.0, %v2973
  %v2975 = vpop.f32.mrb[0].mxu0
  %v2976 = vadd.f32 0.0, %v2975
  %v2977 = vpop.f32.mrb[0].mxu0
  %v2978 = vadd.f32 0.0, %v2977
  %v2979 = vpop.f32.mrb[0].mxu0
  %v2980 = vadd.f32 0.0, %v2979
  %2981 = vmatprep.mubr.bf16.mxu0 %v2116
  %2982 = vmatmul.mubr.bf16.gmra.mrb[0].mxu0 %v2115
  %v2983 = vpop.f32.mrb[0].mxu0
  %v2984 = vadd.f32 0.0, %v2983
  %v2985 = vpop.f32.mrb[0].mxu0
  %v2986 = vadd.f32 0.0, %v2985
  %v2987 = vpop.f32.mrb[0].mxu0
  %v2988 = vadd.f32 0.0, %v2987
  %v2989 = vpop.f32.mrb[0].mxu0
  %v2990 = vadd.f32 0.0, %v2989
  %2991 = vmatprep.mubr.bf16.mxu0 %v2124
  %2992 = vmatmul.mubr.bf16.gmra.mrb[0].mxu0 %v2123
  %v2993 = vpop.f32.mrb[0].mxu0
  %v2994 = vadd.f32 0.0, %v2993
  %v2995 = vpop.f32.mrb[0].mxu0
  %v2996 = vadd.f32 0.0, %v2995
  %v2997 = vpop.f32.mrb[0].mxu0
  %v2998 = vadd.f32 0.0, %v2997
  %v2999 = vpop.f32.mrb[0].mxu0
  %v3000 = vadd.f32 0.0, %v2999
  %3001 = vmatprep.mubr.bf16.mxu0 %v2132
  %3002 = vmatmul.mubr.bf16.gmra.mrb[0].mxu0 %v2131
  %v3003 = vpop.f32.mrb[0].mxu0
  %v3004 = vadd.f32 0.0, %v3003
  %v3005 = vpop.f32.mrb[0].mxu0
  %v3006 = vadd.f32 0.0, %v3005
  %v3007 = vpop.f32.mrb[0].mxu0
  %v3008 = vadd.f32 0.0, %v3007
  %v3009 = vpop.f32.mrb[0].mxu0
  %v3010 = vadd.f32 0.0, %v3009
  %3011 = vmatprep.mubr.bf16.mxu0 %v2140
  %3012 = vmatmul.mubr.bf16.gmra.mrb[0].mxu0 %v2139
  %v3013 = vpop.f32.mrb[0].mxu0
  %v3014 = vadd.f32 0.0, %v3013
  %v3015 = vpop.f32.mrb[0].mxu0
  %v3016 = vadd.f32 0.0, %v3015
  %v3017 = vpop.f32.mrb[0].mxu0
  %v3018 = vadd.f32 0.0, %v3017
  %v3019 = vpop.f32.mrb[0].mxu0
  %v3020 = vadd.f32 0.0, %v3019
  %3021 = vmatprep.mubr.bf16.mxu0 %v2148
  %3022 = vmatmul.mubr.bf16.gmra.mrb[0].mxu0 %v2147
  %v3023 = vpop.f32.mrb[0].mxu0
  %v3024 = vadd.f32 0.0, %v3023
  %v3025 = vpop.f32.mrb[0].mxu0
  %v3026 = vadd.f32 0.0, %v3025
  %v3027 = vpop.f32.mrb[0].mxu0
  %v3028 = vadd.f32 0.0, %v3027
  %v3029 = vpop.f32.mrb[0].mxu0
  %v3030 = vadd.f32 0.0, %v3029
  %3031 = vmatprep.mubr.bf16.mxu0 %v2156
  %3032 = vmatmul.mubr.bf16.gmra.mrb[0].mxu0 %v2155
  %v3033 = vpop.f32.mrb[0].mxu0
  %v3034 = vadd.f32 0.0, %v3033
  %v3035 = vpop.f32.mrb[0].mxu0
  %v3036 = vadd.f32 0.0, %v3035
  %v3037 = vpop.f32.mrb[0].mxu0
  %v3038 = vadd.f32 0.0, %v3037
  %v3039 = vpop.f32.mrb[0].mxu0
  %v3040 = vadd.f32 0.0, %v3039
  %3041 = vmatprep.mubr.bf16.mxu0 %v2164
  %3042 = vmatmul.mubr.bf16.gmra.mrb[0].mxu0 %v2163
  %v3043 = vpop.f32.mrb[0].mxu0
  %v3044 = vadd.f32 0.0, %v3043
  %v3045 = vpop.f32.mrb[0].mxu0
  %v3046 = vadd.f32 0.0, %v3045
  %v3047 = vpop.f32.mrb[0].mxu0
  %v3048 = vadd.f32 0.0, %v3047
  %v3049 = vpop.f32.mrb[0].mxu0
  %v3050 = vadd.f32 0.0, %v3049
  %3051 = vdwg.mxu0
  %3052 = vmatprep.subr.bf16.mxu0 %v2716
  %3053 = vmatpush1.bf16.msra.mxu0 %v2715
  %3054 = vmatprep.subr.bf16.mxu0 %v2718
  %3055 = vmatpush1.bf16.msra.mxu0 %v2717
  %3056 = vmatprep.subr.bf16.mxu0 %v2720
  %3057 = vmatpush1.bf16.msra.mxu0 %v2719
  %3058 = vmatprep.subr.bf16.mxu0 %v2722
  %3059 = vmatpush1.bf16.msra.mxu0 %v2721
  %3060 = vmatprep.subr.bf16.mxu0 %v2724
  %3061 = vmatpush1.bf16.msra.mxu0 %v2723
  %3062 = vmatprep.subr.bf16.mxu0 %v2726
  %3063 = vmatpush1.bf16.msra.mxu0 %v2725
  %3064 = vmatprep.subr.bf16.mxu0 %v2728
  %3065 = vmatpush1.bf16.msra.mxu0 %v2727
  %3066 = vmatprep.subr.bf16.mxu0 %v2730
  %3067 = vmatpush1.bf16.msra.mxu0 %v2729
  %3068 = vmatprep.subr.bf16.mxu0 %v2732
  %3069 = vmatpush1.bf16.msra.mxu0 %v2731
  %3070 = vmatprep.subr.bf16.mxu0 %v2734
  %3071 = vmatpush1.bf16.msra.mxu0 %v2733
  %3072 = vmatprep.subr.bf16.mxu0 %v2736
  %3073 = vmatpush1.bf16.msra.mxu0 %v2735
  %3074 = vmatprep.subr.bf16.mxu0 %v2738
  %3075 = vmatpush1.bf16.msra.mxu0 %v2737
  %3076 = vmatprep.subr.bf16.mxu0 %v2740
  %3077 = vmatpush1.bf16.msra.mxu0 %v2739
  %3078 = vmatprep.subr.bf16.mxu0 %v2742
  %3079 = vmatpush1.bf16.msra.mxu0 %v2741
  %3080 = vmatprep.subr.bf16.mxu0 %v2744
  %3081 = vmatpush1.bf16.msra.mxu0 %v2743
  %3082 = vmatprep.subr.bf16.mxu0 %v2746
  %3083 = vmatpush1.bf16.msra.mxu0 %v2745
  %3084 = vmatprep.mubr.bf16.mxu0 %v2110
  %3085 = vmatmul.mubr.bf16.gmra.mrb[0].mxu0 %v2109
  %v3086 = vpop.f32.mrb[0].mxu0
  %v3087 = vadd.f32 %v2974, %v3086
  %v3088 = vpop.f32.mrb[0].mxu0
  %v3089 = vadd.f32 %v2976, %v3088
  %v3090 = vpop.f32.mrb[0].mxu0
  %v3091 = vadd.f32 %v2978, %v3090
  %v3092 = vpop.f32.mrb[0].mxu0
  %v3093 = vadd.f32 %v2980, %v3092
  %3094 = vmatprep.mubr.bf16.mxu0 %v2118
  %3095 = vmatmul.mubr.bf16.gmra.mrb[0].mxu0 %v2117
  %v3096 = vpop.f32.mrb[0].mxu0
  %v3097 = vadd.f32 %v2984, %v3096
  %v3098 = vpop.f32.mrb[0].mxu0
  %v3099 = vadd.f32 %v2986, %v3098
  %v3100 = vpop.f32.mrb[0].mxu0
  %v3101 = vadd.f32 %v2988, %v3100
  %v3102 = vpop.f32.mrb[0].mxu0
  %v3103 = vadd.f32 %v2990, %v3102
  %3104 = vmatprep.mubr.bf16.mxu0 %v2126
  %3105 = vmatmul.mubr.bf16.gmra.mrb[0].mxu0 %v2125
  %v3106 = vpop.f32.mrb[0].mxu0
  %v3107 = vadd.f32 %v2994, %v3106
  %v3108 = vpop.f32.mrb[0].mxu0
  %v3109 = vadd.f32 %v2996, %v3108
  %v3110 = vpop.f32.mrb[0].mxu0
  %v3111 = vadd.f32 %v2998, %v3110
  %v3112 = vpop.f32.mrb[0].mxu0
  %v3113 = vadd.f32 %v3000, %v3112
  %3114 = vmatprep.mubr.bf16.mxu0 %v2134
  %3115 = vmatmul.mubr.bf16.gmra.mrb[0].mxu0 %v2133
  %v3116 = vpop.f32.mrb[0].mxu0
  %v3117 = vadd.f32 %v3004, %v3116
  %v3118 = vpop.f32.mrb[0].mxu0
  %v3119 = vadd.f32 %v3006, %v3118
  %v3120 = vpop.f32.mrb[0].mxu0
  %v3121 = vadd.f32 %v3008, %v3120
  %v3122 = vpop.f32.mrb[0].mxu0
  %v3123 = vadd.f32 %v3010, %v3122
  %3124 = vmatprep.mubr.bf16.mxu0 %v2142
  %3125 = vmatmul.mubr.bf16.gmra.mrb[0].mxu0 %v2141
  %v3126 = vpop.f32.mrb[0].mxu0
  %v3127 = vadd.f32 %v3014, %v3126
  %v3128 = vpop.f32.mrb[0].mxu0
  %v3129 = vadd.f32 %v3016, %v3128
  %v3130 = vpop.f32.mrb[0].mxu0
  %v3131 = vadd.f32 %v3018, %v3130
  %v3132 = vpop.f32.mrb[0].mxu0
  %v3133 = vadd.f32 %v3020, %v3132
  %3134 = vmatprep.mubr.bf16.mxu0 %v2150
  %3135 = vmatmul.mubr.bf16.gmra.mrb[0].mxu0 %v2149
  %v3136 = vpop.f32.mrb[0].mxu0
  %v3137 = vadd.f32 %v3024, %v3136
  %v3138 = vpop.f32.mrb[0].mxu0
  %v3139 = vadd.f32 %v3026, %v3138
  %v3140 = vpop.f32.mrb[0].mxu0
  %v3141 = vadd.f32 %v3028, %v3140
  %v3142 = vpop.f32.mrb[0].mxu0
  %v3143 = vadd.f32 %v3030, %v3142
  %3144 = vmatprep.mubr.bf16.mxu0 %v2158
  %3145 = vmatmul.mubr.bf16.gmra.mrb[0].mxu0 %v2157
  %v3146 = vpop.f32.mrb[0].mxu0
  %v3147 = vadd.f32 %v3034, %v3146
  %v3148 = vpop.f32.mrb[0].mxu0
  %v3149 = vadd.f32 %v3036, %v3148
  %v3150 = vpop.f32.mrb[0].mxu0
  %v3151 = vadd.f32 %v3038, %v3150
  %v3152 = vpop.f32.mrb[0].mxu0
  %v3153 = vadd.f32 %v3040, %v3152
  %3154 = vmatprep.mubr.bf16.mxu0 %v2166
  %3155 = vmatmul.mubr.bf16.gmra.mrb[0].mxu0 %v2165
  %v3156 = vpop.f32.mrb[0].mxu0
  %v3157 = vadd.f32 %v3044, %v3156
  %v3158 = vpop.f32.mrb[0].mxu0
  %v3159 = vadd.f32 %v3046, %v3158
  %v3160 = vpop.f32.mrb[0].mxu0
  %v3161 = vadd.f32 %v3048, %v3160
  %v3162 = vpop.f32.mrb[0].mxu0
  %v3163 = vadd.f32 %v3050, %v3162
  %3164 = vdwg.mxu0
  %3165 = vmatprep.subr.bf16.mxu0 %v2748
  %3166 = vmatpush1.bf16.msra.mxu0 %v2747
  %3167 = vmatprep.subr.bf16.mxu0 %v2750
  %3168 = vmatpush1.bf16.msra.mxu0 %v2749
  %3169 = vmatprep.subr.bf16.mxu0 %v2752
  %3170 = vmatpush1.bf16.msra.mxu0 %v2751
  %3171 = vmatprep.subr.bf16.mxu0 %v2754
  %3172 = vmatpush1.bf16.msra.mxu0 %v2753
  %3173 = vmatprep.subr.bf16.mxu0 %v2756
  %3174 = vmatpush1.bf16.msra.mxu0 %v2755
  %3175 = vmatprep.subr.bf16.mxu0 %v2758
  %3176 = vmatpush1.bf16.msra.mxu0 %v2757
  %3177 = vmatprep.subr.bf16.mxu0 %v2760
  %3178 = vmatpush1.bf16.msra.mxu0 %v2759
  %3179 = vmatprep.subr.bf16.mxu0 %v2762
  %3180 = vmatpush1.bf16.msra.mxu0 %v2761
  %3181 = vmatprep.subr.bf16.mxu0 %v2764
  %3182 = vmatpush1.bf16.msra.mxu0 %v2763
  %3183 = vmatprep.subr.bf16.mxu0 %v2766
  %3184 = vmatpush1.bf16.msra.mxu0 %v2765
  %3185 = vmatprep.subr.bf16.mxu0 %v2768
  %3186 = vmatpush1.bf16.msra.mxu0 %v2767
  %3187 = vmatprep.subr.bf16.mxu0 %v2770
  %3188 = vmatpush1.bf16.msra.mxu0 %v2769
  %3189 = vmatprep.subr.bf16.mxu0 %v2772
  %3190 = vmatpush1.bf16.msra.mxu0 %v2771
  %3191 = vmatprep.subr.bf16.mxu0 %v2774
  %3192 = vmatpush1.bf16.msra.mxu0 %v2773
  %3193 = vmatprep.subr.bf16.mxu0 %v2776
  %3194 = vmatpush1.bf16.msra.mxu0 %v2775
  %3195 = vmatprep.subr.bf16.mxu0 %v2778
  %3196 = vmatpush1.bf16.msra.mxu0 %v2777
  %3197 = vmatprep.mubr.bf16.mxu0 %v2112
  %3198 = vmatmul.mubr.bf16.gmra.mrb[0].mxu0 %v2111
  %v3199 = vpop.f32.mrb[0].mxu0
  %v3200 = vadd.f32 %v3087, %v3199
  %v3201 = vpop.f32.mrb[0].mxu0
  %v3202 = vadd.f32 %v3089, %v3201
  %v3203 = vpop.f32.mrb[0].mxu0
  %v3204 = vadd.f32 %v3091, %v3203
  %v3205 = vpop.f32.mrb[0].mxu0
  %v3206 = vadd.f32 %v3093, %v3205
  %3207 = vmatprep.mubr.bf16.mxu0 %v2120
  %3208 = vmatmul.mubr.bf16.gmra.mrb[0].mxu0 %v2119
  %v3209 = vpop.f32.mrb[0].mxu0
  %v3210 = vadd.f32 %v3097, %v3209
  %v3211 = vpop.f32.mrb[0].mxu0
  %v3212 = vadd.f32 %v3099, %v3211
  %v3213 = vpop.f32.mrb[0].mxu0
  %v3214 = vadd.f32 %v3101, %v3213
  %v3215 = vpop.f32.mrb[0].mxu0
  %v3216 = vadd.f32 %v3103, %v3215
  %3217 = vmatprep.mubr.bf16.mxu0 %v2128
  %3218 = vmatmul.mubr.bf16.gmra.mrb[0].mxu0 %v2127
  %v3219 = vpop.f32.mrb[0].mxu0
  %v3220 = vadd.f32 %v3107, %v3219
  %v3221 = vpop.f32.mrb[0].mxu0
  %v3222 = vadd.f32 %v3109, %v3221
  %v3223 = vpop.f32.mrb[0].mxu0
  %v3224 = vadd.f32 %v3111, %v3223
  %v3225 = vpop.f32.mrb[0].mxu0
  %v3226 = vadd.f32 %v3113, %v3225
  %3227 = vmatprep.mubr.bf16.mxu0 %v2136
  %3228 = vmatmul.mubr.bf16.gmra.mrb[0].mxu0 %v2135
  %v3229 = vpop.f32.mrb[0].mxu0
  %v3230 = vadd.f32 %v3117, %v3229
  %v3231 = vpop.f32.mrb[0].mxu0
  %v3232 = vadd.f32 %v3119, %v3231
  %v3233 = vpop.f32.mrb[0].mxu0
  %v3234 = vadd.f32 %v3121, %v3233
  %v3235 = vpop.f32.mrb[0].mxu0
  %v3236 = vadd.f32 %v3123, %v3235
  %3237 = vmatprep.mubr.bf16.mxu0 %v2144
  %3238 = vmatmul.mubr.bf16.gmra.mrb[0].mxu0 %v2143
  %v3239 = vpop.f32.mrb[0].mxu0
  %v3240 = vadd.f32 %v3127, %v3239
  %v3241 = vpop.f32.mrb[0].mxu0
  %v3242 = vadd.f32 %v3129, %v3241
  %v3243 = vpop.f32.mrb[0].mxu0
  %v3244 = vadd.f32 %v3131, %v3243
  %v3245 = vpop.f32.mrb[0].mxu0
  %v3246 = vadd.f32 %v3133, %v3245
  %3247 = vmatprep.mubr.bf16.mxu0 %v2152
  %3248 = vmatmul.mubr.bf16.gmra.mrb[0].mxu0 %v2151
  %v3249 = vpop.f32.mrb[0].mxu0
  %v3250 = vadd.f32 %v3137, %v3249
  %v3251 = vpop.f32.mrb[0].mxu0
  %v3252 = vadd.f32 %v3139, %v3251
  %v3253 = vpop.f32.mrb[0].mxu0
  %v3254 = vadd.f32 %v3141, %v3253
  %v3255 = vpop.f32.mrb[0].mxu0
  %v3256 = vadd.f32 %v3143, %v3255
  %3257 = vmatprep.mubr.bf16.mxu0 %v2160
  %3258 = vmatmul.mubr.bf16.gmra.mrb[0].mxu0 %v2159
  %v3259 = vpop.f32.mrb[0].mxu0
  %v3260 = vadd.f32 %v3147, %v3259
  %v3261 = vpop.f32.mrb[0].mxu0
  %v3262 = vadd.f32 %v3149, %v3261
  %v3263 = vpop.f32.mrb[0].mxu0
  %v3264 = vadd.f32 %v3151, %v3263
  %v3265 = vpop.f32.mrb[0].mxu0
  %v3266 = vadd.f32 %v3153, %v3265
  %3267 = vmatprep.mubr.bf16.mxu0 %v2168
  %3268 = vmatmul.mubr.bf16.gmra.mrb[0].mxu0 %v2167
  %v3269 = vpop.f32.mrb[0].mxu0
  %v3270 = vadd.f32 %v3157, %v3269
  %v3271 = vpop.f32.mrb[0].mxu0
  %v3272 = vadd.f32 %v3159, %v3271
  %v3273 = vpop.f32.mrb[0].mxu0
  %v3274 = vadd.f32 %v3161, %v3273
  %v3275 = vpop.f32.mrb[0].mxu0
  %v3276 = vadd.f32 %v3163, %v3275
  %3277 = vdwg.mxu0
  %3278 = vmatprep.subr.bf16.mxu0 %v2780
  %3279 = vmatpush1.bf16.msra.mxu0 %v2779
  %3280 = vmatprep.subr.bf16.mxu0 %v2782
  %3281 = vmatpush1.bf16.msra.mxu0 %v2781
  %3282 = vmatprep.subr.bf16.mxu0 %v2784
  %3283 = vmatpush1.bf16.msra.mxu0 %v2783
  %3284 = vmatprep.subr.bf16.mxu0 %v2786
  %3285 = vmatpush1.bf16.msra.mxu0 %v2785
  %3286 = vmatprep.subr.bf16.mxu0 %v2788
  %3287 = vmatpush1.bf16.msra.mxu0 %v2787
  %3288 = vmatprep.subr.bf16.mxu0 %v2790
  %3289 = vmatpush1.bf16.msra.mxu0 %v2789
  %3290 = vmatprep.subr.bf16.mxu0 %v2792
  %3291 = vmatpush1.bf16.msra.mxu0 %v2791
  %3292 = vmatprep.subr.bf16.mxu0 %v2794
  %3293 = vmatpush1.bf16.msra.mxu0 %v2793
  %3294 = vmatprep.subr.bf16.mxu0 %v2796
  %3295 = vmatpush1.bf16.msra.mxu0 %v2795
  %3296 = vmatprep.subr.bf16.mxu0 %v2798
  %3297 = vmatpush1.bf16.msra.mxu0 %v2797
  %3298 = vmatprep.subr.bf16.mxu0 %v2800
  %3299 = vmatpush1.bf16.msra.mxu0 %v2799
  %3300 = vmatprep.subr.bf16.mxu0 %v2802
  %3301 = vmatpush1.bf16.msra.mxu0 %v2801
  %3302 = vmatprep.subr.bf16.mxu0 %v2804
  %3303 = vmatpush1.bf16.msra.mxu0 %v2803
  %3304 = vmatprep.subr.bf16.mxu0 %v2806
  %3305 = vmatpush1.bf16.msra.mxu0 %v2805
  %3306 = vmatprep.subr.bf16.mxu0 %v2808
  %3307 = vmatpush1.bf16.msra.mxu0 %v2807
  %3308 = vmatprep.subr.bf16.mxu0 %v2810
  %3309 = vmatpush1.bf16.msra.mxu0 %v2809
  %3310 = vmatprep.mubr.bf16.mxu0 %v2114
  %3311 = vmatmul.mubr.bf16.gmra.mrb[0].mxu0 %v2113
  %v3312 = vpop.f32.mrb[0].mxu0
  %v3313 = vadd.f32 %v3200, %v3312
  %v3314 = vpop.f32.mrb[0].mxu0
  %v3315 = vadd.f32 %v3202, %v3314
  %v3316 = vpop.f32.mrb[0].mxu0
  %v3317 = vadd.f32 %v3204, %v3316
  %v3318 = vpop.f32.mrb[0].mxu0
  %v3319 = vadd.f32 %v3206, %v3318
  %3320 = vmatprep.mubr.bf16.mxu0 %v2122
  %3321 = vmatmul.mubr.bf16.gmra.mrb[0].mxu0 %v2121
  %v3322 = vpop.f32.mrb[0].mxu0
  %v3323 = vadd.f32 %v3210, %v3322
  %v3324 = vpop.f32.mrb[0].mxu0
  %v3325 = vadd.f32 %v3212, %v3324
  %v3326 = vpop.f32.mrb[0].mxu0
  %v3327 = vadd.f32 %v3214, %v3326
  %v3328 = vpop.f32.mrb[0].mxu0
  %v3329 = vadd.f32 %v3216, %v3328
  %3330 = vmatprep.mubr.bf16.mxu0 %v2130
  %3331 = vmatmul.mubr.bf16.gmra.mrb[0].mxu0 %v2129
  %v3332 = vpop.f32.mrb[0].mxu0
  %v3333 = vadd.f32 %v3220, %v3332
  %v3334 = vpop.f32.mrb[0].mxu0
  %v3335 = vadd.f32 %v3222, %v3334
  %v3336 = vpop.f32.mrb[0].mxu0
  %v3337 = vadd.f32 %v3224, %v3336
  %v3338 = vpop.f32.mrb[0].mxu0
  %v3339 = vadd.f32 %v3226, %v3338
  %3340 = vmatprep.mubr.bf16.mxu0 %v2138
  %3341 = vmatmul.mubr.bf16.gmra.mrb[0].mxu0 %v2137
  %v3342 = vpop.f32.mrb[0].mxu0
  %v3343 = vadd.f32 %v3230, %v3342
  %v3344 = vpop.f32.mrb[0].mxu0
  %v3345 = vadd.f32 %v3232, %v3344
  %v3346 = vpop.f32.mrb[0].mxu0
  %v3347 = vadd.f32 %v3234, %v3346
  %v3348 = vpop.f32.mrb[0].mxu0
  %v3349 = vadd.f32 %v3236, %v3348
  %3350 = vmatprep.mubr.bf16.mxu0 %v2146
  %3351 = vmatmul.mubr.bf16.gmra.mrb[0].mxu0 %v2145
  %v3352 = vpop.f32.mrb[0].mxu0
  %v3353 = vadd.f32 %v3240, %v3352
  %v3354 = vpop.f32.mrb[0].mxu0
  %v3355 = vadd.f32 %v3242, %v3354
  %v3356 = vpop.f32.mrb[0].mxu0
  %v3357 = vadd.f32 %v3244, %v3356
  %v3358 = vpop.f32.mrb[0].mxu0
  %v3359 = vadd.f32 %v3246, %v3358
  %3360 = vmatprep.mubr.bf16.mxu0 %v2154
  %3361 = vmatmul.mubr.bf16.gmra.mrb[0].mxu0 %v2153
  %v3362 = vpop.f32.mrb[0].mxu0
  %v3363 = vadd.f32 %v3250, %v3362
  %v3364 = vpop.f32.mrb[0].mxu0
  %v3365 = vadd.f32 %v3252, %v3364
  %v3366 = vpop.f32.mrb[0].mxu0
  %v3367 = vadd.f32 %v3254, %v3366
  %v3368 = vpop.f32.mrb[0].mxu0
  %v3369 = vadd.f32 %v3256, %v3368
  %3370 = vmatprep.mubr.bf16.mxu0 %v2162
  %3371 = vmatmul.mubr.bf16.gmra.mrb[0].mxu0 %v2161
  %v3372 = vpop.f32.mrb[0].mxu0
  %v3373 = vadd.f32 %v3260, %v3372
  %v3374 = vpop.f32.mrb[0].mxu0
  %v3375 = vadd.f32 %v3262, %v3374
  %v3376 = vpop.f32.mrb[0].mxu0
  %v3377 = vadd.f32 %v3264, %v3376
  %v3378 = vpop.f32.mrb[0].mxu0
  %v3379 = vadd.f32 %v3266, %v3378
  %3380 = vmatprep.mubr.bf16.mxu0 %v2170
  %3381 = vmatmul.mubr.bf16.gmra.mrb[0].mxu0 %v2169
  %v3382 = vpop.f32.mrb[0].mxu0
  %v3383 = vadd.f32 %v3270, %v3382
  %v3384 = vpop.f32.mrb[0].mxu0
  %v3385 = vadd.f32 %v3272, %v3384
  %v3386 = vpop.f32.mrb[0].mxu0
  %v3387 = vadd.f32 %v3274, %v3386
  %v3388 = vpop.f32.mrb[0].mxu0
  %v3389 = vadd.f32 %v3276, %v3388
  %3390 = vdwg.mxu0
  %v3391 = vpack.c.bf16 %v3317, %v3313
  %v3392 = vpack.c.bf16 %v3319, %v3315
  %v3393 = vpack.c.bf16 %v3327, %v3323
  %v3394 = vpack.c.bf16 %v3329, %v3325
  %v3395 = vpack.c.bf16 %v3337, %v3333
  %v3396 = vpack.c.bf16 %v3339, %v3335
  %v3397 = vpack.c.bf16 %v3347, %v3343
  %v3398 = vpack.c.bf16 %v3349, %v3345
  %v3399 = vpack.c.bf16 %v3357, %v3353
  %v3400 = vpack.c.bf16 %v3359, %v3355
  %v3401 = vpack.c.bf16 %v3367, %v3363
  %v3402 = vpack.c.bf16 %v3369, %v3365
  %v3403 = vpack.c.bf16 %v3377, %v3373
  %v3404 = vpack.c.bf16 %v3379, %v3375
  %v3405 = vpack.c.bf16 %v3387, %v3383
  %v3406 = vpack.c.bf16 %v3389, %v3385
  %v3423 = vunpack.c.l.b16 %v3391
  %v3424 = vunpack.c.l.b16 %v3392
  %v3425 = vunpack.c.h.b16 %v3391
  %v3426 = vunpack.c.h.b16 %v3392
  %v3427 = vunpack.c.l.b16 %v3393
  %v3428 = vunpack.c.l.b16 %v3394
  %v3429 = vunpack.c.h.b16 %v3393
  %v3430 = vunpack.c.h.b16 %v3394
  %v3431 = vunpack.c.l.b16 %v3395
  %v3432 = vunpack.c.l.b16 %v3396
  %v3433 = vunpack.c.h.b16 %v3395
  %v3434 = vunpack.c.h.b16 %v3396
  %v3435 = vunpack.c.l.b16 %v3397
  %v3436 = vunpack.c.l.b16 %v3398
  %v3437 = vunpack.c.h.b16 %v3397
  %v3438 = vunpack.c.h.b16 %v3398
  %v3439 = vunpack.c.l.b16 %v3399
  %v3440 = vunpack.c.l.b16 %v3400
  %v3441 = vunpack.c.h.b16 %v3399
  %v3442 = vunpack.c.h.b16 %v3400
  %v3443 = vunpack.c.l.b16 %v3401
  %v3444 = vunpack.c.l.b16 %v3402
  %v3445 = vunpack.c.h.b16 %v3401
  %v3446 = vunpack.c.h.b16 %v3402
  %v3447 = vunpack.c.l.b16 %v3403
  %v3448 = vunpack.c.l.b16 %v3404
  %v3449 = vunpack.c.h.b16 %v3403
  %v3450 = vunpack.c.h.b16 %v3404
  %v3451 = vunpack.c.l.b16 %v3405
  %v3452 = vunpack.c.l.b16 %v3406
  %v3453 = vunpack.c.h.b16 %v3405
  %v3454 = vunpack.c.h.b16 %v3406
  %v3455 = vpack.c.b16 %v3424, %v3423
  %v3456 = vpack.c.b16 %v3426, %v3425
  %v3457 = vpack.c.b16 %v3428, %v3427
  %v3458 = vpack.c.b16 %v3430, %v3429
  %v3459 = vpack.c.b16 %v3432, %v3431
  %v3460 = vpack.c.b16 %v3434, %v3433
  %v3461 = vpack.c.b16 %v3436, %v3435
  %v3462 = vpack.c.b16 %v3438, %v3437
  %v3463 = vpack.c.b16 %v3440, %v3439
  %v3464 = vpack.c.b16 %v3442, %v3441
  %v3465 = vpack.c.b16 %v3444, %v3443
  %v3466 = vpack.c.b16 %v3446, %v3445
  %v3467 = vpack.c.b16 %v3448, %v3447
  %v3468 = vpack.c.b16 %v3450, %v3449
  %v3469 = vpack.c.b16 %v3452, %v3451
  %v3470 = vpack.c.b16 %v3454, %v3453
  %v3487 = vadd.bf16 %v534, %v3455
  %v3488 = vadd.bf16 %v535, %v3456
  %v3489 = vadd.bf16 %v536, %v3457
  %v3490 = vadd.bf16 %v537, %v3458
  %v3491 = vadd.bf16 %v538, %v3459
  %v3492 = vadd.bf16 %v539, %v3460
  %v3493 = vadd.bf16 %v540, %v3461
  %v3494 = vadd.bf16 %v541, %v3462
  %v3495 = vadd.bf16 %v542, %v3463
  %v3496 = vadd.bf16 %v543, %v3464
  %v3497 = vadd.bf16 %v544, %v3465
  %v3498 = vadd.bf16 %v545, %v3466
  %v3499 = vadd.bf16 %v546, %v3467
  %v3500 = vadd.bf16 %v547, %v3468
  %v3501 = vadd.bf16 %v548, %v3469
  %v3502 = vadd.bf16 %v549, %v3470
  %3503 = vst [vmem:[%s5] sm:$0xff] %v3487
  %3504 = vst [vmem:[%s5 + $0x8] sm:$0xff] %v3488
  %3505 = vst [vmem:[%s5 + $0x10] sm:$0xff] %v3489
  %3506 = vst [vmem:[%s5 + $0x18] sm:$0xff] %v3490
  %3507 = vst [vmem:[%s5 + $0x20] sm:$0xff] %v3491
  %3508 = vst [vmem:[%s5 + $0x28] sm:$0xff] %v3492
  %3509 = vst [vmem:[%s5 + $0x30] sm:$0xff] %v3493
  %3510 = vst [vmem:[%s5 + $0x38] sm:$0xff] %v3494
  %3511 = vst [vmem:[%s5 + $0x40] sm:$0xff] %v3495
  %3512 = vst [vmem:[%s5 + $0x48] sm:$0xff] %v3496
  %3513 = vst [vmem:[%s5 + $0x50] sm:$0xff] %v3497
  %3514 = vst [vmem:[%s5 + $0x58] sm:$0xff] %v3498
  %3515 = vst [vmem:[%s5 + $0x60] sm:$0xff] %v3499
  %3516 = vst [vmem:[%s5 + $0x68] sm:$0xff] %v3500
  %3517 = vst [vmem:[%s5 + $0x70] sm:$0xff] %v3501
  %3518 = vst [vmem:[%s5 + $0x78] sm:$0xff] %v3502
  // Predicated region
  $region22: #{gpt_forward.9} parent=0 // pred_check
    _
  $region23: #{gpt_forward.9} parent=0 // pred_check_branch
    %3520 = sbr.rel (0) target = $region25
  $region24: #{gpt_forward.9} parent=0 // pred_region
    _
  $region25: #{gpt_forward.9} parent=0 // pred_fallthru
    _
  // Predicated region
  $region26: #{gpt_forward.9} parent=0 // pred_check
    _
  $region27: #{gpt_forward.9} parent=0 // pred_check_branch
    %3522 = sbr.rel (0) target = $region29
  $region28: #{gpt_forward.9} parent=0 // pred_region
    _
  $region29: #{gpt_forward.9} parent=0 // pred_fallthru
    _

</llo_original>
